<compile_context>
chip_gen: v7x
topology: tpu7x:2x2x1
jax: 0.10.0
libtpu: 0.0.40
codegen_flags: <defaults>
</compile_context>

<pallas_src>
import functools
import numpy as np
import jax
import jax.numpy as jnp
from jax.experimental import pallas as pl
from jax.experimental.pallas import tpu as pltpu


def _round_up(x, m):
    return ((x + m - 1) // m) * m


def _pick_tile_n(n, target=1024):
    """Shrink the tile only as far as needed to keep >= 2 grid steps."""
    t = target
    while t > 128 and n <= t:
        t //= 2
    return t


# ----------------------------------------------------------------------------
# Pallas kernel: one fused RGCNConv layer over a tile of nodes
# ----------------------------------------------------------------------------
def _rgcn_fused_kernel(nt_ref, agg_ref, x_ref, w_rel_ref, w_root_ref, b_ref,
                       out_ref, *, num_node_types, cin, apply_relu):
    # Relation term: one MXU matmul over all E relations at once
    #   (tile_n, E*Cin) bf16 @ (E*Cin, Cout) bf16 -> f32 accumulation.
    acc = jnp.dot(agg_ref[...], w_rel_ref[...],
                  preferred_element_type=jnp.float32)

    x = x_ref[...]            # (tile_n, Cin)  bf16
    nt = nt_ref[...]          # (tile_n, 1)    int32  (-1 on padded rows)
    b_all = b_ref[...]        # (T, Cout)      f32

    # Root term + bias, built in VMEM from the node-type compare.  Padded
    # rows (node_type == -1) match no type and contribute nothing.
    for t in range(num_node_types):
        m = nt == t                                        # (tile_n, 1) bool
        xt = x * m.astype(x.dtype)                         # masked features
        acc += jnp.dot(xt, w_root_ref[t * cin:(t + 1) * cin, :],
                       preferred_element_type=jnp.float32)
        acc += m.astype(jnp.float32) * b_all[t:t + 1, :]   # per-type bias, f32

    if apply_relu:
        acc = jnp.maximum(acc, 0.0)
    out_ref[...] = acc.astype(out_ref.dtype)


def rgcn_conv_pallas(node_type2d, agg, x, w_rel, w_root, b, *, num_node_types,
                     apply_relu, tile_n, out_dtype):
    """node_type2d: (Np,1) i32, agg: (Np, E*Cin) bf16, x: (Np, Cin) bf16,
       w_rel: (E*Cin, Cout) bf16, w_root: (T*Cin, Cout) bf16, b: (T, Cout) f32."""
    np_, ka = agg.shape
    cin = x.shape[1]
    cout = w_rel.shape[1]
    t = num_node_types
    assert np_ % tile_n == 0

    kernel = functools.partial(_rgcn_fused_kernel, num_node_types=t, cin=cin,
                               apply_relu=apply_relu)

    out_itemsize = jnp.dtype(out_dtype).itemsize
    cost = pl.CostEstimate(
        flops=2 * np_ * (ka + t * cin) * cout,
        transcendentals=0,
        bytes_accessed=(np_ * (ka + cin) * 2          # agg + x (bf16)
                        + np_ * 4                      # node_type (i32)
                        + (w_rel.size + w_root.size) * 2 + b.size * 4
                        + np_ * cout * out_itemsize))  # output

    return pl.pallas_call(
        kernel,
        out_shape=jax.ShapeDtypeStruct((np_, cout), out_dtype),
        grid_spec=pltpu.PrefetchScalarGridSpec(
            num_scalar_prefetch=0,
            grid=(np_ // tile_n,),
            in_specs=[
                pl.BlockSpec((tile_n, 1), lambda i: (i, 0)),       # node_type
                pl.BlockSpec((tile_n, ka), lambda i: (i, 0)),      # agg_flat
                pl.BlockSpec((tile_n, cin), lambda i: (i, 0)),     # x
                pl.BlockSpec((ka, cout), lambda i: (0, 0)),        # W_rel stack
                pl.BlockSpec((t * cin, cout), lambda i: (0, 0)),   # W_root stack
                pl.BlockSpec((t, cout), lambda i: (0, 0)),         # b_root
            ],
            out_specs=pl.BlockSpec((tile_n, cout), lambda i: (i, 0)),
        ),
        compiler_params=pltpu.CompilerParams(
            dimension_semantics=("parallel",),
            vmem_limit_bytes=32 * 1024 * 1024),   # actual use is a few MiB/step
        cost_estimate=cost,
    )(node_type2d, agg, x, w_rel, w_root, b)


# ----------------------------------------------------------------------------
# Glue (plain JAX): group_input, single-pass aggregation, layer loop
# ----------------------------------------------------------------------------
def group_input(x_dict, emb_dict, node_type, local_node_idx, in_channels):
    n = node_type.shape[0]
    h = jnp.zeros((n, in_channels), jnp.float32)
    for key, tbl in {**x_dict, **emb_dict}.items():
        mask = node_type == key
        idx = jnp.clip(local_node_idx, 0, tbl.shape[0] - 1)
        h = jnp.where(mask[:, None], tbl[idx], h)
    return h


def aggregate_mean_flat(x, src, dst, edge_type, num_edge_types, num_nodes):
    """Single segment-sum pass over all edges, keyed by dst*E + edge_type.
    Returns (num_nodes, E*Cin) bf16 laid out [agg_0 | agg_1 | ... | agg_{E-1}].
    Gather in bf16, accumulate in f32."""
    e = num_edge_types
    c = x.shape[1]
    x_src = x[src].astype(jnp.float32)               # (num_edges, Cin)
    seg = dst * e + edge_type                        # (num_edges,)
    summed = jax.ops.segment_sum(x_src, seg, num_segments=num_nodes * e)
    cnt = jax.ops.segment_sum(jnp.ones(seg.shape, jnp.float32), seg,
                              num_segments=num_nodes * e)
    mean = summed / jnp.maximum(cnt, 1.0)[:, None]   # zero in-degree -> 0
    return mean.reshape(num_nodes, e * c).astype(jnp.bfloat16)


def _prep_layer(layer):
    """Stack relation / root weights along K (bf16); keep bias in f32."""
    e, cin, cout = layer["w_rel"].shape
    t = layer["w_root"].shape[0]
    w_rel = layer["w_rel"].reshape(e * cin, cout).astype(jnp.bfloat16)
    w_root = layer["w_root"].reshape(t * cin, cout).astype(jnp.bfloat16)
    b = layer["b_root"].astype(jnp.float32)
    return w_rel, w_root, b


def rgcn_forward(layers, x_dict, emb_dict, edge_index, edge_type, node_type,
                 local_node_idx, *, num_edge_types, num_node_types,
                 in_channels, tile_n=1024):
    n = node_type.shape[0]
    e = num_edge_types
    tile_n = _pick_tile_n(n, tile_n)

    # Even grid so v7x's two TensorCores split the "parallel" axis evenly.
    steps = -(-n // tile_n)
    if steps > 1 and steps % 2:
        steps += 1
    np_ = steps * tile_n

    # Pad node metadata ONCE.  Padded rows have node_type == -1, so they match
    # no feature table and no in-kernel type mask, receive no edges, and stay
    # exactly zero through every layer; sliced off at the end.
    pad = np_ - n
    node_type_p = jnp.pad(node_type, (0, pad), constant_values=-1)
    local_idx_p = jnp.pad(local_node_idx, (0, pad))
    nt2d = node_type_p.astype(jnp.int32)[:, None]    # (Np, 1)

    x = group_input(x_dict, emb_dict, node_type_p, local_idx_p, in_channels)
    x = x.astype(jnp.bfloat16)
    src, dst = edge_index[0], edge_index[1]
    num_layers = len(layers)
    for li, layer in enumerate(layers):
        w_rel, w_root, b = _prep_layer(layer)
        agg = aggregate_mean_flat(x, src, dst, edge_type, e, np_)
        last = li == num_layers - 1
        x = rgcn_conv_pallas(
            nt2d, agg, x, w_rel, w_root, b,
            num_node_types=num_node_types,
            apply_relu=not last, tile_n=tile_n,
            out_dtype=jnp.float32 if last else jnp.bfloat16)
        # TODO(synk): dropout(p=0.5) is eval-mode identity here (see header).
    return x[:n]


# ----------------------------------------------------------------------------
# Pure-JAX f32 reference (mirrors the PyTorch forward) for a sanity check
# ----------------------------------------------------------------------------
def rgcn_reference(layers, x_dict, emb_dict, edge_index, edge_type, node_type,
                   local_node_idx, *, num_edge_types, num_node_types,
                   in_channels):
    n = node_type.shape[0]
    x = group_input(x_dict, emb_dict, node_type, local_node_idx, in_channels)
    src, dst = edge_index[0], edge_index[1]
    num_layers = len(layers)
    for li, layer in enumerate(layers):
        cout = layer["w_rel"].shape[2]
        out = jnp.zeros((n, cout), jnp.float32)
        for ei in range(num_edge_types):
            em = (edge_type == ei).astype(jnp.float32)
            msg = x[src] @ layer["w_rel"][ei]
            summed = jnp.zeros((n, cout), jnp.float32).at[dst].add(
                msg * em[:, None])
            cnt = jnp.zeros((n,), jnp.float32).at[dst].add(em)
            out = out + summed / jnp.maximum(cnt, 1.0)[:, None]
        for ti in range(num_node_types):
            m = (node_type == ti).astype(jnp.float32)[:, None]
            out = out + m * (x @ layer["w_root"][ti] + layer["b_root"][ti])
        if li != num_layers - 1:
            out = jnp.maximum(out, 0.0)
        x = out
    return x


# ----------------------------------------------------------------------------
# Deterministic parameter init (synthetic; shapes per RGCN.__init__)
# ----------------------------------------------------------------------------
def init_conv_params(key, cin, cout, num_edge_types, num_node_types):
    k1, k2, k3 = jax.random.split(key, 3)
    scale = 1.0 / np.sqrt(cin)
    return {
        "w_rel": jax.random.uniform(k1, (num_edge_types, cin, cout),
                                    jnp.float32, -scale, scale),
        "w_root": jax.random.uniform(k2, (num_node_types, cin, cout),
                                     jnp.float32, -scale, scale),
        "b_root": jax.random.uniform(k3, (num_node_types, cout),
                                     jnp.float32, -scale, scale),
    }


if __name__ == "__main__":
    # Small synthetic heterogeneous graph
    in_channels, hidden_channels, out_channels = 32, 32, 16
    num_layers = 3
    num_node_types = 3
    num_edge_types = 4
    num_nodes_dict = {0: 200, 1: 150, 2: 100}   # node type -> table size
    x_types = [0]                               # types with given features
    N = 512                                     # nodes in the mini-batch
    num_edges = 2048

    root = jax.random.PRNGKey(0)
    keys = jax.random.split(root, 16)

    # feature / embedding tables
    x_dict = {0: jax.random.normal(keys[0], (num_nodes_dict[0], in_channels),
                                   jnp.float32)}
    emb_dict = {
        1: jax.random.normal(keys[1], (num_nodes_dict[1], in_channels),
                             jnp.float32),
        2: jax.random.normal(keys[2], (num_nodes_dict[2], in_channels),
                             jnp.float32),
    }

    # graph structure
    node_type = jax.random.randint(keys[3], (N,), 0, num_node_types,
                                   dtype=jnp.int32)
    sizes = jnp.array([num_nodes_dict[t] for t in range(num_node_types)],
                      jnp.int32)
    u = jax.random.uniform(keys[4], (N,))
    local_node_idx = (u * sizes[node_type].astype(jnp.float32)).astype(jnp.int32)
    edge_index = jax.random.randint(keys[5], (2, num_edges), 0, N,
                                    dtype=jnp.int32)
    edge_type = jax.random.randint(keys[6], (num_edges,), 0, num_edge_types,
                                   dtype=jnp.int32)

    # layers: (I->H), (H->H), (H->O)
    dims = [in_channels] + [hidden_channels] * (num_layers - 1) + [out_channels]
    layers = [init_conv_params(keys[8 + i], dims[i], dims[i + 1],
                               num_edge_types, num_node_types)
              for i in range(num_layers)]

    fwd = jax.jit(functools.partial(
        rgcn_forward,
        num_edge_types=num_edge_types, num_node_types=num_node_types,
        in_channels=in_channels))

    out = fwd(layers, x_dict, emb_dict, edge_index, edge_type,
              node_type, local_node_idx)
    out = jax.block_until_ready(out)
    assert out.shape == (N, out_channels) and out.dtype == jnp.float32
    assert bool(jnp.all(jnp.isfinite(out)))

    # sanity check against a pure-JAX f32 reference (loose tol: bf16 matmuls
    # and bf16 intermediate activations)
    ref = rgcn_reference(layers, x_dict, emb_dict, edge_index, edge_type,
                         node_type, local_node_idx,
                         num_edge_types=num_edge_types,
                         num_node_types=num_node_types,
                         in_channels=in_channels)
    np.testing.assert_allclose(np.asarray(out), np.asarray(ref),
                               rtol=1e-1, atol=1e-1)
    print("KERNEL_OK")
</pallas_src>

<mosaic_0001>
module attributes {stable_mosaic.version = 11 : i64} {
  func.func private @main(%arg0: i32) attributes {dimension_semantics = [#tpu.dimension_semantics<core_parallel>], iteration_bounds = array<i64: 2>, tpu.core_type = #tpu.core_type<sc_scalar_subcore>, window_params = []} {
    return
  }
}

module attributes {stable_mosaic.version = 11 : i64} {
  func.func private @main(%arg0: i32) attributes {dimension_semantics = [#tpu.dimension_semantics<core_parallel>], iteration_bounds = array<i64: 2>, tpu.core_type = #tpu.core_type<sc_scalar_subcore>, window_params = []} {
    return
  }
}

module attributes {stable_mosaic.version = 11 : i64} {
  func.func @_rgcn_fused_kernel(%arg0: i32, %arg1: memref<256x1xi32, #tpu.memory_space<vmem>>, %arg2: memref<256x128xbf16, #tpu.memory_space<vmem>>, %arg3: memref<256x32xbf16, #tpu.memory_space<vmem>>, %arg4: memref<128x32xbf16, #tpu.memory_space<vmem>>, %arg5: memref<96x32xbf16, #tpu.memory_space<vmem>>, %arg6: memref<3x32xf32, #tpu.memory_space<vmem>>, %arg7: memref<256x32xbf16, #tpu.memory_space<vmem>>) attributes {dimension_semantics = [#tpu.dimension_semantics<parallel>], iteration_bounds = array<i64: 2>, scalar_prefetch = 0 : i64, scratch_operands = 0 : i64, tpu.core_type = #tpu.core_type<tc>, window_params = [{transform_indices = @transform_0, window_bounds = array<i64: 256, 1>}, {transform_indices = @transform_1, window_bounds = array<i64: 256, 128>}, {transform_indices = @transform_2, window_bounds = array<i64: 256, 32>}, {pipeline_mode = #tpu.pipeline_mode<synchronous>, transform_indices = @transform_3, window_bounds = array<i64: 128, 32>}, {pipeline_mode = #tpu.pipeline_mode<synchronous>, transform_indices = @transform_4, window_bounds = array<i64: 96, 32>}, {pipeline_mode = #tpu.pipeline_mode<synchronous>, transform_indices = @transform_5, window_bounds = array<i64: 3, 32>}, {transform_indices = @transform_6, window_bounds = array<i64: 256, 32>}]} {
    %c0 = arith.constant 0 : index
    %c0_0 = arith.constant 0 : index
    %0 = vector.load %arg2[%c0, %c0_0] : memref<256x128xbf16, #tpu.memory_space<vmem>>, vector<256x128xbf16>
    %c0_1 = arith.constant 0 : index
    %c0_2 = arith.constant 0 : index
    %1 = vector.load %arg4[%c0_1, %c0_2] : memref<128x32xbf16, #tpu.memory_space<vmem>>, vector<128x32xbf16>
    %cst = arith.constant dense<0.000000e+00> : vector<256x32xf32>
    %2 = tpu.matmul %0, %1, %cst {dimension_numbers = #tpu.dot_dimension_numbers<[1], [0], [0], [1], [0, 0, 1, 1], [], []>} : vector<256x128xbf16>, vector<128x32xbf16>, vector<256x32xf32> -> vector<256x32xf32>
    %c0_3 = arith.constant 0 : index
    %c0_4 = arith.constant 0 : index
    %3 = vector.load %arg3[%c0_3, %c0_4] : memref<256x32xbf16, #tpu.memory_space<vmem>>, vector<256x32xbf16>
    %c0_5 = arith.constant 0 : index
    %c0_6 = arith.constant 0 : index
    %4 = vector.load %arg1[%c0_5, %c0_6] : memref<256x1xi32, #tpu.memory_space<vmem>>, vector<256x1xi32>
    %c0_7 = arith.constant 0 : index
    %c0_8 = arith.constant 0 : index
    %5 = vector.load %arg6[%c0_7, %c0_8] : memref<3x32xf32, #tpu.memory_space<vmem>>, vector<3x32xf32>
    %c0_i32 = arith.constant 0 : i32
    %6 = vector.broadcast %c0_i32 : i32 to vector<256x1xi32>
    %7 = arith.cmpi eq, %4, %6 : vector<256x1xi32>
    %8 = arith.extui %7 : vector<256x1xi1> to vector<256x1xi32>
    %9 = arith.sitofp %8 : vector<256x1xi32> to vector<256x1xf32>
    %10 = arith.truncf %9 : vector<256x1xf32> to vector<256x1xbf16>
    %11 = vector.broadcast %10 : vector<256x1xbf16> to vector<256x32xbf16>
    %12 = arith.mulf %3, %11 : vector<256x32xbf16>
    %c0_9 = arith.constant 0 : index
    %c0_10 = arith.constant 0 : index
    %13 = vector.load %arg5[%c0_9, %c0_10] : memref<96x32xbf16, #tpu.memory_space<vmem>>, vector<32x32xbf16>
    %cst_11 = arith.constant dense<0.000000e+00> : vector<256x32xf32>
    %14 = tpu.matmul %12, %13, %cst_11 {dimension_numbers = #tpu.dot_dimension_numbers<[1], [0], [0], [1], [0, 0, 1, 1], [], []>} : vector<256x32xbf16>, vector<32x32xbf16>, vector<256x32xf32> -> vector<256x32xf32>
    %15 = arith.addf %2, %14 : vector<256x32xf32>
    %16 = arith.extui %7 : vector<256x1xi1> to vector<256x1xi32>
    %17 = arith.sitofp %16 : vector<256x1xi32> to vector<256x1xf32>
    %18 = vector.extract_strided_slice %5 {offsets = [0, 0], sizes = [1, 32], strides = [1, 1]} : vector<3x32xf32> to vector<1x32xf32>
    %19 = vector.broadcast %17 : vector<256x1xf32> to vector<256x32xf32>
    %20 = vector.broadcast %18 : vector<1x32xf32> to vector<256x32xf32>
    %21 = arith.mulf %19, %20 : vector<256x32xf32>
    %22 = arith.addf %15, %21 : vector<256x32xf32>
    %c1_i32 = arith.constant 1 : i32
    %23 = vector.broadcast %c1_i32 : i32 to vector<256x1xi32>
    %24 = arith.cmpi eq, %4, %23 : vector<256x1xi32>
    %25 = arith.extui %24 : vector<256x1xi1> to vector<256x1xi32>
    %26 = arith.sitofp %25 : vector<256x1xi32> to vector<256x1xf32>
    %27 = arith.truncf %26 : vector<256x1xf32> to vector<256x1xbf16>
    %28 = vector.broadcast %27 : vector<256x1xbf16> to vector<256x32xbf16>
    %29 = arith.mulf %3, %28 : vector<256x32xbf16>
    %c32 = arith.constant 32 : index
    %c0_12 = arith.constant 0 : index
    %30 = vector.load %arg5[%c32, %c0_12] : memref<96x32xbf16, #tpu.memory_space<vmem>>, vector<32x32xbf16>
    %cst_13 = arith.constant dense<0.000000e+00> : vector<256x32xf32>
    %31 = tpu.matmul %29, %30, %cst_13 {dimension_numbers = #tpu.dot_dimension_numbers<[1], [0], [0], [1], [0, 0, 1, 1], [], []>} : vector<256x32xbf16>, vector<32x32xbf16>, vector<256x32xf32> -> vector<256x32xf32>
    %32 = arith.addf %22, %31 : vector<256x32xf32>
    %33 = arith.extui %24 : vector<256x1xi1> to vector<256x1xi32>
    %34 = arith.sitofp %33 : vector<256x1xi32> to vector<256x1xf32>
    %35 = vector.extract_strided_slice %5 {offsets = [1, 0], sizes = [1, 32], strides = [1, 1]} : vector<3x32xf32> to vector<1x32xf32>
    %36 = vector.broadcast %34 : vector<256x1xf32> to vector<256x32xf32>
    %37 = vector.broadcast %35 : vector<1x32xf32> to vector<256x32xf32>
    %38 = arith.mulf %36, %37 : vector<256x32xf32>
    %39 = arith.addf %32, %38 : vector<256x32xf32>
    %c2_i32 = arith.constant 2 : i32
    %40 = vector.broadcast %c2_i32 : i32 to vector<256x1xi32>
    %41 = arith.cmpi eq, %4, %40 : vector<256x1xi32>
    %42 = arith.extui %41 : vector<256x1xi1> to vector<256x1xi32>
    %43 = arith.sitofp %42 : vector<256x1xi32> to vector<256x1xf32>
    %44 = arith.truncf %43 : vector<256x1xf32> to vector<256x1xbf16>
    %45 = vector.broadcast %44 : vector<256x1xbf16> to vector<256x32xbf16>
    %46 = arith.mulf %3, %45 : vector<256x32xbf16>
    %c64 = arith.constant 64 : index
    %c0_14 = arith.constant 0 : index
    %47 = vector.load %arg5[%c64, %c0_14] : memref<96x32xbf16, #tpu.memory_space<vmem>>, vector<32x32xbf16>
    %cst_15 = arith.constant dense<0.000000e+00> : vector<256x32xf32>
    %48 = tpu.matmul %46, %47, %cst_15 {dimension_numbers = #tpu.dot_dimension_numbers<[1], [0], [0], [1], [0, 0, 1, 1], [], []>} : vector<256x32xbf16>, vector<32x32xbf16>, vector<256x32xf32> -> vector<256x32xf32>
    %49 = arith.addf %39, %48 : vector<256x32xf32>
    %50 = arith.extui %41 : vector<256x1xi1> to vector<256x1xi32>
    %51 = arith.sitofp %50 : vector<256x1xi32> to vector<256x1xf32>
    %52 = vector.extract_strided_slice %5 {offsets = [2, 0], sizes = [1, 32], strides = [1, 1]} : vector<3x32xf32> to vector<1x32xf32>
    %53 = vector.broadcast %51 : vector<256x1xf32> to vector<256x32xf32>
    %54 = vector.broadcast %52 : vector<1x32xf32> to vector<256x32xf32>
    %55 = arith.mulf %53, %54 : vector<256x32xf32>
    %56 = arith.addf %49, %55 : vector<256x32xf32>
    %cst_16 = arith.constant 0.000000e+00 : f32
    %57 = vector.broadcast %cst_16 : f32 to vector<256x32xf32>
    %58 = arith.maximumf %56, %57 : vector<256x32xf32>
    %59 = arith.truncf %58 : vector<256x32xf32> to vector<256x32xbf16>
    %c0_17 = arith.constant 0 : index
    %c0_18 = arith.constant 0 : index
    %60 = vector.load %arg7[%c0_17, %c0_18] : memref<256x32xbf16, #tpu.memory_space<vmem>>, vector<256x32xbf16>
    tpu.vector_store %arg7[%c0_17, %c0_18], %59 {strides = array<i32>} : memref<256x32xbf16, #tpu.memory_space<vmem>>, vector<256x32xbf16>,
    return
  }
  func.func @transform_0(%arg0: i32) -> (i32, i32) {
    %c0_i32 = arith.constant 0 : i32
    %c0_i32_0 = arith.constant 0 : i32
    return %arg0, %c0_i32 : i32, i32
  }
  func.func @transform_1(%arg0: i32) -> (i32, i32) {
    %c0_i32 = arith.constant 0 : i32
    %c0_i32_0 = arith.constant 0 : i32
    return %arg0, %c0_i32 : i32, i32
  }
  func.func @transform_2(%arg0: i32) -> (i32, i32) {
    %c0_i32 = arith.constant 0 : i32
    %c0_i32_0 = arith.constant 0 : i32
    return %arg0, %c0_i32 : i32, i32
  }
  func.func @transform_3(%arg0: i32) -> (i32, i32) {
    %c0_i32 = arith.constant 0 : i32
    %c0_i32_0 = arith.constant 0 : i32
    %c0_i32_1 = arith.constant 0 : i32
    return %c0_i32, %c0_i32_0 : i32, i32
  }
  func.func @transform_4(%arg0: i32) -> (i32, i32) {
    %c0_i32 = arith.constant 0 : i32
    %c0_i32_0 = arith.constant 0 : i32
    %c0_i32_1 = arith.constant 0 : i32
    return %c0_i32, %c0_i32_0 : i32, i32
  }
  func.func @transform_5(%arg0: i32) -> (i32, i32) {
    %c0_i32 = arith.constant 0 : i32
    %c0_i32_0 = arith.constant 0 : i32
    %c0_i32_1 = arith.constant 0 : i32
    return %c0_i32, %c0_i32_0 : i32, i32
  }
  func.func @transform_6(%arg0: i32) -> (i32, i32) {
    %c0_i32 = arith.constant 0 : i32
    %c0_i32_0 = arith.constant 0 : i32
    return %arg0, %c0_i32 : i32, i32
  }
}

module attributes {stable_mosaic.version = 11 : i64} {
  func.func @_rgcn_fused_kernel(%arg0: i32, %arg1: memref<256x1xi32, #tpu.memory_space<vmem>>, %arg2: memref<256x128xbf16, #tpu.memory_space<vmem>>, %arg3: memref<256x32xbf16, #tpu.memory_space<vmem>>, %arg4: memref<128x16xbf16, #tpu.memory_space<vmem>>, %arg5: memref<96x16xbf16, #tpu.memory_space<vmem>>, %arg6: memref<3x16xf32, #tpu.memory_space<vmem>>, %arg7: memref<256x16xf32, #tpu.memory_space<vmem>>) attributes {dimension_semantics = [#tpu.dimension_semantics<parallel>], iteration_bounds = array<i64: 2>, scalar_prefetch = 0 : i64, scratch_operands = 0 : i64, tpu.core_type = #tpu.core_type<tc>, window_params = [{transform_indices = @transform_0, window_bounds = array<i64: 256, 1>}, {transform_indices = @transform_1, window_bounds = array<i64: 256, 128>}, {transform_indices = @transform_2, window_bounds = array<i64: 256, 32>}, {pipeline_mode = #tpu.pipeline_mode<synchronous>, transform_indices = @transform_3, window_bounds = array<i64: 128, 16>}, {pipeline_mode = #tpu.pipeline_mode<synchronous>, transform_indices = @transform_4, window_bounds = array<i64: 96, 16>}, {pipeline_mode = #tpu.pipeline_mode<synchronous>, transform_indices = @transform_5, window_bounds = array<i64: 3, 16>}, {transform_indices = @transform_6, window_bounds = array<i64: 256, 16>}]} {
    %c0 = arith.constant 0 : index
    %c0_0 = arith.constant 0 : index
    %0 = vector.load %arg2[%c0, %c0_0] : memref<256x128xbf16, #tpu.memory_space<vmem>>, vector<256x128xbf16>
    %c0_1 = arith.constant 0 : index
    %c0_2 = arith.constant 0 : index
    %1 = vector.load %arg4[%c0_1, %c0_2] : memref<128x16xbf16, #tpu.memory_space<vmem>>, vector<128x16xbf16>
    %cst = arith.constant dense<0.000000e+00> : vector<256x16xf32>
    %2 = tpu.matmul %0, %1, %cst {dimension_numbers = #tpu.dot_dimension_numbers<[1], [0], [0], [1], [0, 0, 1, 1], [], []>} : vector<256x128xbf16>, vector<128x16xbf16>, vector<256x16xf32> -> vector<256x16xf32>
    %c0_3 = arith.constant 0 : index
    %c0_4 = arith.constant 0 : index
    %3 = vector.load %arg3[%c0_3, %c0_4] : memref<256x32xbf16, #tpu.memory_space<vmem>>, vector<256x32xbf16>
    %c0_5 = arith.constant 0 : index
    %c0_6 = arith.constant 0 : index
    %4 = vector.load %arg1[%c0_5, %c0_6] : memref<256x1xi32, #tpu.memory_space<vmem>>, vector<256x1xi32>
    %c0_7 = arith.constant 0 : index
    %c0_8 = arith.constant 0 : index
    %5 = vector.load %arg6[%c0_7, %c0_8] : memref<3x16xf32, #tpu.memory_space<vmem>>, vector<3x16xf32>
    %c0_i32 = arith.constant 0 : i32
    %6 = vector.broadcast %c0_i32 : i32 to vector<256x1xi32>
    %7 = arith.cmpi eq, %4, %6 : vector<256x1xi32>
    %8 = arith.extui %7 : vector<256x1xi1> to vector<256x1xi32>
    %9 = arith.sitofp %8 : vector<256x1xi32> to vector<256x1xf32>
    %10 = arith.truncf %9 : vector<256x1xf32> to vector<256x1xbf16>
    %11 = vector.broadcast %10 : vector<256x1xbf16> to vector<256x32xbf16>
    %12 = arith.mulf %3, %11 : vector<256x32xbf16>
    %c0_9 = arith.constant 0 : index
    %c0_10 = arith.constant 0 : index
    %13 = vector.load %arg5[%c0_9, %c0_10] : memref<96x16xbf16, #tpu.memory_space<vmem>>, vector<32x16xbf16>
    %cst_11 = arith.constant dense<0.000000e+00> : vector<256x16xf32>
    %14 = tpu.matmul %12, %13, %cst_11 {dimension_numbers = #tpu.dot_dimension_numbers<[1], [0], [0], [1], [0, 0, 1, 1], [], []>} : vector<256x32xbf16>, vector<32x16xbf16>, vector<256x16xf32> -> vector<256x16xf32>
    %15 = arith.addf %2, %14 : vector<256x16xf32>
    %16 = arith.extui %7 : vector<256x1xi1> to vector<256x1xi32>
    %17 = arith.sitofp %16 : vector<256x1xi32> to vector<256x1xf32>
    %18 = vector.extract_strided_slice %5 {offsets = [0, 0], sizes = [1, 16], strides = [1, 1]} : vector<3x16xf32> to vector<1x16xf32>
    %19 = vector.broadcast %17 : vector<256x1xf32> to vector<256x16xf32>
    %20 = vector.broadcast %18 : vector<1x16xf32> to vector<256x16xf32>
    %21 = arith.mulf %19, %20 : vector<256x16xf32>
    %22 = arith.addf %15, %21 : vector<256x16xf32>
    %c1_i32 = arith.constant 1 : i32
    %23 = vector.broadcast %c1_i32 : i32 to vector<256x1xi32>
    %24 = arith.cmpi eq, %4, %23 : vector<256x1xi32>
    %25 = arith.extui %24 : vector<256x1xi1> to vector<256x1xi32>
    %26 = arith.sitofp %25 : vector<256x1xi32> to vector<256x1xf32>
    %27 = arith.truncf %26 : vector<256x1xf32> to vector<256x1xbf16>
    %28 = vector.broadcast %27 : vector<256x1xbf16> to vector<256x32xbf16>
    %29 = arith.mulf %3, %28 : vector<256x32xbf16>
    %c32 = arith.constant 32 : index
    %c0_12 = arith.constant 0 : index
    %30 = vector.load %arg5[%c32, %c0_12] : memref<96x16xbf16, #tpu.memory_space<vmem>>, vector<32x16xbf16>
    %cst_13 = arith.constant dense<0.000000e+00> : vector<256x16xf32>
    %31 = tpu.matmul %29, %30, %cst_13 {dimension_numbers = #tpu.dot_dimension_numbers<[1], [0], [0], [1], [0, 0, 1, 1], [], []>} : vector<256x32xbf16>, vector<32x16xbf16>, vector<256x16xf32> -> vector<256x16xf32>
    %32 = arith.addf %22, %31 : vector<256x16xf32>
    %33 = arith.extui %24 : vector<256x1xi1> to vector<256x1xi32>
    %34 = arith.sitofp %33 : vector<256x1xi32> to vector<256x1xf32>
    %35 = vector.extract_strided_slice %5 {offsets = [1, 0], sizes = [1, 16], strides = [1, 1]} : vector<3x16xf32> to vector<1x16xf32>
    %36 = vector.broadcast %34 : vector<256x1xf32> to vector<256x16xf32>
    %37 = vector.broadcast %35 : vector<1x16xf32> to vector<256x16xf32>
    %38 = arith.mulf %36, %37 : vector<256x16xf32>
    %39 = arith.addf %32, %38 : vector<256x16xf32>
    %c2_i32 = arith.constant 2 : i32
    %40 = vector.broadcast %c2_i32 : i32 to vector<256x1xi32>
    %41 = arith.cmpi eq, %4, %40 : vector<256x1xi32>
    %42 = arith.extui %41 : vector<256x1xi1> to vector<256x1xi32>
    %43 = arith.sitofp %42 : vector<256x1xi32> to vector<256x1xf32>
    %44 = arith.truncf %43 : vector<256x1xf32> to vector<256x1xbf16>
    %45 = vector.broadcast %44 : vector<256x1xbf16> to vector<256x32xbf16>
    %46 = arith.mulf %3, %45 : vector<256x32xbf16>
    %c64 = arith.constant 64 : index
    %c0_14 = arith.constant 0 : index
    %47 = vector.load %arg5[%c64, %c0_14] : memref<96x16xbf16, #tpu.memory_space<vmem>>, vector<32x16xbf16>
    %cst_15 = arith.constant dense<0.000000e+00> : vector<256x16xf32>
    %48 = tpu.matmul %46, %47, %cst_15 {dimension_numbers = #tpu.dot_dimension_numbers<[1], [0], [0], [1], [0, 0, 1, 1], [], []>} : vector<256x32xbf16>, vector<32x16xbf16>, vector<256x16xf32> -> vector<256x16xf32>
    %49 = arith.addf %39, %48 : vector<256x16xf32>
    %50 = arith.extui %41 : vector<256x1xi1> to vector<256x1xi32>
    %51 = arith.sitofp %50 : vector<256x1xi32> to vector<256x1xf32>
    %52 = vector.extract_strided_slice %5 {offsets = [2, 0], sizes = [1, 16], strides = [1, 1]} : vector<3x16xf32> to vector<1x16xf32>
    %53 = vector.broadcast %51 : vector<256x1xf32> to vector<256x16xf32>
    %54 = vector.broadcast %52 : vector<1x16xf32> to vector<256x16xf32>
    %55 = arith.mulf %53, %54 : vector<256x16xf32>
    %56 = arith.addf %49, %55 : vector<256x16xf32>
    %c0_16 = arith.constant 0 : index
    %c0_17 = arith.constant 0 : index
    %57 = vector.load %arg7[%c0_16, %c0_17] : memref<256x16xf32, #tpu.memory_space<vmem>>, vector<256x16xf32>
    tpu.vector_store %arg7[%c0_16, %c0_17], %56 {strides = array<i32>} : memref<256x16xf32, #tpu.memory_space<vmem>>, vector<256x16xf32>,
    return
  }
  func.func @transform_0(%arg0: i32) -> (i32, i32) {
    %c0_i32 = arith.constant 0 : i32
    %c0_i32_0 = arith.constant 0 : i32
    return %arg0, %c0_i32 : i32, i32
  }
  func.func @transform_1(%arg0: i32) -> (i32, i32) {
    %c0_i32 = arith.constant 0 : i32
    %c0_i32_0 = arith.constant 0 : i32
    return %arg0, %c0_i32 : i32, i32
  }
  func.func @transform_2(%arg0: i32) -> (i32, i32) {
    %c0_i32 = arith.constant 0 : i32
    %c0_i32_0 = arith.constant 0 : i32
    return %arg0, %c0_i32 : i32, i32
  }
  func.func @transform_3(%arg0: i32) -> (i32, i32) {
    %c0_i32 = arith.constant 0 : i32
    %c0_i32_0 = arith.constant 0 : i32
    %c0_i32_1 = arith.constant 0 : i32
    return %c0_i32, %c0_i32_0 : i32, i32
  }
  func.func @transform_4(%arg0: i32) -> (i32, i32) {
    %c0_i32 = arith.constant 0 : i32
    %c0_i32_0 = arith.constant 0 : i32
    %c0_i32_1 = arith.constant 0 : i32
    return %c0_i32, %c0_i32_0 : i32, i32
  }
  func.func @transform_5(%arg0: i32) -> (i32, i32) {
    %c0_i32 = arith.constant 0 : i32
    %c0_i32_0 = arith.constant 0 : i32
    %c0_i32_1 = arith.constant 0 : i32
    return %c0_i32, %c0_i32_0 : i32, i32
  }
  func.func @transform_6(%arg0: i32) -> (i32, i32) {
    %c0_i32 = arith.constant 0 : i32
    %c0_i32_0 = arith.constant 0 : i32
    return %arg0, %c0_i32 : i32, i32
  }
}

</mosaic_0001>

<llo_original>
// kernel: rgcn_forward.3
$region0: #{rgcn_forward.3}
  #allocation0 [shape = 'u32[]', space=smem, size = 0x4, offset = 0x4, fixed_abs, tag = 'smem constant byte address 0x4 - core index']
  #allocation1 [shape = 'u32[144,128]{1,0:T(1,128)}', space=vmem, size = 0x12000, scoped, tag = 'internal scratch']
  %s0 = inlined_call_operand.vmem [shape: s32[512,1], index: 0, kind: input, shape index: {}]
  %s1 = inlined_call_operand.vmem [shape: bf16[512,128], index: 1, kind: input, shape index: {}]
  %s2 = inlined_call_operand.vmem [shape: bf16[512,32], index: 2, kind: input, shape index: {}]
  %s3 = inlined_call_operand.vmem [shape: bf16[128,32], index: 3, kind: input, shape index: {}]
  %s4 = inlined_call_operand.vmem [shape: bf16[96,32], index: 4, kind: input, shape index: {}]
  %s5 = inlined_call_operand.vmem [shape: f32[3,32], index: 5, kind: input, shape index: {}]
  %s6 = inlined_call_operand.vmem [shape: bf16[512,32], index: 6, kind: output, shape index: {}]
  %s7 = sld [smem:[#allocation0]]
  $region57: #{rgcn_forward.3} parent=0
    _
  %s9 = ssub.s32 1, %s7
  %s10 = scalar_select 0, %s9, %s7
  loop: start=0, step=1, limit=4
  $region2: #{rgcn_forward.3} parent=0 // loop_pre_header
    _
  $region3: #{rgcn_forward.3} parent=0 // loop_header
    %s12 = sphi 0, %s16
    %p13 = scmp.ge.s32.totalorder %s12, 4
    %s22 = sphi 0, %s24
    %s25 = sphi 0, %s22
    %s26 = sphi 0, %s25
    %s42 = sphi 0, %s26
    %s48 = sphi 0, %s50
    %s51 = sphi 0, %s48
    %s52 = sphi 0, %s51
    %s68 = sphi 0, %s52
    %s74 = sphi 0, %s76
    %s77 = sphi 0, %s74
    %s78 = sphi 0, %s77
    %s94 = sphi 0, %s78
    %s98 = sphi 0, %s98
    %s100 = sphi 0, %s98
    %s101 = sphi 0, %s100
    %s115 = sphi 0, %s101
    %s119 = sphi 0, %s119
    %s121 = sphi 0, %s119
    %s122 = sphi 0, %s121
    %s136 = sphi 0, %s122
    %s140 = sphi 0, %s140
    %s142 = sphi 0, %s140
    %s143 = sphi 0, %s142
    %s157 = sphi 0, %s143
    %s163 = sphi 0, %s165
    %s166 = sphi 0, %s163
    %s167 = sphi 0, %s166
    %s183 = sphi 0, %s167
  $region4: #{rgcn_forward.3} parent=0 // loop_header_branch
    %15 = sbr.rel (%p13) target = $region8
  $region5: #{rgcn_forward.3} parent=0 // loop_body
    %s17 = ssub.s32 %s12, 1
    %s18 = ssub.s32 %s12, 2
    %s19 = sadd.s32 %s12, 1
    %s20 = ssub.s32 %s12, %s19
    %p21 = scmp.eq.s32.totalorder %s20, 0
    %s23 = sadd.s32 %s22, 1
    %s24 = scalar_select %p21, %s22, %s23
    %p27 = pneg %p21
    %p28 = scmp.eq.s32.totalorder %s12, 1
    %p29 = por %p27, %p28
    %p30 = scmp.ne.s32.totalorder %s22, %s25
    %p31 = scmp.eq.s32.totalorder %s12, 0
    %p32 = por %p30, %p31
    %p33 = scmp.ne.s32.totalorder %s22, %s25
    %p34 = scmp.eq.s32.totalorder %s17, 1
    %p35 = por %p33, %p34
    %p36 = scmp.ne.s32.totalorder %s25, %s26
    %p37 = scmp.eq.s32.totalorder %s17, 0
    %p38 = por %p36, %p37
    %p39 = scmp.ne.s32.totalorder %s25, %s26
    %p40 = scmp.eq.s32.totalorder %s18, 1
    %p41 = por %p39, %p40
    %p43 = scmp.ne.s32.totalorder %s26, %s42
    %p44 = scmp.eq.s32.totalorder %s18, 0
    %p45 = por %p43, %p44
    %s46 = ssub.s32 %s12, %s19
    %p47 = scmp.eq.s32.totalorder %s46, 0
    %s49 = sadd.s32 %s48, 1
    %s50 = scalar_select %p47, %s48, %s49
    %p53 = pneg %p47
    %p54 = scmp.eq.s32.totalorder %s12, 1
    %p55 = por %p53, %p54
    %p56 = scmp.ne.s32.totalorder %s48, %s51
    %p57 = scmp.eq.s32.totalorder %s12, 0
    %p58 = por %p56, %p57
    %p59 = scmp.ne.s32.totalorder %s48, %s51
    %p60 = scmp.eq.s32.totalorder %s17, 1
    %p61 = por %p59, %p60
    %p62 = scmp.ne.s32.totalorder %s51, %s52
    %p63 = scmp.eq.s32.totalorder %s17, 0
    %p64 = por %p62, %p63
    %p65 = scmp.ne.s32.totalorder %s51, %s52
    %p66 = scmp.eq.s32.totalorder %s18, 1
    %p67 = por %p65, %p66
    %p69 = scmp.ne.s32.totalorder %s52, %s68
    %p70 = scmp.eq.s32.totalorder %s18, 0
    %p71 = por %p69, %p70
    %s72 = ssub.s32 %s12, %s19
    %p73 = scmp.eq.s32.totalorder %s72, 0
    %s75 = sadd.s32 %s74, 1
    %s76 = scalar_select %p73, %s74, %s75
    %p79 = pneg %p73
    %p80 = scmp.eq.s32.totalorder %s12, 1
    %p81 = por %p79, %p80
    %p82 = scmp.ne.s32.totalorder %s74, %s77
    %p83 = scmp.eq.s32.totalorder %s12, 0
    %p84 = por %p82, %p83
    %p85 = scmp.ne.s32.totalorder %s74, %s77
    %p86 = scmp.eq.s32.totalorder %s17, 1
    %p87 = por %p85, %p86
    %p88 = scmp.ne.s32.totalorder %s77, %s78
    %p89 = scmp.eq.s32.totalorder %s17, 0
    %p90 = por %p88, %p89
    %p91 = scmp.ne.s32.totalorder %s77, %s78
    %p92 = scmp.eq.s32.totalorder %s18, 1
    %p93 = por %p91, %p92
    %p95 = scmp.ne.s32.totalorder %s78, %s94
    %p96 = scmp.eq.s32.totalorder %s18, 0
    %p97 = por %p95, %p96
    %s99 = sadd.s32 %s98, 1
    %p102 = scmp.eq.s32.totalorder %s12, 1
    %p103 = scmp.ne.s32.totalorder %s98, %s100
    %p104 = scmp.eq.s32.totalorder %s12, 0
    %p105 = por %p103, %p104
    %p106 = scmp.ne.s32.totalorder %s98, %s100
    %p107 = scmp.eq.s32.totalorder %s17, 1
    %p108 = por %p106, %p107
    %p109 = scmp.ne.s32.totalorder %s100, %s101
    %p110 = scmp.eq.s32.totalorder %s17, 0
    %p111 = por %p109, %p110
    %p112 = scmp.ne.s32.totalorder %s100, %s101
    %p113 = scmp.eq.s32.totalorder %s18, 1
    %p114 = por %p112, %p113
    %p116 = scmp.ne.s32.totalorder %s101, %s115
    %p117 = scmp.eq.s32.totalorder %s18, 0
    %p118 = por %p116, %p117
    %s120 = sadd.s32 %s119, 1
    %p123 = scmp.eq.s32.totalorder %s12, 1
    %p124 = scmp.ne.s32.totalorder %s119, %s121
    %p125 = scmp.eq.s32.totalorder %s12, 0
    %p126 = por %p124, %p125
    %p127 = scmp.ne.s32.totalorder %s119, %s121
    %p128 = scmp.eq.s32.totalorder %s17, 1
    %p129 = por %p127, %p128
    %p130 = scmp.ne.s32.totalorder %s121, %s122
    %p131 = scmp.eq.s32.totalorder %s17, 0
    %p132 = por %p130, %p131
    %p133 = scmp.ne.s32.totalorder %s121, %s122
    %p134 = scmp.eq.s32.totalorder %s18, 1
    %p135 = por %p133, %p134
    %p137 = scmp.ne.s32.totalorder %s122, %s136
    %p138 = scmp.eq.s32.totalorder %s18, 0
    %p139 = por %p137, %p138
    %s141 = sadd.s32 %s140, 1
    %p144 = scmp.eq.s32.totalorder %s12, 1
    %p145 = scmp.ne.s32.totalorder %s140, %s142
    %p146 = scmp.eq.s32.totalorder %s12, 0
    %p147 = por %p145, %p146
    %p148 = scmp.ne.s32.totalorder %s140, %s142
    %p149 = scmp.eq.s32.totalorder %s17, 1
    %p150 = por %p148, %p149
    %p151 = scmp.ne.s32.totalorder %s142, %s143
    %p152 = scmp.eq.s32.totalorder %s17, 0
    %p153 = por %p151, %p152
    %p154 = scmp.ne.s32.totalorder %s142, %s143
    %p155 = scmp.eq.s32.totalorder %s18, 1
    %p156 = por %p154, %p155
    %p158 = scmp.ne.s32.totalorder %s143, %s157
    %p159 = scmp.eq.s32.totalorder %s18, 0
    %p160 = por %p158, %p159
    %s161 = ssub.s32 %s12, %s19
    %p162 = scmp.eq.s32.totalorder %s161, 0
    %s164 = sadd.s32 %s163, 1
    %s165 = scalar_select %p162, %s163, %s164
    %p168 = pneg %p162
    %p169 = scmp.eq.s32.totalorder %s12, 1
    %p170 = por %p168, %p169
    %p171 = scmp.ne.s32.totalorder %s163, %s166
    %p172 = scmp.eq.s32.totalorder %s12, 0
    %p173 = por %p171, %p172
    %p174 = scmp.ne.s32.totalorder %s163, %s166
    %p175 = scmp.eq.s32.totalorder %s17, 1
    %p176 = por %p174, %p175
    %p177 = scmp.ne.s32.totalorder %s166, %s167
    %p178 = scmp.eq.s32.totalorder %s17, 0
    %p179 = por %p177, %p178
    %p180 = scmp.ne.s32.totalorder %s166, %s167
    %p181 = scmp.eq.s32.totalorder %s18, 1
    %p182 = por %p180, %p181
    %p184 = scmp.ne.s32.totalorder %s167, %s183
    %p185 = scmp.eq.s32.totalorder %s18, 0
    %p186 = por %p184, %p185
    %p187 = scmp.le.s32.totalorder 1, %s12
    %p188 = scmp.lt.s32.totalorder %s12, 3
    %p189 = pnand %p187, %p188
    %p190 = pneg %p189
    // Predicated region
    $region9: #{rgcn_forward.3} parent=5 // pred_check
      _
    $region10: #{rgcn_forward.3} parent=5 // pred_check_branch
      %192 = sbr.rel (%p189) target = $region12
    $region11: #{rgcn_forward.3} parent=5 // pred_region
      %s193 = ssub.s32 %s12, 1
      // Predicated region
      $region13: #{rgcn_forward.3} parent=11 // pred_check
        %p194 = pneg %p111
      $region14: #{rgcn_forward.3} parent=11 // pred_check_branch
        %196 = sbr.rel (%p194) target = $region16
      $region15: #{rgcn_forward.3} parent=11 // pred_region
        _
      $region16: #{rgcn_forward.3} parent=11 // pred_fallthru
        _
      // Predicated region
      $region17: #{rgcn_forward.3} parent=11 // pred_check
        %p197 = pneg %p132
      $region18: #{rgcn_forward.3} parent=11 // pred_check_branch
        %199 = sbr.rel (%p197) target = $region20
      $region19: #{rgcn_forward.3} parent=11 // pred_region
        _
      $region20: #{rgcn_forward.3} parent=11 // pred_fallthru
        _
      // Predicated region
      $region21: #{rgcn_forward.3} parent=11 // pred_check
        %p200 = pneg %p153
      $region22: #{rgcn_forward.3} parent=11 // pred_check_branch
        %202 = sbr.rel (%p200) target = $region24
      $region23: #{rgcn_forward.3} parent=11 // pred_region
        _
      $region24: #{rgcn_forward.3} parent=11 // pred_fallthru
        _
    $region12: #{rgcn_forward.3} parent=5 // pred_fallthru
      _
    %p203 = scmp.lt.s32.totalorder %s12, 2
    // Predicated region
    $region25: #{rgcn_forward.3} parent=5 // pred_check
      %p204 = pneg %p203
    $region26: #{rgcn_forward.3} parent=5 // pred_check_branch
      %206 = sbr.rel (%p204) target = $region28
    $region27: #{rgcn_forward.3} parent=5 // pred_region
      // Predicated region
      $region29: #{rgcn_forward.3} parent=27 // pred_check
        %p207 = pneg %p32
      $region30: #{rgcn_forward.3} parent=27 // pred_check_branch
        %209 = sbr.rel (%p207) target = $region32
      $region31: #{rgcn_forward.3} parent=27 // pred_region
        %s210 = smul.u32 32, %s12
        %p211 = scmp.lt.s32.totalorder %s210, 63
        %s212 = scalar_select %p211, %s210, 63
        %s213 = smul.addr %s212, 8
        %s214 = scalar_lea.vmem %s0, %s213
        %s215 = smul.u32 32, %s12
      $region32: #{rgcn_forward.3} parent=27 // pred_fallthru
        _
      // Predicated region
      $region33: #{rgcn_forward.3} parent=27 // pred_check
        %p216 = pneg %p58
      $region34: #{rgcn_forward.3} parent=27 // pred_check_branch
        %218 = sbr.rel (%p216) target = $region36
      $region35: #{rgcn_forward.3} parent=27 // pred_region
        %s219 = smul.u32 32, %s12
        %p220 = scmp.lt.s32.totalorder %s219, 63
        %s221 = scalar_select %p220, %s219, 63
        %s222 = smul.addr %s221, 4
        %s223 = scalar_lea.vmem %s1, %s222
        %s224 = smul.u32 32, %s12
      $region36: #{rgcn_forward.3} parent=27 // pred_fallthru
        _
      // Predicated region
      $region37: #{rgcn_forward.3} parent=27 // pred_check
        %p225 = pneg %p84
      $region38: #{rgcn_forward.3} parent=27 // pred_check_branch
        %227 = sbr.rel (%p225) target = $region40
      $region39: #{rgcn_forward.3} parent=27 // pred_region
        %s228 = smul.u32 32, %s12
        %p229 = scmp.lt.s32.totalorder %s228, 63
        %s230 = scalar_select %p229, %s228, 63
        %s231 = smul.addr %s230, 4
        %s232 = scalar_lea.vmem %s2, %s231
        %s233 = smul.u32 32, %s12
      $region40: #{rgcn_forward.3} parent=27 // pred_fallthru
        _
    $region28: #{rgcn_forward.3} parent=5 // pred_fallthru
      _
    %p234 = scmp.le.s32.totalorder 1, %s12
    %p235 = scmp.lt.s32.totalorder %s12, 3
    %p236 = pnand %p234, %p235
    %p237 = pneg %p236
    // Predicated region
    $region41: #{rgcn_forward.3} parent=5 // pred_check
      _
    $region42: #{rgcn_forward.3} parent=5 // pred_check_branch
      %239 = sbr.rel (%p236) target = $region44
    $region43: #{rgcn_forward.3} parent=5 // pred_region
      %s240 = ssub.s32 %s12, 1
      %s241 = smul.u32 32, %s17
      %p242 = scmp.lt.s32.totalorder %s241, 63
      %s243 = scalar_select %p242, %s241, 63
      %s244 = smul.addr %s243, 8
      %s245 = scalar_lea.vmem %s0, %s244
      %p246 = pneg %p38
      %p247 = pneg %p35
      %s248 = smul.u32 32, %s17
      %p249 = scmp.lt.s32.totalorder %s248, 63
      %s250 = scalar_select %p249, %s248, 63
      %s251 = smul.addr %s250, 4
      %s252 = scalar_lea.vmem %s1, %s251
      %p253 = pneg %p64
      %p254 = pneg %p61
      %s255 = smul.u32 32, %s17
      %p256 = scmp.lt.s32.totalorder %s255, 63
      %s257 = scalar_select %p256, %s255, 63
      %s258 = smul.addr %s257, 4
      %s259 = scalar_lea.vmem %s2, %s258
      %p260 = pneg %p90
      %p261 = pneg %p87
      %p262 = pneg %p111
      %p263 = pneg %p108
      %p264 = pneg %p132
      %p265 = pneg %p129
      %p266 = pneg %p153
      %p267 = pneg %p150
      %p268 = pneg %p179
      %p269 = pneg %p176
      %s270 = smul.u32 32, %s17
      %p271 = scmp.lt.s32.totalorder %s270, 63
      %s272 = scalar_select %p271, %s270, 63
      %s273 = smul.addr %s272, 4
      %s274 = scalar_lea.vmem %s6, %s273
      %s275 = smul.u32 32, %s17
      %p276 = scmp.lt.s32.totalorder %s275, 63
      %s277 = scalar_select %p276, %s275, 63
      %s278 = smul.addr %s277, 8
      %s279 = scalar_lea.vmem %s0, %s278
      %s280 = smul.u32 32, %s17
      %s281 = smul.u32 32, %s17
      %p282 = scmp.lt.s32.totalorder %s281, 63
      %s283 = scalar_select %p282, %s281, 63
      %s284 = smul.addr %s283, 4
      %s285 = scalar_lea.vmem %s1, %s284
      %s286 = smul.u32 32, %s17
      %s287 = smul.u32 32, %s17
      %p288 = scmp.lt.s32.totalorder %s287, 63
      %s289 = scalar_select %p288, %s287, 63
      %s290 = smul.addr %s289, 4
      %s291 = scalar_lea.vmem %s2, %s290
      %s292 = smul.u32 32, %s17
      %s293 = smul.u32 32, %s17
      %p294 = scmp.lt.s32.totalorder %s293, 63
      %s295 = scalar_select %p294, %s293, 63
      %s296 = smul.addr %s295, 4
      %s297 = scalar_lea.vmem %s6, %s296
      %s298 = smul.u32 32, %s17
      %v300 = vld [vmem:[%s285] sm:$0xf]
      %v301 = vld [vmem:[%s285 + $0x4] sm:$0xf]
      %v302 = vld [vmem:[%s285 + $0x8] sm:$0xf]
      %v303 = vld [vmem:[%s285 + $0xc] sm:$0xf]
      %v304 = vld [vmem:[%s285 + $0x10] sm:$0xf]
      %v305 = vld [vmem:[%s285 + $0x14] sm:$0xf]
      %v306 = vld [vmem:[%s285 + $0x18] sm:$0xf]
      %v307 = vld [vmem:[%s285 + $0x1c] sm:$0xf]
      %v308 = vld [vmem:[%s285 + $0x20] sm:$0xf]
      %v309 = vld [vmem:[%s285 + $0x24] sm:$0xf]
      %v310 = vld [vmem:[%s285 + $0x28] sm:$0xf]
      %v311 = vld [vmem:[%s285 + $0x2c] sm:$0xf]
      %v312 = vld [vmem:[%s285 + $0x30] sm:$0xf]
      %v313 = vld [vmem:[%s285 + $0x34] sm:$0xf]
      %v314 = vld [vmem:[%s285 + $0x38] sm:$0xf]
      %v315 = vld [vmem:[%s285 + $0x3c] sm:$0xf]
      %v316 = vld [vmem:[%s285 + $0x40] sm:$0xf]
      %v317 = vld [vmem:[%s285 + $0x44] sm:$0xf]
      %v318 = vld [vmem:[%s285 + $0x48] sm:$0xf]
      %v319 = vld [vmem:[%s285 + $0x4c] sm:$0xf]
      %v320 = vld [vmem:[%s285 + $0x50] sm:$0xf]
      %v321 = vld [vmem:[%s285 + $0x54] sm:$0xf]
      %v322 = vld [vmem:[%s285 + $0x58] sm:$0xf]
      %v323 = vld [vmem:[%s285 + $0x5c] sm:$0xf]
      %v324 = vld [vmem:[%s285 + $0x60] sm:$0xf]
      %v325 = vld [vmem:[%s285 + $0x64] sm:$0xf]
      %v326 = vld [vmem:[%s285 + $0x68] sm:$0xf]
      %v327 = vld [vmem:[%s285 + $0x6c] sm:$0xf]
      %v328 = vld [vmem:[%s285 + $0x70] sm:$0xf]
      %v329 = vld [vmem:[%s285 + $0x74] sm:$0xf]
      %v330 = vld [vmem:[%s285 + $0x78] sm:$0xf]
      %v331 = vld [vmem:[%s285 + $0x7c] sm:$0xf]
      %v332 = vld [vmem:[%s3] sm:$0xf]
      %v333 = vld [vmem:[%s3 + $0x4] sm:$0xf]
      %v334 = vld [vmem:[%s3 + $0x8] sm:$0xf]
      %v335 = vld [vmem:[%s3 + $0xc] sm:$0xf]
      %v336 = vld [vmem:[%s3 + $0x10] sm:$0xf]
      %v337 = vld [vmem:[%s3 + $0x14] sm:$0xf]
      %v338 = vld [vmem:[%s3 + $0x18] sm:$0xf]
      %v339 = vld [vmem:[%s3 + $0x1c] sm:$0xf]
      %v340 = vld [vmem:[%s3 + $0x20] sm:$0xf]
      %v341 = vld [vmem:[%s3 + $0x24] sm:$0xf]
      %v342 = vld [vmem:[%s3 + $0x28] sm:$0xf]
      %v343 = vld [vmem:[%s3 + $0x2c] sm:$0xf]
      %v344 = vld [vmem:[%s3 + $0x30] sm:$0xf]
      %v345 = vld [vmem:[%s3 + $0x34] sm:$0xf]
      %v346 = vld [vmem:[%s3 + $0x38] sm:$0xf]
      %v347 = vld [vmem:[%s3 + $0x3c] sm:$0xf]
      %v348 = vld [vmem:[%s291] sm:$0xf]
      %v349 = vld [vmem:[%s291 + $0x4] sm:$0xf]
      %v350 = vld [vmem:[%s291 + $0x8] sm:$0xf]
      %v351 = vld [vmem:[%s291 + $0xc] sm:$0xf]
      %v352 = vld [vmem:[%s291 + $0x10] sm:$0xf]
      %v353 = vld [vmem:[%s291 + $0x14] sm:$0xf]
      %v354 = vld [vmem:[%s291 + $0x18] sm:$0xf]
      %v355 = vld [vmem:[%s291 + $0x1c] sm:$0xf]
      %v356 = vld [vmem:[%s291 + $0x20] sm:$0xf]
      %v357 = vld [vmem:[%s291 + $0x24] sm:$0xf]
      %v358 = vld [vmem:[%s291 + $0x28] sm:$0xf]
      %v359 = vld [vmem:[%s291 + $0x2c] sm:$0xf]
      %v360 = vld [vmem:[%s291 + $0x30] sm:$0xf]
      %v361 = vld [vmem:[%s291 + $0x34] sm:$0xf]
      %v362 = vld [vmem:[%s291 + $0x38] sm:$0xf]
      %v363 = vld [vmem:[%s291 + $0x3c] sm:$0xf]
      %v364 = vld [vmem:[%s291 + $0x40] sm:$0xf]
      %v365 = vld [vmem:[%s291 + $0x44] sm:$0xf]
      %v366 = vld [vmem:[%s291 + $0x48] sm:$0xf]
      %v367 = vld [vmem:[%s291 + $0x4c] sm:$0xf]
      %v368 = vld [vmem:[%s291 + $0x50] sm:$0xf]
      %v369 = vld [vmem:[%s291 + $0x54] sm:$0xf]
      %v370 = vld [vmem:[%s291 + $0x58] sm:$0xf]
      %v371 = vld [vmem:[%s291 + $0x5c] sm:$0xf]
      %v372 = vld [vmem:[%s291 + $0x60] sm:$0xf]
      %v373 = vld [vmem:[%s291 + $0x64] sm:$0xf]
      %v374 = vld [vmem:[%s291 + $0x68] sm:$0xf]
      %v375 = vld [vmem:[%s291 + $0x6c] sm:$0xf]
      %v376 = vld [vmem:[%s291 + $0x70] sm:$0xf]
      %v377 = vld [vmem:[%s291 + $0x74] sm:$0xf]
      %v378 = vld [vmem:[%s291 + $0x78] sm:$0xf]
      %v379 = vld [vmem:[%s291 + $0x7c] sm:$0xf]
      %v380 = vld [vmem:[%s279] sm:$0xff]
      %v381 = vld [vmem:[%s279 + $0x8] sm:$0xff]
      %v382 = vld [vmem:[%s279 + $0x10] sm:$0xff]
      %v383 = vld [vmem:[%s279 + $0x18] sm:$0xff]
      %v384 = vld [vmem:[%s279 + $0x20] sm:$0xff]
      %v385 = vld [vmem:[%s279 + $0x28] sm:$0xff]
      %v386 = vld [vmem:[%s279 + $0x30] sm:$0xff]
      %v387 = vld [vmem:[%s279 + $0x38] sm:$0xff]
      %v388 = vld [vmem:[%s279 + $0x40] sm:$0xff]
      %v389 = vld [vmem:[%s279 + $0x48] sm:$0xff]
      %v390 = vld [vmem:[%s279 + $0x50] sm:$0xff]
      %v391 = vld [vmem:[%s279 + $0x58] sm:$0xff]
      %v392 = vld [vmem:[%s279 + $0x60] sm:$0xff]
      %v393 = vld [vmem:[%s279 + $0x68] sm:$0xff]
      %v394 = vld [vmem:[%s279 + $0x70] sm:$0xff]
      %v395 = vld [vmem:[%s279 + $0x78] sm:$0xff]
      %v396 = vld [vmem:[%s279 + $0x80] sm:$0xff]
      %v397 = vld [vmem:[%s279 + $0x88] sm:$0xff]
      %v398 = vld [vmem:[%s279 + $0x90] sm:$0xff]
      %v399 = vld [vmem:[%s279 + $0x98] sm:$0xff]
      %v400 = vld [vmem:[%s279 + $0xa0] sm:$0xff]
      %v401 = vld [vmem:[%s279 + $0xa8] sm:$0xff]
      %v402 = vld [vmem:[%s279 + $0xb0] sm:$0xff]
      %v403 = vld [vmem:[%s279 + $0xb8] sm:$0xff]
      %v404 = vld [vmem:[%s279 + $0xc0] sm:$0xff]
      %v405 = vld [vmem:[%s279 + $0xc8] sm:$0xff]
      %v406 = vld [vmem:[%s279 + $0xd0] sm:$0xff]
      %v407 = vld [vmem:[%s279 + $0xd8] sm:$0xff]
      %v408 = vld [vmem:[%s279 + $0xe0] sm:$0xff]
      %v409 = vld [vmem:[%s279 + $0xe8] sm:$0xff]
      %v410 = vld [vmem:[%s279 + $0xf0] sm:$0xff]
      %v411 = vld [vmem:[%s279 + $0xf8] sm:$0xff]
      %v412 = vld [vmem:[%s5] sm:$0x7]
      %vm413 = vcmp.eq.s32.totalorder %v380, 0
      %vm414 = vcmp.eq.s32.totalorder %v381, 0
      %vm415 = vcmp.eq.s32.totalorder %v382, 0
      %vm416 = vcmp.eq.s32.totalorder %v383, 0
      %vm417 = vcmp.eq.s32.totalorder %v384, 0
      %vm418 = vcmp.eq.s32.totalorder %v385, 0
      %vm419 = vcmp.eq.s32.totalorder %v386, 0
      %vm420 = vcmp.eq.s32.totalorder %v387, 0
      %vm421 = vcmp.eq.s32.totalorder %v388, 0
      %vm422 = vcmp.eq.s32.totalorder %v389, 0
      %vm423 = vcmp.eq.s32.totalorder %v390, 0
      %vm424 = vcmp.eq.s32.totalorder %v391, 0
      %vm425 = vcmp.eq.s32.totalorder %v392, 0
      %vm426 = vcmp.eq.s32.totalorder %v393, 0
      %vm427 = vcmp.eq.s32.totalorder %v394, 0
      %vm428 = vcmp.eq.s32.totalorder %v395, 0
      %vm429 = vcmp.eq.s32.totalorder %v396, 0
      %vm430 = vcmp.eq.s32.totalorder %v397, 0
      %vm431 = vcmp.eq.s32.totalorder %v398, 0
      %vm432 = vcmp.eq.s32.totalorder %v399, 0
      %vm433 = vcmp.eq.s32.totalorder %v400, 0
      %vm434 = vcmp.eq.s32.totalorder %v401, 0
      %vm435 = vcmp.eq.s32.totalorder %v402, 0
      %vm436 = vcmp.eq.s32.totalorder %v403, 0
      %vm437 = vcmp.eq.s32.totalorder %v404, 0
      %vm438 = vcmp.eq.s32.totalorder %v405, 0
      %vm439 = vcmp.eq.s32.totalorder %v406, 0
      %vm440 = vcmp.eq.s32.totalorder %v407, 0
      %vm441 = vcmp.eq.s32.totalorder %v408, 0
      %vm442 = vcmp.eq.s32.totalorder %v409, 0
      %vm443 = vcmp.eq.s32.totalorder %v410, 0
      %vm444 = vcmp.eq.s32.totalorder %v411, 0
      %v445 = vsel %vm413, 1, 0
      %v446 = vsel %vm414, 1, 0
      %v447 = vsel %vm415, 1, 0
      %v448 = vsel %vm416, 1, 0
      %v449 = vsel %vm417, 1, 0
      %v450 = vsel %vm418, 1, 0
      %v451 = vsel %vm419, 1, 0
      %v452 = vsel %vm420, 1, 0
      %v453 = vsel %vm421, 1, 0
      %v454 = vsel %vm422, 1, 0
      %v455 = vsel %vm423, 1, 0
      %v456 = vsel %vm424, 1, 0
      %v457 = vsel %vm425, 1, 0
      %v458 = vsel %vm426, 1, 0
      %v459 = vsel %vm427, 1, 0
      %v460 = vsel %vm428, 1, 0
      %v461 = vsel %vm429, 1, 0
      %v462 = vsel %vm430, 1, 0
      %v463 = vsel %vm431, 1, 0
      %v464 = vsel %vm432, 1, 0
      %v465 = vsel %vm433, 1, 0
      %v466 = vsel %vm434, 1, 0
      %v467 = vsel %vm435, 1, 0
      %v468 = vsel %vm436, 1, 0
      %v469 = vsel %vm437, 1, 0
      %v470 = vsel %vm438, 1, 0
      %v471 = vsel %vm439, 1, 0
      %v472 = vsel %vm440, 1, 0
      %v473 = vsel %vm441, 1, 0
      %v474 = vsel %vm442, 1, 0
      %v475 = vsel %vm443, 1, 0
      %v476 = vsel %vm444, 1, 0
      %v477 = vcvt.s32.f32 %v445
      %v478 = vcvt.s32.f32 %v446
      %v479 = vcvt.s32.f32 %v447
      %v480 = vcvt.s32.f32 %v448
      %v481 = vcvt.s32.f32 %v449
      %v482 = vcvt.s32.f32 %v450
      %v483 = vcvt.s32.f32 %v451
      %v484 = vcvt.s32.f32 %v452
      %v485 = vcvt.s32.f32 %v453
      %v486 = vcvt.s32.f32 %v454
      %v487 = vcvt.s32.f32 %v455
      %v488 = vcvt.s32.f32 %v456
      %v489 = vcvt.s32.f32 %v457
      %v490 = vcvt.s32.f32 %v458
      %v491 = vcvt.s32.f32 %v459
      %v492 = vcvt.s32.f32 %v460
      %v493 = vcvt.s32.f32 %v461
      %v494 = vcvt.s32.f32 %v462
      %v495 = vcvt.s32.f32 %v463
      %v496 = vcvt.s32.f32 %v464
      %v497 = vcvt.s32.f32 %v465
      %v498 = vcvt.s32.f32 %v466
      %v499 = vcvt.s32.f32 %v467
      %v500 = vcvt.s32.f32 %v468
      %v501 = vcvt.s32.f32 %v469
      %v502 = vcvt.s32.f32 %v470
      %v503 = vcvt.s32.f32 %v471
      %v504 = vcvt.s32.f32 %v472
      %v505 = vcvt.s32.f32 %v473
      %v506 = vcvt.s32.f32 %v474
      %v507 = vcvt.s32.f32 %v475
      %v508 = vcvt.s32.f32 %v476
      %v509 = vpack.c.bf16 %v478, %v477
      %v510 = vpack.c.bf16 %v480, %v479
      %v511 = vpack.c.bf16 %v482, %v481
      %v512 = vpack.c.bf16 %v484, %v483
      %v513 = vpack.c.bf16 %v486, %v485
      %v514 = vpack.c.bf16 %v488, %v487
      %v515 = vpack.c.bf16 %v490, %v489
      %v516 = vpack.c.bf16 %v492, %v491
      %v517 = vpack.c.bf16 %v494, %v493
      %v518 = vpack.c.bf16 %v496, %v495
      %v519 = vpack.c.bf16 %v498, %v497
      %v520 = vpack.c.bf16 %v500, %v499
      %v521 = vpack.c.bf16 %v502, %v501
      %v522 = vpack.c.bf16 %v504, %v503
      %v523 = vpack.c.bf16 %v506, %v505
      %v524 = vpack.c.bf16 %v508, %v507
      %526 = vset.pattern.permute.xlu0 0
      %527 = vperm.xlu0 %526, %v509
      %v528 = vpop.permute.xlu0 %527
      %530 = vset.pattern.permute.xlu0 0
      %531 = vperm.xlu0 %530, %v510
      %v532 = vpop.permute.xlu0 %531
      %534 = vset.pattern.permute.xlu0 0
      %535 = vperm.xlu0 %534, %v511
      %v536 = vpop.permute.xlu0 %535
      %538 = vset.pattern.permute.xlu0 0
      %539 = vperm.xlu0 %538, %v512
      %v540 = vpop.permute.xlu0 %539
      %542 = vset.pattern.permute.xlu0 0
      %543 = vperm.xlu0 %542, %v513
      %v544 = vpop.permute.xlu0 %543
      %546 = vset.pattern.permute.xlu0 0
      %547 = vperm.xlu0 %546, %v514
      %v548 = vpop.permute.xlu0 %547
      %550 = vset.pattern.permute.xlu0 0
      %551 = vperm.xlu0 %550, %v515
      %v552 = vpop.permute.xlu0 %551
      %554 = vset.pattern.permute.xlu0 0
      %555 = vperm.xlu0 %554, %v516
      %v556 = vpop.permute.xlu0 %555
      %558 = vset.pattern.permute.xlu0 0
      %559 = vperm.xlu0 %558, %v517
      %v560 = vpop.permute.xlu0 %559
      %562 = vset.pattern.permute.xlu0 0
      %563 = vperm.xlu0 %562, %v518
      %v564 = vpop.permute.xlu0 %563
      %566 = vset.pattern.permute.xlu0 0
      %567 = vperm.xlu0 %566, %v519
      %v568 = vpop.permute.xlu0 %567
      %570 = vset.pattern.permute.xlu0 0
      %571 = vperm.xlu0 %570, %v520
      %v572 = vpop.permute.xlu0 %571
      %574 = vset.pattern.permute.xlu0 0
      %575 = vperm.xlu0 %574, %v521
      %v576 = vpop.permute.xlu0 %575
      %578 = vset.pattern.permute.xlu0 0
      %579 = vperm.xlu0 %578, %v522
      %v580 = vpop.permute.xlu0 %579
      %582 = vset.pattern.permute.xlu0 0
      %583 = vperm.xlu0 %582, %v523
      %v584 = vpop.permute.xlu0 %583
      %586 = vset.pattern.permute.xlu0 0
      %587 = vperm.xlu0 %586, %v524
      %v588 = vpop.permute.xlu0 %587
      %v606 = vunpack.c.l.s4 839922192
      %v607 = vunpack.c.0.s8 %v606
      %v608 = vlaneseq
      %v609 = vshrl.u32 %v608, 7
      %v610 = vsub.s32 %v607, %v609
      %v611 = vrot.slane %v528, %v610
      %v613 = vunpack.c.l.s4 1985246804
      %v614 = vunpack.c.0.s8 %v613
      %v615 = vlaneseq
      %v616 = vshrl.u32 %v615, 7
      %v617 = vsub.s32 %v614, %v616
      %v618 = vrot.slane %v528, %v617
      %v620 = vunpack.c.l.s4 839922192
      %v621 = vunpack.c.0.s8 %v620
      %v622 = vlaneseq
      %v623 = vshrl.u32 %v622, 7
      %v624 = vsub.s32 %v621, %v623
      %v625 = vrot.slane %v532, %v624
      %v627 = vunpack.c.l.s4 1985246804
      %v628 = vunpack.c.0.s8 %v627
      %v629 = vlaneseq
      %v630 = vshrl.u32 %v629, 7
      %v631 = vsub.s32 %v628, %v630
      %v632 = vrot.slane %v532, %v631
      %v634 = vunpack.c.l.s4 839922192
      %v635 = vunpack.c.0.s8 %v634
      %v636 = vlaneseq
      %v637 = vshrl.u32 %v636, 7
      %v638 = vsub.s32 %v635, %v637
      %v639 = vrot.slane %v536, %v638
      %v641 = vunpack.c.l.s4 1985246804
      %v642 = vunpack.c.0.s8 %v641
      %v643 = vlaneseq
      %v644 = vshrl.u32 %v643, 7
      %v645 = vsub.s32 %v642, %v644
      %v646 = vrot.slane %v536, %v645
      %v648 = vunpack.c.l.s4 839922192
      %v649 = vunpack.c.0.s8 %v648
      %v650 = vlaneseq
      %v651 = vshrl.u32 %v650, 7
      %v652 = vsub.s32 %v649, %v651
      %v653 = vrot.slane %v540, %v652
      %v655 = vunpack.c.l.s4 1985246804
      %v656 = vunpack.c.0.s8 %v655
      %v657 = vlaneseq
      %v658 = vshrl.u32 %v657, 7
      %v659 = vsub.s32 %v656, %v658
      %v660 = vrot.slane %v540, %v659
      %v662 = vunpack.c.l.s4 839922192
      %v663 = vunpack.c.0.s8 %v662
      %v664 = vlaneseq
      %v665 = vshrl.u32 %v664, 7
      %v666 = vsub.s32 %v663, %v665
      %v667 = vrot.slane %v544, %v666
      %v669 = vunpack.c.l.s4 1985246804
      %v670 = vunpack.c.0.s8 %v669
      %v671 = vlaneseq
      %v672 = vshrl.u32 %v671, 7
      %v673 = vsub.s32 %v670, %v672
      %v674 = vrot.slane %v544, %v673
      %v676 = vunpack.c.l.s4 839922192
      %v677 = vunpack.c.0.s8 %v676
      %v678 = vlaneseq
      %v679 = vshrl.u32 %v678, 7
      %v680 = vsub.s32 %v677, %v679
      %v681 = vrot.slane %v548, %v680
      %v683 = vunpack.c.l.s4 1985246804
      %v684 = vunpack.c.0.s8 %v683
      %v685 = vlaneseq
      %v686 = vshrl.u32 %v685, 7
      %v687 = vsub.s32 %v684, %v686
      %v688 = vrot.slane %v548, %v687
      %v690 = vunpack.c.l.s4 839922192
      %v691 = vunpack.c.0.s8 %v690
      %v692 = vlaneseq
      %v693 = vshrl.u32 %v692, 7
      %v694 = vsub.s32 %v691, %v693
      %v695 = vrot.slane %v552, %v694
      %v697 = vunpack.c.l.s4 1985246804
      %v698 = vunpack.c.0.s8 %v697
      %v699 = vlaneseq
      %v700 = vshrl.u32 %v699, 7
      %v701 = vsub.s32 %v698, %v700
      %v702 = vrot.slane %v552, %v701
      %v704 = vunpack.c.l.s4 839922192
      %v705 = vunpack.c.0.s8 %v704
      %v706 = vlaneseq
      %v707 = vshrl.u32 %v706, 7
      %v708 = vsub.s32 %v705, %v707
      %v709 = vrot.slane %v556, %v708
      %v711 = vunpack.c.l.s4 1985246804
      %v712 = vunpack.c.0.s8 %v711
      %v713 = vlaneseq
      %v714 = vshrl.u32 %v713, 7
      %v715 = vsub.s32 %v712, %v714
      %v716 = vrot.slane %v556, %v715
      %v718 = vunpack.c.l.s4 839922192
      %v719 = vunpack.c.0.s8 %v718
      %v720 = vlaneseq
      %v721 = vshrl.u32 %v720, 7
      %v722 = vsub.s32 %v719, %v721
      %v723 = vrot.slane %v560, %v722
      %v725 = vunpack.c.l.s4 1985246804
      %v726 = vunpack.c.0.s8 %v725
      %v727 = vlaneseq
      %v728 = vshrl.u32 %v727, 7
      %v729 = vsub.s32 %v726, %v728
      %v730 = vrot.slane %v560, %v729
      %v732 = vunpack.c.l.s4 839922192
      %v733 = vunpack.c.0.s8 %v732
      %v734 = vlaneseq
      %v735 = vshrl.u32 %v734, 7
      %v736 = vsub.s32 %v733, %v735
      %v737 = vrot.slane %v564, %v736
      %v739 = vunpack.c.l.s4 1985246804
      %v740 = vunpack.c.0.s8 %v739
      %v741 = vlaneseq
      %v742 = vshrl.u32 %v741, 7
      %v743 = vsub.s32 %v740, %v742
      %v744 = vrot.slane %v564, %v743
      %v746 = vunpack.c.l.s4 839922192
      %v747 = vunpack.c.0.s8 %v746
      %v748 = vlaneseq
      %v749 = vshrl.u32 %v748, 7
      %v750 = vsub.s32 %v747, %v749
      %v751 = vrot.slane %v568, %v750
      %v753 = vunpack.c.l.s4 1985246804
      %v754 = vunpack.c.0.s8 %v753
      %v755 = vlaneseq
      %v756 = vshrl.u32 %v755, 7
      %v757 = vsub.s32 %v754, %v756
      %v758 = vrot.slane %v568, %v757
      %v760 = vunpack.c.l.s4 839922192
      %v761 = vunpack.c.0.s8 %v760
      %v762 = vlaneseq
      %v763 = vshrl.u32 %v762, 7
      %v764 = vsub.s32 %v761, %v763
      %v765 = vrot.slane %v572, %v764
      %v767 = vunpack.c.l.s4 1985246804
      %v768 = vunpack.c.0.s8 %v767
      %v769 = vlaneseq
      %v770 = vshrl.u32 %v769, 7
      %v771 = vsub.s32 %v768, %v770
      %v772 = vrot.slane %v572, %v771
      %v774 = vunpack.c.l.s4 839922192
      %v775 = vunpack.c.0.s8 %v774
      %v776 = vlaneseq
      %v777 = vshrl.u32 %v776, 7
      %v778 = vsub.s32 %v775, %v777
      %v779 = vrot.slane %v576, %v778
      %v781 = vunpack.c.l.s4 1985246804
      %v782 = vunpack.c.0.s8 %v781
      %v783 = vlaneseq
      %v784 = vshrl.u32 %v783, 7
      %v785 = vsub.s32 %v782, %v784
      %v786 = vrot.slane %v576, %v785
      %v788 = vunpack.c.l.s4 839922192
      %v789 = vunpack.c.0.s8 %v788
      %v790 = vlaneseq
      %v791 = vshrl.u32 %v790, 7
      %v792 = vsub.s32 %v789, %v791
      %v793 = vrot.slane %v580, %v792
      %v795 = vunpack.c.l.s4 1985246804
      %v796 = vunpack.c.0.s8 %v795
      %v797 = vlaneseq
      %v798 = vshrl.u32 %v797, 7
      %v799 = vsub.s32 %v796, %v798
      %v800 = vrot.slane %v580, %v799
      %v802 = vunpack.c.l.s4 839922192
      %v803 = vunpack.c.0.s8 %v802
      %v804 = vlaneseq
      %v805 = vshrl.u32 %v804, 7
      %v806 = vsub.s32 %v803, %v805
      %v807 = vrot.slane %v584, %v806
      %v809 = vunpack.c.l.s4 1985246804
      %v810 = vunpack.c.0.s8 %v809
      %v811 = vlaneseq
      %v812 = vshrl.u32 %v811, 7
      %v813 = vsub.s32 %v810, %v812
      %v814 = vrot.slane %v584, %v813
      %v816 = vunpack.c.l.s4 839922192
      %v817 = vunpack.c.0.s8 %v816
      %v818 = vlaneseq
      %v819 = vshrl.u32 %v818, 7
      %v820 = vsub.s32 %v817, %v819
      %v821 = vrot.slane %v588, %v820
      %v823 = vunpack.c.l.s4 1985246804
      %v824 = vunpack.c.0.s8 %v823
      %v825 = vlaneseq
      %v826 = vshrl.u32 %v825, 7
      %v827 = vsub.s32 %v824, %v826
      %v828 = vrot.slane %v588, %v827
      %v861 = vmul.bf16 %v348, %v611
      %v862 = vmul.bf16 %v349, %v618
      %v863 = vmul.bf16 %v350, %v625
      %v864 = vmul.bf16 %v351, %v632
      %v865 = vmul.bf16 %v352, %v639
      %v866 = vmul.bf16 %v353, %v646
      %v867 = vmul.bf16 %v354, %v653
      %v868 = vmul.bf16 %v355, %v660
      %v869 = vmul.bf16 %v356, %v667
      %v870 = vmul.bf16 %v357, %v674
      %v871 = vmul.bf16 %v358, %v681
      %v872 = vmul.bf16 %v359, %v688
      %v873 = vmul.bf16 %v360, %v695
      %v874 = vmul.bf16 %v361, %v702
      %v875 = vmul.bf16 %v362, %v709
      %v876 = vmul.bf16 %v363, %v716
      %v877 = vmul.bf16 %v364, %v723
      %v878 = vmul.bf16 %v365, %v730
      %v879 = vmul.bf16 %v366, %v737
      %v880 = vmul.bf16 %v367, %v744
      %v881 = vmul.bf16 %v368, %v751
      %v882 = vmul.bf16 %v369, %v758
      %v883 = vmul.bf16 %v370, %v765
      %v884 = vmul.bf16 %v371, %v772
      %v885 = vmul.bf16 %v372, %v779
      %v886 = vmul.bf16 %v373, %v786
      %v887 = vmul.bf16 %v374, %v793
      %v888 = vmul.bf16 %v375, %v800
      %v889 = vmul.bf16 %v376, %v807
      %v890 = vmul.bf16 %v377, %v814
      %v891 = vmul.bf16 %v378, %v821
      %v892 = vmul.bf16 %v379, %v828
      %v893 = vld [vmem:[%s4] sm:$0xf]
      %v894 = vld [vmem:[%s4 + $0x4] sm:$0xf]
      %v895 = vld [vmem:[%s4 + $0x8] sm:$0xf]
      %v896 = vld [vmem:[%s4 + $0xc] sm:$0xf]
      %v929 = vunpack.c.l.b16 %v861
      %v930 = vunpack.c.l.b16 %v862
      %v931 = vunpack.c.l.b16 %v863
      %v932 = vunpack.c.l.b16 %v864
      %v933 = vunpack.c.l.b16 %v865
      %v934 = vunpack.c.l.b16 %v866
      %v935 = vunpack.c.l.b16 %v867
      %v936 = vunpack.c.l.b16 %v868
      %v937 = vunpack.c.l.b16 %v869
      %v938 = vunpack.c.l.b16 %v870
      %v939 = vunpack.c.l.b16 %v871
      %v940 = vunpack.c.l.b16 %v872
      %v941 = vunpack.c.l.b16 %v873
      %v942 = vunpack.c.l.b16 %v874
      %v943 = vunpack.c.l.b16 %v875
      %v944 = vunpack.c.l.b16 %v876
      %v945 = vunpack.c.l.b16 %v877
      %v946 = vunpack.c.l.b16 %v878
      %v947 = vunpack.c.l.b16 %v879
      %v948 = vunpack.c.l.b16 %v880
      %v949 = vunpack.c.l.b16 %v881
      %v950 = vunpack.c.l.b16 %v882
      %v951 = vunpack.c.l.b16 %v883
      %v952 = vunpack.c.l.b16 %v884
      %v953 = vunpack.c.l.b16 %v885
      %v954 = vunpack.c.l.b16 %v886
      %v955 = vunpack.c.l.b16 %v887
      %v956 = vunpack.c.l.b16 %v888
      %v957 = vunpack.c.l.b16 %v889
      %v958 = vunpack.c.l.b16 %v890
      %v959 = vunpack.c.l.b16 %v891
      %v960 = vunpack.c.l.b16 %v892
      %v961 = vpack.c.b16 %v930, %v929
      %v962 = vpack.c.b16 %v932, %v931
      %v963 = vpack.c.b16 %v934, %v933
      %v964 = vpack.c.b16 %v936, %v935
      %v965 = vpack.c.b16 %v938, %v937
      %v966 = vpack.c.b16 %v940, %v939
      %v967 = vpack.c.b16 %v942, %v941
      %v968 = vpack.c.b16 %v944, %v943
      %v969 = vpack.c.b16 %v946, %v945
      %v970 = vpack.c.b16 %v948, %v947
      %v971 = vpack.c.b16 %v950, %v949
      %v972 = vpack.c.b16 %v952, %v951
      %v973 = vpack.c.b16 %v954, %v953
      %v974 = vpack.c.b16 %v956, %v955
      %v975 = vpack.c.b16 %v958, %v957
      %v976 = vpack.c.b16 %v960, %v959
      %v981 = vunpack.c.l.b16 %v893
      %v982 = vunpack.c.l.b16 %v894
      %v983 = vunpack.c.l.b16 %v895
      %v984 = vunpack.c.l.b16 %v896
      %v985 = vpack.c.b16 %v982, %v981
      %v986 = vpack.c.b16 %v984, %v983
      %vm989 = vcmask 261120
      %v991 = vsel %vm989, %v961, 0
      %v994 = vsel %vm989, %v962, 0
      %v997 = vsel %vm989, %v963, 0
      %v1000 = vsel %vm989, %v964, 0
      %v1003 = vsel %vm989, %v965, 0
      %v1006 = vsel %vm989, %v966, 0
      %v1009 = vsel %vm989, %v967, 0
      %v1012 = vsel %vm989, %v968, 0
      %v1015 = vsel %vm989, %v969, 0
      %v1018 = vsel %vm989, %v970, 0
      %v1021 = vsel %vm989, %v971, 0
      %v1024 = vsel %vm989, %v972, 0
      %v1027 = vsel %vm989, %v973, 0
      %v1030 = vsel %vm989, %v974, 0
      %v1033 = vsel %vm989, %v975, 0
      %v1036 = vsel %vm989, %v976, 0
      %1038 = vmatprep.subr.bf16.mxu0 0
      %1039 = vmatpush1.bf16.msra.mxu0 %v985
      %1040 = vmatprep.subr.bf16.mxu0 0
      %1041 = vmatpush1.bf16.msra.mxu0 %v986
      %1042 = vmatprep.subr.bf16.mxu0 0
      %1043 = vmatpush1.bf16.msra.mxu0 0
      %1044 = vmatprep.subr.bf16.mxu0 0
      %1045 = vmatpush1.bf16.msra.mxu0 0
      %1046 = vmatprep.subr.bf16.mxu0 0
      %1047 = vmatpush1.bf16.msra.mxu0 0
      %1048 = vmatprep.subr.bf16.mxu0 0
      %1049 = vmatpush1.bf16.msra.mxu0 0
      %1050 = vmatprep.subr.bf16.mxu0 0
      %1051 = vmatpush1.bf16.msra.mxu0 0
      %1052 = vmatprep.subr.bf16.mxu0 0
      %1053 = vmatpush1.bf16.msra.mxu0 0
      %1054 = vmatprep.subr.bf16.mxu0 0
      %1055 = vmatpush1.bf16.msra.mxu0 0
      %1056 = vmatprep.subr.bf16.mxu0 0
      %1057 = vmatpush1.bf16.msra.mxu0 0
      %1058 = vmatprep.subr.bf16.mxu0 0
      %1059 = vmatpush1.bf16.msra.mxu0 0
      %1060 = vmatprep.subr.bf16.mxu0 0
      %1061 = vmatpush1.bf16.msra.mxu0 0
      %1062 = vmatprep.subr.bf16.mxu0 0
      %1063 = vmatpush1.bf16.msra.mxu0 0
      %1064 = vmatprep.subr.bf16.mxu0 0
      %1065 = vmatpush1.bf16.msra.mxu0 0
      %1066 = vmatprep.subr.bf16.mxu0 0
      %1067 = vmatpush1.bf16.msra.mxu0 0
      %1068 = vmatprep.subr.bf16.mxu0 0
      %1069 = vmatpush1.bf16.msra.mxu0 0
      %1070 = vmatprep.mubr.bf16.mxu0 0
      %1071 = vmatmul.mubr.bf16.gmra.mrb[0].mxu0 %v991
      %v1072 = vpop.f32.mrb[0].mxu0
      %v1073 = vadd.f32 0.0, %v1072
      %v1074 = vpop.f32.mrb[0].mxu0
      %v1075 = vpop.f32.mrb[0].mxu0
      %v1076 = vadd.f32 0.0, %v1075
      %v1077 = vpop.f32.mrb[0].mxu0
      %1078 = vmatprep.mubr.bf16.mxu0 0
      %1079 = vmatmul.mubr.bf16.gmra.mrb[0].mxu0 %v994
      %v1080 = vpop.f32.mrb[0].mxu0
      %v1081 = vadd.f32 0.0, %v1080
      %v1082 = vpop.f32.mrb[0].mxu0
      %v1083 = vpop.f32.mrb[0].mxu0
      %v1084 = vadd.f32 0.0, %v1083
      %v1085 = vpop.f32.mrb[0].mxu0
      %1086 = vmatprep.mubr.bf16.mxu0 0
      %1087 = vmatmul.mubr.bf16.gmra.mrb[0].mxu0 %v997
      %v1088 = vpop.f32.mrb[0].mxu0
      %v1089 = vadd.f32 0.0, %v1088
      %v1090 = vpop.f32.mrb[0].mxu0
      %v1091 = vpop.f32.mrb[0].mxu0
      %v1092 = vadd.f32 0.0, %v1091
      %v1093 = vpop.f32.mrb[0].mxu0
      %1094 = vmatprep.mubr.bf16.mxu0 0
      %1095 = vmatmul.mubr.bf16.gmra.mrb[0].mxu0 %v1000
      %v1096 = vpop.f32.mrb[0].mxu0
      %v1097 = vadd.f32 0.0, %v1096
      %v1098 = vpop.f32.mrb[0].mxu0
      %v1099 = vpop.f32.mrb[0].mxu0
      %v1100 = vadd.f32 0.0, %v1099
      %v1101 = vpop.f32.mrb[0].mxu0
      %1102 = vmatprep.mubr.bf16.mxu0 0
      %1103 = vmatmul.mubr.bf16.gmra.mrb[0].mxu0 %v1003
      %v1104 = vpop.f32.mrb[0].mxu0
      %v1105 = vadd.f32 0.0, %v1104
      %v1106 = vpop.f32.mrb[0].mxu0
      %v1107 = vpop.f32.mrb[0].mxu0
      %v1108 = vadd.f32 0.0, %v1107
      %v1109 = vpop.f32.mrb[0].mxu0
      %1110 = vmatprep.mubr.bf16.mxu0 0
      %1111 = vmatmul.mubr.bf16.gmra.mrb[0].mxu0 %v1006
      %v1112 = vpop.f32.mrb[0].mxu0
      %v1113 = vadd.f32 0.0, %v1112
      %v1114 = vpop.f32.mrb[0].mxu0
      %v1115 = vpop.f32.mrb[0].mxu0
      %v1116 = vadd.f32 0.0, %v1115
      %v1117 = vpop.f32.mrb[0].mxu0
      %1118 = vmatprep.mubr.bf16.mxu0 0
      %1119 = vmatmul.mubr.bf16.gmra.mrb[0].mxu0 %v1009
      %v1120 = vpop.f32.mrb[0].mxu0
      %v1121 = vadd.f32 0.0, %v1120
      %v1122 = vpop.f32.mrb[0].mxu0
      %v1123 = vpop.f32.mrb[0].mxu0
      %v1124 = vadd.f32 0.0, %v1123
      %v1125 = vpop.f32.mrb[0].mxu0
      %1126 = vmatprep.mubr.bf16.mxu0 0
      %1127 = vmatmul.mubr.bf16.gmra.mrb[0].mxu0 %v1012
      %v1128 = vpop.f32.mrb[0].mxu0
      %v1129 = vadd.f32 0.0, %v1128
      %v1130 = vpop.f32.mrb[0].mxu0
      %v1131 = vpop.f32.mrb[0].mxu0
      %v1132 = vadd.f32 0.0, %v1131
      %v1133 = vpop.f32.mrb[0].mxu0
      %1134 = vmatprep.mubr.bf16.mxu0 0
      %1135 = vmatmul.mubr.bf16.gmra.mrb[0].mxu0 %v1015
      %v1136 = vpop.f32.mrb[0].mxu0
      %v1137 = vadd.f32 0.0, %v1136
      %v1138 = vpop.f32.mrb[0].mxu0
      %v1139 = vpop.f32.mrb[0].mxu0
      %v1140 = vadd.f32 0.0, %v1139
      %v1141 = vpop.f32.mrb[0].mxu0
      %1142 = vmatprep.mubr.bf16.mxu0 0
      %1143 = vmatmul.mubr.bf16.gmra.mrb[0].mxu0 %v1018
      %v1144 = vpop.f32.mrb[0].mxu0
      %v1145 = vadd.f32 0.0, %v1144
      %v1146 = vpop.f32.mrb[0].mxu0
      %v1147 = vpop.f32.mrb[0].mxu0
      %v1148 = vadd.f32 0.0, %v1147
      %v1149 = vpop.f32.mrb[0].mxu0
      %1150 = vmatprep.mubr.bf16.mxu0 0
      %1151 = vmatmul.mubr.bf16.gmra.mrb[0].mxu0 %v1021
      %v1152 = vpop.f32.mrb[0].mxu0
      %v1153 = vadd.f32 0.0, %v1152
      %v1154 = vpop.f32.mrb[0].mxu0
      %v1155 = vpop.f32.mrb[0].mxu0
      %v1156 = vadd.f32 0.0, %v1155
      %v1157 = vpop.f32.mrb[0].mxu0
      %1158 = vmatprep.mubr.bf16.mxu0 0
      %1159 = vmatmul.mubr.bf16.gmra.mrb[0].mxu0 %v1024
      %v1160 = vpop.f32.mrb[0].mxu0
      %v1161 = vadd.f32 0.0, %v1160
      %v1162 = vpop.f32.mrb[0].mxu0
      %v1163 = vpop.f32.mrb[0].mxu0
      %v1164 = vadd.f32 0.0, %v1163
      %v1165 = vpop.f32.mrb[0].mxu0
      %1166 = vmatprep.mubr.bf16.mxu0 0
      %1167 = vmatmul.mubr.bf16.gmra.mrb[0].mxu0 %v1027
      %v1168 = vpop.f32.mrb[0].mxu0
      %v1169 = vadd.f32 0.0, %v1168
      %v1170 = vpop.f32.mrb[0].mxu0
      %v1171 = vpop.f32.mrb[0].mxu0
      %v1172 = vadd.f32 0.0, %v1171
      %v1173 = vpop.f32.mrb[0].mxu0
      %1174 = vmatprep.mubr.bf16.mxu0 0
      %1175 = vmatmul.mubr.bf16.gmra.mrb[0].mxu0 %v1030
      %v1176 = vpop.f32.mrb[0].mxu0
      %v1177 = vadd.f32 0.0, %v1176
      %v1178 = vpop.f32.mrb[0].mxu0
      %v1179 = vpop.f32.mrb[0].mxu0
      %v1180 = vadd.f32 0.0, %v1179
      %v1181 = vpop.f32.mrb[0].mxu0
      %1182 = vmatprep.mubr.bf16.mxu0 0
      %1183 = vmatmul.mubr.bf16.gmra.mrb[0].mxu0 %v1033
      %v1184 = vpop.f32.mrb[0].mxu0
      %v1185 = vadd.f32 0.0, %v1184
      %v1186 = vpop.f32.mrb[0].mxu0
      %v1187 = vpop.f32.mrb[0].mxu0
      %v1188 = vadd.f32 0.0, %v1187
      %v1189 = vpop.f32.mrb[0].mxu0
      %1190 = vmatprep.mubr.bf16.mxu0 0
      %1191 = vmatmul.mubr.bf16.gmra.mrb[0].mxu0 %v1036
      %v1192 = vpop.f32.mrb[0].mxu0
      %v1193 = vadd.f32 0.0, %v1192
      %v1194 = vpop.f32.mrb[0].mxu0
      %v1195 = vpop.f32.mrb[0].mxu0
      %v1196 = vadd.f32 0.0, %v1195
      %v1197 = vpop.f32.mrb[0].mxu0
      %1198 = vdwg.mxu0
      %v1231 = vunpack.c.l.b16 %v300
      %v1232 = vunpack.c.l.b16 %v301
      %v1233 = vunpack.c.l.b16 %v302
      %v1234 = vunpack.c.l.b16 %v303
      %v1235 = vunpack.c.l.b16 %v304
      %v1236 = vunpack.c.l.b16 %v305
      %v1237 = vunpack.c.l.b16 %v306
      %v1238 = vunpack.c.l.b16 %v307
      %v1239 = vunpack.c.l.b16 %v308
      %v1240 = vunpack.c.l.b16 %v309
      %v1241 = vunpack.c.l.b16 %v310
      %v1242 = vunpack.c.l.b16 %v311
      %v1243 = vunpack.c.l.b16 %v312
      %v1244 = vunpack.c.l.b16 %v313
      %v1245 = vunpack.c.l.b16 %v314
      %v1246 = vunpack.c.l.b16 %v315
      %v1247 = vunpack.c.l.b16 %v316
      %v1248 = vunpack.c.l.b16 %v317
      %v1249 = vunpack.c.l.b16 %v318
      %v1250 = vunpack.c.l.b16 %v319
      %v1251 = vunpack.c.l.b16 %v320
      %v1252 = vunpack.c.l.b16 %v321
      %v1253 = vunpack.c.l.b16 %v322
      %v1254 = vunpack.c.l.b16 %v323
      %v1255 = vunpack.c.l.b16 %v324
      %v1256 = vunpack.c.l.b16 %v325
      %v1257 = vunpack.c.l.b16 %v326
      %v1258 = vunpack.c.l.b16 %v327
      %v1259 = vunpack.c.l.b16 %v328
      %v1260 = vunpack.c.l.b16 %v329
      %v1261 = vunpack.c.l.b16 %v330
      %v1262 = vunpack.c.l.b16 %v331
      %v1263 = vpack.c.b16 %v1232, %v1231
      %v1264 = vpack.c.b16 %v1234, %v1233
      %v1265 = vpack.c.b16 %v1236, %v1235
      %v1266 = vpack.c.b16 %v1238, %v1237
      %v1267 = vpack.c.b16 %v1240, %v1239
      %v1268 = vpack.c.b16 %v1242, %v1241
      %v1269 = vpack.c.b16 %v1244, %v1243
      %v1270 = vpack.c.b16 %v1246, %v1245
      %v1271 = vpack.c.b16 %v1248, %v1247
      %v1272 = vpack.c.b16 %v1250, %v1249
      %v1273 = vpack.c.b16 %v1252, %v1251
      %v1274 = vpack.c.b16 %v1254, %v1253
      %v1275 = vpack.c.b16 %v1256, %v1255
      %v1276 = vpack.c.b16 %v1258, %v1257
      %v1277 = vpack.c.b16 %v1260, %v1259
      %v1278 = vpack.c.b16 %v1262, %v1261
      %v1311 = vunpack.c.l.b16 %v332
      %v1312 = vunpack.c.l.b16 %v333
      %v1313 = vunpack.c.l.b16 %v334
      %v1314 = vunpack.c.l.b16 %v335
      %v1315 = vunpack.c.l.b16 %v336
      %v1316 = vunpack.c.l.b16 %v337
      %v1317 = vunpack.c.l.b16 %v338
      %v1318 = vunpack.c.l.b16 %v339
      %v1319 = vunpack.c.l.b16 %v340
      %v1320 = vunpack.c.l.b16 %v341
      %v1321 = vunpack.c.l.b16 %v342
      %v1322 = vunpack.c.l.b16 %v343
      %v1323 = vunpack.c.l.b16 %v344
      %v1324 = vunpack.c.l.b16 %v345
      %v1325 = vunpack.c.l.b16 %v346
      %v1326 = vunpack.c.l.b16 %v347
      %v1327 = vpack.c.b16 %v1312, %v1311
      %v1328 = vpack.c.b16 %v1314, %v1313
      %v1329 = vpack.c.b16 %v1316, %v1315
      %v1330 = vpack.c.b16 %v1318, %v1317
      %v1331 = vpack.c.b16 %v1320, %v1319
      %v1332 = vpack.c.b16 %v1322, %v1321
      %v1333 = vpack.c.b16 %v1324, %v1323
      %v1334 = vpack.c.b16 %v1326, %v1325
      %1343 = vmatprep.subr.bf16.mxu0 0
      %1344 = vmatpush1.bf16.msra.mxu0 %v1327
      %1345 = vmatprep.subr.bf16.mxu0 0
      %1346 = vmatpush1.bf16.msra.mxu0 %v1328
      %1347 = vmatprep.subr.bf16.mxu0 0
      %1348 = vmatpush1.bf16.msra.mxu0 %v1329
      %1349 = vmatprep.subr.bf16.mxu0 0
      %1350 = vmatpush1.bf16.msra.mxu0 %v1330
      %1351 = vmatprep.subr.bf16.mxu0 0
      %1352 = vmatpush1.bf16.msra.mxu0 %v1331
      %1353 = vmatprep.subr.bf16.mxu0 0
      %1354 = vmatpush1.bf16.msra.mxu0 %v1332
      %1355 = vmatprep.subr.bf16.mxu0 0
      %1356 = vmatpush1.bf16.msra.mxu0 %v1333
      %1357 = vmatprep.subr.bf16.mxu0 0
      %1358 = vmatpush1.bf16.msra.mxu0 %v1334
      %1359 = vmatprep.subr.bf16.mxu0 0
      %1360 = vmatpush1.bf16.msra.mxu0 0
      %1361 = vmatprep.subr.bf16.mxu0 0
      %1362 = vmatpush1.bf16.msra.mxu0 0
      %1363 = vmatprep.subr.bf16.mxu0 0
      %1364 = vmatpush1.bf16.msra.mxu0 0
      %1365 = vmatprep.subr.bf16.mxu0 0
      %1366 = vmatpush1.bf16.msra.mxu0 0
      %1367 = vmatprep.subr.bf16.mxu0 0
      %1368 = vmatpush1.bf16.msra.mxu0 0
      %1369 = vmatprep.subr.bf16.mxu0 0
      %1370 = vmatpush1.bf16.msra.mxu0 0
      %1371 = vmatprep.subr.bf16.mxu0 0
      %1372 = vmatpush1.bf16.msra.mxu0 0
      %1373 = vmatprep.subr.bf16.mxu0 0
      %1374 = vmatpush1.bf16.msra.mxu0 0
      %1375 = vmatprep.mubr.bf16.mxu0 0
      %1376 = vmatmul.mubr.bf16.gmra.mrb[0].mxu0 %v1263
      %v1377 = vpop.f32.mrb[0].mxu0
      %v1378 = vadd.f32 %v1073, %v1377
      %v1379 = vpop.f32.mrb[0].mxu0
      %v1380 = vpop.f32.mrb[0].mxu0
      %v1381 = vadd.f32 %v1076, %v1380
      %v1382 = vpop.f32.mrb[0].mxu0
      %1383 = vmatprep.mubr.bf16.mxu0 0
      %1384 = vmatmul.mubr.bf16.gmra.mrb[0].mxu0 %v1264
      %v1385 = vpop.f32.mrb[0].mxu0
      %v1386 = vadd.f32 %v1081, %v1385
      %v1387 = vpop.f32.mrb[0].mxu0
      %v1388 = vpop.f32.mrb[0].mxu0
      %v1389 = vadd.f32 %v1084, %v1388
      %v1390 = vpop.f32.mrb[0].mxu0
      %1391 = vmatprep.mubr.bf16.mxu0 0
      %1392 = vmatmul.mubr.bf16.gmra.mrb[0].mxu0 %v1265
      %v1393 = vpop.f32.mrb[0].mxu0
      %v1394 = vadd.f32 %v1089, %v1393
      %v1395 = vpop.f32.mrb[0].mxu0
      %v1396 = vpop.f32.mrb[0].mxu0
      %v1397 = vadd.f32 %v1092, %v1396
      %v1398 = vpop.f32.mrb[0].mxu0
      %1399 = vmatprep.mubr.bf16.mxu0 0
      %1400 = vmatmul.mubr.bf16.gmra.mrb[0].mxu0 %v1266
      %v1401 = vpop.f32.mrb[0].mxu0
      %v1402 = vadd.f32 %v1097, %v1401
      %v1403 = vpop.f32.mrb[0].mxu0
      %v1404 = vpop.f32.mrb[0].mxu0
      %v1405 = vadd.f32 %v1100, %v1404
      %v1406 = vpop.f32.mrb[0].mxu0
      %1407 = vmatprep.mubr.bf16.mxu0 0
      %1408 = vmatmul.mubr.bf16.gmra.mrb[0].mxu0 %v1267
      %v1409 = vpop.f32.mrb[0].mxu0
      %v1410 = vadd.f32 %v1105, %v1409
      %v1411 = vpop.f32.mrb[0].mxu0
      %v1412 = vpop.f32.mrb[0].mxu0
      %v1413 = vadd.f32 %v1108, %v1412
      %v1414 = vpop.f32.mrb[0].mxu0
      %1415 = vmatprep.mubr.bf16.mxu0 0
      %1416 = vmatmul.mubr.bf16.gmra.mrb[0].mxu0 %v1268
      %v1417 = vpop.f32.mrb[0].mxu0
      %v1418 = vadd.f32 %v1113, %v1417
      %v1419 = vpop.f32.mrb[0].mxu0
      %v1420 = vpop.f32.mrb[0].mxu0
      %v1421 = vadd.f32 %v1116, %v1420
      %v1422 = vpop.f32.mrb[0].mxu0
      %1423 = vmatprep.mubr.bf16.mxu0 0
      %1424 = vmatmul.mubr.bf16.gmra.mrb[0].mxu0 %v1269
      %v1425 = vpop.f32.mrb[0].mxu0
      %v1426 = vadd.f32 %v1121, %v1425
      %v1427 = vpop.f32.mrb[0].mxu0
      %v1428 = vpop.f32.mrb[0].mxu0
      %v1429 = vadd.f32 %v1124, %v1428
      %v1430 = vpop.f32.mrb[0].mxu0
      %1431 = vmatprep.mubr.bf16.mxu0 0
      %1432 = vmatmul.mubr.bf16.gmra.mrb[0].mxu0 %v1270
      %v1433 = vpop.f32.mrb[0].mxu0
      %v1434 = vadd.f32 %v1129, %v1433
      %v1435 = vpop.f32.mrb[0].mxu0
      %v1436 = vpop.f32.mrb[0].mxu0
      %v1437 = vadd.f32 %v1132, %v1436
      %v1438 = vpop.f32.mrb[0].mxu0
      %1439 = vmatprep.mubr.bf16.mxu0 0
      %1440 = vmatmul.mubr.bf16.gmra.mrb[0].mxu0 %v1271
      %v1441 = vpop.f32.mrb[0].mxu0
      %v1442 = vadd.f32 %v1137, %v1441
      %v1443 = vpop.f32.mrb[0].mxu0
      %v1444 = vpop.f32.mrb[0].mxu0
      %v1445 = vadd.f32 %v1140, %v1444
      %v1446 = vpop.f32.mrb[0].mxu0
      %1447 = vmatprep.mubr.bf16.mxu0 0
      %1448 = vmatmul.mubr.bf16.gmra.mrb[0].mxu0 %v1272
      %v1449 = vpop.f32.mrb[0].mxu0
      %v1450 = vadd.f32 %v1145, %v1449
      %v1451 = vpop.f32.mrb[0].mxu0
      %v1452 = vpop.f32.mrb[0].mxu0
      %v1453 = vadd.f32 %v1148, %v1452
      %v1454 = vpop.f32.mrb[0].mxu0
      %1455 = vmatprep.mubr.bf16.mxu0 0
      %1456 = vmatmul.mubr.bf16.gmra.mrb[0].mxu0 %v1273
      %v1457 = vpop.f32.mrb[0].mxu0
      %v1458 = vadd.f32 %v1153, %v1457
      %v1459 = vpop.f32.mrb[0].mxu0
      %v1460 = vpop.f32.mrb[0].mxu0
      %v1461 = vadd.f32 %v1156, %v1460
      %v1462 = vpop.f32.mrb[0].mxu0
      %1463 = vmatprep.mubr.bf16.mxu0 0
      %1464 = vmatmul.mubr.bf16.gmra.mrb[0].mxu0 %v1274
      %v1465 = vpop.f32.mrb[0].mxu0
      %v1466 = vadd.f32 %v1161, %v1465
      %v1467 = vpop.f32.mrb[0].mxu0
      %v1468 = vpop.f32.mrb[0].mxu0
      %v1469 = vadd.f32 %v1164, %v1468
      %v1470 = vpop.f32.mrb[0].mxu0
      %1471 = vmatprep.mubr.bf16.mxu0 0
      %1472 = vmatmul.mubr.bf16.gmra.mrb[0].mxu0 %v1275
      %v1473 = vpop.f32.mrb[0].mxu0
      %v1474 = vadd.f32 %v1169, %v1473
      %v1475 = vpop.f32.mrb[0].mxu0
      %v1476 = vpop.f32.mrb[0].mxu0
      %v1477 = vadd.f32 %v1172, %v1476
      %v1478 = vpop.f32.mrb[0].mxu0
      %1479 = vmatprep.mubr.bf16.mxu0 0
      %1480 = vmatmul.mubr.bf16.gmra.mrb[0].mxu0 %v1276
      %v1481 = vpop.f32.mrb[0].mxu0
      %v1482 = vadd.f32 %v1177, %v1481
      %v1483 = vpop.f32.mrb[0].mxu0
      %v1484 = vpop.f32.mrb[0].mxu0
      %v1485 = vadd.f32 %v1180, %v1484
      %v1486 = vpop.f32.mrb[0].mxu0
      %1487 = vmatprep.mubr.bf16.mxu0 0
      %1488 = vmatmul.mubr.bf16.gmra.mrb[0].mxu0 %v1277
      %v1489 = vpop.f32.mrb[0].mxu0
      %v1490 = vadd.f32 %v1185, %v1489
      %v1491 = vpop.f32.mrb[0].mxu0
      %v1492 = vpop.f32.mrb[0].mxu0
      %v1493 = vadd.f32 %v1188, %v1492
      %v1494 = vpop.f32.mrb[0].mxu0
      %1495 = vmatprep.mubr.bf16.mxu0 0
      %1496 = vmatmul.mubr.bf16.gmra.mrb[0].mxu0 %v1278
      %v1497 = vpop.f32.mrb[0].mxu0
      %v1498 = vadd.f32 %v1193, %v1497
      %v1499 = vpop.f32.mrb[0].mxu0
      %v1500 = vpop.f32.mrb[0].mxu0
      %v1501 = vadd.f32 %v1196, %v1500
      %v1502 = vpop.f32.mrb[0].mxu0
      %1503 = vdwg.mxu0
      %1505 = vset.pattern.permute.xlu0 0
      %1506 = vperm.xlu0 %1505, %v477
      %v1507 = vpop.permute.xlu0 %1506
      %1510 = vset.pattern.permute.xlu0 0
      %1511 = vperm.xlu0 %1510, %v478
      %v1512 = vpop.permute.xlu0 %1511
      %1515 = vset.pattern.permute.xlu0 0
      %1516 = vperm.xlu0 %1515, %v479
      %v1517 = vpop.permute.xlu0 %1516
      %1520 = vset.pattern.permute.xlu0 0
      %1521 = vperm.xlu0 %1520, %v480
      %v1522 = vpop.permute.xlu0 %1521
      %1525 = vset.pattern.permute.xlu0 0
      %1526 = vperm.xlu0 %1525, %v481
      %v1527 = vpop.permute.xlu0 %1526
      %1530 = vset.pattern.permute.xlu0 0
      %1531 = vperm.xlu0 %1530, %v482
      %v1532 = vpop.permute.xlu0 %1531
      %1535 = vset.pattern.permute.xlu0 0
      %1536 = vperm.xlu0 %1535, %v483
      %v1537 = vpop.permute.xlu0 %1536
      %1540 = vset.pattern.permute.xlu0 0
      %1541 = vperm.xlu0 %1540, %v484
      %v1542 = vpop.permute.xlu0 %1541
      %1545 = vset.pattern.permute.xlu0 0
      %1546 = vperm.xlu0 %1545, %v485
      %v1547 = vpop.permute.xlu0 %1546
      %1550 = vset.pattern.permute.xlu0 0
      %1551 = vperm.xlu0 %1550, %v486
      %v1552 = vpop.permute.xlu0 %1551
      %1555 = vset.pattern.permute.xlu0 0
      %1556 = vperm.xlu0 %1555, %v487
      %v1557 = vpop.permute.xlu0 %1556
      %1560 = vset.pattern.permute.xlu0 0
      %1561 = vperm.xlu0 %1560, %v488
      %v1562 = vpop.permute.xlu0 %1561
      %1565 = vset.pattern.permute.xlu0 0
      %1566 = vperm.xlu0 %1565, %v489
      %v1567 = vpop.permute.xlu0 %1566
      %1570 = vset.pattern.permute.xlu0 0
      %1571 = vperm.xlu0 %1570, %v490
      %v1572 = vpop.permute.xlu0 %1571
      %1575 = vset.pattern.permute.xlu0 0
      %1576 = vperm.xlu0 %1575, %v491
      %v1577 = vpop.permute.xlu0 %1576
      %1580 = vset.pattern.permute.xlu0 0
      %1581 = vperm.xlu0 %1580, %v492
      %v1582 = vpop.permute.xlu0 %1581
      %1585 = vset.pattern.permute.xlu0 0
      %1586 = vperm.xlu0 %1585, %v493
      %v1587 = vpop.permute.xlu0 %1586
      %1590 = vset.pattern.permute.xlu0 0
      %1591 = vperm.xlu0 %1590, %v494
      %v1592 = vpop.permute.xlu0 %1591
      %1595 = vset.pattern.permute.xlu0 0
      %1596 = vperm.xlu0 %1595, %v495
      %v1597 = vpop.permute.xlu0 %1596
      %1600 = vset.pattern.permute.xlu0 0
      %1601 = vperm.xlu0 %1600, %v496
      %v1602 = vpop.permute.xlu0 %1601
      %1605 = vset.pattern.permute.xlu0 0
      %1606 = vperm.xlu0 %1605, %v497
      %v1607 = vpop.permute.xlu0 %1606
      %1610 = vset.pattern.permute.xlu0 0
      %1611 = vperm.xlu0 %1610, %v498
      %v1612 = vpop.permute.xlu0 %1611
      %1615 = vset.pattern.permute.xlu0 0
      %1616 = vperm.xlu0 %1615, %v499
      %v1617 = vpop.permute.xlu0 %1616
      %1620 = vset.pattern.permute.xlu0 0
      %1621 = vperm.xlu0 %1620, %v500
      %v1622 = vpop.permute.xlu0 %1621
      %1625 = vset.pattern.permute.xlu0 0
      %1626 = vperm.xlu0 %1625, %v501
      %v1627 = vpop.permute.xlu0 %1626
      %1630 = vset.pattern.permute.xlu0 0
      %1631 = vperm.xlu0 %1630, %v502
      %v1632 = vpop.permute.xlu0 %1631
      %1635 = vset.pattern.permute.xlu0 0
      %1636 = vperm.xlu0 %1635, %v503
      %v1637 = vpop.permute.xlu0 %1636
      %1640 = vset.pattern.permute.xlu0 0
      %1641 = vperm.xlu0 %1640, %v504
      %v1642 = vpop.permute.xlu0 %1641
      %1645 = vset.pattern.permute.xlu0 0
      %1646 = vperm.xlu0 %1645, %v505
      %v1647 = vpop.permute.xlu0 %1646
      %1650 = vset.pattern.permute.xlu0 0
      %1651 = vperm.xlu0 %1650, %v506
      %v1652 = vpop.permute.xlu0 %1651
      %1655 = vset.pattern.permute.xlu0 0
      %1656 = vperm.xlu0 %1655, %v507
      %v1657 = vpop.permute.xlu0 %1656
      %1660 = vset.pattern.permute.xlu0 0
      %1661 = vperm.xlu0 %1660, %v508
      %v1662 = vpop.permute.xlu0 %1661
      %v1664 = vlaneseq
      %v1665 = vshrl.u32 %v1664, 7
      %v1666 = vsub.s32 0, %v1665
      %v1667 = vrot.slane %v412, %v1666
      %v1668 = vmul.f32 %v1507, %v1667
      %v1669 = vmul.f32 %v1512, %v1667
      %v1670 = vmul.f32 %v1517, %v1667
      %v1671 = vmul.f32 %v1522, %v1667
      %v1672 = vmul.f32 %v1527, %v1667
      %v1673 = vmul.f32 %v1532, %v1667
      %v1674 = vmul.f32 %v1537, %v1667
      %v1675 = vmul.f32 %v1542, %v1667
      %v1676 = vmul.f32 %v1547, %v1667
      %v1677 = vmul.f32 %v1552, %v1667
      %v1678 = vmul.f32 %v1557, %v1667
      %v1679 = vmul.f32 %v1562, %v1667
      %v1680 = vmul.f32 %v1567, %v1667
      %v1681 = vmul.f32 %v1572, %v1667
      %v1682 = vmul.f32 %v1577, %v1667
      %v1683 = vmul.f32 %v1582, %v1667
      %v1684 = vmul.f32 %v1587, %v1667
      %v1685 = vmul.f32 %v1592, %v1667
      %v1686 = vmul.f32 %v1597, %v1667
      %v1687 = vmul.f32 %v1602, %v1667
      %v1688 = vmul.f32 %v1607, %v1667
      %v1689 = vmul.f32 %v1612, %v1667
      %v1690 = vmul.f32 %v1617, %v1667
      %v1691 = vmul.f32 %v1622, %v1667
      %v1692 = vmul.f32 %v1627, %v1667
      %v1693 = vmul.f32 %v1632, %v1667
      %v1694 = vmul.f32 %v1637, %v1667
      %v1695 = vmul.f32 %v1642, %v1667
      %v1696 = vmul.f32 %v1647, %v1667
      %v1697 = vmul.f32 %v1652, %v1667
      %v1698 = vmul.f32 %v1657, %v1667
      %v1699 = vmul.f32 %v1662, %v1667
      %v1700 = vadd.f32 %v1378, %v1668
      %v1701 = vadd.f32 %v1381, %v1669
      %v1702 = vadd.f32 %v1386, %v1670
      %v1703 = vadd.f32 %v1389, %v1671
      %v1704 = vadd.f32 %v1394, %v1672
      %v1705 = vadd.f32 %v1397, %v1673
      %v1706 = vadd.f32 %v1402, %v1674
      %v1707 = vadd.f32 %v1405, %v1675
      %v1708 = vadd.f32 %v1410, %v1676
      %v1709 = vadd.f32 %v1413, %v1677
      %v1710 = vadd.f32 %v1418, %v1678
      %v1711 = vadd.f32 %v1421, %v1679
      %v1712 = vadd.f32 %v1426, %v1680
      %v1713 = vadd.f32 %v1429, %v1681
      %v1714 = vadd.f32 %v1434, %v1682
      %v1715 = vadd.f32 %v1437, %v1683
      %v1716 = vadd.f32 %v1442, %v1684
      %v1717 = vadd.f32 %v1445, %v1685
      %v1718 = vadd.f32 %v1450, %v1686
      %v1719 = vadd.f32 %v1453, %v1687
      %v1720 = vadd.f32 %v1458, %v1688
      %v1721 = vadd.f32 %v1461, %v1689
      %v1722 = vadd.f32 %v1466, %v1690
      %v1723 = vadd.f32 %v1469, %v1691
      %v1724 = vadd.f32 %v1474, %v1692
      %v1725 = vadd.f32 %v1477, %v1693
      %v1726 = vadd.f32 %v1482, %v1694
      %v1727 = vadd.f32 %v1485, %v1695
      %v1728 = vadd.f32 %v1490, %v1696
      %v1729 = vadd.f32 %v1493, %v1697
      %v1730 = vadd.f32 %v1498, %v1698
      %v1731 = vadd.f32 %v1501, %v1699
      %vm1732 = vcmp.eq.s32.totalorder %v380, 1
      %vm1733 = vcmp.eq.s32.totalorder %v381, 1
      %vm1734 = vcmp.eq.s32.totalorder %v382, 1
      %vm1735 = vcmp.eq.s32.totalorder %v383, 1
      %vm1736 = vcmp.eq.s32.totalorder %v384, 1
      %vm1737 = vcmp.eq.s32.totalorder %v385, 1
      %vm1738 = vcmp.eq.s32.totalorder %v386, 1
      %vm1739 = vcmp.eq.s32.totalorder %v387, 1
      %vm1740 = vcmp.eq.s32.totalorder %v388, 1
      %vm1741 = vcmp.eq.s32.totalorder %v389, 1
      %vm1742 = vcmp.eq.s32.totalorder %v390, 1
      %vm1743 = vcmp.eq.s32.totalorder %v391, 1
      %vm1744 = vcmp.eq.s32.totalorder %v392, 1
      %vm1745 = vcmp.eq.s32.totalorder %v393, 1
      %vm1746 = vcmp.eq.s32.totalorder %v394, 1
      %vm1747 = vcmp.eq.s32.totalorder %v395, 1
      %vm1748 = vcmp.eq.s32.totalorder %v396, 1
      %vm1749 = vcmp.eq.s32.totalorder %v397, 1
      %vm1750 = vcmp.eq.s32.totalorder %v398, 1
      %vm1751 = vcmp.eq.s32.totalorder %v399, 1
      %vm1752 = vcmp.eq.s32.totalorder %v400, 1
      %vm1753 = vcmp.eq.s32.totalorder %v401, 1
      %vm1754 = vcmp.eq.s32.totalorder %v402, 1
      %vm1755 = vcmp.eq.s32.totalorder %v403, 1
      %vm1756 = vcmp.eq.s32.totalorder %v404, 1
      %vm1757 = vcmp.eq.s32.totalorder %v405, 1
      %vm1758 = vcmp.eq.s32.totalorder %v406, 1
      %vm1759 = vcmp.eq.s32.totalorder %v407, 1
      %vm1760 = vcmp.eq.s32.totalorder %v408, 1
      %vm1761 = vcmp.eq.s32.totalorder %v409, 1
      %vm1762 = vcmp.eq.s32.totalorder %v410, 1
      %vm1763 = vcmp.eq.s32.totalorder %v411, 1
      %v1764 = vsel %vm1732, 1, 0
      %v1765 = vsel %vm1733, 1, 0
      %v1766 = vsel %vm1734, 1, 0
      %v1767 = vsel %vm1735, 1, 0
      %v1768 = vsel %vm1736, 1, 0
      %v1769 = vsel %vm1737, 1, 0
      %v1770 = vsel %vm1738, 1, 0
      %v1771 = vsel %vm1739, 1, 0
      %v1772 = vsel %vm1740, 1, 0
      %v1773 = vsel %vm1741, 1, 0
      %v1774 = vsel %vm1742, 1, 0
      %v1775 = vsel %vm1743, 1, 0
      %v1776 = vsel %vm1744, 1, 0
      %v1777 = vsel %vm1745, 1, 0
      %v1778 = vsel %vm1746, 1, 0
      %v1779 = vsel %vm1747, 1, 0
      %v1780 = vsel %vm1748, 1, 0
      %v1781 = vsel %vm1749, 1, 0
      %v1782 = vsel %vm1750, 1, 0
      %v1783 = vsel %vm1751, 1, 0
      %v1784 = vsel %vm1752, 1, 0
      %v1785 = vsel %vm1753, 1, 0
      %v1786 = vsel %vm1754, 1, 0
      %v1787 = vsel %vm1755, 1, 0
      %v1788 = vsel %vm1756, 1, 0
      %v1789 = vsel %vm1757, 1, 0
      %v1790 = vsel %vm1758, 1, 0
      %v1791 = vsel %vm1759, 1, 0
      %v1792 = vsel %vm1760, 1, 0
      %v1793 = vsel %vm1761, 1, 0
      %v1794 = vsel %vm1762, 1, 0
      %v1795 = vsel %vm1763, 1, 0
      %v1796 = vcvt.s32.f32 %v1764
      %v1797 = vcvt.s32.f32 %v1765
      %v1798 = vcvt.s32.f32 %v1766
      %v1799 = vcvt.s32.f32 %v1767
      %v1800 = vcvt.s32.f32 %v1768
      %v1801 = vcvt.s32.f32 %v1769
      %v1802 = vcvt.s32.f32 %v1770
      %v1803 = vcvt.s32.f32 %v1771
      %v1804 = vcvt.s32.f32 %v1772
      %v1805 = vcvt.s32.f32 %v1773
      %v1806 = vcvt.s32.f32 %v1774
      %v1807 = vcvt.s32.f32 %v1775
      %v1808 = vcvt.s32.f32 %v1776
      %v1809 = vcvt.s32.f32 %v1777
      %v1810 = vcvt.s32.f32 %v1778
      %v1811 = vcvt.s32.f32 %v1779
      %v1812 = vcvt.s32.f32 %v1780
      %v1813 = vcvt.s32.f32 %v1781
      %v1814 = vcvt.s32.f32 %v1782
      %v1815 = vcvt.s32.f32 %v1783
      %v1816 = vcvt.s32.f32 %v1784
      %v1817 = vcvt.s32.f32 %v1785
      %v1818 = vcvt.s32.f32 %v1786
      %v1819 = vcvt.s32.f32 %v1787
      %v1820 = vcvt.s32.f32 %v1788
      %v1821 = vcvt.s32.f32 %v1789
      %v1822 = vcvt.s32.f32 %v1790
      %v1823 = vcvt.s32.f32 %v1791
      %v1824 = vcvt.s32.f32 %v1792
      %v1825 = vcvt.s32.f32 %v1793
      %v1826 = vcvt.s32.f32 %v1794
      %v1827 = vcvt.s32.f32 %v1795
      %v1828 = vpack.c.bf16 %v1797, %v1796
      %v1829 = vpack.c.bf16 %v1799, %v1798
      %v1830 = vpack.c.bf16 %v1801, %v1800
      %v1831 = vpack.c.bf16 %v1803, %v1802
      %v1832 = vpack.c.bf16 %v1805, %v1804
      %v1833 = vpack.c.bf16 %v1807, %v1806
      %v1834 = vpack.c.bf16 %v1809, %v1808
      %v1835 = vpack.c.bf16 %v1811, %v1810
      %v1836 = vpack.c.bf16 %v1813, %v1812
      %v1837 = vpack.c.bf16 %v1815, %v1814
      %v1838 = vpack.c.bf16 %v1817, %v1816
      %v1839 = vpack.c.bf16 %v1819, %v1818
      %v1840 = vpack.c.bf16 %v1821, %v1820
      %v1841 = vpack.c.bf16 %v1823, %v1822
      %v1842 = vpack.c.bf16 %v1825, %v1824
      %v1843 = vpack.c.bf16 %v1827, %v1826
      %1845 = vset.pattern.permute.xlu0 0
      %1846 = vperm.xlu0 %1845, %v1828
      %v1847 = vpop.permute.xlu0 %1846
      %1849 = vset.pattern.permute.xlu0 0
      %1850 = vperm.xlu0 %1849, %v1829
      %v1851 = vpop.permute.xlu0 %1850
      %1853 = vset.pattern.permute.xlu0 0
      %1854 = vperm.xlu0 %1853, %v1830
      %v1855 = vpop.permute.xlu0 %1854
      %1857 = vset.pattern.permute.xlu0 0
      %1858 = vperm.xlu0 %1857, %v1831
      %v1859 = vpop.permute.xlu0 %1858
      %1861 = vset.pattern.permute.xlu0 0
      %1862 = vperm.xlu0 %1861, %v1832
      %v1863 = vpop.permute.xlu0 %1862
      %1865 = vset.pattern.permute.xlu0 0
      %1866 = vperm.xlu0 %1865, %v1833
      %v1867 = vpop.permute.xlu0 %1866
      %1869 = vset.pattern.permute.xlu0 0
      %1870 = vperm.xlu0 %1869, %v1834
      %v1871 = vpop.permute.xlu0 %1870
      %1873 = vset.pattern.permute.xlu0 0
      %1874 = vperm.xlu0 %1873, %v1835
      %v1875 = vpop.permute.xlu0 %1874
      %1877 = vset.pattern.permute.xlu0 0
      %1878 = vperm.xlu0 %1877, %v1836
      %v1879 = vpop.permute.xlu0 %1878
      %1881 = vset.pattern.permute.xlu0 0
      %1882 = vperm.xlu0 %1881, %v1837
      %v1883 = vpop.permute.xlu0 %1882
      %1885 = vset.pattern.permute.xlu0 0
      %1886 = vperm.xlu0 %1885, %v1838
      %v1887 = vpop.permute.xlu0 %1886
      %1889 = vset.pattern.permute.xlu0 0
      %1890 = vperm.xlu0 %1889, %v1839
      %v1891 = vpop.permute.xlu0 %1890
      %1893 = vset.pattern.permute.xlu0 0
      %1894 = vperm.xlu0 %1893, %v1840
      %v1895 = vpop.permute.xlu0 %1894
      %1897 = vset.pattern.permute.xlu0 0
      %1898 = vperm.xlu0 %1897, %v1841
      %v1899 = vpop.permute.xlu0 %1898
      %1901 = vset.pattern.permute.xlu0 0
      %1902 = vperm.xlu0 %1901, %v1842
      %v1903 = vpop.permute.xlu0 %1902
      %1905 = vset.pattern.permute.xlu0 0
      %1906 = vperm.xlu0 %1905, %v1843
      %v1907 = vpop.permute.xlu0 %1906
      %v1925 = vunpack.c.l.s4 839922192
      %v1926 = vunpack.c.0.s8 %v1925
      %v1927 = vlaneseq
      %v1928 = vshrl.u32 %v1927, 7
      %v1929 = vsub.s32 %v1926, %v1928
      %v1930 = vrot.slane %v1847, %v1929
      %v1932 = vunpack.c.l.s4 1985246804
      %v1933 = vunpack.c.0.s8 %v1932
      %v1934 = vlaneseq
      %v1935 = vshrl.u32 %v1934, 7
      %v1936 = vsub.s32 %v1933, %v1935
      %v1937 = vrot.slane %v1847, %v1936
      %v1939 = vunpack.c.l.s4 839922192
      %v1940 = vunpack.c.0.s8 %v1939
      %v1941 = vlaneseq
      %v1942 = vshrl.u32 %v1941, 7
      %v1943 = vsub.s32 %v1940, %v1942
      %v1944 = vrot.slane %v1851, %v1943
      %v1946 = vunpack.c.l.s4 1985246804
      %v1947 = vunpack.c.0.s8 %v1946
      %v1948 = vlaneseq
      %v1949 = vshrl.u32 %v1948, 7
      %v1950 = vsub.s32 %v1947, %v1949
      %v1951 = vrot.slane %v1851, %v1950
      %v1953 = vunpack.c.l.s4 839922192
      %v1954 = vunpack.c.0.s8 %v1953
      %v1955 = vlaneseq
      %v1956 = vshrl.u32 %v1955, 7
      %v1957 = vsub.s32 %v1954, %v1956
      %v1958 = vrot.slane %v1855, %v1957
      %v1960 = vunpack.c.l.s4 1985246804
      %v1961 = vunpack.c.0.s8 %v1960
      %v1962 = vlaneseq
      %v1963 = vshrl.u32 %v1962, 7
      %v1964 = vsub.s32 %v1961, %v1963
      %v1965 = vrot.slane %v1855, %v1964
      %v1967 = vunpack.c.l.s4 839922192
      %v1968 = vunpack.c.0.s8 %v1967
      %v1969 = vlaneseq
      %v1970 = vshrl.u32 %v1969, 7
      %v1971 = vsub.s32 %v1968, %v1970
      %v1972 = vrot.slane %v1859, %v1971
      %v1974 = vunpack.c.l.s4 1985246804
      %v1975 = vunpack.c.0.s8 %v1974
      %v1976 = vlaneseq
      %v1977 = vshrl.u32 %v1976, 7
      %v1978 = vsub.s32 %v1975, %v1977
      %v1979 = vrot.slane %v1859, %v1978
      %v1981 = vunpack.c.l.s4 839922192
      %v1982 = vunpack.c.0.s8 %v1981
      %v1983 = vlaneseq
      %v1984 = vshrl.u32 %v1983, 7
      %v1985 = vsub.s32 %v1982, %v1984
      %v1986 = vrot.slane %v1863, %v1985
      %v1988 = vunpack.c.l.s4 1985246804
      %v1989 = vunpack.c.0.s8 %v1988
      %v1990 = vlaneseq
      %v1991 = vshrl.u32 %v1990, 7
      %v1992 = vsub.s32 %v1989, %v1991
      %v1993 = vrot.slane %v1863, %v1992
      %v1995 = vunpack.c.l.s4 839922192
      %v1996 = vunpack.c.0.s8 %v1995
      %v1997 = vlaneseq
      %v1998 = vshrl.u32 %v1997, 7
      %v1999 = vsub.s32 %v1996, %v1998
      %v2000 = vrot.slane %v1867, %v1999
      %v2002 = vunpack.c.l.s4 1985246804
      %v2003 = vunpack.c.0.s8 %v2002
      %v2004 = vlaneseq
      %v2005 = vshrl.u32 %v2004, 7
      %v2006 = vsub.s32 %v2003, %v2005
      %v2007 = vrot.slane %v1867, %v2006
      %v2009 = vunpack.c.l.s4 839922192
      %v2010 = vunpack.c.0.s8 %v2009
      %v2011 = vlaneseq
      %v2012 = vshrl.u32 %v2011, 7
      %v2013 = vsub.s32 %v2010, %v2012
      %v2014 = vrot.slane %v1871, %v2013
      %v2016 = vunpack.c.l.s4 1985246804
      %v2017 = vunpack.c.0.s8 %v2016
      %v2018 = vlaneseq
      %v2019 = vshrl.u32 %v2018, 7
      %v2020 = vsub.s32 %v2017, %v2019
      %v2021 = vrot.slane %v1871, %v2020
      %v2023 = vunpack.c.l.s4 839922192
      %v2024 = vunpack.c.0.s8 %v2023
      %v2025 = vlaneseq
      %v2026 = vshrl.u32 %v2025, 7
      %v2027 = vsub.s32 %v2024, %v2026
      %v2028 = vrot.slane %v1875, %v2027
      %v2030 = vunpack.c.l.s4 1985246804
      %v2031 = vunpack.c.0.s8 %v2030
      %v2032 = vlaneseq
      %v2033 = vshrl.u32 %v2032, 7
      %v2034 = vsub.s32 %v2031, %v2033
      %v2035 = vrot.slane %v1875, %v2034
      %v2037 = vunpack.c.l.s4 839922192
      %v2038 = vunpack.c.0.s8 %v2037
      %v2039 = vlaneseq
      %v2040 = vshrl.u32 %v2039, 7
      %v2041 = vsub.s32 %v2038, %v2040
      %v2042 = vrot.slane %v1879, %v2041
      %v2044 = vunpack.c.l.s4 1985246804
      %v2045 = vunpack.c.0.s8 %v2044
      %v2046 = vlaneseq
      %v2047 = vshrl.u32 %v2046, 7
      %v2048 = vsub.s32 %v2045, %v2047
      %v2049 = vrot.slane %v1879, %v2048
      %v2051 = vunpack.c.l.s4 839922192
      %v2052 = vunpack.c.0.s8 %v2051
      %v2053 = vlaneseq
      %v2054 = vshrl.u32 %v2053, 7
      %v2055 = vsub.s32 %v2052, %v2054
      %v2056 = vrot.slane %v1883, %v2055
      %v2058 = vunpack.c.l.s4 1985246804
      %v2059 = vunpack.c.0.s8 %v2058
      %v2060 = vlaneseq
      %v2061 = vshrl.u32 %v2060, 7
      %v2062 = vsub.s32 %v2059, %v2061
      %v2063 = vrot.slane %v1883, %v2062
      %v2065 = vunpack.c.l.s4 839922192
      %v2066 = vunpack.c.0.s8 %v2065
      %v2067 = vlaneseq
      %v2068 = vshrl.u32 %v2067, 7
      %v2069 = vsub.s32 %v2066, %v2068
      %v2070 = vrot.slane %v1887, %v2069
      %v2072 = vunpack.c.l.s4 1985246804
      %v2073 = vunpack.c.0.s8 %v2072
      %v2074 = vlaneseq
      %v2075 = vshrl.u32 %v2074, 7
      %v2076 = vsub.s32 %v2073, %v2075
      %v2077 = vrot.slane %v1887, %v2076
      %v2079 = vunpack.c.l.s4 839922192
      %v2080 = vunpack.c.0.s8 %v2079
      %v2081 = vlaneseq
      %v2082 = vshrl.u32 %v2081, 7
      %v2083 = vsub.s32 %v2080, %v2082
      %v2084 = vrot.slane %v1891, %v2083
      %v2086 = vunpack.c.l.s4 1985246804
      %v2087 = vunpack.c.0.s8 %v2086
      %v2088 = vlaneseq
      %v2089 = vshrl.u32 %v2088, 7
      %v2090 = vsub.s32 %v2087, %v2089
      %v2091 = vrot.slane %v1891, %v2090
      %v2093 = vunpack.c.l.s4 839922192
      %v2094 = vunpack.c.0.s8 %v2093
      %v2095 = vlaneseq
      %v2096 = vshrl.u32 %v2095, 7
      %v2097 = vsub.s32 %v2094, %v2096
      %v2098 = vrot.slane %v1895, %v2097
      %v2100 = vunpack.c.l.s4 1985246804
      %v2101 = vunpack.c.0.s8 %v2100
      %v2102 = vlaneseq
      %v2103 = vshrl.u32 %v2102, 7
      %v2104 = vsub.s32 %v2101, %v2103
      %v2105 = vrot.slane %v1895, %v2104
      %v2107 = vunpack.c.l.s4 839922192
      %v2108 = vunpack.c.0.s8 %v2107
      %v2109 = vlaneseq
      %v2110 = vshrl.u32 %v2109, 7
      %v2111 = vsub.s32 %v2108, %v2110
      %v2112 = vrot.slane %v1899, %v2111
      %v2114 = vunpack.c.l.s4 1985246804
      %v2115 = vunpack.c.0.s8 %v2114
      %v2116 = vlaneseq
      %v2117 = vshrl.u32 %v2116, 7
      %v2118 = vsub.s32 %v2115, %v2117
      %v2119 = vrot.slane %v1899, %v2118
      %v2121 = vunpack.c.l.s4 839922192
      %v2122 = vunpack.c.0.s8 %v2121
      %v2123 = vlaneseq
      %v2124 = vshrl.u32 %v2123, 7
      %v2125 = vsub.s32 %v2122, %v2124
      %v2126 = vrot.slane %v1903, %v2125
      %v2128 = vunpack.c.l.s4 1985246804
      %v2129 = vunpack.c.0.s8 %v2128
      %v2130 = vlaneseq
      %v2131 = vshrl.u32 %v2130, 7
      %v2132 = vsub.s32 %v2129, %v2131
      %v2133 = vrot.slane %v1903, %v2132
      %v2135 = vunpack.c.l.s4 839922192
      %v2136 = vunpack.c.0.s8 %v2135
      %v2137 = vlaneseq
      %v2138 = vshrl.u32 %v2137, 7
      %v2139 = vsub.s32 %v2136, %v2138
      %v2140 = vrot.slane %v1907, %v2139
      %v2142 = vunpack.c.l.s4 1985246804
      %v2143 = vunpack.c.0.s8 %v2142
      %v2144 = vlaneseq
      %v2145 = vshrl.u32 %v2144, 7
      %v2146 = vsub.s32 %v2143, %v2145
      %v2147 = vrot.slane %v1907, %v2146
      %v2180 = vmul.bf16 %v348, %v1930
      %v2181 = vmul.bf16 %v349, %v1937
      %v2182 = vmul.bf16 %v350, %v1944
      %v2183 = vmul.bf16 %v351, %v1951
      %v2184 = vmul.bf16 %v352, %v1958
      %v2185 = vmul.bf16 %v353, %v1965
      %v2186 = vmul.bf16 %v354, %v1972
      %v2187 = vmul.bf16 %v355, %v1979
      %v2188 = vmul.bf16 %v356, %v1986
      %v2189 = vmul.bf16 %v357, %v1993
      %v2190 = vmul.bf16 %v358, %v2000
      %v2191 = vmul.bf16 %v359, %v2007
      %v2192 = vmul.bf16 %v360, %v2014
      %v2193 = vmul.bf16 %v361, %v2021
      %v2194 = vmul.bf16 %v362, %v2028
      %v2195 = vmul.bf16 %v363, %v2035
      %v2196 = vmul.bf16 %v364, %v2042
      %v2197 = vmul.bf16 %v365, %v2049
      %v2198 = vmul.bf16 %v366, %v2056
      %v2199 = vmul.bf16 %v367, %v2063
      %v2200 = vmul.bf16 %v368, %v2070
      %v2201 = vmul.bf16 %v369, %v2077
      %v2202 = vmul.bf16 %v370, %v2084
      %v2203 = vmul.bf16 %v371, %v2091
      %v2204 = vmul.bf16 %v372, %v2098
      %v2205 = vmul.bf16 %v373, %v2105
      %v2206 = vmul.bf16 %v374, %v2112
      %v2207 = vmul.bf16 %v375, %v2119
      %v2208 = vmul.bf16 %v376, %v2126
      %v2209 = vmul.bf16 %v377, %v2133
      %v2210 = vmul.bf16 %v378, %v2140
      %v2211 = vmul.bf16 %v379, %v2147
      %v2212 = vld [vmem:[%s4 + $0x10] sm:$0xf]
      %v2213 = vld [vmem:[%s4 + $0x14] sm:$0xf]
      %v2214 = vld [vmem:[%s4 + $0x18] sm:$0xf]
      %v2215 = vld [vmem:[%s4 + $0x1c] sm:$0xf]
      %v2248 = vunpack.c.l.b16 %v2180
      %v2249 = vunpack.c.l.b16 %v2181
      %v2250 = vunpack.c.l.b16 %v2182
      %v2251 = vunpack.c.l.b16 %v2183
      %v2252 = vunpack.c.l.b16 %v2184
      %v2253 = vunpack.c.l.b16 %v2185
      %v2254 = vunpack.c.l.b16 %v2186
      %v2255 = vunpack.c.l.b16 %v2187
      %v2256 = vunpack.c.l.b16 %v2188
      %v2257 = vunpack.c.l.b16 %v2189
      %v2258 = vunpack.c.l.b16 %v2190
      %v2259 = vunpack.c.l.b16 %v2191
      %v2260 = vunpack.c.l.b16 %v2192
      %v2261 = vunpack.c.l.b16 %v2193
      %v2262 = vunpack.c.l.b16 %v2194
      %v2263 = vunpack.c.l.b16 %v2195
      %v2264 = vunpack.c.l.b16 %v2196
      %v2265 = vunpack.c.l.b16 %v2197
      %v2266 = vunpack.c.l.b16 %v2198
      %v2267 = vunpack.c.l.b16 %v2199
      %v2268 = vunpack.c.l.b16 %v2200
      %v2269 = vunpack.c.l.b16 %v2201
      %v2270 = vunpack.c.l.b16 %v2202
      %v2271 = vunpack.c.l.b16 %v2203
      %v2272 = vunpack.c.l.b16 %v2204
      %v2273 = vunpack.c.l.b16 %v2205
      %v2274 = vunpack.c.l.b16 %v2206
      %v2275 = vunpack.c.l.b16 %v2207
      %v2276 = vunpack.c.l.b16 %v2208
      %v2277 = vunpack.c.l.b16 %v2209
      %v2278 = vunpack.c.l.b16 %v2210
      %v2279 = vunpack.c.l.b16 %v2211
      %v2280 = vpack.c.b16 %v2249, %v2248
      %v2281 = vpack.c.b16 %v2251, %v2250
      %v2282 = vpack.c.b16 %v2253, %v2252
      %v2283 = vpack.c.b16 %v2255, %v2254
      %v2284 = vpack.c.b16 %v2257, %v2256
      %v2285 = vpack.c.b16 %v2259, %v2258
      %v2286 = vpack.c.b16 %v2261, %v2260
      %v2287 = vpack.c.b16 %v2263, %v2262
      %v2288 = vpack.c.b16 %v2265, %v2264
      %v2289 = vpack.c.b16 %v2267, %v2266
      %v2290 = vpack.c.b16 %v2269, %v2268
      %v2291 = vpack.c.b16 %v2271, %v2270
      %v2292 = vpack.c.b16 %v2273, %v2272
      %v2293 = vpack.c.b16 %v2275, %v2274
      %v2294 = vpack.c.b16 %v2277, %v2276
      %v2295 = vpack.c.b16 %v2279, %v2278
      %v2300 = vunpack.c.l.b16 %v2212
      %v2301 = vunpack.c.l.b16 %v2213
      %v2302 = vunpack.c.l.b16 %v2214
      %v2303 = vunpack.c.l.b16 %v2215
      %v2304 = vpack.c.b16 %v2301, %v2300
      %v2305 = vpack.c.b16 %v2303, %v2302
      %v2309 = vsel %vm989, %v2280, 0
      %v2312 = vsel %vm989, %v2281, 0
      %v2315 = vsel %vm989, %v2282, 0
      %v2318 = vsel %vm989, %v2283, 0
      %v2321 = vsel %vm989, %v2284, 0
      %v2324 = vsel %vm989, %v2285, 0
      %v2327 = vsel %vm989, %v2286, 0
      %v2330 = vsel %vm989, %v2287, 0
      %v2333 = vsel %vm989, %v2288, 0
      %v2336 = vsel %vm989, %v2289, 0
      %v2339 = vsel %vm989, %v2290, 0
      %v2342 = vsel %vm989, %v2291, 0
      %v2345 = vsel %vm989, %v2292, 0
      %v2348 = vsel %vm989, %v2293, 0
      %v2351 = vsel %vm989, %v2294, 0
      %v2354 = vsel %vm989, %v2295, 0
      %2356 = vmatprep.subr.bf16.mxu0 0
      %2357 = vmatpush1.bf16.msra.mxu0 %v2304
      %2358 = vmatprep.subr.bf16.mxu0 0
      %2359 = vmatpush1.bf16.msra.mxu0 %v2305
      %2360 = vmatprep.subr.bf16.mxu0 0
      %2361 = vmatpush1.bf16.msra.mxu0 0
      %2362 = vmatprep.subr.bf16.mxu0 0
      %2363 = vmatpush1.bf16.msra.mxu0 0
      %2364 = vmatprep.subr.bf16.mxu0 0
      %2365 = vmatpush1.bf16.msra.mxu0 0
      %2366 = vmatprep.subr.bf16.mxu0 0
      %2367 = vmatpush1.bf16.msra.mxu0 0
      %2368 = vmatprep.subr.bf16.mxu0 0
      %2369 = vmatpush1.bf16.msra.mxu0 0
      %2370 = vmatprep.subr.bf16.mxu0 0
      %2371 = vmatpush1.bf16.msra.mxu0 0
      %2372 = vmatprep.subr.bf16.mxu0 0
      %2373 = vmatpush1.bf16.msra.mxu0 0
      %2374 = vmatprep.subr.bf16.mxu0 0
      %2375 = vmatpush1.bf16.msra.mxu0 0
      %2376 = vmatprep.subr.bf16.mxu0 0
      %2377 = vmatpush1.bf16.msra.mxu0 0
      %2378 = vmatprep.subr.bf16.mxu0 0
      %2379 = vmatpush1.bf16.msra.mxu0 0
      %2380 = vmatprep.subr.bf16.mxu0 0
      %2381 = vmatpush1.bf16.msra.mxu0 0
      %2382 = vmatprep.subr.bf16.mxu0 0
      %2383 = vmatpush1.bf16.msra.mxu0 0
      %2384 = vmatprep.subr.bf16.mxu0 0
      %2385 = vmatpush1.bf16.msra.mxu0 0
      %2386 = vmatprep.subr.bf16.mxu0 0
      %2387 = vmatpush1.bf16.msra.mxu0 0
      %2388 = vmatprep.mubr.bf16.mxu0 0
      %2389 = vmatmul.mubr.bf16.gmra.mrb[0].mxu0 %v2309
      %v2390 = vpop.f32.mrb[0].mxu0
      %v2391 = vadd.f32 0.0, %v2390
      %v2392 = vpop.f32.mrb[0].mxu0
      %v2393 = vpop.f32.mrb[0].mxu0
      %v2394 = vadd.f32 0.0, %v2393
      %v2395 = vpop.f32.mrb[0].mxu0
      %2396 = vmatprep.mubr.bf16.mxu0 0
      %2397 = vmatmul.mubr.bf16.gmra.mrb[0].mxu0 %v2312
      %v2398 = vpop.f32.mrb[0].mxu0
      %v2399 = vadd.f32 0.0, %v2398
      %v2400 = vpop.f32.mrb[0].mxu0
      %v2401 = vpop.f32.mrb[0].mxu0
      %v2402 = vadd.f32 0.0, %v2401
      %v2403 = vpop.f32.mrb[0].mxu0
      %2404 = vmatprep.mubr.bf16.mxu0 0
      %2405 = vmatmul.mubr.bf16.gmra.mrb[0].mxu0 %v2315
      %v2406 = vpop.f32.mrb[0].mxu0
      %v2407 = vadd.f32 0.0, %v2406
      %v2408 = vpop.f32.mrb[0].mxu0
      %v2409 = vpop.f32.mrb[0].mxu0
      %v2410 = vadd.f32 0.0, %v2409
      %v2411 = vpop.f32.mrb[0].mxu0
      %2412 = vmatprep.mubr.bf16.mxu0 0
      %2413 = vmatmul.mubr.bf16.gmra.mrb[0].mxu0 %v2318
      %v2414 = vpop.f32.mrb[0].mxu0
      %v2415 = vadd.f32 0.0, %v2414
      %v2416 = vpop.f32.mrb[0].mxu0
      %v2417 = vpop.f32.mrb[0].mxu0
      %v2418 = vadd.f32 0.0, %v2417
      %v2419 = vpop.f32.mrb[0].mxu0
      %2420 = vmatprep.mubr.bf16.mxu0 0
      %2421 = vmatmul.mubr.bf16.gmra.mrb[0].mxu0 %v2321
      %v2422 = vpop.f32.mrb[0].mxu0
      %v2423 = vadd.f32 0.0, %v2422
      %v2424 = vpop.f32.mrb[0].mxu0
      %v2425 = vpop.f32.mrb[0].mxu0
      %v2426 = vadd.f32 0.0, %v2425
      %v2427 = vpop.f32.mrb[0].mxu0
      %2428 = vmatprep.mubr.bf16.mxu0 0
      %2429 = vmatmul.mubr.bf16.gmra.mrb[0].mxu0 %v2324
      %v2430 = vpop.f32.mrb[0].mxu0
      %v2431 = vadd.f32 0.0, %v2430
      %v2432 = vpop.f32.mrb[0].mxu0
      %v2433 = vpop.f32.mrb[0].mxu0
      %v2434 = vadd.f32 0.0, %v2433
      %v2435 = vpop.f32.mrb[0].mxu0
      %2436 = vmatprep.mubr.bf16.mxu0 0
      %2437 = vmatmul.mubr.bf16.gmra.mrb[0].mxu0 %v2327
      %v2438 = vpop.f32.mrb[0].mxu0
      %v2439 = vadd.f32 0.0, %v2438
      %v2440 = vpop.f32.mrb[0].mxu0
      %v2441 = vpop.f32.mrb[0].mxu0
      %v2442 = vadd.f32 0.0, %v2441
      %v2443 = vpop.f32.mrb[0].mxu0
      %2444 = vmatprep.mubr.bf16.mxu0 0
      %2445 = vmatmul.mubr.bf16.gmra.mrb[0].mxu0 %v2330
      %v2446 = vpop.f32.mrb[0].mxu0
      %v2447 = vadd.f32 0.0, %v2446
      %v2448 = vpop.f32.mrb[0].mxu0
      %v2449 = vpop.f32.mrb[0].mxu0
      %v2450 = vadd.f32 0.0, %v2449
      %v2451 = vpop.f32.mrb[0].mxu0
      %2452 = vmatprep.mubr.bf16.mxu0 0
      %2453 = vmatmul.mubr.bf16.gmra.mrb[0].mxu0 %v2333
      %v2454 = vpop.f32.mrb[0].mxu0
      %v2455 = vadd.f32 0.0, %v2454
      %v2456 = vpop.f32.mrb[0].mxu0
      %v2457 = vpop.f32.mrb[0].mxu0
      %v2458 = vadd.f32 0.0, %v2457
      %v2459 = vpop.f32.mrb[0].mxu0
      %2460 = vmatprep.mubr.bf16.mxu0 0
      %2461 = vmatmul.mubr.bf16.gmra.mrb[0].mxu0 %v2336
      %v2462 = vpop.f32.mrb[0].mxu0
      %v2463 = vadd.f32 0.0, %v2462
      %v2464 = vpop.f32.mrb[0].mxu0
      %v2465 = vpop.f32.mrb[0].mxu0
      %v2466 = vadd.f32 0.0, %v2465
      %v2467 = vpop.f32.mrb[0].mxu0
      %2468 = vmatprep.mubr.bf16.mxu0 0
      %2469 = vmatmul.mubr.bf16.gmra.mrb[0].mxu0 %v2339
      %v2470 = vpop.f32.mrb[0].mxu0
      %v2471 = vadd.f32 0.0, %v2470
      %v2472 = vpop.f32.mrb[0].mxu0
      %v2473 = vpop.f32.mrb[0].mxu0
      %v2474 = vadd.f32 0.0, %v2473
      %v2475 = vpop.f32.mrb[0].mxu0
      %2476 = vmatprep.mubr.bf16.mxu0 0
      %2477 = vmatmul.mubr.bf16.gmra.mrb[0].mxu0 %v2342
      %v2478 = vpop.f32.mrb[0].mxu0
      %v2479 = vadd.f32 0.0, %v2478
      %v2480 = vpop.f32.mrb[0].mxu0
      %v2481 = vpop.f32.mrb[0].mxu0
      %v2482 = vadd.f32 0.0, %v2481
      %v2483 = vpop.f32.mrb[0].mxu0
      %2484 = vmatprep.mubr.bf16.mxu0 0
      %2485 = vmatmul.mubr.bf16.gmra.mrb[0].mxu0 %v2345
      %v2486 = vpop.f32.mrb[0].mxu0
      %v2487 = vadd.f32 0.0, %v2486
      %v2488 = vpop.f32.mrb[0].mxu0
      %v2489 = vpop.f32.mrb[0].mxu0
      %v2490 = vadd.f32 0.0, %v2489
      %v2491 = vpop.f32.mrb[0].mxu0
      %2492 = vmatprep.mubr.bf16.mxu0 0
      %2493 = vmatmul.mubr.bf16.gmra.mrb[0].mxu0 %v2348
      %v2494 = vpop.f32.mrb[0].mxu0
      %v2495 = vadd.f32 0.0, %v2494
      %v2496 = vpop.f32.mrb[0].mxu0
      %v2497 = vpop.f32.mrb[0].mxu0
      %v2498 = vadd.f32 0.0, %v2497
      %v2499 = vpop.f32.mrb[0].mxu0
      %2500 = vmatprep.mubr.bf16.mxu0 0
      %2501 = vmatmul.mubr.bf16.gmra.mrb[0].mxu0 %v2351
      %v2502 = vpop.f32.mrb[0].mxu0
      %v2503 = vadd.f32 0.0, %v2502
      %v2504 = vpop.f32.mrb[0].mxu0
      %v2505 = vpop.f32.mrb[0].mxu0
      %v2506 = vadd.f32 0.0, %v2505
      %v2507 = vpop.f32.mrb[0].mxu0
      %2508 = vmatprep.mubr.bf16.mxu0 0
      %2509 = vmatmul.mubr.bf16.gmra.mrb[0].mxu0 %v2354
      %v2510 = vpop.f32.mrb[0].mxu0
      %v2511 = vadd.f32 0.0, %v2510
      %v2512 = vpop.f32.mrb[0].mxu0
      %v2513 = vpop.f32.mrb[0].mxu0
      %v2514 = vadd.f32 0.0, %v2513
      %v2515 = vpop.f32.mrb[0].mxu0
      %2516 = vdwg.mxu0
      %v2517 = vadd.f32 %v1700, %v2391
      %v2518 = vadd.f32 %v1701, %v2394
      %v2519 = vadd.f32 %v1702, %v2399
      %v2520 = vadd.f32 %v1703, %v2402
      %v2521 = vadd.f32 %v1704, %v2407
      %v2522 = vadd.f32 %v1705, %v2410
      %v2523 = vadd.f32 %v1706, %v2415
      %v2524 = vadd.f32 %v1707, %v2418
      %v2525 = vadd.f32 %v1708, %v2423
      %v2526 = vadd.f32 %v1709, %v2426
      %v2527 = vadd.f32 %v1710, %v2431
      %v2528 = vadd.f32 %v1711, %v2434
      %v2529 = vadd.f32 %v1712, %v2439
      %v2530 = vadd.f32 %v1713, %v2442
      %v2531 = vadd.f32 %v1714, %v2447
      %v2532 = vadd.f32 %v1715, %v2450
      %v2533 = vadd.f32 %v1716, %v2455
      %v2534 = vadd.f32 %v1717, %v2458
      %v2535 = vadd.f32 %v1718, %v2463
      %v2536 = vadd.f32 %v1719, %v2466
      %v2537 = vadd.f32 %v1720, %v2471
      %v2538 = vadd.f32 %v1721, %v2474
      %v2539 = vadd.f32 %v1722, %v2479
      %v2540 = vadd.f32 %v1723, %v2482
      %v2541 = vadd.f32 %v1724, %v2487
      %v2542 = vadd.f32 %v1725, %v2490
      %v2543 = vadd.f32 %v1726, %v2495
      %v2544 = vadd.f32 %v1727, %v2498
      %v2545 = vadd.f32 %v1728, %v2503
      %v2546 = vadd.f32 %v1729, %v2506
      %v2547 = vadd.f32 %v1730, %v2511
      %v2548 = vadd.f32 %v1731, %v2514
      %2550 = vset.pattern.permute.xlu0 0
      %2551 = vperm.xlu0 %2550, %v1796
      %v2552 = vpop.permute.xlu0 %2551
      %2555 = vset.pattern.permute.xlu0 0
      %2556 = vperm.xlu0 %2555, %v1797
      %v2557 = vpop.permute.xlu0 %2556
      %2560 = vset.pattern.permute.xlu0 0
      %2561 = vperm.xlu0 %2560, %v1798
      %v2562 = vpop.permute.xlu0 %2561
      %2565 = vset.pattern.permute.xlu0 0
      %2566 = vperm.xlu0 %2565, %v1799
      %v2567 = vpop.permute.xlu0 %2566
      %2570 = vset.pattern.permute.xlu0 0
      %2571 = vperm.xlu0 %2570, %v1800
      %v2572 = vpop.permute.xlu0 %2571
      %2575 = vset.pattern.permute.xlu0 0
      %2576 = vperm.xlu0 %2575, %v1801
      %v2577 = vpop.permute.xlu0 %2576
      %2580 = vset.pattern.permute.xlu0 0
      %2581 = vperm.xlu0 %2580, %v1802
      %v2582 = vpop.permute.xlu0 %2581
      %2585 = vset.pattern.permute.xlu0 0
      %2586 = vperm.xlu0 %2585, %v1803
      %v2587 = vpop.permute.xlu0 %2586
      %2590 = vset.pattern.permute.xlu0 0
      %2591 = vperm.xlu0 %2590, %v1804
      %v2592 = vpop.permute.xlu0 %2591
      %2595 = vset.pattern.permute.xlu0 0
      %2596 = vperm.xlu0 %2595, %v1805
      %v2597 = vpop.permute.xlu0 %2596
      %2600 = vset.pattern.permute.xlu0 0
      %2601 = vperm.xlu0 %2600, %v1806
      %v2602 = vpop.permute.xlu0 %2601
      %2605 = vset.pattern.permute.xlu0 0
      %2606 = vperm.xlu0 %2605, %v1807
      %v2607 = vpop.permute.xlu0 %2606
      %2610 = vset.pattern.permute.xlu0 0
      %2611 = vperm.xlu0 %2610, %v1808
      %v2612 = vpop.permute.xlu0 %2611
      %2615 = vset.pattern.permute.xlu0 0
      %2616 = vperm.xlu0 %2615, %v1809
      %v2617 = vpop.permute.xlu0 %2616
      %2620 = vset.pattern.permute.xlu0 0
      %2621 = vperm.xlu0 %2620, %v1810
      %v2622 = vpop.permute.xlu0 %2621
      %2625 = vset.pattern.permute.xlu0 0
      %2626 = vperm.xlu0 %2625, %v1811
      %v2627 = vpop.permute.xlu0 %2626
      %2630 = vset.pattern.permute.xlu0 0
      %2631 = vperm.xlu0 %2630, %v1812
      %v2632 = vpop.permute.xlu0 %2631
      %2635 = vset.pattern.permute.xlu0 0
      %2636 = vperm.xlu0 %2635, %v1813
      %v2637 = vpop.permute.xlu0 %2636
      %2640 = vset.pattern.permute.xlu0 0
      %2641 = vperm.xlu0 %2640, %v1814
      %v2642 = vpop.permute.xlu0 %2641
      %2645 = vset.pattern.permute.xlu0 0
      %2646 = vperm.xlu0 %2645, %v1815
      %v2647 = vpop.permute.xlu0 %2646
      %2650 = vset.pattern.permute.xlu0 0
      %2651 = vperm.xlu0 %2650, %v1816
      %v2652 = vpop.permute.xlu0 %2651
      %2655 = vset.pattern.permute.xlu0 0
      %2656 = vperm.xlu0 %2655, %v1817
      %v2657 = vpop.permute.xlu0 %2656
      %2660 = vset.pattern.permute.xlu0 0
      %2661 = vperm.xlu0 %2660, %v1818
      %v2662 = vpop.permute.xlu0 %2661
      %2665 = vset.pattern.permute.xlu0 0
      %2666 = vperm.xlu0 %2665, %v1819
      %v2667 = vpop.permute.xlu0 %2666
      %2670 = vset.pattern.permute.xlu0 0
      %2671 = vperm.xlu0 %2670, %v1820
      %v2672 = vpop.permute.xlu0 %2671
      %2675 = vset.pattern.permute.xlu0 0
      %2676 = vperm.xlu0 %2675, %v1821
      %v2677 = vpop.permute.xlu0 %2676
      %2680 = vset.pattern.permute.xlu0 0
      %2681 = vperm.xlu0 %2680, %v1822
      %v2682 = vpop.permute.xlu0 %2681
      %2685 = vset.pattern.permute.xlu0 0
      %2686 = vperm.xlu0 %2685, %v1823
      %v2687 = vpop.permute.xlu0 %2686
      %2690 = vset.pattern.permute.xlu0 0
      %2691 = vperm.xlu0 %2690, %v1824
      %v2692 = vpop.permute.xlu0 %2691
      %2695 = vset.pattern.permute.xlu0 0
      %2696 = vperm.xlu0 %2695, %v1825
      %v2697 = vpop.permute.xlu0 %2696
      %2700 = vset.pattern.permute.xlu0 0
      %2701 = vperm.xlu0 %2700, %v1826
      %v2702 = vpop.permute.xlu0 %2701
      %2705 = vset.pattern.permute.xlu0 0
      %2706 = vperm.xlu0 %2705, %v1827
      %v2707 = vpop.permute.xlu0 %2706
      %v2709 = vlaneseq
      %v2710 = vshrl.u32 %v2709, 7
      %v2711 = vsub.s32 1, %v2710
      %v2712 = vrot.slane %v412, %v2711
      %v2713 = vmul.f32 %v2552, %v2712
      %v2714 = vmul.f32 %v2557, %v2712
      %v2715 = vmul.f32 %v2562, %v2712
      %v2716 = vmul.f32 %v2567, %v2712
      %v2717 = vmul.f32 %v2572, %v2712
      %v2718 = vmul.f32 %v2577, %v2712
      %v2719 = vmul.f32 %v2582, %v2712
      %v2720 = vmul.f32 %v2587, %v2712
      %v2721 = vmul.f32 %v2592, %v2712
      %v2722 = vmul.f32 %v2597, %v2712
      %v2723 = vmul.f32 %v2602, %v2712
      %v2724 = vmul.f32 %v2607, %v2712
      %v2725 = vmul.f32 %v2612, %v2712
      %v2726 = vmul.f32 %v2617, %v2712
      %v2727 = vmul.f32 %v2622, %v2712
      %v2728 = vmul.f32 %v2627, %v2712
      %v2729 = vmul.f32 %v2632, %v2712
      %v2730 = vmul.f32 %v2637, %v2712
      %v2731 = vmul.f32 %v2642, %v2712
      %v2732 = vmul.f32 %v2647, %v2712
      %v2733 = vmul.f32 %v2652, %v2712
      %v2734 = vmul.f32 %v2657, %v2712
      %v2735 = vmul.f32 %v2662, %v2712
      %v2736 = vmul.f32 %v2667, %v2712
      %v2737 = vmul.f32 %v2672, %v2712
      %v2738 = vmul.f32 %v2677, %v2712
      %v2739 = vmul.f32 %v2682, %v2712
      %v2740 = vmul.f32 %v2687, %v2712
      %v2741 = vmul.f32 %v2692, %v2712
      %v2742 = vmul.f32 %v2697, %v2712
      %v2743 = vmul.f32 %v2702, %v2712
      %v2744 = vmul.f32 %v2707, %v2712
      %v2745 = vadd.f32 %v2517, %v2713
      %v2746 = vadd.f32 %v2518, %v2714
      %v2747 = vadd.f32 %v2519, %v2715
      %v2748 = vadd.f32 %v2520, %v2716
      %v2749 = vadd.f32 %v2521, %v2717
      %v2750 = vadd.f32 %v2522, %v2718
      %v2751 = vadd.f32 %v2523, %v2719
      %v2752 = vadd.f32 %v2524, %v2720
      %v2753 = vadd.f32 %v2525, %v2721
      %v2754 = vadd.f32 %v2526, %v2722
      %v2755 = vadd.f32 %v2527, %v2723
      %v2756 = vadd.f32 %v2528, %v2724
      %v2757 = vadd.f32 %v2529, %v2725
      %v2758 = vadd.f32 %v2530, %v2726
      %v2759 = vadd.f32 %v2531, %v2727
      %v2760 = vadd.f32 %v2532, %v2728
      %v2761 = vadd.f32 %v2533, %v2729
      %v2762 = vadd.f32 %v2534, %v2730
      %v2763 = vadd.f32 %v2535, %v2731
      %v2764 = vadd.f32 %v2536, %v2732
      %v2765 = vadd.f32 %v2537, %v2733
      %v2766 = vadd.f32 %v2538, %v2734
      %v2767 = vadd.f32 %v2539, %v2735
      %v2768 = vadd.f32 %v2540, %v2736
      %v2769 = vadd.f32 %v2541, %v2737
      %v2770 = vadd.f32 %v2542, %v2738
      %v2771 = vadd.f32 %v2543, %v2739
      %v2772 = vadd.f32 %v2544, %v2740
      %v2773 = vadd.f32 %v2545, %v2741
      %v2774 = vadd.f32 %v2546, %v2742
      %v2775 = vadd.f32 %v2547, %v2743
      %v2776 = vadd.f32 %v2548, %v2744
      %vm2777 = vcmp.eq.s32.totalorder %v380, 2
      %vm2778 = vcmp.eq.s32.totalorder %v381, 2
      %vm2779 = vcmp.eq.s32.totalorder %v382, 2
      %vm2780 = vcmp.eq.s32.totalorder %v383, 2
      %vm2781 = vcmp.eq.s32.totalorder %v384, 2
      %vm2782 = vcmp.eq.s32.totalorder %v385, 2
      %vm2783 = vcmp.eq.s32.totalorder %v386, 2
      %vm2784 = vcmp.eq.s32.totalorder %v387, 2
      %vm2785 = vcmp.eq.s32.totalorder %v388, 2
      %vm2786 = vcmp.eq.s32.totalorder %v389, 2
      %vm2787 = vcmp.eq.s32.totalorder %v390, 2
      %vm2788 = vcmp.eq.s32.totalorder %v391, 2
      %vm2789 = vcmp.eq.s32.totalorder %v392, 2
      %vm2790 = vcmp.eq.s32.totalorder %v393, 2
      %vm2791 = vcmp.eq.s32.totalorder %v394, 2
      %vm2792 = vcmp.eq.s32.totalorder %v395, 2
      %vm2793 = vcmp.eq.s32.totalorder %v396, 2
      %vm2794 = vcmp.eq.s32.totalorder %v397, 2
      %vm2795 = vcmp.eq.s32.totalorder %v398, 2
      %vm2796 = vcmp.eq.s32.totalorder %v399, 2
      %vm2797 = vcmp.eq.s32.totalorder %v400, 2
      %vm2798 = vcmp.eq.s32.totalorder %v401, 2
      %vm2799 = vcmp.eq.s32.totalorder %v402, 2
      %vm2800 = vcmp.eq.s32.totalorder %v403, 2
      %vm2801 = vcmp.eq.s32.totalorder %v404, 2
      %vm2802 = vcmp.eq.s32.totalorder %v405, 2
      %vm2803 = vcmp.eq.s32.totalorder %v406, 2
      %vm2804 = vcmp.eq.s32.totalorder %v407, 2
      %vm2805 = vcmp.eq.s32.totalorder %v408, 2
      %vm2806 = vcmp.eq.s32.totalorder %v409, 2
      %vm2807 = vcmp.eq.s32.totalorder %v410, 2
      %vm2808 = vcmp.eq.s32.totalorder %v411, 2
      %v2809 = vsel %vm2777, 1, 0
      %v2810 = vsel %vm2778, 1, 0
      %v2811 = vsel %vm2779, 1, 0
      %v2812 = vsel %vm2780, 1, 0
      %v2813 = vsel %vm2781, 1, 0
      %v2814 = vsel %vm2782, 1, 0
      %v2815 = vsel %vm2783, 1, 0
      %v2816 = vsel %vm2784, 1, 0
      %v2817 = vsel %vm2785, 1, 0
      %v2818 = vsel %vm2786, 1, 0
      %v2819 = vsel %vm2787, 1, 0
      %v2820 = vsel %vm2788, 1, 0
      %v2821 = vsel %vm2789, 1, 0
      %v2822 = vsel %vm2790, 1, 0
      %v2823 = vsel %vm2791, 1, 0
      %v2824 = vsel %vm2792, 1, 0
      %v2825 = vsel %vm2793, 1, 0
      %v2826 = vsel %vm2794, 1, 0
      %v2827 = vsel %vm2795, 1, 0
      %v2828 = vsel %vm2796, 1, 0
      %v2829 = vsel %vm2797, 1, 0
      %v2830 = vsel %vm2798, 1, 0
      %v2831 = vsel %vm2799, 1, 0
      %v2832 = vsel %vm2800, 1, 0
      %v2833 = vsel %vm2801, 1, 0
      %v2834 = vsel %vm2802, 1, 0
      %v2835 = vsel %vm2803, 1, 0
      %v2836 = vsel %vm2804, 1, 0
      %v2837 = vsel %vm2805, 1, 0
      %v2838 = vsel %vm2806, 1, 0
      %v2839 = vsel %vm2807, 1, 0
      %v2840 = vsel %vm2808, 1, 0
      %v2841 = vcvt.s32.f32 %v2809
      %v2842 = vcvt.s32.f32 %v2810
      %v2843 = vcvt.s32.f32 %v2811
      %v2844 = vcvt.s32.f32 %v2812
      %v2845 = vcvt.s32.f32 %v2813
      %v2846 = vcvt.s32.f32 %v2814
      %v2847 = vcvt.s32.f32 %v2815
      %v2848 = vcvt.s32.f32 %v2816
      %v2849 = vcvt.s32.f32 %v2817
      %v2850 = vcvt.s32.f32 %v2818
      %v2851 = vcvt.s32.f32 %v2819
      %v2852 = vcvt.s32.f32 %v2820
      %v2853 = vcvt.s32.f32 %v2821
      %v2854 = vcvt.s32.f32 %v2822
      %v2855 = vcvt.s32.f32 %v2823
      %v2856 = vcvt.s32.f32 %v2824
      %v2857 = vcvt.s32.f32 %v2825
      %v2858 = vcvt.s32.f32 %v2826
      %v2859 = vcvt.s32.f32 %v2827
      %v2860 = vcvt.s32.f32 %v2828
      %v2861 = vcvt.s32.f32 %v2829
      %v2862 = vcvt.s32.f32 %v2830
      %v2863 = vcvt.s32.f32 %v2831
      %v2864 = vcvt.s32.f32 %v2832
      %v2865 = vcvt.s32.f32 %v2833
      %v2866 = vcvt.s32.f32 %v2834
      %v2867 = vcvt.s32.f32 %v2835
      %v2868 = vcvt.s32.f32 %v2836
      %v2869 = vcvt.s32.f32 %v2837
      %v2870 = vcvt.s32.f32 %v2838
      %v2871 = vcvt.s32.f32 %v2839
      %v2872 = vcvt.s32.f32 %v2840
      %v2873 = vpack.c.bf16 %v2842, %v2841
      %v2874 = vpack.c.bf16 %v2844, %v2843
      %v2875 = vpack.c.bf16 %v2846, %v2845
      %v2876 = vpack.c.bf16 %v2848, %v2847
      %v2877 = vpack.c.bf16 %v2850, %v2849
      %v2878 = vpack.c.bf16 %v2852, %v2851
      %v2879 = vpack.c.bf16 %v2854, %v2853
      %v2880 = vpack.c.bf16 %v2856, %v2855
      %v2881 = vpack.c.bf16 %v2858, %v2857
      %v2882 = vpack.c.bf16 %v2860, %v2859
      %v2883 = vpack.c.bf16 %v2862, %v2861
      %v2884 = vpack.c.bf16 %v2864, %v2863
      %v2885 = vpack.c.bf16 %v2866, %v2865
      %v2886 = vpack.c.bf16 %v2868, %v2867
      %v2887 = vpack.c.bf16 %v2870, %v2869
      %v2888 = vpack.c.bf16 %v2872, %v2871
      %2890 = vset.pattern.permute.xlu0 0
      %2891 = vperm.xlu0 %2890, %v2873
      %v2892 = vpop.permute.xlu0 %2891
      %2894 = vset.pattern.permute.xlu0 0
      %2895 = vperm.xlu0 %2894, %v2874
      %v2896 = vpop.permute.xlu0 %2895
      %2898 = vset.pattern.permute.xlu0 0
      %2899 = vperm.xlu0 %2898, %v2875
      %v2900 = vpop.permute.xlu0 %2899
      %2902 = vset.pattern.permute.xlu0 0
      %2903 = vperm.xlu0 %2902, %v2876
      %v2904 = vpop.permute.xlu0 %2903
      %2906 = vset.pattern.permute.xlu0 0
      %2907 = vperm.xlu0 %2906, %v2877
      %v2908 = vpop.permute.xlu0 %2907
      %2910 = vset.pattern.permute.xlu0 0
      %2911 = vperm.xlu0 %2910, %v2878
      %v2912 = vpop.permute.xlu0 %2911
      %2914 = vset.pattern.permute.xlu0 0
      %2915 = vperm.xlu0 %2914, %v2879
      %v2916 = vpop.permute.xlu0 %2915
      %2918 = vset.pattern.permute.xlu0 0
      %2919 = vperm.xlu0 %2918, %v2880
      %v2920 = vpop.permute.xlu0 %2919
      %2922 = vset.pattern.permute.xlu0 0
      %2923 = vperm.xlu0 %2922, %v2881
      %v2924 = vpop.permute.xlu0 %2923
      %2926 = vset.pattern.permute.xlu0 0
      %2927 = vperm.xlu0 %2926, %v2882
      %v2928 = vpop.permute.xlu0 %2927
      %2930 = vset.pattern.permute.xlu0 0
      %2931 = vperm.xlu0 %2930, %v2883
      %v2932 = vpop.permute.xlu0 %2931
      %2934 = vset.pattern.permute.xlu0 0
      %2935 = vperm.xlu0 %2934, %v2884
      %v2936 = vpop.permute.xlu0 %2935
      %2938 = vset.pattern.permute.xlu0 0
      %2939 = vperm.xlu0 %2938, %v2885
      %v2940 = vpop.permute.xlu0 %2939
      %2942 = vset.pattern.permute.xlu0 0
      %2943 = vperm.xlu0 %2942, %v2886
      %v2944 = vpop.permute.xlu0 %2943
      %2946 = vset.pattern.permute.xlu0 0
      %2947 = vperm.xlu0 %2946, %v2887
      %v2948 = vpop.permute.xlu0 %2947
      %2950 = vset.pattern.permute.xlu0 0
      %2951 = vperm.xlu0 %2950, %v2888
      %v2952 = vpop.permute.xlu0 %2951
      %v2970 = vunpack.c.l.s4 839922192
      %v2971 = vunpack.c.0.s8 %v2970
      %v2972 = vlaneseq
      %v2973 = vshrl.u32 %v2972, 7
      %v2974 = vsub.s32 %v2971, %v2973
      %v2975 = vrot.slane %v2892, %v2974
      %v2977 = vunpack.c.l.s4 1985246804
      %v2978 = vunpack.c.0.s8 %v2977
      %v2979 = vlaneseq
      %v2980 = vshrl.u32 %v2979, 7
      %v2981 = vsub.s32 %v2978, %v2980
      %v2982 = vrot.slane %v2892, %v2981
      %v2984 = vunpack.c.l.s4 839922192
      %v2985 = vunpack.c.0.s8 %v2984
      %v2986 = vlaneseq
      %v2987 = vshrl.u32 %v2986, 7
      %v2988 = vsub.s32 %v2985, %v2987
      %v2989 = vrot.slane %v2896, %v2988
      %v2991 = vunpack.c.l.s4 1985246804
      %v2992 = vunpack.c.0.s8 %v2991
      %v2993 = vlaneseq
      %v2994 = vshrl.u32 %v2993, 7
      %v2995 = vsub.s32 %v2992, %v2994
      %v2996 = vrot.slane %v2896, %v2995
      %v2998 = vunpack.c.l.s4 839922192
      %v2999 = vunpack.c.0.s8 %v2998
      %v3000 = vlaneseq
      %v3001 = vshrl.u32 %v3000, 7
      %v3002 = vsub.s32 %v2999, %v3001
      %v3003 = vrot.slane %v2900, %v3002
      %v3005 = vunpack.c.l.s4 1985246804
      %v3006 = vunpack.c.0.s8 %v3005
      %v3007 = vlaneseq
      %v3008 = vshrl.u32 %v3007, 7
      %v3009 = vsub.s32 %v3006, %v3008
      %v3010 = vrot.slane %v2900, %v3009
      %v3012 = vunpack.c.l.s4 839922192
      %v3013 = vunpack.c.0.s8 %v3012
      %v3014 = vlaneseq
      %v3015 = vshrl.u32 %v3014, 7
      %v3016 = vsub.s32 %v3013, %v3015
      %v3017 = vrot.slane %v2904, %v3016
      %v3019 = vunpack.c.l.s4 1985246804
      %v3020 = vunpack.c.0.s8 %v3019
      %v3021 = vlaneseq
      %v3022 = vshrl.u32 %v3021, 7
      %v3023 = vsub.s32 %v3020, %v3022
      %v3024 = vrot.slane %v2904, %v3023
      %v3026 = vunpack.c.l.s4 839922192
      %v3027 = vunpack.c.0.s8 %v3026
      %v3028 = vlaneseq
      %v3029 = vshrl.u32 %v3028, 7
      %v3030 = vsub.s32 %v3027, %v3029
      %v3031 = vrot.slane %v2908, %v3030
      %v3033 = vunpack.c.l.s4 1985246804
      %v3034 = vunpack.c.0.s8 %v3033
      %v3035 = vlaneseq
      %v3036 = vshrl.u32 %v3035, 7
      %v3037 = vsub.s32 %v3034, %v3036
      %v3038 = vrot.slane %v2908, %v3037
      %v3040 = vunpack.c.l.s4 839922192
      %v3041 = vunpack.c.0.s8 %v3040
      %v3042 = vlaneseq
      %v3043 = vshrl.u32 %v3042, 7
      %v3044 = vsub.s32 %v3041, %v3043
      %v3045 = vrot.slane %v2912, %v3044
      %v3047 = vunpack.c.l.s4 1985246804
      %v3048 = vunpack.c.0.s8 %v3047
      %v3049 = vlaneseq
      %v3050 = vshrl.u32 %v3049, 7
      %v3051 = vsub.s32 %v3048, %v3050
      %v3052 = vrot.slane %v2912, %v3051
      %v3054 = vunpack.c.l.s4 839922192
      %v3055 = vunpack.c.0.s8 %v3054
      %v3056 = vlaneseq
      %v3057 = vshrl.u32 %v3056, 7
      %v3058 = vsub.s32 %v3055, %v3057
      %v3059 = vrot.slane %v2916, %v3058
      %v3061 = vunpack.c.l.s4 1985246804
      %v3062 = vunpack.c.0.s8 %v3061
      %v3063 = vlaneseq
      %v3064 = vshrl.u32 %v3063, 7
      %v3065 = vsub.s32 %v3062, %v3064
      %v3066 = vrot.slane %v2916, %v3065
      %v3068 = vunpack.c.l.s4 839922192
      %v3069 = vunpack.c.0.s8 %v3068
      %v3070 = vlaneseq
      %v3071 = vshrl.u32 %v3070, 7
      %v3072 = vsub.s32 %v3069, %v3071
      %v3073 = vrot.slane %v2920, %v3072
      %v3075 = vunpack.c.l.s4 1985246804
      %v3076 = vunpack.c.0.s8 %v3075
      %v3077 = vlaneseq
      %v3078 = vshrl.u32 %v3077, 7
      %v3079 = vsub.s32 %v3076, %v3078
      %v3080 = vrot.slane %v2920, %v3079
      %v3082 = vunpack.c.l.s4 839922192
      %v3083 = vunpack.c.0.s8 %v3082
      %v3084 = vlaneseq
      %v3085 = vshrl.u32 %v3084, 7
      %v3086 = vsub.s32 %v3083, %v3085
      %v3087 = vrot.slane %v2924, %v3086
      %v3089 = vunpack.c.l.s4 1985246804
      %v3090 = vunpack.c.0.s8 %v3089
      %v3091 = vlaneseq
      %v3092 = vshrl.u32 %v3091, 7
      %v3093 = vsub.s32 %v3090, %v3092
      %v3094 = vrot.slane %v2924, %v3093
      %v3096 = vunpack.c.l.s4 839922192
      %v3097 = vunpack.c.0.s8 %v3096
      %v3098 = vlaneseq
      %v3099 = vshrl.u32 %v3098, 7
      %v3100 = vsub.s32 %v3097, %v3099
      %v3101 = vrot.slane %v2928, %v3100
      %v3103 = vunpack.c.l.s4 1985246804
      %v3104 = vunpack.c.0.s8 %v3103
      %v3105 = vlaneseq
      %v3106 = vshrl.u32 %v3105, 7
      %v3107 = vsub.s32 %v3104, %v3106
      %v3108 = vrot.slane %v2928, %v3107
      %v3110 = vunpack.c.l.s4 839922192
      %v3111 = vunpack.c.0.s8 %v3110
      %v3112 = vlaneseq
      %v3113 = vshrl.u32 %v3112, 7
      %v3114 = vsub.s32 %v3111, %v3113
      %v3115 = vrot.slane %v2932, %v3114
      %v3117 = vunpack.c.l.s4 1985246804
      %v3118 = vunpack.c.0.s8 %v3117
      %v3119 = vlaneseq
      %v3120 = vshrl.u32 %v3119, 7
      %v3121 = vsub.s32 %v3118, %v3120
      %v3122 = vrot.slane %v2932, %v3121
      %v3124 = vunpack.c.l.s4 839922192
      %v3125 = vunpack.c.0.s8 %v3124
      %v3126 = vlaneseq
      %v3127 = vshrl.u32 %v3126, 7
      %v3128 = vsub.s32 %v3125, %v3127
      %v3129 = vrot.slane %v2936, %v3128
      %v3131 = vunpack.c.l.s4 1985246804
      %v3132 = vunpack.c.0.s8 %v3131
      %v3133 = vlaneseq
      %v3134 = vshrl.u32 %v3133, 7
      %v3135 = vsub.s32 %v3132, %v3134
      %v3136 = vrot.slane %v2936, %v3135
      %v3138 = vunpack.c.l.s4 839922192
      %v3139 = vunpack.c.0.s8 %v3138
      %v3140 = vlaneseq
      %v3141 = vshrl.u32 %v3140, 7
      %v3142 = vsub.s32 %v3139, %v3141
      %v3143 = vrot.slane %v2940, %v3142
      %v3145 = vunpack.c.l.s4 1985246804
      %v3146 = vunpack.c.0.s8 %v3145
      %v3147 = vlaneseq
      %v3148 = vshrl.u32 %v3147, 7
      %v3149 = vsub.s32 %v3146, %v3148
      %v3150 = vrot.slane %v2940, %v3149
      %v3152 = vunpack.c.l.s4 839922192
      %v3153 = vunpack.c.0.s8 %v3152
      %v3154 = vlaneseq
      %v3155 = vshrl.u32 %v3154, 7
      %v3156 = vsub.s32 %v3153, %v3155
      %v3157 = vrot.slane %v2944, %v3156
      %v3159 = vunpack.c.l.s4 1985246804
      %v3160 = vunpack.c.0.s8 %v3159
      %v3161 = vlaneseq
      %v3162 = vshrl.u32 %v3161, 7
      %v3163 = vsub.s32 %v3160, %v3162
      %v3164 = vrot.slane %v2944, %v3163
      %v3166 = vunpack.c.l.s4 839922192
      %v3167 = vunpack.c.0.s8 %v3166
      %v3168 = vlaneseq
      %v3169 = vshrl.u32 %v3168, 7
      %v3170 = vsub.s32 %v3167, %v3169
      %v3171 = vrot.slane %v2948, %v3170
      %v3173 = vunpack.c.l.s4 1985246804
      %v3174 = vunpack.c.0.s8 %v3173
      %v3175 = vlaneseq
      %v3176 = vshrl.u32 %v3175, 7
      %v3177 = vsub.s32 %v3174, %v3176
      %v3178 = vrot.slane %v2948, %v3177
      %v3180 = vunpack.c.l.s4 839922192
      %v3181 = vunpack.c.0.s8 %v3180
      %v3182 = vlaneseq
      %v3183 = vshrl.u32 %v3182, 7
      %v3184 = vsub.s32 %v3181, %v3183
      %v3185 = vrot.slane %v2952, %v3184
      %v3187 = vunpack.c.l.s4 1985246804
      %v3188 = vunpack.c.0.s8 %v3187
      %v3189 = vlaneseq
      %v3190 = vshrl.u32 %v3189, 7
      %v3191 = vsub.s32 %v3188, %v3190
      %v3192 = vrot.slane %v2952, %v3191
      %v3225 = vmul.bf16 %v348, %v2975
      %v3226 = vmul.bf16 %v349, %v2982
      %v3227 = vmul.bf16 %v350, %v2989
      %v3228 = vmul.bf16 %v351, %v2996
      %v3229 = vmul.bf16 %v352, %v3003
      %v3230 = vmul.bf16 %v353, %v3010
      %v3231 = vmul.bf16 %v354, %v3017
      %v3232 = vmul.bf16 %v355, %v3024
      %v3233 = vmul.bf16 %v356, %v3031
      %v3234 = vmul.bf16 %v357, %v3038
      %v3235 = vmul.bf16 %v358, %v3045
      %v3236 = vmul.bf16 %v359, %v3052
      %v3237 = vmul.bf16 %v360, %v3059
      %v3238 = vmul.bf16 %v361, %v3066
      %v3239 = vmul.bf16 %v362, %v3073
      %v3240 = vmul.bf16 %v363, %v3080
      %v3241 = vmul.bf16 %v364, %v3087
      %v3242 = vmul.bf16 %v365, %v3094
      %v3243 = vmul.bf16 %v366, %v3101
      %v3244 = vmul.bf16 %v367, %v3108
      %v3245 = vmul.bf16 %v368, %v3115
      %v3246 = vmul.bf16 %v369, %v3122
      %v3247 = vmul.bf16 %v370, %v3129
      %v3248 = vmul.bf16 %v371, %v3136
      %v3249 = vmul.bf16 %v372, %v3143
      %v3250 = vmul.bf16 %v373, %v3150
      %v3251 = vmul.bf16 %v374, %v3157
      %v3252 = vmul.bf16 %v375, %v3164
      %v3253 = vmul.bf16 %v376, %v3171
      %v3254 = vmul.bf16 %v377, %v3178
      %v3255 = vmul.bf16 %v378, %v3185
      %v3256 = vmul.bf16 %v379, %v3192
      %v3257 = vld [vmem:[%s4 + $0x20] sm:$0xf]
      %v3258 = vld [vmem:[%s4 + $0x24] sm:$0xf]
      %v3259 = vld [vmem:[%s4 + $0x28] sm:$0xf]
      %v3260 = vld [vmem:[%s4 + $0x2c] sm:$0xf]
      %v3293 = vunpack.c.l.b16 %v3225
      %v3294 = vunpack.c.l.b16 %v3226
      %v3295 = vunpack.c.l.b16 %v3227
      %v3296 = vunpack.c.l.b16 %v3228
      %v3297 = vunpack.c.l.b16 %v3229
      %v3298 = vunpack.c.l.b16 %v3230
      %v3299 = vunpack.c.l.b16 %v3231
      %v3300 = vunpack.c.l.b16 %v3232
      %v3301 = vunpack.c.l.b16 %v3233
      %v3302 = vunpack.c.l.b16 %v3234
      %v3303 = vunpack.c.l.b16 %v3235
      %v3304 = vunpack.c.l.b16 %v3236
      %v3305 = vunpack.c.l.b16 %v3237
      %v3306 = vunpack.c.l.b16 %v3238
      %v3307 = vunpack.c.l.b16 %v3239
      %v3308 = vunpack.c.l.b16 %v3240
      %v3309 = vunpack.c.l.b16 %v3241
      %v3310 = vunpack.c.l.b16 %v3242
      %v3311 = vunpack.c.l.b16 %v3243
      %v3312 = vunpack.c.l.b16 %v3244
      %v3313 = vunpack.c.l.b16 %v3245
      %v3314 = vunpack.c.l.b16 %v3246
      %v3315 = vunpack.c.l.b16 %v3247
      %v3316 = vunpack.c.l.b16 %v3248
      %v3317 = vunpack.c.l.b16 %v3249
      %v3318 = vunpack.c.l.b16 %v3250
      %v3319 = vunpack.c.l.b16 %v3251
      %v3320 = vunpack.c.l.b16 %v3252
      %v3321 = vunpack.c.l.b16 %v3253
      %v3322 = vunpack.c.l.b16 %v3254
      %v3323 = vunpack.c.l.b16 %v3255
      %v3324 = vunpack.c.l.b16 %v3256
      %v3325 = vpack.c.b16 %v3294, %v3293
      %v3326 = vpack.c.b16 %v3296, %v3295
      %v3327 = vpack.c.b16 %v3298, %v3297
      %v3328 = vpack.c.b16 %v3300, %v3299
      %v3329 = vpack.c.b16 %v3302, %v3301
      %v3330 = vpack.c.b16 %v3304, %v3303
      %v3331 = vpack.c.b16 %v3306, %v3305
      %v3332 = vpack.c.b16 %v3308, %v3307
      %v3333 = vpack.c.b16 %v3310, %v3309
      %v3334 = vpack.c.b16 %v3312, %v3311
      %v3335 = vpack.c.b16 %v3314, %v3313
      %v3336 = vpack.c.b16 %v3316, %v3315
      %v3337 = vpack.c.b16 %v3318, %v3317
      %v3338 = vpack.c.b16 %v3320, %v3319
      %v3339 = vpack.c.b16 %v3322, %v3321
      %v3340 = vpack.c.b16 %v3324, %v3323
      %v3345 = vunpack.c.l.b16 %v3257
      %v3346 = vunpack.c.l.b16 %v3258
      %v3347 = vunpack.c.l.b16 %v3259
      %v3348 = vunpack.c.l.b16 %v3260
      %v3349 = vpack.c.b16 %v3346, %v3345
      %v3350 = vpack.c.b16 %v3348, %v3347
      %v3354 = vsel %vm989, %v3325, 0
      %v3357 = vsel %vm989, %v3326, 0
      %v3360 = vsel %vm989, %v3327, 0
      %v3363 = vsel %vm989, %v3328, 0
      %v3366 = vsel %vm989, %v3329, 0
      %v3369 = vsel %vm989, %v3330, 0
      %v3372 = vsel %vm989, %v3331, 0
      %v3375 = vsel %vm989, %v3332, 0
      %v3378 = vsel %vm989, %v3333, 0
      %v3381 = vsel %vm989, %v3334, 0
      %v3384 = vsel %vm989, %v3335, 0
      %v3387 = vsel %vm989, %v3336, 0
      %v3390 = vsel %vm989, %v3337, 0
      %v3393 = vsel %vm989, %v3338, 0
      %v3396 = vsel %vm989, %v3339, 0
      %v3399 = vsel %vm989, %v3340, 0
      %3401 = vmatprep.subr.bf16.mxu0 0
      %3402 = vmatpush1.bf16.msra.mxu0 %v3349
      %3403 = vmatprep.subr.bf16.mxu0 0
      %3404 = vmatpush1.bf16.msra.mxu0 %v3350
      %3405 = vmatprep.subr.bf16.mxu0 0
      %3406 = vmatpush1.bf16.msra.mxu0 0
      %3407 = vmatprep.subr.bf16.mxu0 0
      %3408 = vmatpush1.bf16.msra.mxu0 0
      %3409 = vmatprep.subr.bf16.mxu0 0
      %3410 = vmatpush1.bf16.msra.mxu0 0
      %3411 = vmatprep.subr.bf16.mxu0 0
      %3412 = vmatpush1.bf16.msra.mxu0 0
      %3413 = vmatprep.subr.bf16.mxu0 0
      %3414 = vmatpush1.bf16.msra.mxu0 0
      %3415 = vmatprep.subr.bf16.mxu0 0
      %3416 = vmatpush1.bf16.msra.mxu0 0
      %3417 = vmatprep.subr.bf16.mxu0 0
      %3418 = vmatpush1.bf16.msra.mxu0 0
      %3419 = vmatprep.subr.bf16.mxu0 0
      %3420 = vmatpush1.bf16.msra.mxu0 0
      %3421 = vmatprep.subr.bf16.mxu0 0
      %3422 = vmatpush1.bf16.msra.mxu0 0
      %3423 = vmatprep.subr.bf16.mxu0 0
      %3424 = vmatpush1.bf16.msra.mxu0 0
      %3425 = vmatprep.subr.bf16.mxu0 0
      %3426 = vmatpush1.bf16.msra.mxu0 0
      %3427 = vmatprep.subr.bf16.mxu0 0
      %3428 = vmatpush1.bf16.msra.mxu0 0
      %3429 = vmatprep.subr.bf16.mxu0 0
      %3430 = vmatpush1.bf16.msra.mxu0 0
      %3431 = vmatprep.subr.bf16.mxu0 0
      %3432 = vmatpush1.bf16.msra.mxu0 0
      %3433 = vmatprep.mubr.bf16.mxu0 0
      %3434 = vmatmul.mubr.bf16.gmra.mrb[0].mxu0 %v3354
      %v3435 = vpop.f32.mrb[0].mxu0
      %v3436 = vadd.f32 0.0, %v3435
      %v3437 = vpop.f32.mrb[0].mxu0
      %v3438 = vpop.f32.mrb[0].mxu0
      %v3439 = vadd.f32 0.0, %v3438
      %v3440 = vpop.f32.mrb[0].mxu0
      %3441 = vmatprep.mubr.bf16.mxu0 0
      %3442 = vmatmul.mubr.bf16.gmra.mrb[0].mxu0 %v3357
      %v3443 = vpop.f32.mrb[0].mxu0
      %v3444 = vadd.f32 0.0, %v3443
      %v3445 = vpop.f32.mrb[0].mxu0
      %v3446 = vpop.f32.mrb[0].mxu0
      %v3447 = vadd.f32 0.0, %v3446
      %v3448 = vpop.f32.mrb[0].mxu0
      %3449 = vmatprep.mubr.bf16.mxu0 0
      %3450 = vmatmul.mubr.bf16.gmra.mrb[0].mxu0 %v3360
      %v3451 = vpop.f32.mrb[0].mxu0
      %v3452 = vadd.f32 0.0, %v3451
      %v3453 = vpop.f32.mrb[0].mxu0
      %v3454 = vpop.f32.mrb[0].mxu0
      %v3455 = vadd.f32 0.0, %v3454
      %v3456 = vpop.f32.mrb[0].mxu0
      %3457 = vmatprep.mubr.bf16.mxu0 0
      %3458 = vmatmul.mubr.bf16.gmra.mrb[0].mxu0 %v3363
      %v3459 = vpop.f32.mrb[0].mxu0
      %v3460 = vadd.f32 0.0, %v3459
      %v3461 = vpop.f32.mrb[0].mxu0
      %v3462 = vpop.f32.mrb[0].mxu0
      %v3463 = vadd.f32 0.0, %v3462
      %v3464 = vpop.f32.mrb[0].mxu0
      %3465 = vmatprep.mubr.bf16.mxu0 0
      %3466 = vmatmul.mubr.bf16.gmra.mrb[0].mxu0 %v3366
      %v3467 = vpop.f32.mrb[0].mxu0
      %v3468 = vadd.f32 0.0, %v3467
      %v3469 = vpop.f32.mrb[0].mxu0
      %v3470 = vpop.f32.mrb[0].mxu0
      %v3471 = vadd.f32 0.0, %v3470
      %v3472 = vpop.f32.mrb[0].mxu0
      %3473 = vmatprep.mubr.bf16.mxu0 0
      %3474 = vmatmul.mubr.bf16.gmra.mrb[0].mxu0 %v3369
      %v3475 = vpop.f32.mrb[0].mxu0
      %v3476 = vadd.f32 0.0, %v3475
      %v3477 = vpop.f32.mrb[0].mxu0
      %v3478 = vpop.f32.mrb[0].mxu0
      %v3479 = vadd.f32 0.0, %v3478
      %v3480 = vpop.f32.mrb[0].mxu0
      %3481 = vmatprep.mubr.bf16.mxu0 0
      %3482 = vmatmul.mubr.bf16.gmra.mrb[0].mxu0 %v3372
      %v3483 = vpop.f32.mrb[0].mxu0
      %v3484 = vadd.f32 0.0, %v3483
      %v3485 = vpop.f32.mrb[0].mxu0
      %v3486 = vpop.f32.mrb[0].mxu0
      %v3487 = vadd.f32 0.0, %v3486
      %v3488 = vpop.f32.mrb[0].mxu0
      %3489 = vmatprep.mubr.bf16.mxu0 0
      %3490 = vmatmul.mubr.bf16.gmra.mrb[0].mxu0 %v3375
      %v3491 = vpop.f32.mrb[0].mxu0
      %v3492 = vadd.f32 0.0, %v3491
      %v3493 = vpop.f32.mrb[0].mxu0
      %v3494 = vpop.f32.mrb[0].mxu0
      %v3495 = vadd.f32 0.0, %v3494
      %v3496 = vpop.f32.mrb[0].mxu0
      %3497 = vmatprep.mubr.bf16.mxu0 0
      %3498 = vmatmul.mubr.bf16.gmra.mrb[0].mxu0 %v3378
      %v3499 = vpop.f32.mrb[0].mxu0
      %v3500 = vadd.f32 0.0, %v3499
      %v3501 = vpop.f32.mrb[0].mxu0
      %v3502 = vpop.f32.mrb[0].mxu0
      %v3503 = vadd.f32 0.0, %v3502
      %v3504 = vpop.f32.mrb[0].mxu0
      %3505 = vmatprep.mubr.bf16.mxu0 0
      %3506 = vmatmul.mubr.bf16.gmra.mrb[0].mxu0 %v3381
      %v3507 = vpop.f32.mrb[0].mxu0
      %v3508 = vadd.f32 0.0, %v3507
      %v3509 = vpop.f32.mrb[0].mxu0
      %v3510 = vpop.f32.mrb[0].mxu0
      %v3511 = vadd.f32 0.0, %v3510
      %v3512 = vpop.f32.mrb[0].mxu0
      %3513 = vmatprep.mubr.bf16.mxu0 0
      %3514 = vmatmul.mubr.bf16.gmra.mrb[0].mxu0 %v3384
      %v3515 = vpop.f32.mrb[0].mxu0
      %v3516 = vadd.f32 0.0, %v3515
      %v3517 = vpop.f32.mrb[0].mxu0
      %v3518 = vpop.f32.mrb[0].mxu0
      %v3519 = vadd.f32 0.0, %v3518
      %v3520 = vpop.f32.mrb[0].mxu0
      %3521 = vmatprep.mubr.bf16.mxu0 0
      %3522 = vmatmul.mubr.bf16.gmra.mrb[0].mxu0 %v3387
      %v3523 = vpop.f32.mrb[0].mxu0
      %v3524 = vadd.f32 0.0, %v3523
      %v3525 = vpop.f32.mrb[0].mxu0
      %v3526 = vpop.f32.mrb[0].mxu0
      %v3527 = vadd.f32 0.0, %v3526
      %v3528 = vpop.f32.mrb[0].mxu0
      %3529 = vmatprep.mubr.bf16.mxu0 0
      %3530 = vmatmul.mubr.bf16.gmra.mrb[0].mxu0 %v3390
      %v3531 = vpop.f32.mrb[0].mxu0
      %v3532 = vadd.f32 0.0, %v3531
      %v3533 = vpop.f32.mrb[0].mxu0
      %v3534 = vpop.f32.mrb[0].mxu0
      %v3535 = vadd.f32 0.0, %v3534
      %v3536 = vpop.f32.mrb[0].mxu0
      %3537 = vmatprep.mubr.bf16.mxu0 0
      %3538 = vmatmul.mubr.bf16.gmra.mrb[0].mxu0 %v3393
      %v3539 = vpop.f32.mrb[0].mxu0
      %v3540 = vadd.f32 0.0, %v3539
      %v3541 = vpop.f32.mrb[0].mxu0
      %v3542 = vpop.f32.mrb[0].mxu0
      %v3543 = vadd.f32 0.0, %v3542
      %v3544 = vpop.f32.mrb[0].mxu0
      %3545 = vmatprep.mubr.bf16.mxu0 0
      %3546 = vmatmul.mubr.bf16.gmra.mrb[0].mxu0 %v3396
      %v3547 = vpop.f32.mrb[0].mxu0
      %v3548 = vadd.f32 0.0, %v3547
      %v3549 = vpop.f32.mrb[0].mxu0
      %v3550 = vpop.f32.mrb[0].mxu0
      %v3551 = vadd.f32 0.0, %v3550
      %v3552 = vpop.f32.mrb[0].mxu0
      %3553 = vmatprep.mubr.bf16.mxu0 0
      %3554 = vmatmul.mubr.bf16.gmra.mrb[0].mxu0 %v3399
      %v3555 = vpop.f32.mrb[0].mxu0
      %v3556 = vadd.f32 0.0, %v3555
      %v3557 = vpop.f32.mrb[0].mxu0
      %v3558 = vpop.f32.mrb[0].mxu0
      %v3559 = vadd.f32 0.0, %v3558
      %v3560 = vpop.f32.mrb[0].mxu0
      %3561 = vdwg.mxu0
      %v3562 = vadd.f32 %v2745, %v3436
      %v3563 = vadd.f32 %v2746, %v3439
      %v3564 = vadd.f32 %v2747, %v3444
      %v3565 = vadd.f32 %v2748, %v3447
      %v3566 = vadd.f32 %v2749, %v3452
      %v3567 = vadd.f32 %v2750, %v3455
      %v3568 = vadd.f32 %v2751, %v3460
      %v3569 = vadd.f32 %v2752, %v3463
      %v3570 = vadd.f32 %v2753, %v3468
      %v3571 = vadd.f32 %v2754, %v3471
      %v3572 = vadd.f32 %v2755, %v3476
      %v3573 = vadd.f32 %v2756, %v3479
      %v3574 = vadd.f32 %v2757, %v3484
      %v3575 = vadd.f32 %v2758, %v3487
      %v3576 = vadd.f32 %v2759, %v3492
      %v3577 = vadd.f32 %v2760, %v3495
      %v3578 = vadd.f32 %v2761, %v3500
      %v3579 = vadd.f32 %v2762, %v3503
      %v3580 = vadd.f32 %v2763, %v3508
      %v3581 = vadd.f32 %v2764, %v3511
      %v3582 = vadd.f32 %v2765, %v3516
      %v3583 = vadd.f32 %v2766, %v3519
      %v3584 = vadd.f32 %v2767, %v3524
      %v3585 = vadd.f32 %v2768, %v3527
      %v3586 = vadd.f32 %v2769, %v3532
      %v3587 = vadd.f32 %v2770, %v3535
      %v3588 = vadd.f32 %v2771, %v3540
      %v3589 = vadd.f32 %v2772, %v3543
      %v3590 = vadd.f32 %v2773, %v3548
      %v3591 = vadd.f32 %v2774, %v3551
      %v3592 = vadd.f32 %v2775, %v3556
      %v3593 = vadd.f32 %v2776, %v3559
      %3595 = vset.pattern.permute.xlu0 0
      %3596 = vperm.xlu0 %3595, %v2841
      %v3597 = vpop.permute.xlu0 %3596
      %3600 = vset.pattern.permute.xlu0 0
      %3601 = vperm.xlu0 %3600, %v2842
      %v3602 = vpop.permute.xlu0 %3601
      %3605 = vset.pattern.permute.xlu0 0
      %3606 = vperm.xlu0 %3605, %v2843
      %v3607 = vpop.permute.xlu0 %3606
      %3610 = vset.pattern.permute.xlu0 0
      %3611 = vperm.xlu0 %3610, %v2844
      %v3612 = vpop.permute.xlu0 %3611
      %3615 = vset.pattern.permute.xlu0 0
      %3616 = vperm.xlu0 %3615, %v2845
      %v3617 = vpop.permute.xlu0 %3616
      %3620 = vset.pattern.permute.xlu0 0
      %3621 = vperm.xlu0 %3620, %v2846
      %v3622 = vpop.permute.xlu0 %3621
      %3625 = vset.pattern.permute.xlu0 0
      %3626 = vperm.xlu0 %3625, %v2847
      %v3627 = vpop.permute.xlu0 %3626
      %3630 = vset.pattern.permute.xlu0 0
      %3631 = vperm.xlu0 %3630, %v2848
      %v3632 = vpop.permute.xlu0 %3631
      %3635 = vset.pattern.permute.xlu0 0
      %3636 = vperm.xlu0 %3635, %v2849
      %v3637 = vpop.permute.xlu0 %3636
      %3640 = vset.pattern.permute.xlu0 0
      %3641 = vperm.xlu0 %3640, %v2850
      %v3642 = vpop.permute.xlu0 %3641
      %3645 = vset.pattern.permute.xlu0 0
      %3646 = vperm.xlu0 %3645, %v2851
      %v3647 = vpop.permute.xlu0 %3646
      %3650 = vset.pattern.permute.xlu0 0
      %3651 = vperm.xlu0 %3650, %v2852
      %v3652 = vpop.permute.xlu0 %3651
      %3655 = vset.pattern.permute.xlu0 0
      %3656 = vperm.xlu0 %3655, %v2853
      %v3657 = vpop.permute.xlu0 %3656
      %3660 = vset.pattern.permute.xlu0 0
      %3661 = vperm.xlu0 %3660, %v2854
      %v3662 = vpop.permute.xlu0 %3661
      %3665 = vset.pattern.permute.xlu0 0
      %3666 = vperm.xlu0 %3665, %v2855
      %v3667 = vpop.permute.xlu0 %3666
      %3670 = vset.pattern.permute.xlu0 0
      %3671 = vperm.xlu0 %3670, %v2856
      %v3672 = vpop.permute.xlu0 %3671
      %3675 = vset.pattern.permute.xlu0 0
      %3676 = vperm.xlu0 %3675, %v2857
      %v3677 = vpop.permute.xlu0 %3676
      %3680 = vset.pattern.permute.xlu0 0
      %3681 = vperm.xlu0 %3680, %v2858
      %v3682 = vpop.permute.xlu0 %3681
      %3685 = vset.pattern.permute.xlu0 0
      %3686 = vperm.xlu0 %3685, %v2859
      %v3687 = vpop.permute.xlu0 %3686
      %3690 = vset.pattern.permute.xlu0 0
      %3691 = vperm.xlu0 %3690, %v2860
      %v3692 = vpop.permute.xlu0 %3691
      %3695 = vset.pattern.permute.xlu0 0
      %3696 = vperm.xlu0 %3695, %v2861
      %v3697 = vpop.permute.xlu0 %3696
      %3700 = vset.pattern.permute.xlu0 0
      %3701 = vperm.xlu0 %3700, %v2862
      %v3702 = vpop.permute.xlu0 %3701
      %3705 = vset.pattern.permute.xlu0 0
      %3706 = vperm.xlu0 %3705, %v2863
      %v3707 = vpop.permute.xlu0 %3706
      %3710 = vset.pattern.permute.xlu0 0
      %3711 = vperm.xlu0 %3710, %v2864
      %v3712 = vpop.permute.xlu0 %3711
      %3715 = vset.pattern.permute.xlu0 0
      %3716 = vperm.xlu0 %3715, %v2865
      %v3717 = vpop.permute.xlu0 %3716
      %3720 = vset.pattern.permute.xlu0 0
      %3721 = vperm.xlu0 %3720, %v2866
      %v3722 = vpop.permute.xlu0 %3721
      %3725 = vset.pattern.permute.xlu0 0
      %3726 = vperm.xlu0 %3725, %v2867
      %v3727 = vpop.permute.xlu0 %3726
      %3730 = vset.pattern.permute.xlu0 0
      %3731 = vperm.xlu0 %3730, %v2868
      %v3732 = vpop.permute.xlu0 %3731
      %3735 = vset.pattern.permute.xlu0 0
      %3736 = vperm.xlu0 %3735, %v2869
      %v3737 = vpop.permute.xlu0 %3736
      %3740 = vset.pattern.permute.xlu0 0
      %3741 = vperm.xlu0 %3740, %v2870
      %v3742 = vpop.permute.xlu0 %3741
      %3745 = vset.pattern.permute.xlu0 0
      %3746 = vperm.xlu0 %3745, %v2871
      %v3747 = vpop.permute.xlu0 %3746
      %3750 = vset.pattern.permute.xlu0 0
      %3751 = vperm.xlu0 %3750, %v2872
      %v3752 = vpop.permute.xlu0 %3751
      %v3754 = vlaneseq
      %v3755 = vshrl.u32 %v3754, 7
      %v3756 = vsub.s32 2, %v3755
      %v3757 = vrot.slane %v412, %v3756
      %v3758 = vmul.f32 %v3597, %v3757
      %v3759 = vmul.f32 %v3602, %v3757
      %v3760 = vmul.f32 %v3607, %v3757
      %v3761 = vmul.f32 %v3612, %v3757
      %v3762 = vmul.f32 %v3617, %v3757
      %v3763 = vmul.f32 %v3622, %v3757
      %v3764 = vmul.f32 %v3627, %v3757
      %v3765 = vmul.f32 %v3632, %v3757
      %v3766 = vmul.f32 %v3637, %v3757
      %v3767 = vmul.f32 %v3642, %v3757
      %v3768 = vmul.f32 %v3647, %v3757
      %v3769 = vmul.f32 %v3652, %v3757
      %v3770 = vmul.f32 %v3657, %v3757
      %v3771 = vmul.f32 %v3662, %v3757
      %v3772 = vmul.f32 %v3667, %v3757
      %v3773 = vmul.f32 %v3672, %v3757
      %v3774 = vmul.f32 %v3677, %v3757
      %v3775 = vmul.f32 %v3682, %v3757
      %v3776 = vmul.f32 %v3687, %v3757
      %v3777 = vmul.f32 %v3692, %v3757
      %v3778 = vmul.f32 %v3697, %v3757
      %v3779 = vmul.f32 %v3702, %v3757
      %v3780 = vmul.f32 %v3707, %v3757
      %v3781 = vmul.f32 %v3712, %v3757
      %v3782 = vmul.f32 %v3717, %v3757
      %v3783 = vmul.f32 %v3722, %v3757
      %v3784 = vmul.f32 %v3727, %v3757
      %v3785 = vmul.f32 %v3732, %v3757
      %v3786 = vmul.f32 %v3737, %v3757
      %v3787 = vmul.f32 %v3742, %v3757
      %v3788 = vmul.f32 %v3747, %v3757
      %v3789 = vmul.f32 %v3752, %v3757
      %v3790 = vadd.f32 %v3562, %v3758
      %v3791 = vadd.f32 %v3563, %v3759
      %v3792 = vadd.f32 %v3564, %v3760
      %v3793 = vadd.f32 %v3565, %v3761
      %v3794 = vadd.f32 %v3566, %v3762
      %v3795 = vadd.f32 %v3567, %v3763
      %v3796 = vadd.f32 %v3568, %v3764
      %v3797 = vadd.f32 %v3569, %v3765
      %v3798 = vadd.f32 %v3570, %v3766
      %v3799 = vadd.f32 %v3571, %v3767
      %v3800 = vadd.f32 %v3572, %v3768
      %v3801 = vadd.f32 %v3573, %v3769
      %v3802 = vadd.f32 %v3574, %v3770
      %v3803 = vadd.f32 %v3575, %v3771
      %v3804 = vadd.f32 %v3576, %v3772
      %v3805 = vadd.f32 %v3577, %v3773
      %v3806 = vadd.f32 %v3578, %v3774
      %v3807 = vadd.f32 %v3579, %v3775
      %v3808 = vadd.f32 %v3580, %v3776
      %v3809 = vadd.f32 %v3581, %v3777
      %v3810 = vadd.f32 %v3582, %v3778
      %v3811 = vadd.f32 %v3583, %v3779
      %v3812 = vadd.f32 %v3584, %v3780
      %v3813 = vadd.f32 %v3585, %v3781
      %v3814 = vadd.f32 %v3586, %v3782
      %v3815 = vadd.f32 %v3587, %v3783
      %v3816 = vadd.f32 %v3588, %v3784
      %v3817 = vadd.f32 %v3589, %v3785
      %v3818 = vadd.f32 %v3590, %v3786
      %v3819 = vadd.f32 %v3591, %v3787
      %v3820 = vadd.f32 %v3592, %v3788
      %v3821 = vadd.f32 %v3593, %v3789
      %v3822 = vmax.f32 %v3790, 0.0
      %v3823 = vmax.f32 %v3791, 0.0
      %v3824 = vmax.f32 %v3792, 0.0
      %v3825 = vmax.f32 %v3793, 0.0
      %v3826 = vmax.f32 %v3794, 0.0
      %v3827 = vmax.f32 %v3795, 0.0
      %v3828 = vmax.f32 %v3796, 0.0
      %v3829 = vmax.f32 %v3797, 0.0
      %v3830 = vmax.f32 %v3798, 0.0
      %v3831 = vmax.f32 %v3799, 0.0
      %v3832 = vmax.f32 %v3800, 0.0
      %v3833 = vmax.f32 %v3801, 0.0
      %v3834 = vmax.f32 %v3802, 0.0
      %v3835 = vmax.f32 %v3803, 0.0
      %v3836 = vmax.f32 %v3804, 0.0
      %v3837 = vmax.f32 %v3805, 0.0
      %v3838 = vmax.f32 %v3806, 0.0
      %v3839 = vmax.f32 %v3807, 0.0
      %v3840 = vmax.f32 %v3808, 0.0
      %v3841 = vmax.f32 %v3809, 0.0
      %v3842 = vmax.f32 %v3810, 0.0
      %v3843 = vmax.f32 %v3811, 0.0
      %v3844 = vmax.f32 %v3812, 0.0
      %v3845 = vmax.f32 %v3813, 0.0
      %v3846 = vmax.f32 %v3814, 0.0
      %v3847 = vmax.f32 %v3815, 0.0
      %v3848 = vmax.f32 %v3816, 0.0
      %v3849 = vmax.f32 %v3817, 0.0
      %v3850 = vmax.f32 %v3818, 0.0
      %v3851 = vmax.f32 %v3819, 0.0
      %v3852 = vmax.f32 %v3820, 0.0
      %v3853 = vmax.f32 %v3821, 0.0
      %v3854 = vpack.c.bf16 %v3823, %v3822
      %v3855 = vpack.c.bf16 %v3825, %v3824
      %v3856 = vpack.c.bf16 %v3827, %v3826
      %v3857 = vpack.c.bf16 %v3829, %v3828
      %v3858 = vpack.c.bf16 %v3831, %v3830
      %v3859 = vpack.c.bf16 %v3833, %v3832
      %v3860 = vpack.c.bf16 %v3835, %v3834
      %v3861 = vpack.c.bf16 %v3837, %v3836
      %v3862 = vpack.c.bf16 %v3839, %v3838
      %v3863 = vpack.c.bf16 %v3841, %v3840
      %v3864 = vpack.c.bf16 %v3843, %v3842
      %v3865 = vpack.c.bf16 %v3845, %v3844
      %v3866 = vpack.c.bf16 %v3847, %v3846
      %v3867 = vpack.c.bf16 %v3849, %v3848
      %v3868 = vpack.c.bf16 %v3851, %v3850
      %v3869 = vpack.c.bf16 %v3853, %v3852
      %v3886 = vunpack.c.l.b16 %v3854
      %v3887 = vunpack.c.h.b16 %v3854
      %v3888 = vunpack.c.l.b16 %v3855
      %v3889 = vunpack.c.h.b16 %v3855
      %v3890 = vunpack.c.l.b16 %v3856
      %v3891 = vunpack.c.h.b16 %v3856
      %v3892 = vunpack.c.l.b16 %v3857
      %v3893 = vunpack.c.h.b16 %v3857
      %v3894 = vunpack.c.l.b16 %v3858
      %v3895 = vunpack.c.h.b16 %v3858
      %v3896 = vunpack.c.l.b16 %v3859
      %v3897 = vunpack.c.h.b16 %v3859
      %v3898 = vunpack.c.l.b16 %v3860
      %v3899 = vunpack.c.h.b16 %v3860
      %v3900 = vunpack.c.l.b16 %v3861
      %v3901 = vunpack.c.h.b16 %v3861
      %v3902 = vunpack.c.l.b16 %v3862
      %v3903 = vunpack.c.h.b16 %v3862
      %v3904 = vunpack.c.l.b16 %v3863
      %v3905 = vunpack.c.h.b16 %v3863
      %v3906 = vunpack.c.l.b16 %v3864
      %v3907 = vunpack.c.h.b16 %v3864
      %v3908 = vunpack.c.l.b16 %v3865
      %v3909 = vunpack.c.h.b16 %v3865
      %v3910 = vunpack.c.l.b16 %v3866
      %v3911 = vunpack.c.h.b16 %v3866
      %v3912 = vunpack.c.l.b16 %v3867
      %v3913 = vunpack.c.h.b16 %v3867
      %v3914 = vunpack.c.l.b16 %v3868
      %v3915 = vunpack.c.h.b16 %v3868
      %v3916 = vunpack.c.l.b16 %v3869
      %v3917 = vunpack.c.h.b16 %v3869
      %v3918 = vpack.c.b16 %v3886, %v3886
      %v3919 = vpack.c.b16 %v3887, %v3887
      %v3920 = vpack.c.b16 %v3888, %v3888
      %v3921 = vpack.c.b16 %v3889, %v3889
      %v3922 = vpack.c.b16 %v3890, %v3890
      %v3923 = vpack.c.b16 %v3891, %v3891
      %v3924 = vpack.c.b16 %v3892, %v3892
      %v3925 = vpack.c.b16 %v3893, %v3893
      %v3926 = vpack.c.b16 %v3894, %v3894
      %v3927 = vpack.c.b16 %v3895, %v3895
      %v3928 = vpack.c.b16 %v3896, %v3896
      %v3929 = vpack.c.b16 %v3897, %v3897
      %v3930 = vpack.c.b16 %v3898, %v3898
      %v3931 = vpack.c.b16 %v3899, %v3899
      %v3932 = vpack.c.b16 %v3900, %v3900
      %v3933 = vpack.c.b16 %v3901, %v3901
      %v3934 = vpack.c.b16 %v3902, %v3902
      %v3935 = vpack.c.b16 %v3903, %v3903
      %v3936 = vpack.c.b16 %v3904, %v3904
      %v3937 = vpack.c.b16 %v3905, %v3905
      %v3938 = vpack.c.b16 %v3906, %v3906
      %v3939 = vpack.c.b16 %v3907, %v3907
      %v3940 = vpack.c.b16 %v3908, %v3908
      %v3941 = vpack.c.b16 %v3909, %v3909
      %v3942 = vpack.c.b16 %v3910, %v3910
      %v3943 = vpack.c.b16 %v3911, %v3911
      %v3944 = vpack.c.b16 %v3912, %v3912
      %v3945 = vpack.c.b16 %v3913, %v3913
      %v3946 = vpack.c.b16 %v3914, %v3914
      %v3947 = vpack.c.b16 %v3915, %v3915
      %v3948 = vpack.c.b16 %v3916, %v3916
      %v3949 = vpack.c.b16 %v3917, %v3917
      %vm3982 = vcmask 257024
      %3983 = vst.msk [vmem:[%s297] sm:$0xf] %vm3982, %v3918
      %3984 = vst.msk [vmem:[%s297 + $0x4] sm:$0xf] %vm3982, %v3919
      %3985 = vst.msk [vmem:[%s297 + $0x8] sm:$0xf] %vm3982, %v3920
      %3986 = vst.msk [vmem:[%s297 + $0xc] sm:$0xf] %vm3982, %v3921
      %3987 = vst.msk [vmem:[%s297 + $0x10] sm:$0xf] %vm3982, %v3922
      %3988 = vst.msk [vmem:[%s297 + $0x14] sm:$0xf] %vm3982, %v3923
      %3989 = vst.msk [vmem:[%s297 + $0x18] sm:$0xf] %vm3982, %v3924
      %3990 = vst.msk [vmem:[%s297 + $0x1c] sm:$0xf] %vm3982, %v3925
      %3991 = vst.msk [vmem:[%s297 + $0x20] sm:$0xf] %vm3982, %v3926
      %3992 = vst.msk [vmem:[%s297 + $0x24] sm:$0xf] %vm3982, %v3927
      %3993 = vst.msk [vmem:[%s297 + $0x28] sm:$0xf] %vm3982, %v3928
      %3994 = vst.msk [vmem:[%s297 + $0x2c] sm:$0xf] %vm3982, %v3929
      %3995 = vst.msk [vmem:[%s297 + $0x30] sm:$0xf] %vm3982, %v3930
      %3996 = vst.msk [vmem:[%s297 + $0x34] sm:$0xf] %vm3982, %v3931
      %3997 = vst.msk [vmem:[%s297 + $0x38] sm:$0xf] %vm3982, %v3932
      %3998 = vst.msk [vmem:[%s297 + $0x3c] sm:$0xf] %vm3982, %v3933
      %3999 = vst.msk [vmem:[%s297 + $0x40] sm:$0xf] %vm3982, %v3934
      %4000 = vst.msk [vmem:[%s297 + $0x44] sm:$0xf] %vm3982, %v3935
      %4001 = vst.msk [vmem:[%s297 + $0x48] sm:$0xf] %vm3982, %v3936
      %4002 = vst.msk [vmem:[%s297 + $0x4c] sm:$0xf] %vm3982, %v3937
      %4003 = vst.msk [vmem:[%s297 + $0x50] sm:$0xf] %vm3982, %v3938
      %4004 = vst.msk [vmem:[%s297 + $0x54] sm:$0xf] %vm3982, %v3939
      %4005 = vst.msk [vmem:[%s297 + $0x58] sm:$0xf] %vm3982, %v3940
      %4006 = vst.msk [vmem:[%s297 + $0x5c] sm:$0xf] %vm3982, %v3941
      %4007 = vst.msk [vmem:[%s297 + $0x60] sm:$0xf] %vm3982, %v3942
      %4008 = vst.msk [vmem:[%s297 + $0x64] sm:$0xf] %vm3982, %v3943
      %4009 = vst.msk [vmem:[%s297 + $0x68] sm:$0xf] %vm3982, %v3944
      %4010 = vst.msk [vmem:[%s297 + $0x6c] sm:$0xf] %vm3982, %v3945
      %4011 = vst.msk [vmem:[%s297 + $0x70] sm:$0xf] %vm3982, %v3946
      %4012 = vst.msk [vmem:[%s297 + $0x74] sm:$0xf] %vm3982, %v3947
      %4013 = vst.msk [vmem:[%s297 + $0x78] sm:$0xf] %vm3982, %v3948
      %4014 = vst.msk [vmem:[%s297 + $0x7c] sm:$0xf] %vm3982, %v3949
      %s4015 = smul.u32 32, %s17
      %p4016 = scmp.lt.s32.totalorder %s4015, 63
      %s4017 = scalar_select %p4016, %s4015, 63
      %s4018 = smul.addr %s4017, 4
      %s4019 = scalar_lea.vmem %s6, %s4018
      // Predicated region
      $region45: #{rgcn_forward.3} parent=43 // pred_check
        %p4020 = pneg %p176
      $region46: #{rgcn_forward.3} parent=43 // pred_check_branch
        %4022 = sbr.rel (%p4020) target = $region48
      $region47: #{rgcn_forward.3} parent=43 // pred_region
        %s4023 = smul.u32 32, %s17
      $region48: #{rgcn_forward.3} parent=43 // pred_fallthru
        _
    $region44: #{rgcn_forward.3} parent=5 // pred_fallthru
      _
    %p4024 = scmp.le.s32.totalorder 2, %s12
    // Predicated region
    $region49: #{rgcn_forward.3} parent=5 // pred_check
      %p4025 = pneg %p4024
    $region50: #{rgcn_forward.3} parent=5 // pred_check_branch
      %4027 = sbr.rel (%p4025) target = $region52
    $region51: #{rgcn_forward.3} parent=5 // pred_region
      %s4028 = ssub.s32 %s12, 2
      // Predicated region
      $region53: #{rgcn_forward.3} parent=51 // pred_check
        %p4029 = pneg %p182
      $region54: #{rgcn_forward.3} parent=51 // pred_check_branch
        %4031 = sbr.rel (%p4029) target = $region56
      $region55: #{rgcn_forward.3} parent=51 // pred_region
        %s4032 = smul.u32 32, %s18
        %p4033 = scmp.lt.s32.totalorder %s4032, 63
        %s4034 = scalar_select %p4033, %s4032, 63
        %s4035 = smul.addr %s4034, 4
        %s4036 = scalar_lea.vmem %s6, %s4035
      $region56: #{rgcn_forward.3} parent=51 // pred_fallthru
        _
    $region52: #{rgcn_forward.3} parent=5 // pred_fallthru
      _
  $region6: #{rgcn_forward.3} parent=0 // loop_footer
    %s16 = sadd.s32 1, %s12
  $region7: #{rgcn_forward.3} parent=0 // loop_footer_branch
    %11 = sbr.rel target = $region3
  $region8: #{rgcn_forward.3} parent=0 // loop_exit
    _

// kernel: rgcn_forward.5
$region0: #{rgcn_forward.5}
  #allocation0 [shape = 'u32[]', space=smem, size = 0x4, offset = 0x4, fixed_abs, tag = 'smem constant byte address 0x4 - core index']
  #allocation1 [shape = 'u32[144,128]{1,0:T(1,128)}', space=vmem, size = 0x12000, scoped, tag = 'internal scratch']
  %s0 = inlined_call_operand.vmem [shape: s32[512,1], index: 0, kind: input, shape index: {}]
  %s1 = inlined_call_operand.vmem [shape: bf16[512,128], index: 1, kind: input, shape index: {}]
  %s2 = inlined_call_operand.vmem [shape: bf16[512,32], index: 2, kind: input, shape index: {}]
  %s3 = inlined_call_operand.vmem [shape: bf16[128,16], index: 3, kind: input, shape index: {}]
  %s4 = inlined_call_operand.vmem [shape: bf16[96,16], index: 4, kind: input, shape index: {}]
  %s5 = inlined_call_operand.vmem [shape: f32[3,16], index: 5, kind: input, shape index: {}]
  %s6 = inlined_call_operand.vmem [shape: f32[512,16], index: 6, kind: output, shape index: {}]
  %s7 = sld [smem:[#allocation0]]
  $region57: #{rgcn_forward.5} parent=0
    _
  %s9 = ssub.s32 1, %s7
  %s10 = scalar_select 0, %s9, %s7
  loop: start=0, step=1, limit=4
  $region2: #{rgcn_forward.5} parent=0 // loop_pre_header
    _
  $region3: #{rgcn_forward.5} parent=0 // loop_header
    %s12 = sphi 0, %s16
    %p13 = scmp.ge.s32.totalorder %s12, 4
    %s22 = sphi 0, %s24
    %s25 = sphi 0, %s22
    %s26 = sphi 0, %s25
    %s42 = sphi 0, %s26
    %s48 = sphi 0, %s50
    %s51 = sphi 0, %s48
    %s52 = sphi 0, %s51
    %s68 = sphi 0, %s52
    %s74 = sphi 0, %s76
    %s77 = sphi 0, %s74
    %s78 = sphi 0, %s77
    %s94 = sphi 0, %s78
    %s98 = sphi 0, %s98
    %s100 = sphi 0, %s98
    %s101 = sphi 0, %s100
    %s115 = sphi 0, %s101
    %s119 = sphi 0, %s119
    %s121 = sphi 0, %s119
    %s122 = sphi 0, %s121
    %s136 = sphi 0, %s122
    %s140 = sphi 0, %s140
    %s142 = sphi 0, %s140
    %s143 = sphi 0, %s142
    %s157 = sphi 0, %s143
    %s163 = sphi 0, %s165
    %s166 = sphi 0, %s163
    %s167 = sphi 0, %s166
    %s183 = sphi 0, %s167
  $region4: #{rgcn_forward.5} parent=0 // loop_header_branch
    %15 = sbr.rel (%p13) target = $region8
  $region5: #{rgcn_forward.5} parent=0 // loop_body
    %s17 = ssub.s32 %s12, 1
    %s18 = ssub.s32 %s12, 2
    %s19 = sadd.s32 %s12, 1
    %s20 = ssub.s32 %s12, %s19
    %p21 = scmp.eq.s32.totalorder %s20, 0
    %s23 = sadd.s32 %s22, 1
    %s24 = scalar_select %p21, %s22, %s23
    %p27 = pneg %p21
    %p28 = scmp.eq.s32.totalorder %s12, 1
    %p29 = por %p27, %p28
    %p30 = scmp.ne.s32.totalorder %s22, %s25
    %p31 = scmp.eq.s32.totalorder %s12, 0
    %p32 = por %p30, %p31
    %p33 = scmp.ne.s32.totalorder %s22, %s25
    %p34 = scmp.eq.s32.totalorder %s17, 1
    %p35 = por %p33, %p34
    %p36 = scmp.ne.s32.totalorder %s25, %s26
    %p37 = scmp.eq.s32.totalorder %s17, 0
    %p38 = por %p36, %p37
    %p39 = scmp.ne.s32.totalorder %s25, %s26
    %p40 = scmp.eq.s32.totalorder %s18, 1
    %p41 = por %p39, %p40
    %p43 = scmp.ne.s32.totalorder %s26, %s42
    %p44 = scmp.eq.s32.totalorder %s18, 0
    %p45 = por %p43, %p44
    %s46 = ssub.s32 %s12, %s19
    %p47 = scmp.eq.s32.totalorder %s46, 0
    %s49 = sadd.s32 %s48, 1
    %s50 = scalar_select %p47, %s48, %s49
    %p53 = pneg %p47
    %p54 = scmp.eq.s32.totalorder %s12, 1
    %p55 = por %p53, %p54
    %p56 = scmp.ne.s32.totalorder %s48, %s51
    %p57 = scmp.eq.s32.totalorder %s12, 0
    %p58 = por %p56, %p57
    %p59 = scmp.ne.s32.totalorder %s48, %s51
    %p60 = scmp.eq.s32.totalorder %s17, 1
    %p61 = por %p59, %p60
    %p62 = scmp.ne.s32.totalorder %s51, %s52
    %p63 = scmp.eq.s32.totalorder %s17, 0
    %p64 = por %p62, %p63
    %p65 = scmp.ne.s32.totalorder %s51, %s52
    %p66 = scmp.eq.s32.totalorder %s18, 1
    %p67 = por %p65, %p66
    %p69 = scmp.ne.s32.totalorder %s52, %s68
    %p70 = scmp.eq.s32.totalorder %s18, 0
    %p71 = por %p69, %p70
    %s72 = ssub.s32 %s12, %s19
    %p73 = scmp.eq.s32.totalorder %s72, 0
    %s75 = sadd.s32 %s74, 1
    %s76 = scalar_select %p73, %s74, %s75
    %p79 = pneg %p73
    %p80 = scmp.eq.s32.totalorder %s12, 1
    %p81 = por %p79, %p80
    %p82 = scmp.ne.s32.totalorder %s74, %s77
    %p83 = scmp.eq.s32.totalorder %s12, 0
    %p84 = por %p82, %p83
    %p85 = scmp.ne.s32.totalorder %s74, %s77
    %p86 = scmp.eq.s32.totalorder %s17, 1
    %p87 = por %p85, %p86
    %p88 = scmp.ne.s32.totalorder %s77, %s78
    %p89 = scmp.eq.s32.totalorder %s17, 0
    %p90 = por %p88, %p89
    %p91 = scmp.ne.s32.totalorder %s77, %s78
    %p92 = scmp.eq.s32.totalorder %s18, 1
    %p93 = por %p91, %p92
    %p95 = scmp.ne.s32.totalorder %s78, %s94
    %p96 = scmp.eq.s32.totalorder %s18, 0
    %p97 = por %p95, %p96
    %s99 = sadd.s32 %s98, 1
    %p102 = scmp.eq.s32.totalorder %s12, 1
    %p103 = scmp.ne.s32.totalorder %s98, %s100
    %p104 = scmp.eq.s32.totalorder %s12, 0
    %p105 = por %p103, %p104
    %p106 = scmp.ne.s32.totalorder %s98, %s100
    %p107 = scmp.eq.s32.totalorder %s17, 1
    %p108 = por %p106, %p107
    %p109 = scmp.ne.s32.totalorder %s100, %s101
    %p110 = scmp.eq.s32.totalorder %s17, 0
    %p111 = por %p109, %p110
    %p112 = scmp.ne.s32.totalorder %s100, %s101
    %p113 = scmp.eq.s32.totalorder %s18, 1
    %p114 = por %p112, %p113
    %p116 = scmp.ne.s32.totalorder %s101, %s115
    %p117 = scmp.eq.s32.totalorder %s18, 0
    %p118 = por %p116, %p117
    %s120 = sadd.s32 %s119, 1
    %p123 = scmp.eq.s32.totalorder %s12, 1
    %p124 = scmp.ne.s32.totalorder %s119, %s121
    %p125 = scmp.eq.s32.totalorder %s12, 0
    %p126 = por %p124, %p125
    %p127 = scmp.ne.s32.totalorder %s119, %s121
    %p128 = scmp.eq.s32.totalorder %s17, 1
    %p129 = por %p127, %p128
    %p130 = scmp.ne.s32.totalorder %s121, %s122
    %p131 = scmp.eq.s32.totalorder %s17, 0
    %p132 = por %p130, %p131
    %p133 = scmp.ne.s32.totalorder %s121, %s122
    %p134 = scmp.eq.s32.totalorder %s18, 1
    %p135 = por %p133, %p134
    %p137 = scmp.ne.s32.totalorder %s122, %s136
    %p138 = scmp.eq.s32.totalorder %s18, 0
    %p139 = por %p137, %p138
    %s141 = sadd.s32 %s140, 1
    %p144 = scmp.eq.s32.totalorder %s12, 1
    %p145 = scmp.ne.s32.totalorder %s140, %s142
    %p146 = scmp.eq.s32.totalorder %s12, 0
    %p147 = por %p145, %p146
    %p148 = scmp.ne.s32.totalorder %s140, %s142
    %p149 = scmp.eq.s32.totalorder %s17, 1
    %p150 = por %p148, %p149
    %p151 = scmp.ne.s32.totalorder %s142, %s143
    %p152 = scmp.eq.s32.totalorder %s17, 0
    %p153 = por %p151, %p152
    %p154 = scmp.ne.s32.totalorder %s142, %s143
    %p155 = scmp.eq.s32.totalorder %s18, 1
    %p156 = por %p154, %p155
    %p158 = scmp.ne.s32.totalorder %s143, %s157
    %p159 = scmp.eq.s32.totalorder %s18, 0
    %p160 = por %p158, %p159
    %s161 = ssub.s32 %s12, %s19
    %p162 = scmp.eq.s32.totalorder %s161, 0
    %s164 = sadd.s32 %s163, 1
    %s165 = scalar_select %p162, %s163, %s164
    %p168 = pneg %p162
    %p169 = scmp.eq.s32.totalorder %s12, 1
    %p170 = por %p168, %p169
    %p171 = scmp.ne.s32.totalorder %s163, %s166
    %p172 = scmp.eq.s32.totalorder %s12, 0
    %p173 = por %p171, %p172
    %p174 = scmp.ne.s32.totalorder %s163, %s166
    %p175 = scmp.eq.s32.totalorder %s17, 1
    %p176 = por %p174, %p175
    %p177 = scmp.ne.s32.totalorder %s166, %s167
    %p178 = scmp.eq.s32.totalorder %s17, 0
    %p179 = por %p177, %p178
    %p180 = scmp.ne.s32.totalorder %s166, %s167
    %p181 = scmp.eq.s32.totalorder %s18, 1
    %p182 = por %p180, %p181
    %p184 = scmp.ne.s32.totalorder %s167, %s183
    %p185 = scmp.eq.s32.totalorder %s18, 0
    %p186 = por %p184, %p185
    %p187 = scmp.le.s32.totalorder 1, %s12
    %p188 = scmp.lt.s32.totalorder %s12, 3
    %p189 = pnand %p187, %p188
    %p190 = pneg %p189
    // Predicated region
    $region9: #{rgcn_forward.5} parent=5 // pred_check
      _
    $region10: #{rgcn_forward.5} parent=5 // pred_check_branch
      %192 = sbr.rel (%p189) target = $region12
    $region11: #{rgcn_forward.5} parent=5 // pred_region
      %s193 = ssub.s32 %s12, 1
      // Predicated region
      $region13: #{rgcn_forward.5} parent=11 // pred_check
        %p194 = pneg %p111
      $region14: #{rgcn_forward.5} parent=11 // pred_check_branch
        %196 = sbr.rel (%p194) target = $region16
      $region15: #{rgcn_forward.5} parent=11 // pred_region
        _
      $region16: #{rgcn_forward.5} parent=11 // pred_fallthru
        _
      // Predicated region
      $region17: #{rgcn_forward.5} parent=11 // pred_check
        %p197 = pneg %p132
      $region18: #{rgcn_forward.5} parent=11 // pred_check_branch
        %199 = sbr.rel (%p197) target = $region20
      $region19: #{rgcn_forward.5} parent=11 // pred_region
        _
      $region20: #{rgcn_forward.5} parent=11 // pred_fallthru
        _
      // Predicated region
      $region21: #{rgcn_forward.5} parent=11 // pred_check
        %p200 = pneg %p153
      $region22: #{rgcn_forward.5} parent=11 // pred_check_branch
        %202 = sbr.rel (%p200) target = $region24
      $region23: #{rgcn_forward.5} parent=11 // pred_region
        _
      $region24: #{rgcn_forward.5} parent=11 // pred_fallthru
        _
    $region12: #{rgcn_forward.5} parent=5 // pred_fallthru
      _
    %p203 = scmp.lt.s32.totalorder %s12, 2
    // Predicated region
    $region25: #{rgcn_forward.5} parent=5 // pred_check
      %p204 = pneg %p203
    $region26: #{rgcn_forward.5} parent=5 // pred_check_branch
      %206 = sbr.rel (%p204) target = $region28
    $region27: #{rgcn_forward.5} parent=5 // pred_region
      // Predicated region
      $region29: #{rgcn_forward.5} parent=27 // pred_check
        %p207 = pneg %p32
      $region30: #{rgcn_forward.5} parent=27 // pred_check_branch
        %209 = sbr.rel (%p207) target = $region32
      $region31: #{rgcn_forward.5} parent=27 // pred_region
        %s210 = smul.u32 32, %s12
        %p211 = scmp.lt.s32.totalorder %s210, 63
        %s212 = scalar_select %p211, %s210, 63
        %s213 = smul.addr %s212, 8
        %s214 = scalar_lea.vmem %s0, %s213
        %s215 = smul.u32 32, %s12
      $region32: #{rgcn_forward.5} parent=27 // pred_fallthru
        _
      // Predicated region
      $region33: #{rgcn_forward.5} parent=27 // pred_check
        %p216 = pneg %p58
      $region34: #{rgcn_forward.5} parent=27 // pred_check_branch
        %218 = sbr.rel (%p216) target = $region36
      $region35: #{rgcn_forward.5} parent=27 // pred_region
        %s219 = smul.u32 32, %s12
        %p220 = scmp.lt.s32.totalorder %s219, 63
        %s221 = scalar_select %p220, %s219, 63
        %s222 = smul.addr %s221, 4
        %s223 = scalar_lea.vmem %s1, %s222
        %s224 = smul.u32 32, %s12
      $region36: #{rgcn_forward.5} parent=27 // pred_fallthru
        _
      // Predicated region
      $region37: #{rgcn_forward.5} parent=27 // pred_check
        %p225 = pneg %p84
      $region38: #{rgcn_forward.5} parent=27 // pred_check_branch
        %227 = sbr.rel (%p225) target = $region40
      $region39: #{rgcn_forward.5} parent=27 // pred_region
        %s228 = smul.u32 32, %s12
        %p229 = scmp.lt.s32.totalorder %s228, 63
        %s230 = scalar_select %p229, %s228, 63
        %s231 = smul.addr %s230, 4
        %s232 = scalar_lea.vmem %s2, %s231
        %s233 = smul.u32 32, %s12
      $region40: #{rgcn_forward.5} parent=27 // pred_fallthru
        _
    $region28: #{rgcn_forward.5} parent=5 // pred_fallthru
      _
    %p234 = scmp.le.s32.totalorder 1, %s12
    %p235 = scmp.lt.s32.totalorder %s12, 3
    %p236 = pnand %p234, %p235
    %p237 = pneg %p236
    // Predicated region
    $region41: #{rgcn_forward.5} parent=5 // pred_check
      _
    $region42: #{rgcn_forward.5} parent=5 // pred_check_branch
      %239 = sbr.rel (%p236) target = $region44
    $region43: #{rgcn_forward.5} parent=5 // pred_region
      %s240 = ssub.s32 %s12, 1
      %s241 = smul.u32 32, %s17
      %p242 = scmp.lt.s32.totalorder %s241, 63
      %s243 = scalar_select %p242, %s241, 63
      %s244 = smul.addr %s243, 8
      %s245 = scalar_lea.vmem %s0, %s244
      %p246 = pneg %p38
      %p247 = pneg %p35
      %s248 = smul.u32 32, %s17
      %p249 = scmp.lt.s32.totalorder %s248, 63
      %s250 = scalar_select %p249, %s248, 63
      %s251 = smul.addr %s250, 4
      %s252 = scalar_lea.vmem %s1, %s251
      %p253 = pneg %p64
      %p254 = pneg %p61
      %s255 = smul.u32 32, %s17
      %p256 = scmp.lt.s32.totalorder %s255, 63
      %s257 = scalar_select %p256, %s255, 63
      %s258 = smul.addr %s257, 4
      %s259 = scalar_lea.vmem %s2, %s258
      %p260 = pneg %p90
      %p261 = pneg %p87
      %p262 = pneg %p111
      %p263 = pneg %p108
      %p264 = pneg %p132
      %p265 = pneg %p129
      %p266 = pneg %p153
      %p267 = pneg %p150
      %p268 = pneg %p179
      %p269 = pneg %p176
      %s270 = smul.u32 32, %s17
      %p271 = scmp.lt.s32.totalorder %s270, 63
      %s272 = scalar_select %p271, %s270, 63
      %s273 = smul.addr %s272, 8
      %s274 = scalar_lea.vmem %s6, %s273
      %s275 = smul.u32 32, %s17
      %p276 = scmp.lt.s32.totalorder %s275, 63
      %s277 = scalar_select %p276, %s275, 63
      %s278 = smul.addr %s277, 8
      %s279 = scalar_lea.vmem %s0, %s278
      %s280 = smul.u32 32, %s17
      %s281 = smul.u32 32, %s17
      %p282 = scmp.lt.s32.totalorder %s281, 63
      %s283 = scalar_select %p282, %s281, 63
      %s284 = smul.addr %s283, 4
      %s285 = scalar_lea.vmem %s1, %s284
      %s286 = smul.u32 32, %s17
      %s287 = smul.u32 32, %s17
      %p288 = scmp.lt.s32.totalorder %s287, 63
      %s289 = scalar_select %p288, %s287, 63
      %s290 = smul.addr %s289, 4
      %s291 = scalar_lea.vmem %s2, %s290
      %s292 = smul.u32 32, %s17
      %s293 = smul.u32 32, %s17
      %p294 = scmp.lt.s32.totalorder %s293, 63
      %s295 = scalar_select %p294, %s293, 63
      %s296 = smul.addr %s295, 8
      %s297 = scalar_lea.vmem %s6, %s296
      %s298 = smul.u32 32, %s17
      %v300 = vld [vmem:[%s285] sm:$0xf]
      %v301 = vld [vmem:[%s285 + $0x4] sm:$0xf]
      %v302 = vld [vmem:[%s285 + $0x8] sm:$0xf]
      %v303 = vld [vmem:[%s285 + $0xc] sm:$0xf]
      %v304 = vld [vmem:[%s285 + $0x10] sm:$0xf]
      %v305 = vld [vmem:[%s285 + $0x14] sm:$0xf]
      %v306 = vld [vmem:[%s285 + $0x18] sm:$0xf]
      %v307 = vld [vmem:[%s285 + $0x1c] sm:$0xf]
      %v308 = vld [vmem:[%s285 + $0x20] sm:$0xf]
      %v309 = vld [vmem:[%s285 + $0x24] sm:$0xf]
      %v310 = vld [vmem:[%s285 + $0x28] sm:$0xf]
      %v311 = vld [vmem:[%s285 + $0x2c] sm:$0xf]
      %v312 = vld [vmem:[%s285 + $0x30] sm:$0xf]
      %v313 = vld [vmem:[%s285 + $0x34] sm:$0xf]
      %v314 = vld [vmem:[%s285 + $0x38] sm:$0xf]
      %v315 = vld [vmem:[%s285 + $0x3c] sm:$0xf]
      %v316 = vld [vmem:[%s285 + $0x40] sm:$0xf]
      %v317 = vld [vmem:[%s285 + $0x44] sm:$0xf]
      %v318 = vld [vmem:[%s285 + $0x48] sm:$0xf]
      %v319 = vld [vmem:[%s285 + $0x4c] sm:$0xf]
      %v320 = vld [vmem:[%s285 + $0x50] sm:$0xf]
      %v321 = vld [vmem:[%s285 + $0x54] sm:$0xf]
      %v322 = vld [vmem:[%s285 + $0x58] sm:$0xf]
      %v323 = vld [vmem:[%s285 + $0x5c] sm:$0xf]
      %v324 = vld [vmem:[%s285 + $0x60] sm:$0xf]
      %v325 = vld [vmem:[%s285 + $0x64] sm:$0xf]
      %v326 = vld [vmem:[%s285 + $0x68] sm:$0xf]
      %v327 = vld [vmem:[%s285 + $0x6c] sm:$0xf]
      %v328 = vld [vmem:[%s285 + $0x70] sm:$0xf]
      %v329 = vld [vmem:[%s285 + $0x74] sm:$0xf]
      %v330 = vld [vmem:[%s285 + $0x78] sm:$0xf]
      %v331 = vld [vmem:[%s285 + $0x7c] sm:$0xf]
      %v332 = vld [vmem:[%s3] sm:$0xf]
      %v333 = vld [vmem:[%s3 + $0x4] sm:$0xf]
      %v334 = vld [vmem:[%s3 + $0x8] sm:$0xf]
      %v335 = vld [vmem:[%s3 + $0xc] sm:$0xf]
      %v336 = vld [vmem:[%s3 + $0x10] sm:$0xf]
      %v337 = vld [vmem:[%s3 + $0x14] sm:$0xf]
      %v338 = vld [vmem:[%s3 + $0x18] sm:$0xf]
      %v339 = vld [vmem:[%s3 + $0x1c] sm:$0xf]
      %v340 = vld [vmem:[%s3 + $0x20] sm:$0xf]
      %v341 = vld [vmem:[%s3 + $0x24] sm:$0xf]
      %v342 = vld [vmem:[%s3 + $0x28] sm:$0xf]
      %v343 = vld [vmem:[%s3 + $0x2c] sm:$0xf]
      %v344 = vld [vmem:[%s3 + $0x30] sm:$0xf]
      %v345 = vld [vmem:[%s3 + $0x34] sm:$0xf]
      %v346 = vld [vmem:[%s3 + $0x38] sm:$0xf]
      %v347 = vld [vmem:[%s3 + $0x3c] sm:$0xf]
      %v348 = vld [vmem:[%s291] sm:$0xf]
      %v349 = vld [vmem:[%s291 + $0x4] sm:$0xf]
      %v350 = vld [vmem:[%s291 + $0x8] sm:$0xf]
      %v351 = vld [vmem:[%s291 + $0xc] sm:$0xf]
      %v352 = vld [vmem:[%s291 + $0x10] sm:$0xf]
      %v353 = vld [vmem:[%s291 + $0x14] sm:$0xf]
      %v354 = vld [vmem:[%s291 + $0x18] sm:$0xf]
      %v355 = vld [vmem:[%s291 + $0x1c] sm:$0xf]
      %v356 = vld [vmem:[%s291 + $0x20] sm:$0xf]
      %v357 = vld [vmem:[%s291 + $0x24] sm:$0xf]
      %v358 = vld [vmem:[%s291 + $0x28] sm:$0xf]
      %v359 = vld [vmem:[%s291 + $0x2c] sm:$0xf]
      %v360 = vld [vmem:[%s291 + $0x30] sm:$0xf]
      %v361 = vld [vmem:[%s291 + $0x34] sm:$0xf]
      %v362 = vld [vmem:[%s291 + $0x38] sm:$0xf]
      %v363 = vld [vmem:[%s291 + $0x3c] sm:$0xf]
      %v364 = vld [vmem:[%s291 + $0x40] sm:$0xf]
      %v365 = vld [vmem:[%s291 + $0x44] sm:$0xf]
      %v366 = vld [vmem:[%s291 + $0x48] sm:$0xf]
      %v367 = vld [vmem:[%s291 + $0x4c] sm:$0xf]
      %v368 = vld [vmem:[%s291 + $0x50] sm:$0xf]
      %v369 = vld [vmem:[%s291 + $0x54] sm:$0xf]
      %v370 = vld [vmem:[%s291 + $0x58] sm:$0xf]
      %v371 = vld [vmem:[%s291 + $0x5c] sm:$0xf]
      %v372 = vld [vmem:[%s291 + $0x60] sm:$0xf]
      %v373 = vld [vmem:[%s291 + $0x64] sm:$0xf]
      %v374 = vld [vmem:[%s291 + $0x68] sm:$0xf]
      %v375 = vld [vmem:[%s291 + $0x6c] sm:$0xf]
      %v376 = vld [vmem:[%s291 + $0x70] sm:$0xf]
      %v377 = vld [vmem:[%s291 + $0x74] sm:$0xf]
      %v378 = vld [vmem:[%s291 + $0x78] sm:$0xf]
      %v379 = vld [vmem:[%s291 + $0x7c] sm:$0xf]
      %v380 = vld [vmem:[%s279] sm:$0xff]
      %v381 = vld [vmem:[%s279 + $0x8] sm:$0xff]
      %v382 = vld [vmem:[%s279 + $0x10] sm:$0xff]
      %v383 = vld [vmem:[%s279 + $0x18] sm:$0xff]
      %v384 = vld [vmem:[%s279 + $0x20] sm:$0xff]
      %v385 = vld [vmem:[%s279 + $0x28] sm:$0xff]
      %v386 = vld [vmem:[%s279 + $0x30] sm:$0xff]
      %v387 = vld [vmem:[%s279 + $0x38] sm:$0xff]
      %v388 = vld [vmem:[%s279 + $0x40] sm:$0xff]
      %v389 = vld [vmem:[%s279 + $0x48] sm:$0xff]
      %v390 = vld [vmem:[%s279 + $0x50] sm:$0xff]
      %v391 = vld [vmem:[%s279 + $0x58] sm:$0xff]
      %v392 = vld [vmem:[%s279 + $0x60] sm:$0xff]
      %v393 = vld [vmem:[%s279 + $0x68] sm:$0xff]
      %v394 = vld [vmem:[%s279 + $0x70] sm:$0xff]
      %v395 = vld [vmem:[%s279 + $0x78] sm:$0xff]
      %v396 = vld [vmem:[%s279 + $0x80] sm:$0xff]
      %v397 = vld [vmem:[%s279 + $0x88] sm:$0xff]
      %v398 = vld [vmem:[%s279 + $0x90] sm:$0xff]
      %v399 = vld [vmem:[%s279 + $0x98] sm:$0xff]
      %v400 = vld [vmem:[%s279 + $0xa0] sm:$0xff]
      %v401 = vld [vmem:[%s279 + $0xa8] sm:$0xff]
      %v402 = vld [vmem:[%s279 + $0xb0] sm:$0xff]
      %v403 = vld [vmem:[%s279 + $0xb8] sm:$0xff]
      %v404 = vld [vmem:[%s279 + $0xc0] sm:$0xff]
      %v405 = vld [vmem:[%s279 + $0xc8] sm:$0xff]
      %v406 = vld [vmem:[%s279 + $0xd0] sm:$0xff]
      %v407 = vld [vmem:[%s279 + $0xd8] sm:$0xff]
      %v408 = vld [vmem:[%s279 + $0xe0] sm:$0xff]
      %v409 = vld [vmem:[%s279 + $0xe8] sm:$0xff]
      %v410 = vld [vmem:[%s279 + $0xf0] sm:$0xff]
      %v411 = vld [vmem:[%s279 + $0xf8] sm:$0xff]
      %v412 = vld [vmem:[%s5] sm:$0x7]
      %vm413 = vcmp.eq.s32.totalorder %v380, 0
      %vm414 = vcmp.eq.s32.totalorder %v381, 0
      %vm415 = vcmp.eq.s32.totalorder %v382, 0
      %vm416 = vcmp.eq.s32.totalorder %v383, 0
      %vm417 = vcmp.eq.s32.totalorder %v384, 0
      %vm418 = vcmp.eq.s32.totalorder %v385, 0
      %vm419 = vcmp.eq.s32.totalorder %v386, 0
      %vm420 = vcmp.eq.s32.totalorder %v387, 0
      %vm421 = vcmp.eq.s32.totalorder %v388, 0
      %vm422 = vcmp.eq.s32.totalorder %v389, 0
      %vm423 = vcmp.eq.s32.totalorder %v390, 0
      %vm424 = vcmp.eq.s32.totalorder %v391, 0
      %vm425 = vcmp.eq.s32.totalorder %v392, 0
      %vm426 = vcmp.eq.s32.totalorder %v393, 0
      %vm427 = vcmp.eq.s32.totalorder %v394, 0
      %vm428 = vcmp.eq.s32.totalorder %v395, 0
      %vm429 = vcmp.eq.s32.totalorder %v396, 0
      %vm430 = vcmp.eq.s32.totalorder %v397, 0
      %vm431 = vcmp.eq.s32.totalorder %v398, 0
      %vm432 = vcmp.eq.s32.totalorder %v399, 0
      %vm433 = vcmp.eq.s32.totalorder %v400, 0
      %vm434 = vcmp.eq.s32.totalorder %v401, 0
      %vm435 = vcmp.eq.s32.totalorder %v402, 0
      %vm436 = vcmp.eq.s32.totalorder %v403, 0
      %vm437 = vcmp.eq.s32.totalorder %v404, 0
      %vm438 = vcmp.eq.s32.totalorder %v405, 0
      %vm439 = vcmp.eq.s32.totalorder %v406, 0
      %vm440 = vcmp.eq.s32.totalorder %v407, 0
      %vm441 = vcmp.eq.s32.totalorder %v408, 0
      %vm442 = vcmp.eq.s32.totalorder %v409, 0
      %vm443 = vcmp.eq.s32.totalorder %v410, 0
      %vm444 = vcmp.eq.s32.totalorder %v411, 0
      %v445 = vsel %vm413, 1, 0
      %v446 = vsel %vm414, 1, 0
      %v447 = vsel %vm415, 1, 0
      %v448 = vsel %vm416, 1, 0
      %v449 = vsel %vm417, 1, 0
      %v450 = vsel %vm418, 1, 0
      %v451 = vsel %vm419, 1, 0
      %v452 = vsel %vm420, 1, 0
      %v453 = vsel %vm421, 1, 0
      %v454 = vsel %vm422, 1, 0
      %v455 = vsel %vm423, 1, 0
      %v456 = vsel %vm424, 1, 0
      %v457 = vsel %vm425, 1, 0
      %v458 = vsel %vm426, 1, 0
      %v459 = vsel %vm427, 1, 0
      %v460 = vsel %vm428, 1, 0
      %v461 = vsel %vm429, 1, 0
      %v462 = vsel %vm430, 1, 0
      %v463 = vsel %vm431, 1, 0
      %v464 = vsel %vm432, 1, 0
      %v465 = vsel %vm433, 1, 0
      %v466 = vsel %vm434, 1, 0
      %v467 = vsel %vm435, 1, 0
      %v468 = vsel %vm436, 1, 0
      %v469 = vsel %vm437, 1, 0
      %v470 = vsel %vm438, 1, 0
      %v471 = vsel %vm439, 1, 0
      %v472 = vsel %vm440, 1, 0
      %v473 = vsel %vm441, 1, 0
      %v474 = vsel %vm442, 1, 0
      %v475 = vsel %vm443, 1, 0
      %v476 = vsel %vm444, 1, 0
      %v477 = vcvt.s32.f32 %v445
      %v478 = vcvt.s32.f32 %v446
      %v479 = vcvt.s32.f32 %v447
      %v480 = vcvt.s32.f32 %v448
      %v481 = vcvt.s32.f32 %v449
      %v482 = vcvt.s32.f32 %v450
      %v483 = vcvt.s32.f32 %v451
      %v484 = vcvt.s32.f32 %v452
      %v485 = vcvt.s32.f32 %v453
      %v486 = vcvt.s32.f32 %v454
      %v487 = vcvt.s32.f32 %v455
      %v488 = vcvt.s32.f32 %v456
      %v489 = vcvt.s32.f32 %v457
      %v490 = vcvt.s32.f32 %v458
      %v491 = vcvt.s32.f32 %v459
      %v492 = vcvt.s32.f32 %v460
      %v493 = vcvt.s32.f32 %v461
      %v494 = vcvt.s32.f32 %v462
      %v495 = vcvt.s32.f32 %v463
      %v496 = vcvt.s32.f32 %v464
      %v497 = vcvt.s32.f32 %v465
      %v498 = vcvt.s32.f32 %v466
      %v499 = vcvt.s32.f32 %v467
      %v500 = vcvt.s32.f32 %v468
      %v501 = vcvt.s32.f32 %v469
      %v502 = vcvt.s32.f32 %v470
      %v503 = vcvt.s32.f32 %v471
      %v504 = vcvt.s32.f32 %v472
      %v505 = vcvt.s32.f32 %v473
      %v506 = vcvt.s32.f32 %v474
      %v507 = vcvt.s32.f32 %v475
      %v508 = vcvt.s32.f32 %v476
      %v509 = vpack.c.bf16 %v478, %v477
      %v510 = vpack.c.bf16 %v480, %v479
      %v511 = vpack.c.bf16 %v482, %v481
      %v512 = vpack.c.bf16 %v484, %v483
      %v513 = vpack.c.bf16 %v486, %v485
      %v514 = vpack.c.bf16 %v488, %v487
      %v515 = vpack.c.bf16 %v490, %v489
      %v516 = vpack.c.bf16 %v492, %v491
      %v517 = vpack.c.bf16 %v494, %v493
      %v518 = vpack.c.bf16 %v496, %v495
      %v519 = vpack.c.bf16 %v498, %v497
      %v520 = vpack.c.bf16 %v500, %v499
      %v521 = vpack.c.bf16 %v502, %v501
      %v522 = vpack.c.bf16 %v504, %v503
      %v523 = vpack.c.bf16 %v506, %v505
      %v524 = vpack.c.bf16 %v508, %v507
      %526 = vset.pattern.permute.xlu0 0
      %527 = vperm.xlu0 %526, %v509
      %v528 = vpop.permute.xlu0 %527
      %530 = vset.pattern.permute.xlu0 0
      %531 = vperm.xlu0 %530, %v510
      %v532 = vpop.permute.xlu0 %531
      %534 = vset.pattern.permute.xlu0 0
      %535 = vperm.xlu0 %534, %v511
      %v536 = vpop.permute.xlu0 %535
      %538 = vset.pattern.permute.xlu0 0
      %539 = vperm.xlu0 %538, %v512
      %v540 = vpop.permute.xlu0 %539
      %542 = vset.pattern.permute.xlu0 0
      %543 = vperm.xlu0 %542, %v513
      %v544 = vpop.permute.xlu0 %543
      %546 = vset.pattern.permute.xlu0 0
      %547 = vperm.xlu0 %546, %v514
      %v548 = vpop.permute.xlu0 %547
      %550 = vset.pattern.permute.xlu0 0
      %551 = vperm.xlu0 %550, %v515
      %v552 = vpop.permute.xlu0 %551
      %554 = vset.pattern.permute.xlu0 0
      %555 = vperm.xlu0 %554, %v516
      %v556 = vpop.permute.xlu0 %555
      %558 = vset.pattern.permute.xlu0 0
      %559 = vperm.xlu0 %558, %v517
      %v560 = vpop.permute.xlu0 %559
      %562 = vset.pattern.permute.xlu0 0
      %563 = vperm.xlu0 %562, %v518
      %v564 = vpop.permute.xlu0 %563
      %566 = vset.pattern.permute.xlu0 0
      %567 = vperm.xlu0 %566, %v519
      %v568 = vpop.permute.xlu0 %567
      %570 = vset.pattern.permute.xlu0 0
      %571 = vperm.xlu0 %570, %v520
      %v572 = vpop.permute.xlu0 %571
      %574 = vset.pattern.permute.xlu0 0
      %575 = vperm.xlu0 %574, %v521
      %v576 = vpop.permute.xlu0 %575
      %578 = vset.pattern.permute.xlu0 0
      %579 = vperm.xlu0 %578, %v522
      %v580 = vpop.permute.xlu0 %579
      %582 = vset.pattern.permute.xlu0 0
      %583 = vperm.xlu0 %582, %v523
      %v584 = vpop.permute.xlu0 %583
      %586 = vset.pattern.permute.xlu0 0
      %587 = vperm.xlu0 %586, %v524
      %v588 = vpop.permute.xlu0 %587
      %v606 = vunpack.c.l.s4 839922192
      %v607 = vunpack.c.0.s8 %v606
      %v608 = vlaneseq
      %v609 = vshrl.u32 %v608, 7
      %v610 = vsub.s32 %v607, %v609
      %v611 = vrot.slane %v528, %v610
      %v613 = vunpack.c.l.s4 1985246804
      %v614 = vunpack.c.0.s8 %v613
      %v615 = vlaneseq
      %v616 = vshrl.u32 %v615, 7
      %v617 = vsub.s32 %v614, %v616
      %v618 = vrot.slane %v528, %v617
      %v620 = vunpack.c.l.s4 839922192
      %v621 = vunpack.c.0.s8 %v620
      %v622 = vlaneseq
      %v623 = vshrl.u32 %v622, 7
      %v624 = vsub.s32 %v621, %v623
      %v625 = vrot.slane %v532, %v624
      %v627 = vunpack.c.l.s4 1985246804
      %v628 = vunpack.c.0.s8 %v627
      %v629 = vlaneseq
      %v630 = vshrl.u32 %v629, 7
      %v631 = vsub.s32 %v628, %v630
      %v632 = vrot.slane %v532, %v631
      %v634 = vunpack.c.l.s4 839922192
      %v635 = vunpack.c.0.s8 %v634
      %v636 = vlaneseq
      %v637 = vshrl.u32 %v636, 7
      %v638 = vsub.s32 %v635, %v637
      %v639 = vrot.slane %v536, %v638
      %v641 = vunpack.c.l.s4 1985246804
      %v642 = vunpack.c.0.s8 %v641
      %v643 = vlaneseq
      %v644 = vshrl.u32 %v643, 7
      %v645 = vsub.s32 %v642, %v644
      %v646 = vrot.slane %v536, %v645
      %v648 = vunpack.c.l.s4 839922192
      %v649 = vunpack.c.0.s8 %v648
      %v650 = vlaneseq
      %v651 = vshrl.u32 %v650, 7
      %v652 = vsub.s32 %v649, %v651
      %v653 = vrot.slane %v540, %v652
      %v655 = vunpack.c.l.s4 1985246804
      %v656 = vunpack.c.0.s8 %v655
      %v657 = vlaneseq
      %v658 = vshrl.u32 %v657, 7
      %v659 = vsub.s32 %v656, %v658
      %v660 = vrot.slane %v540, %v659
      %v662 = vunpack.c.l.s4 839922192
      %v663 = vunpack.c.0.s8 %v662
      %v664 = vlaneseq
      %v665 = vshrl.u32 %v664, 7
      %v666 = vsub.s32 %v663, %v665
      %v667 = vrot.slane %v544, %v666
      %v669 = vunpack.c.l.s4 1985246804
      %v670 = vunpack.c.0.s8 %v669
      %v671 = vlaneseq
      %v672 = vshrl.u32 %v671, 7
      %v673 = vsub.s32 %v670, %v672
      %v674 = vrot.slane %v544, %v673
      %v676 = vunpack.c.l.s4 839922192
      %v677 = vunpack.c.0.s8 %v676
      %v678 = vlaneseq
      %v679 = vshrl.u32 %v678, 7
      %v680 = vsub.s32 %v677, %v679
      %v681 = vrot.slane %v548, %v680
      %v683 = vunpack.c.l.s4 1985246804
      %v684 = vunpack.c.0.s8 %v683
      %v685 = vlaneseq
      %v686 = vshrl.u32 %v685, 7
      %v687 = vsub.s32 %v684, %v686
      %v688 = vrot.slane %v548, %v687
      %v690 = vunpack.c.l.s4 839922192
      %v691 = vunpack.c.0.s8 %v690
      %v692 = vlaneseq
      %v693 = vshrl.u32 %v692, 7
      %v694 = vsub.s32 %v691, %v693
      %v695 = vrot.slane %v552, %v694
      %v697 = vunpack.c.l.s4 1985246804
      %v698 = vunpack.c.0.s8 %v697
      %v699 = vlaneseq
      %v700 = vshrl.u32 %v699, 7
      %v701 = vsub.s32 %v698, %v700
      %v702 = vrot.slane %v552, %v701
      %v704 = vunpack.c.l.s4 839922192
      %v705 = vunpack.c.0.s8 %v704
      %v706 = vlaneseq
      %v707 = vshrl.u32 %v706, 7
      %v708 = vsub.s32 %v705, %v707
      %v709 = vrot.slane %v556, %v708
      %v711 = vunpack.c.l.s4 1985246804
      %v712 = vunpack.c.0.s8 %v711
      %v713 = vlaneseq
      %v714 = vshrl.u32 %v713, 7
      %v715 = vsub.s32 %v712, %v714
      %v716 = vrot.slane %v556, %v715
      %v718 = vunpack.c.l.s4 839922192
      %v719 = vunpack.c.0.s8 %v718
      %v720 = vlaneseq
      %v721 = vshrl.u32 %v720, 7
      %v722 = vsub.s32 %v719, %v721
      %v723 = vrot.slane %v560, %v722
      %v725 = vunpack.c.l.s4 1985246804
      %v726 = vunpack.c.0.s8 %v725
      %v727 = vlaneseq
      %v728 = vshrl.u32 %v727, 7
      %v729 = vsub.s32 %v726, %v728
      %v730 = vrot.slane %v560, %v729
      %v732 = vunpack.c.l.s4 839922192
      %v733 = vunpack.c.0.s8 %v732
      %v734 = vlaneseq
      %v735 = vshrl.u32 %v734, 7
      %v736 = vsub.s32 %v733, %v735
      %v737 = vrot.slane %v564, %v736
      %v739 = vunpack.c.l.s4 1985246804
      %v740 = vunpack.c.0.s8 %v739
      %v741 = vlaneseq
      %v742 = vshrl.u32 %v741, 7
      %v743 = vsub.s32 %v740, %v742
      %v744 = vrot.slane %v564, %v743
      %v746 = vunpack.c.l.s4 839922192
      %v747 = vunpack.c.0.s8 %v746
      %v748 = vlaneseq
      %v749 = vshrl.u32 %v748, 7
      %v750 = vsub.s32 %v747, %v749
      %v751 = vrot.slane %v568, %v750
      %v753 = vunpack.c.l.s4 1985246804
      %v754 = vunpack.c.0.s8 %v753
      %v755 = vlaneseq
      %v756 = vshrl.u32 %v755, 7
      %v757 = vsub.s32 %v754, %v756
      %v758 = vrot.slane %v568, %v757
      %v760 = vunpack.c.l.s4 839922192
      %v761 = vunpack.c.0.s8 %v760
      %v762 = vlaneseq
      %v763 = vshrl.u32 %v762, 7
      %v764 = vsub.s32 %v761, %v763
      %v765 = vrot.slane %v572, %v764
      %v767 = vunpack.c.l.s4 1985246804
      %v768 = vunpack.c.0.s8 %v767
      %v769 = vlaneseq
      %v770 = vshrl.u32 %v769, 7
      %v771 = vsub.s32 %v768, %v770
      %v772 = vrot.slane %v572, %v771
      %v774 = vunpack.c.l.s4 839922192
      %v775 = vunpack.c.0.s8 %v774
      %v776 = vlaneseq
      %v777 = vshrl.u32 %v776, 7
      %v778 = vsub.s32 %v775, %v777
      %v779 = vrot.slane %v576, %v778
      %v781 = vunpack.c.l.s4 1985246804
      %v782 = vunpack.c.0.s8 %v781
      %v783 = vlaneseq
      %v784 = vshrl.u32 %v783, 7
      %v785 = vsub.s32 %v782, %v784
      %v786 = vrot.slane %v576, %v785
      %v788 = vunpack.c.l.s4 839922192
      %v789 = vunpack.c.0.s8 %v788
      %v790 = vlaneseq
      %v791 = vshrl.u32 %v790, 7
      %v792 = vsub.s32 %v789, %v791
      %v793 = vrot.slane %v580, %v792
      %v795 = vunpack.c.l.s4 1985246804
      %v796 = vunpack.c.0.s8 %v795
      %v797 = vlaneseq
      %v798 = vshrl.u32 %v797, 7
      %v799 = vsub.s32 %v796, %v798
      %v800 = vrot.slane %v580, %v799
      %v802 = vunpack.c.l.s4 839922192
      %v803 = vunpack.c.0.s8 %v802
      %v804 = vlaneseq
      %v805 = vshrl.u32 %v804, 7
      %v806 = vsub.s32 %v803, %v805
      %v807 = vrot.slane %v584, %v806
      %v809 = vunpack.c.l.s4 1985246804
      %v810 = vunpack.c.0.s8 %v809
      %v811 = vlaneseq
      %v812 = vshrl.u32 %v811, 7
      %v813 = vsub.s32 %v810, %v812
      %v814 = vrot.slane %v584, %v813
      %v816 = vunpack.c.l.s4 839922192
      %v817 = vunpack.c.0.s8 %v816
      %v818 = vlaneseq
      %v819 = vshrl.u32 %v818, 7
      %v820 = vsub.s32 %v817, %v819
      %v821 = vrot.slane %v588, %v820
      %v823 = vunpack.c.l.s4 1985246804
      %v824 = vunpack.c.0.s8 %v823
      %v825 = vlaneseq
      %v826 = vshrl.u32 %v825, 7
      %v827 = vsub.s32 %v824, %v826
      %v828 = vrot.slane %v588, %v827
      %v861 = vmul.bf16 %v348, %v611
      %v862 = vmul.bf16 %v349, %v618
      %v863 = vmul.bf16 %v350, %v625
      %v864 = vmul.bf16 %v351, %v632
      %v865 = vmul.bf16 %v352, %v639
      %v866 = vmul.bf16 %v353, %v646
      %v867 = vmul.bf16 %v354, %v653
      %v868 = vmul.bf16 %v355, %v660
      %v869 = vmul.bf16 %v356, %v667
      %v870 = vmul.bf16 %v357, %v674
      %v871 = vmul.bf16 %v358, %v681
      %v872 = vmul.bf16 %v359, %v688
      %v873 = vmul.bf16 %v360, %v695
      %v874 = vmul.bf16 %v361, %v702
      %v875 = vmul.bf16 %v362, %v709
      %v876 = vmul.bf16 %v363, %v716
      %v877 = vmul.bf16 %v364, %v723
      %v878 = vmul.bf16 %v365, %v730
      %v879 = vmul.bf16 %v366, %v737
      %v880 = vmul.bf16 %v367, %v744
      %v881 = vmul.bf16 %v368, %v751
      %v882 = vmul.bf16 %v369, %v758
      %v883 = vmul.bf16 %v370, %v765
      %v884 = vmul.bf16 %v371, %v772
      %v885 = vmul.bf16 %v372, %v779
      %v886 = vmul.bf16 %v373, %v786
      %v887 = vmul.bf16 %v374, %v793
      %v888 = vmul.bf16 %v375, %v800
      %v889 = vmul.bf16 %v376, %v807
      %v890 = vmul.bf16 %v377, %v814
      %v891 = vmul.bf16 %v378, %v821
      %v892 = vmul.bf16 %v379, %v828
      %v893 = vld [vmem:[%s4] sm:$0xf]
      %v894 = vld [vmem:[%s4 + $0x4] sm:$0xf]
      %v895 = vld [vmem:[%s4 + $0x8] sm:$0xf]
      %v896 = vld [vmem:[%s4 + $0xc] sm:$0xf]
      %v929 = vunpack.c.l.b16 %v861
      %v930 = vunpack.c.l.b16 %v862
      %v931 = vunpack.c.l.b16 %v863
      %v932 = vunpack.c.l.b16 %v864
      %v933 = vunpack.c.l.b16 %v865
      %v934 = vunpack.c.l.b16 %v866
      %v935 = vunpack.c.l.b16 %v867
      %v936 = vunpack.c.l.b16 %v868
      %v937 = vunpack.c.l.b16 %v869
      %v938 = vunpack.c.l.b16 %v870
      %v939 = vunpack.c.l.b16 %v871
      %v940 = vunpack.c.l.b16 %v872
      %v941 = vunpack.c.l.b16 %v873
      %v942 = vunpack.c.l.b16 %v874
      %v943 = vunpack.c.l.b16 %v875
      %v944 = vunpack.c.l.b16 %v876
      %v945 = vunpack.c.l.b16 %v877
      %v946 = vunpack.c.l.b16 %v878
      %v947 = vunpack.c.l.b16 %v879
      %v948 = vunpack.c.l.b16 %v880
      %v949 = vunpack.c.l.b16 %v881
      %v950 = vunpack.c.l.b16 %v882
      %v951 = vunpack.c.l.b16 %v883
      %v952 = vunpack.c.l.b16 %v884
      %v953 = vunpack.c.l.b16 %v885
      %v954 = vunpack.c.l.b16 %v886
      %v955 = vunpack.c.l.b16 %v887
      %v956 = vunpack.c.l.b16 %v888
      %v957 = vunpack.c.l.b16 %v889
      %v958 = vunpack.c.l.b16 %v890
      %v959 = vunpack.c.l.b16 %v891
      %v960 = vunpack.c.l.b16 %v892
      %v961 = vpack.c.b16 %v930, %v929
      %v962 = vpack.c.b16 %v932, %v931
      %v963 = vpack.c.b16 %v934, %v933
      %v964 = vpack.c.b16 %v936, %v935
      %v965 = vpack.c.b16 %v938, %v937
      %v966 = vpack.c.b16 %v940, %v939
      %v967 = vpack.c.b16 %v942, %v941
      %v968 = vpack.c.b16 %v944, %v943
      %v969 = vpack.c.b16 %v946, %v945
      %v970 = vpack.c.b16 %v948, %v947
      %v971 = vpack.c.b16 %v950, %v949
      %v972 = vpack.c.b16 %v952, %v951
      %v973 = vpack.c.b16 %v954, %v953
      %v974 = vpack.c.b16 %v956, %v955
      %v975 = vpack.c.b16 %v958, %v957
      %v976 = vpack.c.b16 %v960, %v959
      %v981 = vunpack.c.l.b16 %v893
      %v982 = vunpack.c.l.b16 %v894
      %v983 = vunpack.c.l.b16 %v895
      %v984 = vunpack.c.l.b16 %v896
      %v985 = vpack.c.b16 %v982, %v981
      %v986 = vpack.c.b16 %v984, %v983
      %vm989 = vcmask 261120
      %v991 = vsel %vm989, %v961, 0
      %v994 = vsel %vm989, %v962, 0
      %v997 = vsel %vm989, %v963, 0
      %v1000 = vsel %vm989, %v964, 0
      %v1003 = vsel %vm989, %v965, 0
      %v1006 = vsel %vm989, %v966, 0
      %v1009 = vsel %vm989, %v967, 0
      %v1012 = vsel %vm989, %v968, 0
      %v1015 = vsel %vm989, %v969, 0
      %v1018 = vsel %vm989, %v970, 0
      %v1021 = vsel %vm989, %v971, 0
      %v1024 = vsel %vm989, %v972, 0
      %v1027 = vsel %vm989, %v973, 0
      %v1030 = vsel %vm989, %v974, 0
      %v1033 = vsel %vm989, %v975, 0
      %v1036 = vsel %vm989, %v976, 0
      %1038 = vmatprep.subr.bf16.mxu0 0
      %1039 = vmatpush1.bf16.msra.mxu0 %v985
      %1040 = vmatprep.subr.bf16.mxu0 0
      %1041 = vmatpush1.bf16.msra.mxu0 %v986
      %1042 = vmatprep.subr.bf16.mxu0 0
      %1043 = vmatpush1.bf16.msra.mxu0 0
      %1044 = vmatprep.subr.bf16.mxu0 0
      %1045 = vmatpush1.bf16.msra.mxu0 0
      %1046 = vmatprep.subr.bf16.mxu0 0
      %1047 = vmatpush1.bf16.msra.mxu0 0
      %1048 = vmatprep.subr.bf16.mxu0 0
      %1049 = vmatpush1.bf16.msra.mxu0 0
      %1050 = vmatprep.subr.bf16.mxu0 0
      %1051 = vmatpush1.bf16.msra.mxu0 0
      %1052 = vmatprep.subr.bf16.mxu0 0
      %1053 = vmatpush1.bf16.msra.mxu0 0
      %1054 = vmatprep.subr.bf16.mxu0 0
      %1055 = vmatpush1.bf16.msra.mxu0 0
      %1056 = vmatprep.subr.bf16.mxu0 0
      %1057 = vmatpush1.bf16.msra.mxu0 0
      %1058 = vmatprep.subr.bf16.mxu0 0
      %1059 = vmatpush1.bf16.msra.mxu0 0
      %1060 = vmatprep.subr.bf16.mxu0 0
      %1061 = vmatpush1.bf16.msra.mxu0 0
      %1062 = vmatprep.subr.bf16.mxu0 0
      %1063 = vmatpush1.bf16.msra.mxu0 0
      %1064 = vmatprep.subr.bf16.mxu0 0
      %1065 = vmatpush1.bf16.msra.mxu0 0
      %1066 = vmatprep.subr.bf16.mxu0 0
      %1067 = vmatpush1.bf16.msra.mxu0 0
      %1068 = vmatprep.subr.bf16.mxu0 0
      %1069 = vmatpush1.bf16.msra.mxu0 0
      %1070 = vmatprep.mubr.bf16.mxu0 0
      %1071 = vmatmul.mubr.bf16.gmra.mrb[0].mxu0 %v991
      %v1072 = vpop.f32.mrb[0].mxu0
      %v1073 = vadd.f32 0.0, %v1072
      %v1074 = vpop.f32.mrb[0].mxu0
      %v1075 = vpop.f32.mrb[0].mxu0
      %v1076 = vadd.f32 0.0, %v1075
      %v1077 = vpop.f32.mrb[0].mxu0
      %1078 = vmatprep.mubr.bf16.mxu0 0
      %1079 = vmatmul.mubr.bf16.gmra.mrb[0].mxu0 %v994
      %v1080 = vpop.f32.mrb[0].mxu0
      %v1081 = vadd.f32 0.0, %v1080
      %v1082 = vpop.f32.mrb[0].mxu0
      %v1083 = vpop.f32.mrb[0].mxu0
      %v1084 = vadd.f32 0.0, %v1083
      %v1085 = vpop.f32.mrb[0].mxu0
      %1086 = vmatprep.mubr.bf16.mxu0 0
      %1087 = vmatmul.mubr.bf16.gmra.mrb[0].mxu0 %v997
      %v1088 = vpop.f32.mrb[0].mxu0
      %v1089 = vadd.f32 0.0, %v1088
      %v1090 = vpop.f32.mrb[0].mxu0
      %v1091 = vpop.f32.mrb[0].mxu0
      %v1092 = vadd.f32 0.0, %v1091
      %v1093 = vpop.f32.mrb[0].mxu0
      %1094 = vmatprep.mubr.bf16.mxu0 0
      %1095 = vmatmul.mubr.bf16.gmra.mrb[0].mxu0 %v1000
      %v1096 = vpop.f32.mrb[0].mxu0
      %v1097 = vadd.f32 0.0, %v1096
      %v1098 = vpop.f32.mrb[0].mxu0
      %v1099 = vpop.f32.mrb[0].mxu0
      %v1100 = vadd.f32 0.0, %v1099
      %v1101 = vpop.f32.mrb[0].mxu0
      %1102 = vmatprep.mubr.bf16.mxu0 0
      %1103 = vmatmul.mubr.bf16.gmra.mrb[0].mxu0 %v1003
      %v1104 = vpop.f32.mrb[0].mxu0
      %v1105 = vadd.f32 0.0, %v1104
      %v1106 = vpop.f32.mrb[0].mxu0
      %v1107 = vpop.f32.mrb[0].mxu0
      %v1108 = vadd.f32 0.0, %v1107
      %v1109 = vpop.f32.mrb[0].mxu0
      %1110 = vmatprep.mubr.bf16.mxu0 0
      %1111 = vmatmul.mubr.bf16.gmra.mrb[0].mxu0 %v1006
      %v1112 = vpop.f32.mrb[0].mxu0
      %v1113 = vadd.f32 0.0, %v1112
      %v1114 = vpop.f32.mrb[0].mxu0
      %v1115 = vpop.f32.mrb[0].mxu0
      %v1116 = vadd.f32 0.0, %v1115
      %v1117 = vpop.f32.mrb[0].mxu0
      %1118 = vmatprep.mubr.bf16.mxu0 0
      %1119 = vmatmul.mubr.bf16.gmra.mrb[0].mxu0 %v1009
      %v1120 = vpop.f32.mrb[0].mxu0
      %v1121 = vadd.f32 0.0, %v1120
      %v1122 = vpop.f32.mrb[0].mxu0
      %v1123 = vpop.f32.mrb[0].mxu0
      %v1124 = vadd.f32 0.0, %v1123
      %v1125 = vpop.f32.mrb[0].mxu0
      %1126 = vmatprep.mubr.bf16.mxu0 0
      %1127 = vmatmul.mubr.bf16.gmra.mrb[0].mxu0 %v1012
      %v1128 = vpop.f32.mrb[0].mxu0
      %v1129 = vadd.f32 0.0, %v1128
      %v1130 = vpop.f32.mrb[0].mxu0
      %v1131 = vpop.f32.mrb[0].mxu0
      %v1132 = vadd.f32 0.0, %v1131
      %v1133 = vpop.f32.mrb[0].mxu0
      %1134 = vmatprep.mubr.bf16.mxu0 0
      %1135 = vmatmul.mubr.bf16.gmra.mrb[0].mxu0 %v1015
      %v1136 = vpop.f32.mrb[0].mxu0
      %v1137 = vadd.f32 0.0, %v1136
      %v1138 = vpop.f32.mrb[0].mxu0
      %v1139 = vpop.f32.mrb[0].mxu0
      %v1140 = vadd.f32 0.0, %v1139
      %v1141 = vpop.f32.mrb[0].mxu0
      %1142 = vmatprep.mubr.bf16.mxu0 0
      %1143 = vmatmul.mubr.bf16.gmra.mrb[0].mxu0 %v1018
      %v1144 = vpop.f32.mrb[0].mxu0
      %v1145 = vadd.f32 0.0, %v1144
      %v1146 = vpop.f32.mrb[0].mxu0
      %v1147 = vpop.f32.mrb[0].mxu0
      %v1148 = vadd.f32 0.0, %v1147
      %v1149 = vpop.f32.mrb[0].mxu0
      %1150 = vmatprep.mubr.bf16.mxu0 0
      %1151 = vmatmul.mubr.bf16.gmra.mrb[0].mxu0 %v1021
      %v1152 = vpop.f32.mrb[0].mxu0
      %v1153 = vadd.f32 0.0, %v1152
      %v1154 = vpop.f32.mrb[0].mxu0
      %v1155 = vpop.f32.mrb[0].mxu0
      %v1156 = vadd.f32 0.0, %v1155
      %v1157 = vpop.f32.mrb[0].mxu0
      %1158 = vmatprep.mubr.bf16.mxu0 0
      %1159 = vmatmul.mubr.bf16.gmra.mrb[0].mxu0 %v1024
      %v1160 = vpop.f32.mrb[0].mxu0
      %v1161 = vadd.f32 0.0, %v1160
      %v1162 = vpop.f32.mrb[0].mxu0
      %v1163 = vpop.f32.mrb[0].mxu0
      %v1164 = vadd.f32 0.0, %v1163
      %v1165 = vpop.f32.mrb[0].mxu0
      %1166 = vmatprep.mubr.bf16.mxu0 0
      %1167 = vmatmul.mubr.bf16.gmra.mrb[0].mxu0 %v1027
      %v1168 = vpop.f32.mrb[0].mxu0
      %v1169 = vadd.f32 0.0, %v1168
      %v1170 = vpop.f32.mrb[0].mxu0
      %v1171 = vpop.f32.mrb[0].mxu0
      %v1172 = vadd.f32 0.0, %v1171
      %v1173 = vpop.f32.mrb[0].mxu0
      %1174 = vmatprep.mubr.bf16.mxu0 0
      %1175 = vmatmul.mubr.bf16.gmra.mrb[0].mxu0 %v1030
      %v1176 = vpop.f32.mrb[0].mxu0
      %v1177 = vadd.f32 0.0, %v1176
      %v1178 = vpop.f32.mrb[0].mxu0
      %v1179 = vpop.f32.mrb[0].mxu0
      %v1180 = vadd.f32 0.0, %v1179
      %v1181 = vpop.f32.mrb[0].mxu0
      %1182 = vmatprep.mubr.bf16.mxu0 0
      %1183 = vmatmul.mubr.bf16.gmra.mrb[0].mxu0 %v1033
      %v1184 = vpop.f32.mrb[0].mxu0
      %v1185 = vadd.f32 0.0, %v1184
      %v1186 = vpop.f32.mrb[0].mxu0
      %v1187 = vpop.f32.mrb[0].mxu0
      %v1188 = vadd.f32 0.0, %v1187
      %v1189 = vpop.f32.mrb[0].mxu0
      %1190 = vmatprep.mubr.bf16.mxu0 0
      %1191 = vmatmul.mubr.bf16.gmra.mrb[0].mxu0 %v1036
      %v1192 = vpop.f32.mrb[0].mxu0
      %v1193 = vadd.f32 0.0, %v1192
      %v1194 = vpop.f32.mrb[0].mxu0
      %v1195 = vpop.f32.mrb[0].mxu0
      %v1196 = vadd.f32 0.0, %v1195
      %v1197 = vpop.f32.mrb[0].mxu0
      %1198 = vdwg.mxu0
      %v1231 = vunpack.c.l.b16 %v300
      %v1232 = vunpack.c.l.b16 %v301
      %v1233 = vunpack.c.l.b16 %v302
      %v1234 = vunpack.c.l.b16 %v303
      %v1235 = vunpack.c.l.b16 %v304
      %v1236 = vunpack.c.l.b16 %v305
      %v1237 = vunpack.c.l.b16 %v306
      %v1238 = vunpack.c.l.b16 %v307
      %v1239 = vunpack.c.l.b16 %v308
      %v1240 = vunpack.c.l.b16 %v309
      %v1241 = vunpack.c.l.b16 %v310
      %v1242 = vunpack.c.l.b16 %v311
      %v1243 = vunpack.c.l.b16 %v312
      %v1244 = vunpack.c.l.b16 %v313
      %v1245 = vunpack.c.l.b16 %v314
      %v1246 = vunpack.c.l.b16 %v315
      %v1247 = vunpack.c.l.b16 %v316
      %v1248 = vunpack.c.l.b16 %v317
      %v1249 = vunpack.c.l.b16 %v318
      %v1250 = vunpack.c.l.b16 %v319
      %v1251 = vunpack.c.l.b16 %v320
      %v1252 = vunpack.c.l.b16 %v321
      %v1253 = vunpack.c.l.b16 %v322
      %v1254 = vunpack.c.l.b16 %v323
      %v1255 = vunpack.c.l.b16 %v324
      %v1256 = vunpack.c.l.b16 %v325
      %v1257 = vunpack.c.l.b16 %v326
      %v1258 = vunpack.c.l.b16 %v327
      %v1259 = vunpack.c.l.b16 %v328
      %v1260 = vunpack.c.l.b16 %v329
      %v1261 = vunpack.c.l.b16 %v330
      %v1262 = vunpack.c.l.b16 %v331
      %v1263 = vpack.c.b16 %v1232, %v1231
      %v1264 = vpack.c.b16 %v1234, %v1233
      %v1265 = vpack.c.b16 %v1236, %v1235
      %v1266 = vpack.c.b16 %v1238, %v1237
      %v1267 = vpack.c.b16 %v1240, %v1239
      %v1268 = vpack.c.b16 %v1242, %v1241
      %v1269 = vpack.c.b16 %v1244, %v1243
      %v1270 = vpack.c.b16 %v1246, %v1245
      %v1271 = vpack.c.b16 %v1248, %v1247
      %v1272 = vpack.c.b16 %v1250, %v1249
      %v1273 = vpack.c.b16 %v1252, %v1251
      %v1274 = vpack.c.b16 %v1254, %v1253
      %v1275 = vpack.c.b16 %v1256, %v1255
      %v1276 = vpack.c.b16 %v1258, %v1257
      %v1277 = vpack.c.b16 %v1260, %v1259
      %v1278 = vpack.c.b16 %v1262, %v1261
      %v1311 = vunpack.c.l.b16 %v332
      %v1312 = vunpack.c.l.b16 %v333
      %v1313 = vunpack.c.l.b16 %v334
      %v1314 = vunpack.c.l.b16 %v335
      %v1315 = vunpack.c.l.b16 %v336
      %v1316 = vunpack.c.l.b16 %v337
      %v1317 = vunpack.c.l.b16 %v338
      %v1318 = vunpack.c.l.b16 %v339
      %v1319 = vunpack.c.l.b16 %v340
      %v1320 = vunpack.c.l.b16 %v341
      %v1321 = vunpack.c.l.b16 %v342
      %v1322 = vunpack.c.l.b16 %v343
      %v1323 = vunpack.c.l.b16 %v344
      %v1324 = vunpack.c.l.b16 %v345
      %v1325 = vunpack.c.l.b16 %v346
      %v1326 = vunpack.c.l.b16 %v347
      %v1327 = vpack.c.b16 %v1312, %v1311
      %v1328 = vpack.c.b16 %v1314, %v1313
      %v1329 = vpack.c.b16 %v1316, %v1315
      %v1330 = vpack.c.b16 %v1318, %v1317
      %v1331 = vpack.c.b16 %v1320, %v1319
      %v1332 = vpack.c.b16 %v1322, %v1321
      %v1333 = vpack.c.b16 %v1324, %v1323
      %v1334 = vpack.c.b16 %v1326, %v1325
      %1343 = vmatprep.subr.bf16.mxu0 0
      %1344 = vmatpush1.bf16.msra.mxu0 %v1327
      %1345 = vmatprep.subr.bf16.mxu0 0
      %1346 = vmatpush1.bf16.msra.mxu0 %v1328
      %1347 = vmatprep.subr.bf16.mxu0 0
      %1348 = vmatpush1.bf16.msra.mxu0 %v1329
      %1349 = vmatprep.subr.bf16.mxu0 0
      %1350 = vmatpush1.bf16.msra.mxu0 %v1330
      %1351 = vmatprep.subr.bf16.mxu0 0
      %1352 = vmatpush1.bf16.msra.mxu0 %v1331
      %1353 = vmatprep.subr.bf16.mxu0 0
      %1354 = vmatpush1.bf16.msra.mxu0 %v1332
      %1355 = vmatprep.subr.bf16.mxu0 0
      %1356 = vmatpush1.bf16.msra.mxu0 %v1333
      %1357 = vmatprep.subr.bf16.mxu0 0
      %1358 = vmatpush1.bf16.msra.mxu0 %v1334
      %1359 = vmatprep.subr.bf16.mxu0 0
      %1360 = vmatpush1.bf16.msra.mxu0 0
      %1361 = vmatprep.subr.bf16.mxu0 0
      %1362 = vmatpush1.bf16.msra.mxu0 0
      %1363 = vmatprep.subr.bf16.mxu0 0
      %1364 = vmatpush1.bf16.msra.mxu0 0
      %1365 = vmatprep.subr.bf16.mxu0 0
      %1366 = vmatpush1.bf16.msra.mxu0 0
      %1367 = vmatprep.subr.bf16.mxu0 0
      %1368 = vmatpush1.bf16.msra.mxu0 0
      %1369 = vmatprep.subr.bf16.mxu0 0
      %1370 = vmatpush1.bf16.msra.mxu0 0
      %1371 = vmatprep.subr.bf16.mxu0 0
      %1372 = vmatpush1.bf16.msra.mxu0 0
      %1373 = vmatprep.subr.bf16.mxu0 0
      %1374 = vmatpush1.bf16.msra.mxu0 0
      %1375 = vmatprep.mubr.bf16.mxu0 0
      %1376 = vmatmul.mubr.bf16.gmra.mrb[0].mxu0 %v1263
      %v1377 = vpop.f32.mrb[0].mxu0
      %v1378 = vadd.f32 %v1073, %v1377
      %v1379 = vpop.f32.mrb[0].mxu0
      %v1380 = vpop.f32.mrb[0].mxu0
      %v1381 = vadd.f32 %v1076, %v1380
      %v1382 = vpop.f32.mrb[0].mxu0
      %1383 = vmatprep.mubr.bf16.mxu0 0
      %1384 = vmatmul.mubr.bf16.gmra.mrb[0].mxu0 %v1264
      %v1385 = vpop.f32.mrb[0].mxu0
      %v1386 = vadd.f32 %v1081, %v1385
      %v1387 = vpop.f32.mrb[0].mxu0
      %v1388 = vpop.f32.mrb[0].mxu0
      %v1389 = vadd.f32 %v1084, %v1388
      %v1390 = vpop.f32.mrb[0].mxu0
      %1391 = vmatprep.mubr.bf16.mxu0 0
      %1392 = vmatmul.mubr.bf16.gmra.mrb[0].mxu0 %v1265
      %v1393 = vpop.f32.mrb[0].mxu0
      %v1394 = vadd.f32 %v1089, %v1393
      %v1395 = vpop.f32.mrb[0].mxu0
      %v1396 = vpop.f32.mrb[0].mxu0
      %v1397 = vadd.f32 %v1092, %v1396
      %v1398 = vpop.f32.mrb[0].mxu0
      %1399 = vmatprep.mubr.bf16.mxu0 0
      %1400 = vmatmul.mubr.bf16.gmra.mrb[0].mxu0 %v1266
      %v1401 = vpop.f32.mrb[0].mxu0
      %v1402 = vadd.f32 %v1097, %v1401
      %v1403 = vpop.f32.mrb[0].mxu0
      %v1404 = vpop.f32.mrb[0].mxu0
      %v1405 = vadd.f32 %v1100, %v1404
      %v1406 = vpop.f32.mrb[0].mxu0
      %1407 = vmatprep.mubr.bf16.mxu0 0
      %1408 = vmatmul.mubr.bf16.gmra.mrb[0].mxu0 %v1267
      %v1409 = vpop.f32.mrb[0].mxu0
      %v1410 = vadd.f32 %v1105, %v1409
      %v1411 = vpop.f32.mrb[0].mxu0
      %v1412 = vpop.f32.mrb[0].mxu0
      %v1413 = vadd.f32 %v1108, %v1412
      %v1414 = vpop.f32.mrb[0].mxu0
      %1415 = vmatprep.mubr.bf16.mxu0 0
      %1416 = vmatmul.mubr.bf16.gmra.mrb[0].mxu0 %v1268
      %v1417 = vpop.f32.mrb[0].mxu0
      %v1418 = vadd.f32 %v1113, %v1417
      %v1419 = vpop.f32.mrb[0].mxu0
      %v1420 = vpop.f32.mrb[0].mxu0
      %v1421 = vadd.f32 %v1116, %v1420
      %v1422 = vpop.f32.mrb[0].mxu0
      %1423 = vmatprep.mubr.bf16.mxu0 0
      %1424 = vmatmul.mubr.bf16.gmra.mrb[0].mxu0 %v1269
      %v1425 = vpop.f32.mrb[0].mxu0
      %v1426 = vadd.f32 %v1121, %v1425
      %v1427 = vpop.f32.mrb[0].mxu0
      %v1428 = vpop.f32.mrb[0].mxu0
      %v1429 = vadd.f32 %v1124, %v1428
      %v1430 = vpop.f32.mrb[0].mxu0
      %1431 = vmatprep.mubr.bf16.mxu0 0
      %1432 = vmatmul.mubr.bf16.gmra.mrb[0].mxu0 %v1270
      %v1433 = vpop.f32.mrb[0].mxu0
      %v1434 = vadd.f32 %v1129, %v1433
      %v1435 = vpop.f32.mrb[0].mxu0
      %v1436 = vpop.f32.mrb[0].mxu0
      %v1437 = vadd.f32 %v1132, %v1436
      %v1438 = vpop.f32.mrb[0].mxu0
      %1439 = vmatprep.mubr.bf16.mxu0 0
      %1440 = vmatmul.mubr.bf16.gmra.mrb[0].mxu0 %v1271
      %v1441 = vpop.f32.mrb[0].mxu0
      %v1442 = vadd.f32 %v1137, %v1441
      %v1443 = vpop.f32.mrb[0].mxu0
      %v1444 = vpop.f32.mrb[0].mxu0
      %v1445 = vadd.f32 %v1140, %v1444
      %v1446 = vpop.f32.mrb[0].mxu0
      %1447 = vmatprep.mubr.bf16.mxu0 0
      %1448 = vmatmul.mubr.bf16.gmra.mrb[0].mxu0 %v1272
      %v1449 = vpop.f32.mrb[0].mxu0
      %v1450 = vadd.f32 %v1145, %v1449
      %v1451 = vpop.f32.mrb[0].mxu0
      %v1452 = vpop.f32.mrb[0].mxu0
      %v1453 = vadd.f32 %v1148, %v1452
      %v1454 = vpop.f32.mrb[0].mxu0
      %1455 = vmatprep.mubr.bf16.mxu0 0
      %1456 = vmatmul.mubr.bf16.gmra.mrb[0].mxu0 %v1273
      %v1457 = vpop.f32.mrb[0].mxu0
      %v1458 = vadd.f32 %v1153, %v1457
      %v1459 = vpop.f32.mrb[0].mxu0
      %v1460 = vpop.f32.mrb[0].mxu0
      %v1461 = vadd.f32 %v1156, %v1460
      %v1462 = vpop.f32.mrb[0].mxu0
      %1463 = vmatprep.mubr.bf16.mxu0 0
      %1464 = vmatmul.mubr.bf16.gmra.mrb[0].mxu0 %v1274
      %v1465 = vpop.f32.mrb[0].mxu0
      %v1466 = vadd.f32 %v1161, %v1465
      %v1467 = vpop.f32.mrb[0].mxu0
      %v1468 = vpop.f32.mrb[0].mxu0
      %v1469 = vadd.f32 %v1164, %v1468
      %v1470 = vpop.f32.mrb[0].mxu0
      %1471 = vmatprep.mubr.bf16.mxu0 0
      %1472 = vmatmul.mubr.bf16.gmra.mrb[0].mxu0 %v1275
      %v1473 = vpop.f32.mrb[0].mxu0
      %v1474 = vadd.f32 %v1169, %v1473
      %v1475 = vpop.f32.mrb[0].mxu0
      %v1476 = vpop.f32.mrb[0].mxu0
      %v1477 = vadd.f32 %v1172, %v1476
      %v1478 = vpop.f32.mrb[0].mxu0
      %1479 = vmatprep.mubr.bf16.mxu0 0
      %1480 = vmatmul.mubr.bf16.gmra.mrb[0].mxu0 %v1276
      %v1481 = vpop.f32.mrb[0].mxu0
      %v1482 = vadd.f32 %v1177, %v1481
      %v1483 = vpop.f32.mrb[0].mxu0
      %v1484 = vpop.f32.mrb[0].mxu0
      %v1485 = vadd.f32 %v1180, %v1484
      %v1486 = vpop.f32.mrb[0].mxu0
      %1487 = vmatprep.mubr.bf16.mxu0 0
      %1488 = vmatmul.mubr.bf16.gmra.mrb[0].mxu0 %v1277
      %v1489 = vpop.f32.mrb[0].mxu0
      %v1490 = vadd.f32 %v1185, %v1489
      %v1491 = vpop.f32.mrb[0].mxu0
      %v1492 = vpop.f32.mrb[0].mxu0
      %v1493 = vadd.f32 %v1188, %v1492
      %v1494 = vpop.f32.mrb[0].mxu0
      %1495 = vmatprep.mubr.bf16.mxu0 0
      %1496 = vmatmul.mubr.bf16.gmra.mrb[0].mxu0 %v1278
      %v1497 = vpop.f32.mrb[0].mxu0
      %v1498 = vadd.f32 %v1193, %v1497
      %v1499 = vpop.f32.mrb[0].mxu0
      %v1500 = vpop.f32.mrb[0].mxu0
      %v1501 = vadd.f32 %v1196, %v1500
      %v1502 = vpop.f32.mrb[0].mxu0
      %1503 = vdwg.mxu0
      %1505 = vset.pattern.permute.xlu0 0
      %1506 = vperm.xlu0 %1505, %v477
      %v1507 = vpop.permute.xlu0 %1506
      %1510 = vset.pattern.permute.xlu0 0
      %1511 = vperm.xlu0 %1510, %v478
      %v1512 = vpop.permute.xlu0 %1511
      %1515 = vset.pattern.permute.xlu0 0
      %1516 = vperm.xlu0 %1515, %v479
      %v1517 = vpop.permute.xlu0 %1516
      %1520 = vset.pattern.permute.xlu0 0
      %1521 = vperm.xlu0 %1520, %v480
      %v1522 = vpop.permute.xlu0 %1521
      %1525 = vset.pattern.permute.xlu0 0
      %1526 = vperm.xlu0 %1525, %v481
      %v1527 = vpop.permute.xlu0 %1526
      %1530 = vset.pattern.permute.xlu0 0
      %1531 = vperm.xlu0 %1530, %v482
      %v1532 = vpop.permute.xlu0 %1531
      %1535 = vset.pattern.permute.xlu0 0
      %1536 = vperm.xlu0 %1535, %v483
      %v1537 = vpop.permute.xlu0 %1536
      %1540 = vset.pattern.permute.xlu0 0
      %1541 = vperm.xlu0 %1540, %v484
      %v1542 = vpop.permute.xlu0 %1541
      %1545 = vset.pattern.permute.xlu0 0
      %1546 = vperm.xlu0 %1545, %v485
      %v1547 = vpop.permute.xlu0 %1546
      %1550 = vset.pattern.permute.xlu0 0
      %1551 = vperm.xlu0 %1550, %v486
      %v1552 = vpop.permute.xlu0 %1551
      %1555 = vset.pattern.permute.xlu0 0
      %1556 = vperm.xlu0 %1555, %v487
      %v1557 = vpop.permute.xlu0 %1556
      %1560 = vset.pattern.permute.xlu0 0
      %1561 = vperm.xlu0 %1560, %v488
      %v1562 = vpop.permute.xlu0 %1561
      %1565 = vset.pattern.permute.xlu0 0
      %1566 = vperm.xlu0 %1565, %v489
      %v1567 = vpop.permute.xlu0 %1566
      %1570 = vset.pattern.permute.xlu0 0
      %1571 = vperm.xlu0 %1570, %v490
      %v1572 = vpop.permute.xlu0 %1571
      %1575 = vset.pattern.permute.xlu0 0
      %1576 = vperm.xlu0 %1575, %v491
      %v1577 = vpop.permute.xlu0 %1576
      %1580 = vset.pattern.permute.xlu0 0
      %1581 = vperm.xlu0 %1580, %v492
      %v1582 = vpop.permute.xlu0 %1581
      %1585 = vset.pattern.permute.xlu0 0
      %1586 = vperm.xlu0 %1585, %v493
      %v1587 = vpop.permute.xlu0 %1586
      %1590 = vset.pattern.permute.xlu0 0
      %1591 = vperm.xlu0 %1590, %v494
      %v1592 = vpop.permute.xlu0 %1591
      %1595 = vset.pattern.permute.xlu0 0
      %1596 = vperm.xlu0 %1595, %v495
      %v1597 = vpop.permute.xlu0 %1596
      %1600 = vset.pattern.permute.xlu0 0
      %1601 = vperm.xlu0 %1600, %v496
      %v1602 = vpop.permute.xlu0 %1601
      %1605 = vset.pattern.permute.xlu0 0
      %1606 = vperm.xlu0 %1605, %v497
      %v1607 = vpop.permute.xlu0 %1606
      %1610 = vset.pattern.permute.xlu0 0
      %1611 = vperm.xlu0 %1610, %v498
      %v1612 = vpop.permute.xlu0 %1611
      %1615 = vset.pattern.permute.xlu0 0
      %1616 = vperm.xlu0 %1615, %v499
      %v1617 = vpop.permute.xlu0 %1616
      %1620 = vset.pattern.permute.xlu0 0
      %1621 = vperm.xlu0 %1620, %v500
      %v1622 = vpop.permute.xlu0 %1621
      %1625 = vset.pattern.permute.xlu0 0
      %1626 = vperm.xlu0 %1625, %v501
      %v1627 = vpop.permute.xlu0 %1626
      %1630 = vset.pattern.permute.xlu0 0
      %1631 = vperm.xlu0 %1630, %v502
      %v1632 = vpop.permute.xlu0 %1631
      %1635 = vset.pattern.permute.xlu0 0
      %1636 = vperm.xlu0 %1635, %v503
      %v1637 = vpop.permute.xlu0 %1636
      %1640 = vset.pattern.permute.xlu0 0
      %1641 = vperm.xlu0 %1640, %v504
      %v1642 = vpop.permute.xlu0 %1641
      %1645 = vset.pattern.permute.xlu0 0
      %1646 = vperm.xlu0 %1645, %v505
      %v1647 = vpop.permute.xlu0 %1646
      %1650 = vset.pattern.permute.xlu0 0
      %1651 = vperm.xlu0 %1650, %v506
      %v1652 = vpop.permute.xlu0 %1651
      %1655 = vset.pattern.permute.xlu0 0
      %1656 = vperm.xlu0 %1655, %v507
      %v1657 = vpop.permute.xlu0 %1656
      %1660 = vset.pattern.permute.xlu0 0
      %1661 = vperm.xlu0 %1660, %v508
      %v1662 = vpop.permute.xlu0 %1661
      %v1664 = vlaneseq
      %v1665 = vshrl.u32 %v1664, 7
      %v1666 = vsub.s32 0, %v1665
      %v1667 = vrot.slane %v412, %v1666
      %v1668 = vmul.f32 %v1507, %v1667
      %v1669 = vmul.f32 %v1512, %v1667
      %v1670 = vmul.f32 %v1517, %v1667
      %v1671 = vmul.f32 %v1522, %v1667
      %v1672 = vmul.f32 %v1527, %v1667
      %v1673 = vmul.f32 %v1532, %v1667
      %v1674 = vmul.f32 %v1537, %v1667
      %v1675 = vmul.f32 %v1542, %v1667
      %v1676 = vmul.f32 %v1547, %v1667
      %v1677 = vmul.f32 %v1552, %v1667
      %v1678 = vmul.f32 %v1557, %v1667
      %v1679 = vmul.f32 %v1562, %v1667
      %v1680 = vmul.f32 %v1567, %v1667
      %v1681 = vmul.f32 %v1572, %v1667
      %v1682 = vmul.f32 %v1577, %v1667
      %v1683 = vmul.f32 %v1582, %v1667
      %v1684 = vmul.f32 %v1587, %v1667
      %v1685 = vmul.f32 %v1592, %v1667
      %v1686 = vmul.f32 %v1597, %v1667
      %v1687 = vmul.f32 %v1602, %v1667
      %v1688 = vmul.f32 %v1607, %v1667
      %v1689 = vmul.f32 %v1612, %v1667
      %v1690 = vmul.f32 %v1617, %v1667
      %v1691 = vmul.f32 %v1622, %v1667
      %v1692 = vmul.f32 %v1627, %v1667
      %v1693 = vmul.f32 %v1632, %v1667
      %v1694 = vmul.f32 %v1637, %v1667
      %v1695 = vmul.f32 %v1642, %v1667
      %v1696 = vmul.f32 %v1647, %v1667
      %v1697 = vmul.f32 %v1652, %v1667
      %v1698 = vmul.f32 %v1657, %v1667
      %v1699 = vmul.f32 %v1662, %v1667
      %v1700 = vadd.f32 %v1378, %v1668
      %v1701 = vadd.f32 %v1381, %v1669
      %v1702 = vadd.f32 %v1386, %v1670
      %v1703 = vadd.f32 %v1389, %v1671
      %v1704 = vadd.f32 %v1394, %v1672
      %v1705 = vadd.f32 %v1397, %v1673
      %v1706 = vadd.f32 %v1402, %v1674
      %v1707 = vadd.f32 %v1405, %v1675
      %v1708 = vadd.f32 %v1410, %v1676
      %v1709 = vadd.f32 %v1413, %v1677
      %v1710 = vadd.f32 %v1418, %v1678
      %v1711 = vadd.f32 %v1421, %v1679
      %v1712 = vadd.f32 %v1426, %v1680
      %v1713 = vadd.f32 %v1429, %v1681
      %v1714 = vadd.f32 %v1434, %v1682
      %v1715 = vadd.f32 %v1437, %v1683
      %v1716 = vadd.f32 %v1442, %v1684
      %v1717 = vadd.f32 %v1445, %v1685
      %v1718 = vadd.f32 %v1450, %v1686
      %v1719 = vadd.f32 %v1453, %v1687
      %v1720 = vadd.f32 %v1458, %v1688
      %v1721 = vadd.f32 %v1461, %v1689
      %v1722 = vadd.f32 %v1466, %v1690
      %v1723 = vadd.f32 %v1469, %v1691
      %v1724 = vadd.f32 %v1474, %v1692
      %v1725 = vadd.f32 %v1477, %v1693
      %v1726 = vadd.f32 %v1482, %v1694
      %v1727 = vadd.f32 %v1485, %v1695
      %v1728 = vadd.f32 %v1490, %v1696
      %v1729 = vadd.f32 %v1493, %v1697
      %v1730 = vadd.f32 %v1498, %v1698
      %v1731 = vadd.f32 %v1501, %v1699
      %vm1732 = vcmp.eq.s32.totalorder %v380, 1
      %vm1733 = vcmp.eq.s32.totalorder %v381, 1
      %vm1734 = vcmp.eq.s32.totalorder %v382, 1
      %vm1735 = vcmp.eq.s32.totalorder %v383, 1
      %vm1736 = vcmp.eq.s32.totalorder %v384, 1
      %vm1737 = vcmp.eq.s32.totalorder %v385, 1
      %vm1738 = vcmp.eq.s32.totalorder %v386, 1
      %vm1739 = vcmp.eq.s32.totalorder %v387, 1
      %vm1740 = vcmp.eq.s32.totalorder %v388, 1
      %vm1741 = vcmp.eq.s32.totalorder %v389, 1
      %vm1742 = vcmp.eq.s32.totalorder %v390, 1
      %vm1743 = vcmp.eq.s32.totalorder %v391, 1
      %vm1744 = vcmp.eq.s32.totalorder %v392, 1
      %vm1745 = vcmp.eq.s32.totalorder %v393, 1
      %vm1746 = vcmp.eq.s32.totalorder %v394, 1
      %vm1747 = vcmp.eq.s32.totalorder %v395, 1
      %vm1748 = vcmp.eq.s32.totalorder %v396, 1
      %vm1749 = vcmp.eq.s32.totalorder %v397, 1
      %vm1750 = vcmp.eq.s32.totalorder %v398, 1
      %vm1751 = vcmp.eq.s32.totalorder %v399, 1
      %vm1752 = vcmp.eq.s32.totalorder %v400, 1
      %vm1753 = vcmp.eq.s32.totalorder %v401, 1
      %vm1754 = vcmp.eq.s32.totalorder %v402, 1
      %vm1755 = vcmp.eq.s32.totalorder %v403, 1
      %vm1756 = vcmp.eq.s32.totalorder %v404, 1
      %vm1757 = vcmp.eq.s32.totalorder %v405, 1
      %vm1758 = vcmp.eq.s32.totalorder %v406, 1
      %vm1759 = vcmp.eq.s32.totalorder %v407, 1
      %vm1760 = vcmp.eq.s32.totalorder %v408, 1
      %vm1761 = vcmp.eq.s32.totalorder %v409, 1
      %vm1762 = vcmp.eq.s32.totalorder %v410, 1
      %vm1763 = vcmp.eq.s32.totalorder %v411, 1
      %v1764 = vsel %vm1732, 1, 0
      %v1765 = vsel %vm1733, 1, 0
      %v1766 = vsel %vm1734, 1, 0
      %v1767 = vsel %vm1735, 1, 0
      %v1768 = vsel %vm1736, 1, 0
      %v1769 = vsel %vm1737, 1, 0
      %v1770 = vsel %vm1738, 1, 0
      %v1771 = vsel %vm1739, 1, 0
      %v1772 = vsel %vm1740, 1, 0
      %v1773 = vsel %vm1741, 1, 0
      %v1774 = vsel %vm1742, 1, 0
      %v1775 = vsel %vm1743, 1, 0
      %v1776 = vsel %vm1744, 1, 0
      %v1777 = vsel %vm1745, 1, 0
      %v1778 = vsel %vm1746, 1, 0
      %v1779 = vsel %vm1747, 1, 0
      %v1780 = vsel %vm1748, 1, 0
      %v1781 = vsel %vm1749, 1, 0
      %v1782 = vsel %vm1750, 1, 0
      %v1783 = vsel %vm1751, 1, 0
      %v1784 = vsel %vm1752, 1, 0
      %v1785 = vsel %vm1753, 1, 0
      %v1786 = vsel %vm1754, 1, 0
      %v1787 = vsel %vm1755, 1, 0
      %v1788 = vsel %vm1756, 1, 0
      %v1789 = vsel %vm1757, 1, 0
      %v1790 = vsel %vm1758, 1, 0
      %v1791 = vsel %vm1759, 1, 0
      %v1792 = vsel %vm1760, 1, 0
      %v1793 = vsel %vm1761, 1, 0
      %v1794 = vsel %vm1762, 1, 0
      %v1795 = vsel %vm1763, 1, 0
      %v1796 = vcvt.s32.f32 %v1764
      %v1797 = vcvt.s32.f32 %v1765
      %v1798 = vcvt.s32.f32 %v1766
      %v1799 = vcvt.s32.f32 %v1767
      %v1800 = vcvt.s32.f32 %v1768
      %v1801 = vcvt.s32.f32 %v1769
      %v1802 = vcvt.s32.f32 %v1770
      %v1803 = vcvt.s32.f32 %v1771
      %v1804 = vcvt.s32.f32 %v1772
      %v1805 = vcvt.s32.f32 %v1773
      %v1806 = vcvt.s32.f32 %v1774
      %v1807 = vcvt.s32.f32 %v1775
      %v1808 = vcvt.s32.f32 %v1776
      %v1809 = vcvt.s32.f32 %v1777
      %v1810 = vcvt.s32.f32 %v1778
      %v1811 = vcvt.s32.f32 %v1779
      %v1812 = vcvt.s32.f32 %v1780
      %v1813 = vcvt.s32.f32 %v1781
      %v1814 = vcvt.s32.f32 %v1782
      %v1815 = vcvt.s32.f32 %v1783
      %v1816 = vcvt.s32.f32 %v1784
      %v1817 = vcvt.s32.f32 %v1785
      %v1818 = vcvt.s32.f32 %v1786
      %v1819 = vcvt.s32.f32 %v1787
      %v1820 = vcvt.s32.f32 %v1788
      %v1821 = vcvt.s32.f32 %v1789
      %v1822 = vcvt.s32.f32 %v1790
      %v1823 = vcvt.s32.f32 %v1791
      %v1824 = vcvt.s32.f32 %v1792
      %v1825 = vcvt.s32.f32 %v1793
      %v1826 = vcvt.s32.f32 %v1794
      %v1827 = vcvt.s32.f32 %v1795
      %v1828 = vpack.c.bf16 %v1797, %v1796
      %v1829 = vpack.c.bf16 %v1799, %v1798
      %v1830 = vpack.c.bf16 %v1801, %v1800
      %v1831 = vpack.c.bf16 %v1803, %v1802
      %v1832 = vpack.c.bf16 %v1805, %v1804
      %v1833 = vpack.c.bf16 %v1807, %v1806
      %v1834 = vpack.c.bf16 %v1809, %v1808
      %v1835 = vpack.c.bf16 %v1811, %v1810
      %v1836 = vpack.c.bf16 %v1813, %v1812
      %v1837 = vpack.c.bf16 %v1815, %v1814
      %v1838 = vpack.c.bf16 %v1817, %v1816
      %v1839 = vpack.c.bf16 %v1819, %v1818
      %v1840 = vpack.c.bf16 %v1821, %v1820
      %v1841 = vpack.c.bf16 %v1823, %v1822
      %v1842 = vpack.c.bf16 %v1825, %v1824
      %v1843 = vpack.c.bf16 %v1827, %v1826
      %1845 = vset.pattern.permute.xlu0 0
      %1846 = vperm.xlu0 %1845, %v1828
      %v1847 = vpop.permute.xlu0 %1846
      %1849 = vset.pattern.permute.xlu0 0
      %1850 = vperm.xlu0 %1849, %v1829
      %v1851 = vpop.permute.xlu0 %1850
      %1853 = vset.pattern.permute.xlu0 0
      %1854 = vperm.xlu0 %1853, %v1830
      %v1855 = vpop.permute.xlu0 %1854
      %1857 = vset.pattern.permute.xlu0 0
      %1858 = vperm.xlu0 %1857, %v1831
      %v1859 = vpop.permute.xlu0 %1858
      %1861 = vset.pattern.permute.xlu0 0
      %1862 = vperm.xlu0 %1861, %v1832
      %v1863 = vpop.permute.xlu0 %1862
      %1865 = vset.pattern.permute.xlu0 0
      %1866 = vperm.xlu0 %1865, %v1833
      %v1867 = vpop.permute.xlu0 %1866
      %1869 = vset.pattern.permute.xlu0 0
      %1870 = vperm.xlu0 %1869, %v1834
      %v1871 = vpop.permute.xlu0 %1870
      %1873 = vset.pattern.permute.xlu0 0
      %1874 = vperm.xlu0 %1873, %v1835
      %v1875 = vpop.permute.xlu0 %1874
      %1877 = vset.pattern.permute.xlu0 0
      %1878 = vperm.xlu0 %1877, %v1836
      %v1879 = vpop.permute.xlu0 %1878
      %1881 = vset.pattern.permute.xlu0 0
      %1882 = vperm.xlu0 %1881, %v1837
      %v1883 = vpop.permute.xlu0 %1882
      %1885 = vset.pattern.permute.xlu0 0
      %1886 = vperm.xlu0 %1885, %v1838
      %v1887 = vpop.permute.xlu0 %1886
      %1889 = vset.pattern.permute.xlu0 0
      %1890 = vperm.xlu0 %1889, %v1839
      %v1891 = vpop.permute.xlu0 %1890
      %1893 = vset.pattern.permute.xlu0 0
      %1894 = vperm.xlu0 %1893, %v1840
      %v1895 = vpop.permute.xlu0 %1894
      %1897 = vset.pattern.permute.xlu0 0
      %1898 = vperm.xlu0 %1897, %v1841
      %v1899 = vpop.permute.xlu0 %1898
      %1901 = vset.pattern.permute.xlu0 0
      %1902 = vperm.xlu0 %1901, %v1842
      %v1903 = vpop.permute.xlu0 %1902
      %1905 = vset.pattern.permute.xlu0 0
      %1906 = vperm.xlu0 %1905, %v1843
      %v1907 = vpop.permute.xlu0 %1906
      %v1925 = vunpack.c.l.s4 839922192
      %v1926 = vunpack.c.0.s8 %v1925
      %v1927 = vlaneseq
      %v1928 = vshrl.u32 %v1927, 7
      %v1929 = vsub.s32 %v1926, %v1928
      %v1930 = vrot.slane %v1847, %v1929
      %v1932 = vunpack.c.l.s4 1985246804
      %v1933 = vunpack.c.0.s8 %v1932
      %v1934 = vlaneseq
      %v1935 = vshrl.u32 %v1934, 7
      %v1936 = vsub.s32 %v1933, %v1935
      %v1937 = vrot.slane %v1847, %v1936
      %v1939 = vunpack.c.l.s4 839922192
      %v1940 = vunpack.c.0.s8 %v1939
      %v1941 = vlaneseq
      %v1942 = vshrl.u32 %v1941, 7
      %v1943 = vsub.s32 %v1940, %v1942
      %v1944 = vrot.slane %v1851, %v1943
      %v1946 = vunpack.c.l.s4 1985246804
      %v1947 = vunpack.c.0.s8 %v1946
      %v1948 = vlaneseq
      %v1949 = vshrl.u32 %v1948, 7
      %v1950 = vsub.s32 %v1947, %v1949
      %v1951 = vrot.slane %v1851, %v1950
      %v1953 = vunpack.c.l.s4 839922192
      %v1954 = vunpack.c.0.s8 %v1953
      %v1955 = vlaneseq
      %v1956 = vshrl.u32 %v1955, 7
      %v1957 = vsub.s32 %v1954, %v1956
      %v1958 = vrot.slane %v1855, %v1957
      %v1960 = vunpack.c.l.s4 1985246804
      %v1961 = vunpack.c.0.s8 %v1960
      %v1962 = vlaneseq
      %v1963 = vshrl.u32 %v1962, 7
      %v1964 = vsub.s32 %v1961, %v1963
      %v1965 = vrot.slane %v1855, %v1964
      %v1967 = vunpack.c.l.s4 839922192
      %v1968 = vunpack.c.0.s8 %v1967
      %v1969 = vlaneseq
      %v1970 = vshrl.u32 %v1969, 7
      %v1971 = vsub.s32 %v1968, %v1970
      %v1972 = vrot.slane %v1859, %v1971
      %v1974 = vunpack.c.l.s4 1985246804
      %v1975 = vunpack.c.0.s8 %v1974
      %v1976 = vlaneseq
      %v1977 = vshrl.u32 %v1976, 7
      %v1978 = vsub.s32 %v1975, %v1977
      %v1979 = vrot.slane %v1859, %v1978
      %v1981 = vunpack.c.l.s4 839922192
      %v1982 = vunpack.c.0.s8 %v1981
      %v1983 = vlaneseq
      %v1984 = vshrl.u32 %v1983, 7
      %v1985 = vsub.s32 %v1982, %v1984
      %v1986 = vrot.slane %v1863, %v1985
      %v1988 = vunpack.c.l.s4 1985246804
      %v1989 = vunpack.c.0.s8 %v1988
      %v1990 = vlaneseq
      %v1991 = vshrl.u32 %v1990, 7
      %v1992 = vsub.s32 %v1989, %v1991
      %v1993 = vrot.slane %v1863, %v1992
      %v1995 = vunpack.c.l.s4 839922192
      %v1996 = vunpack.c.0.s8 %v1995
      %v1997 = vlaneseq
      %v1998 = vshrl.u32 %v1997, 7
      %v1999 = vsub.s32 %v1996, %v1998
      %v2000 = vrot.slane %v1867, %v1999
      %v2002 = vunpack.c.l.s4 1985246804
      %v2003 = vunpack.c.0.s8 %v2002
      %v2004 = vlaneseq
      %v2005 = vshrl.u32 %v2004, 7
      %v2006 = vsub.s32 %v2003, %v2005
      %v2007 = vrot.slane %v1867, %v2006
      %v2009 = vunpack.c.l.s4 839922192
      %v2010 = vunpack.c.0.s8 %v2009
      %v2011 = vlaneseq
      %v2012 = vshrl.u32 %v2011, 7
      %v2013 = vsub.s32 %v2010, %v2012
      %v2014 = vrot.slane %v1871, %v2013
      %v2016 = vunpack.c.l.s4 1985246804
      %v2017 = vunpack.c.0.s8 %v2016
      %v2018 = vlaneseq
      %v2019 = vshrl.u32 %v2018, 7
      %v2020 = vsub.s32 %v2017, %v2019
      %v2021 = vrot.slane %v1871, %v2020
      %v2023 = vunpack.c.l.s4 839922192
      %v2024 = vunpack.c.0.s8 %v2023
      %v2025 = vlaneseq
      %v2026 = vshrl.u32 %v2025, 7
      %v2027 = vsub.s32 %v2024, %v2026
      %v2028 = vrot.slane %v1875, %v2027
      %v2030 = vunpack.c.l.s4 1985246804
      %v2031 = vunpack.c.0.s8 %v2030
      %v2032 = vlaneseq
      %v2033 = vshrl.u32 %v2032, 7
      %v2034 = vsub.s32 %v2031, %v2033
      %v2035 = vrot.slane %v1875, %v2034
      %v2037 = vunpack.c.l.s4 839922192
      %v2038 = vunpack.c.0.s8 %v2037
      %v2039 = vlaneseq
      %v2040 = vshrl.u32 %v2039, 7
      %v2041 = vsub.s32 %v2038, %v2040
      %v2042 = vrot.slane %v1879, %v2041
      %v2044 = vunpack.c.l.s4 1985246804
      %v2045 = vunpack.c.0.s8 %v2044
      %v2046 = vlaneseq
      %v2047 = vshrl.u32 %v2046, 7
      %v2048 = vsub.s32 %v2045, %v2047
      %v2049 = vrot.slane %v1879, %v2048
      %v2051 = vunpack.c.l.s4 839922192
      %v2052 = vunpack.c.0.s8 %v2051
      %v2053 = vlaneseq
      %v2054 = vshrl.u32 %v2053, 7
      %v2055 = vsub.s32 %v2052, %v2054
      %v2056 = vrot.slane %v1883, %v2055
      %v2058 = vunpack.c.l.s4 1985246804
      %v2059 = vunpack.c.0.s8 %v2058
      %v2060 = vlaneseq
      %v2061 = vshrl.u32 %v2060, 7
      %v2062 = vsub.s32 %v2059, %v2061
      %v2063 = vrot.slane %v1883, %v2062
      %v2065 = vunpack.c.l.s4 839922192
      %v2066 = vunpack.c.0.s8 %v2065
      %v2067 = vlaneseq
      %v2068 = vshrl.u32 %v2067, 7
      %v2069 = vsub.s32 %v2066, %v2068
      %v2070 = vrot.slane %v1887, %v2069
      %v2072 = vunpack.c.l.s4 1985246804
      %v2073 = vunpack.c.0.s8 %v2072
      %v2074 = vlaneseq
      %v2075 = vshrl.u32 %v2074, 7
      %v2076 = vsub.s32 %v2073, %v2075
      %v2077 = vrot.slane %v1887, %v2076
      %v2079 = vunpack.c.l.s4 839922192
      %v2080 = vunpack.c.0.s8 %v2079
      %v2081 = vlaneseq
      %v2082 = vshrl.u32 %v2081, 7
      %v2083 = vsub.s32 %v2080, %v2082
      %v2084 = vrot.slane %v1891, %v2083
      %v2086 = vunpack.c.l.s4 1985246804
      %v2087 = vunpack.c.0.s8 %v2086
      %v2088 = vlaneseq
      %v2089 = vshrl.u32 %v2088, 7
      %v2090 = vsub.s32 %v2087, %v2089
      %v2091 = vrot.slane %v1891, %v2090
      %v2093 = vunpack.c.l.s4 839922192
      %v2094 = vunpack.c.0.s8 %v2093
      %v2095 = vlaneseq
      %v2096 = vshrl.u32 %v2095, 7
      %v2097 = vsub.s32 %v2094, %v2096
      %v2098 = vrot.slane %v1895, %v2097
      %v2100 = vunpack.c.l.s4 1985246804
      %v2101 = vunpack.c.0.s8 %v2100
      %v2102 = vlaneseq
      %v2103 = vshrl.u32 %v2102, 7
      %v2104 = vsub.s32 %v2101, %v2103
      %v2105 = vrot.slane %v1895, %v2104
      %v2107 = vunpack.c.l.s4 839922192
      %v2108 = vunpack.c.0.s8 %v2107
      %v2109 = vlaneseq
      %v2110 = vshrl.u32 %v2109, 7
      %v2111 = vsub.s32 %v2108, %v2110
      %v2112 = vrot.slane %v1899, %v2111
      %v2114 = vunpack.c.l.s4 1985246804
      %v2115 = vunpack.c.0.s8 %v2114
      %v2116 = vlaneseq
      %v2117 = vshrl.u32 %v2116, 7
      %v2118 = vsub.s32 %v2115, %v2117
      %v2119 = vrot.slane %v1899, %v2118
      %v2121 = vunpack.c.l.s4 839922192
      %v2122 = vunpack.c.0.s8 %v2121
      %v2123 = vlaneseq
      %v2124 = vshrl.u32 %v2123, 7
      %v2125 = vsub.s32 %v2122, %v2124
      %v2126 = vrot.slane %v1903, %v2125
      %v2128 = vunpack.c.l.s4 1985246804
      %v2129 = vunpack.c.0.s8 %v2128
      %v2130 = vlaneseq
      %v2131 = vshrl.u32 %v2130, 7
      %v2132 = vsub.s32 %v2129, %v2131
      %v2133 = vrot.slane %v1903, %v2132
      %v2135 = vunpack.c.l.s4 839922192
      %v2136 = vunpack.c.0.s8 %v2135
      %v2137 = vlaneseq
      %v2138 = vshrl.u32 %v2137, 7
      %v2139 = vsub.s32 %v2136, %v2138
      %v2140 = vrot.slane %v1907, %v2139
      %v2142 = vunpack.c.l.s4 1985246804
      %v2143 = vunpack.c.0.s8 %v2142
      %v2144 = vlaneseq
      %v2145 = vshrl.u32 %v2144, 7
      %v2146 = vsub.s32 %v2143, %v2145
      %v2147 = vrot.slane %v1907, %v2146
      %v2180 = vmul.bf16 %v348, %v1930
      %v2181 = vmul.bf16 %v349, %v1937
      %v2182 = vmul.bf16 %v350, %v1944
      %v2183 = vmul.bf16 %v351, %v1951
      %v2184 = vmul.bf16 %v352, %v1958
      %v2185 = vmul.bf16 %v353, %v1965
      %v2186 = vmul.bf16 %v354, %v1972
      %v2187 = vmul.bf16 %v355, %v1979
      %v2188 = vmul.bf16 %v356, %v1986
      %v2189 = vmul.bf16 %v357, %v1993
      %v2190 = vmul.bf16 %v358, %v2000
      %v2191 = vmul.bf16 %v359, %v2007
      %v2192 = vmul.bf16 %v360, %v2014
      %v2193 = vmul.bf16 %v361, %v2021
      %v2194 = vmul.bf16 %v362, %v2028
      %v2195 = vmul.bf16 %v363, %v2035
      %v2196 = vmul.bf16 %v364, %v2042
      %v2197 = vmul.bf16 %v365, %v2049
      %v2198 = vmul.bf16 %v366, %v2056
      %v2199 = vmul.bf16 %v367, %v2063
      %v2200 = vmul.bf16 %v368, %v2070
      %v2201 = vmul.bf16 %v369, %v2077
      %v2202 = vmul.bf16 %v370, %v2084
      %v2203 = vmul.bf16 %v371, %v2091
      %v2204 = vmul.bf16 %v372, %v2098
      %v2205 = vmul.bf16 %v373, %v2105
      %v2206 = vmul.bf16 %v374, %v2112
      %v2207 = vmul.bf16 %v375, %v2119
      %v2208 = vmul.bf16 %v376, %v2126
      %v2209 = vmul.bf16 %v377, %v2133
      %v2210 = vmul.bf16 %v378, %v2140
      %v2211 = vmul.bf16 %v379, %v2147
      %v2212 = vld [vmem:[%s4 + $0x10] sm:$0xf]
      %v2213 = vld [vmem:[%s4 + $0x14] sm:$0xf]
      %v2214 = vld [vmem:[%s4 + $0x18] sm:$0xf]
      %v2215 = vld [vmem:[%s4 + $0x1c] sm:$0xf]
      %v2248 = vunpack.c.l.b16 %v2180
      %v2249 = vunpack.c.l.b16 %v2181
      %v2250 = vunpack.c.l.b16 %v2182
      %v2251 = vunpack.c.l.b16 %v2183
      %v2252 = vunpack.c.l.b16 %v2184
      %v2253 = vunpack.c.l.b16 %v2185
      %v2254 = vunpack.c.l.b16 %v2186
      %v2255 = vunpack.c.l.b16 %v2187
      %v2256 = vunpack.c.l.b16 %v2188
      %v2257 = vunpack.c.l.b16 %v2189
      %v2258 = vunpack.c.l.b16 %v2190
      %v2259 = vunpack.c.l.b16 %v2191
      %v2260 = vunpack.c.l.b16 %v2192
      %v2261 = vunpack.c.l.b16 %v2193
      %v2262 = vunpack.c.l.b16 %v2194
      %v2263 = vunpack.c.l.b16 %v2195
      %v2264 = vunpack.c.l.b16 %v2196
      %v2265 = vunpack.c.l.b16 %v2197
      %v2266 = vunpack.c.l.b16 %v2198
      %v2267 = vunpack.c.l.b16 %v2199
      %v2268 = vunpack.c.l.b16 %v2200
      %v2269 = vunpack.c.l.b16 %v2201
      %v2270 = vunpack.c.l.b16 %v2202
      %v2271 = vunpack.c.l.b16 %v2203
      %v2272 = vunpack.c.l.b16 %v2204
      %v2273 = vunpack.c.l.b16 %v2205
      %v2274 = vunpack.c.l.b16 %v2206
      %v2275 = vunpack.c.l.b16 %v2207
      %v2276 = vunpack.c.l.b16 %v2208
      %v2277 = vunpack.c.l.b16 %v2209
      %v2278 = vunpack.c.l.b16 %v2210
      %v2279 = vunpack.c.l.b16 %v2211
      %v2280 = vpack.c.b16 %v2249, %v2248
      %v2281 = vpack.c.b16 %v2251, %v2250
      %v2282 = vpack.c.b16 %v2253, %v2252
      %v2283 = vpack.c.b16 %v2255, %v2254
      %v2284 = vpack.c.b16 %v2257, %v2256
      %v2285 = vpack.c.b16 %v2259, %v2258
      %v2286 = vpack.c.b16 %v2261, %v2260
      %v2287 = vpack.c.b16 %v2263, %v2262
      %v2288 = vpack.c.b16 %v2265, %v2264
      %v2289 = vpack.c.b16 %v2267, %v2266
      %v2290 = vpack.c.b16 %v2269, %v2268
      %v2291 = vpack.c.b16 %v2271, %v2270
      %v2292 = vpack.c.b16 %v2273, %v2272
      %v2293 = vpack.c.b16 %v2275, %v2274
      %v2294 = vpack.c.b16 %v2277, %v2276
      %v2295 = vpack.c.b16 %v2279, %v2278
      %v2300 = vunpack.c.l.b16 %v2212
      %v2301 = vunpack.c.l.b16 %v2213
      %v2302 = vunpack.c.l.b16 %v2214
      %v2303 = vunpack.c.l.b16 %v2215
      %v2304 = vpack.c.b16 %v2301, %v2300
      %v2305 = vpack.c.b16 %v2303, %v2302
      %v2309 = vsel %vm989, %v2280, 0
      %v2312 = vsel %vm989, %v2281, 0
      %v2315 = vsel %vm989, %v2282, 0
      %v2318 = vsel %vm989, %v2283, 0
      %v2321 = vsel %vm989, %v2284, 0
      %v2324 = vsel %vm989, %v2285, 0
      %v2327 = vsel %vm989, %v2286, 0
      %v2330 = vsel %vm989, %v2287, 0
      %v2333 = vsel %vm989, %v2288, 0
      %v2336 = vsel %vm989, %v2289, 0
      %v2339 = vsel %vm989, %v2290, 0
      %v2342 = vsel %vm989, %v2291, 0
      %v2345 = vsel %vm989, %v2292, 0
      %v2348 = vsel %vm989, %v2293, 0
      %v2351 = vsel %vm989, %v2294, 0
      %v2354 = vsel %vm989, %v2295, 0
      %2356 = vmatprep.subr.bf16.mxu0 0
      %2357 = vmatpush1.bf16.msra.mxu0 %v2304
      %2358 = vmatprep.subr.bf16.mxu0 0
      %2359 = vmatpush1.bf16.msra.mxu0 %v2305
      %2360 = vmatprep.subr.bf16.mxu0 0
      %2361 = vmatpush1.bf16.msra.mxu0 0
      %2362 = vmatprep.subr.bf16.mxu0 0
      %2363 = vmatpush1.bf16.msra.mxu0 0
      %2364 = vmatprep.subr.bf16.mxu0 0
      %2365 = vmatpush1.bf16.msra.mxu0 0
      %2366 = vmatprep.subr.bf16.mxu0 0
      %2367 = vmatpush1.bf16.msra.mxu0 0
      %2368 = vmatprep.subr.bf16.mxu0 0
      %2369 = vmatpush1.bf16.msra.mxu0 0
      %2370 = vmatprep.subr.bf16.mxu0 0
      %2371 = vmatpush1.bf16.msra.mxu0 0
      %2372 = vmatprep.subr.bf16.mxu0 0
      %2373 = vmatpush1.bf16.msra.mxu0 0
      %2374 = vmatprep.subr.bf16.mxu0 0
      %2375 = vmatpush1.bf16.msra.mxu0 0
      %2376 = vmatprep.subr.bf16.mxu0 0
      %2377 = vmatpush1.bf16.msra.mxu0 0
      %2378 = vmatprep.subr.bf16.mxu0 0
      %2379 = vmatpush1.bf16.msra.mxu0 0
      %2380 = vmatprep.subr.bf16.mxu0 0
      %2381 = vmatpush1.bf16.msra.mxu0 0
      %2382 = vmatprep.subr.bf16.mxu0 0
      %2383 = vmatpush1.bf16.msra.mxu0 0
      %2384 = vmatprep.subr.bf16.mxu0 0
      %2385 = vmatpush1.bf16.msra.mxu0 0
      %2386 = vmatprep.subr.bf16.mxu0 0
      %2387 = vmatpush1.bf16.msra.mxu0 0
      %2388 = vmatprep.mubr.bf16.mxu0 0
      %2389 = vmatmul.mubr.bf16.gmra.mrb[0].mxu0 %v2309
      %v2390 = vpop.f32.mrb[0].mxu0
      %v2391 = vadd.f32 0.0, %v2390
      %v2392 = vpop.f32.mrb[0].mxu0
      %v2393 = vpop.f32.mrb[0].mxu0
      %v2394 = vadd.f32 0.0, %v2393
      %v2395 = vpop.f32.mrb[0].mxu0
      %2396 = vmatprep.mubr.bf16.mxu0 0
      %2397 = vmatmul.mubr.bf16.gmra.mrb[0].mxu0 %v2312
      %v2398 = vpop.f32.mrb[0].mxu0
      %v2399 = vadd.f32 0.0, %v2398
      %v2400 = vpop.f32.mrb[0].mxu0
      %v2401 = vpop.f32.mrb[0].mxu0
      %v2402 = vadd.f32 0.0, %v2401
      %v2403 = vpop.f32.mrb[0].mxu0
      %2404 = vmatprep.mubr.bf16.mxu0 0
      %2405 = vmatmul.mubr.bf16.gmra.mrb[0].mxu0 %v2315
      %v2406 = vpop.f32.mrb[0].mxu0
      %v2407 = vadd.f32 0.0, %v2406
      %v2408 = vpop.f32.mrb[0].mxu0
      %v2409 = vpop.f32.mrb[0].mxu0
      %v2410 = vadd.f32 0.0, %v2409
      %v2411 = vpop.f32.mrb[0].mxu0
      %2412 = vmatprep.mubr.bf16.mxu0 0
      %2413 = vmatmul.mubr.bf16.gmra.mrb[0].mxu0 %v2318
      %v2414 = vpop.f32.mrb[0].mxu0
      %v2415 = vadd.f32 0.0, %v2414
      %v2416 = vpop.f32.mrb[0].mxu0
      %v2417 = vpop.f32.mrb[0].mxu0
      %v2418 = vadd.f32 0.0, %v2417
      %v2419 = vpop.f32.mrb[0].mxu0
      %2420 = vmatprep.mubr.bf16.mxu0 0
      %2421 = vmatmul.mubr.bf16.gmra.mrb[0].mxu0 %v2321
      %v2422 = vpop.f32.mrb[0].mxu0
      %v2423 = vadd.f32 0.0, %v2422
      %v2424 = vpop.f32.mrb[0].mxu0
      %v2425 = vpop.f32.mrb[0].mxu0
      %v2426 = vadd.f32 0.0, %v2425
      %v2427 = vpop.f32.mrb[0].mxu0
      %2428 = vmatprep.mubr.bf16.mxu0 0
      %2429 = vmatmul.mubr.bf16.gmra.mrb[0].mxu0 %v2324
      %v2430 = vpop.f32.mrb[0].mxu0
      %v2431 = vadd.f32 0.0, %v2430
      %v2432 = vpop.f32.mrb[0].mxu0
      %v2433 = vpop.f32.mrb[0].mxu0
      %v2434 = vadd.f32 0.0, %v2433
      %v2435 = vpop.f32.mrb[0].mxu0
      %2436 = vmatprep.mubr.bf16.mxu0 0
      %2437 = vmatmul.mubr.bf16.gmra.mrb[0].mxu0 %v2327
      %v2438 = vpop.f32.mrb[0].mxu0
      %v2439 = vadd.f32 0.0, %v2438
      %v2440 = vpop.f32.mrb[0].mxu0
      %v2441 = vpop.f32.mrb[0].mxu0
      %v2442 = vadd.f32 0.0, %v2441
      %v2443 = vpop.f32.mrb[0].mxu0
      %2444 = vmatprep.mubr.bf16.mxu0 0
      %2445 = vmatmul.mubr.bf16.gmra.mrb[0].mxu0 %v2330
      %v2446 = vpop.f32.mrb[0].mxu0
      %v2447 = vadd.f32 0.0, %v2446
      %v2448 = vpop.f32.mrb[0].mxu0
      %v2449 = vpop.f32.mrb[0].mxu0
      %v2450 = vadd.f32 0.0, %v2449
      %v2451 = vpop.f32.mrb[0].mxu0
      %2452 = vmatprep.mubr.bf16.mxu0 0
      %2453 = vmatmul.mubr.bf16.gmra.mrb[0].mxu0 %v2333
      %v2454 = vpop.f32.mrb[0].mxu0
      %v2455 = vadd.f32 0.0, %v2454
      %v2456 = vpop.f32.mrb[0].mxu0
      %v2457 = vpop.f32.mrb[0].mxu0
      %v2458 = vadd.f32 0.0, %v2457
      %v2459 = vpop.f32.mrb[0].mxu0
      %2460 = vmatprep.mubr.bf16.mxu0 0
      %2461 = vmatmul.mubr.bf16.gmra.mrb[0].mxu0 %v2336
      %v2462 = vpop.f32.mrb[0].mxu0
      %v2463 = vadd.f32 0.0, %v2462
      %v2464 = vpop.f32.mrb[0].mxu0
      %v2465 = vpop.f32.mrb[0].mxu0
      %v2466 = vadd.f32 0.0, %v2465
      %v2467 = vpop.f32.mrb[0].mxu0
      %2468 = vmatprep.mubr.bf16.mxu0 0
      %2469 = vmatmul.mubr.bf16.gmra.mrb[0].mxu0 %v2339
      %v2470 = vpop.f32.mrb[0].mxu0
      %v2471 = vadd.f32 0.0, %v2470
      %v2472 = vpop.f32.mrb[0].mxu0
      %v2473 = vpop.f32.mrb[0].mxu0
      %v2474 = vadd.f32 0.0, %v2473
      %v2475 = vpop.f32.mrb[0].mxu0
      %2476 = vmatprep.mubr.bf16.mxu0 0
      %2477 = vmatmul.mubr.bf16.gmra.mrb[0].mxu0 %v2342
      %v2478 = vpop.f32.mrb[0].mxu0
      %v2479 = vadd.f32 0.0, %v2478
      %v2480 = vpop.f32.mrb[0].mxu0
      %v2481 = vpop.f32.mrb[0].mxu0
      %v2482 = vadd.f32 0.0, %v2481
      %v2483 = vpop.f32.mrb[0].mxu0
      %2484 = vmatprep.mubr.bf16.mxu0 0
      %2485 = vmatmul.mubr.bf16.gmra.mrb[0].mxu0 %v2345
      %v2486 = vpop.f32.mrb[0].mxu0
      %v2487 = vadd.f32 0.0, %v2486
      %v2488 = vpop.f32.mrb[0].mxu0
      %v2489 = vpop.f32.mrb[0].mxu0
      %v2490 = vadd.f32 0.0, %v2489
      %v2491 = vpop.f32.mrb[0].mxu0
      %2492 = vmatprep.mubr.bf16.mxu0 0
      %2493 = vmatmul.mubr.bf16.gmra.mrb[0].mxu0 %v2348
      %v2494 = vpop.f32.mrb[0].mxu0
      %v2495 = vadd.f32 0.0, %v2494
      %v2496 = vpop.f32.mrb[0].mxu0
      %v2497 = vpop.f32.mrb[0].mxu0
      %v2498 = vadd.f32 0.0, %v2497
      %v2499 = vpop.f32.mrb[0].mxu0
      %2500 = vmatprep.mubr.bf16.mxu0 0
      %2501 = vmatmul.mubr.bf16.gmra.mrb[0].mxu0 %v2351
      %v2502 = vpop.f32.mrb[0].mxu0
      %v2503 = vadd.f32 0.0, %v2502
      %v2504 = vpop.f32.mrb[0].mxu0
      %v2505 = vpop.f32.mrb[0].mxu0
      %v2506 = vadd.f32 0.0, %v2505
      %v2507 = vpop.f32.mrb[0].mxu0
      %2508 = vmatprep.mubr.bf16.mxu0 0
      %2509 = vmatmul.mubr.bf16.gmra.mrb[0].mxu0 %v2354
      %v2510 = vpop.f32.mrb[0].mxu0
      %v2511 = vadd.f32 0.0, %v2510
      %v2512 = vpop.f32.mrb[0].mxu0
      %v2513 = vpop.f32.mrb[0].mxu0
      %v2514 = vadd.f32 0.0, %v2513
      %v2515 = vpop.f32.mrb[0].mxu0
      %2516 = vdwg.mxu0
      %v2517 = vadd.f32 %v1700, %v2391
      %v2518 = vadd.f32 %v1701, %v2394
      %v2519 = vadd.f32 %v1702, %v2399
      %v2520 = vadd.f32 %v1703, %v2402
      %v2521 = vadd.f32 %v1704, %v2407
      %v2522 = vadd.f32 %v1705, %v2410
      %v2523 = vadd.f32 %v1706, %v2415
      %v2524 = vadd.f32 %v1707, %v2418
      %v2525 = vadd.f32 %v1708, %v2423
      %v2526 = vadd.f32 %v1709, %v2426
      %v2527 = vadd.f32 %v1710, %v2431
      %v2528 = vadd.f32 %v1711, %v2434
      %v2529 = vadd.f32 %v1712, %v2439
      %v2530 = vadd.f32 %v1713, %v2442
      %v2531 = vadd.f32 %v1714, %v2447
      %v2532 = vadd.f32 %v1715, %v2450
      %v2533 = vadd.f32 %v1716, %v2455
      %v2534 = vadd.f32 %v1717, %v2458
      %v2535 = vadd.f32 %v1718, %v2463
      %v2536 = vadd.f32 %v1719, %v2466
      %v2537 = vadd.f32 %v1720, %v2471
      %v2538 = vadd.f32 %v1721, %v2474
      %v2539 = vadd.f32 %v1722, %v2479
      %v2540 = vadd.f32 %v1723, %v2482
      %v2541 = vadd.f32 %v1724, %v2487
      %v2542 = vadd.f32 %v1725, %v2490
      %v2543 = vadd.f32 %v1726, %v2495
      %v2544 = vadd.f32 %v1727, %v2498
      %v2545 = vadd.f32 %v1728, %v2503
      %v2546 = vadd.f32 %v1729, %v2506
      %v2547 = vadd.f32 %v1730, %v2511
      %v2548 = vadd.f32 %v1731, %v2514
      %2550 = vset.pattern.permute.xlu0 0
      %2551 = vperm.xlu0 %2550, %v1796
      %v2552 = vpop.permute.xlu0 %2551
      %2555 = vset.pattern.permute.xlu0 0
      %2556 = vperm.xlu0 %2555, %v1797
      %v2557 = vpop.permute.xlu0 %2556
      %2560 = vset.pattern.permute.xlu0 0
      %2561 = vperm.xlu0 %2560, %v1798
      %v2562 = vpop.permute.xlu0 %2561
      %2565 = vset.pattern.permute.xlu0 0
      %2566 = vperm.xlu0 %2565, %v1799
      %v2567 = vpop.permute.xlu0 %2566
      %2570 = vset.pattern.permute.xlu0 0
      %2571 = vperm.xlu0 %2570, %v1800
      %v2572 = vpop.permute.xlu0 %2571
      %2575 = vset.pattern.permute.xlu0 0
      %2576 = vperm.xlu0 %2575, %v1801
      %v2577 = vpop.permute.xlu0 %2576
      %2580 = vset.pattern.permute.xlu0 0
      %2581 = vperm.xlu0 %2580, %v1802
      %v2582 = vpop.permute.xlu0 %2581
      %2585 = vset.pattern.permute.xlu0 0
      %2586 = vperm.xlu0 %2585, %v1803
      %v2587 = vpop.permute.xlu0 %2586
      %2590 = vset.pattern.permute.xlu0 0
      %2591 = vperm.xlu0 %2590, %v1804
      %v2592 = vpop.permute.xlu0 %2591
      %2595 = vset.pattern.permute.xlu0 0
      %2596 = vperm.xlu0 %2595, %v1805
      %v2597 = vpop.permute.xlu0 %2596
      %2600 = vset.pattern.permute.xlu0 0
      %2601 = vperm.xlu0 %2600, %v1806
      %v2602 = vpop.permute.xlu0 %2601
      %2605 = vset.pattern.permute.xlu0 0
      %2606 = vperm.xlu0 %2605, %v1807
      %v2607 = vpop.permute.xlu0 %2606
      %2610 = vset.pattern.permute.xlu0 0
      %2611 = vperm.xlu0 %2610, %v1808
      %v2612 = vpop.permute.xlu0 %2611
      %2615 = vset.pattern.permute.xlu0 0
      %2616 = vperm.xlu0 %2615, %v1809
      %v2617 = vpop.permute.xlu0 %2616
      %2620 = vset.pattern.permute.xlu0 0
      %2621 = vperm.xlu0 %2620, %v1810
      %v2622 = vpop.permute.xlu0 %2621
      %2625 = vset.pattern.permute.xlu0 0
      %2626 = vperm.xlu0 %2625, %v1811
      %v2627 = vpop.permute.xlu0 %2626
      %2630 = vset.pattern.permute.xlu0 0
      %2631 = vperm.xlu0 %2630, %v1812
      %v2632 = vpop.permute.xlu0 %2631
      %2635 = vset.pattern.permute.xlu0 0
      %2636 = vperm.xlu0 %2635, %v1813
      %v2637 = vpop.permute.xlu0 %2636
      %2640 = vset.pattern.permute.xlu0 0
      %2641 = vperm.xlu0 %2640, %v1814
      %v2642 = vpop.permute.xlu0 %2641
      %2645 = vset.pattern.permute.xlu0 0
      %2646 = vperm.xlu0 %2645, %v1815
      %v2647 = vpop.permute.xlu0 %2646
      %2650 = vset.pattern.permute.xlu0 0
      %2651 = vperm.xlu0 %2650, %v1816
      %v2652 = vpop.permute.xlu0 %2651
      %2655 = vset.pattern.permute.xlu0 0
      %2656 = vperm.xlu0 %2655, %v1817
      %v2657 = vpop.permute.xlu0 %2656
      %2660 = vset.pattern.permute.xlu0 0
      %2661 = vperm.xlu0 %2660, %v1818
      %v2662 = vpop.permute.xlu0 %2661
      %2665 = vset.pattern.permute.xlu0 0
      %2666 = vperm.xlu0 %2665, %v1819
      %v2667 = vpop.permute.xlu0 %2666
      %2670 = vset.pattern.permute.xlu0 0
      %2671 = vperm.xlu0 %2670, %v1820
      %v2672 = vpop.permute.xlu0 %2671
      %2675 = vset.pattern.permute.xlu0 0
      %2676 = vperm.xlu0 %2675, %v1821
      %v2677 = vpop.permute.xlu0 %2676
      %2680 = vset.pattern.permute.xlu0 0
      %2681 = vperm.xlu0 %2680, %v1822
      %v2682 = vpop.permute.xlu0 %2681
      %2685 = vset.pattern.permute.xlu0 0
      %2686 = vperm.xlu0 %2685, %v1823
      %v2687 = vpop.permute.xlu0 %2686
      %2690 = vset.pattern.permute.xlu0 0
      %2691 = vperm.xlu0 %2690, %v1824
      %v2692 = vpop.permute.xlu0 %2691
      %2695 = vset.pattern.permute.xlu0 0
      %2696 = vperm.xlu0 %2695, %v1825
      %v2697 = vpop.permute.xlu0 %2696
      %2700 = vset.pattern.permute.xlu0 0
      %2701 = vperm.xlu0 %2700, %v1826
      %v2702 = vpop.permute.xlu0 %2701
      %2705 = vset.pattern.permute.xlu0 0
      %2706 = vperm.xlu0 %2705, %v1827
      %v2707 = vpop.permute.xlu0 %2706
      %v2709 = vlaneseq
      %v2710 = vshrl.u32 %v2709, 7
      %v2711 = vsub.s32 1, %v2710
      %v2712 = vrot.slane %v412, %v2711
      %v2713 = vmul.f32 %v2552, %v2712
      %v2714 = vmul.f32 %v2557, %v2712
      %v2715 = vmul.f32 %v2562, %v2712
      %v2716 = vmul.f32 %v2567, %v2712
      %v2717 = vmul.f32 %v2572, %v2712
      %v2718 = vmul.f32 %v2577, %v2712
      %v2719 = vmul.f32 %v2582, %v2712
      %v2720 = vmul.f32 %v2587, %v2712
      %v2721 = vmul.f32 %v2592, %v2712
      %v2722 = vmul.f32 %v2597, %v2712
      %v2723 = vmul.f32 %v2602, %v2712
      %v2724 = vmul.f32 %v2607, %v2712
      %v2725 = vmul.f32 %v2612, %v2712
      %v2726 = vmul.f32 %v2617, %v2712
      %v2727 = vmul.f32 %v2622, %v2712
      %v2728 = vmul.f32 %v2627, %v2712
      %v2729 = vmul.f32 %v2632, %v2712
      %v2730 = vmul.f32 %v2637, %v2712
      %v2731 = vmul.f32 %v2642, %v2712
      %v2732 = vmul.f32 %v2647, %v2712
      %v2733 = vmul.f32 %v2652, %v2712
      %v2734 = vmul.f32 %v2657, %v2712
      %v2735 = vmul.f32 %v2662, %v2712
      %v2736 = vmul.f32 %v2667, %v2712
      %v2737 = vmul.f32 %v2672, %v2712
      %v2738 = vmul.f32 %v2677, %v2712
      %v2739 = vmul.f32 %v2682, %v2712
      %v2740 = vmul.f32 %v2687, %v2712
      %v2741 = vmul.f32 %v2692, %v2712
      %v2742 = vmul.f32 %v2697, %v2712
      %v2743 = vmul.f32 %v2702, %v2712
      %v2744 = vmul.f32 %v2707, %v2712
      %v2745 = vadd.f32 %v2517, %v2713
      %v2746 = vadd.f32 %v2518, %v2714
      %v2747 = vadd.f32 %v2519, %v2715
      %v2748 = vadd.f32 %v2520, %v2716
      %v2749 = vadd.f32 %v2521, %v2717
      %v2750 = vadd.f32 %v2522, %v2718
      %v2751 = vadd.f32 %v2523, %v2719
      %v2752 = vadd.f32 %v2524, %v2720
      %v2753 = vadd.f32 %v2525, %v2721
      %v2754 = vadd.f32 %v2526, %v2722
      %v2755 = vadd.f32 %v2527, %v2723
      %v2756 = vadd.f32 %v2528, %v2724
      %v2757 = vadd.f32 %v2529, %v2725
      %v2758 = vadd.f32 %v2530, %v2726
      %v2759 = vadd.f32 %v2531, %v2727
      %v2760 = vadd.f32 %v2532, %v2728
      %v2761 = vadd.f32 %v2533, %v2729
      %v2762 = vadd.f32 %v2534, %v2730
      %v2763 = vadd.f32 %v2535, %v2731
      %v2764 = vadd.f32 %v2536, %v2732
      %v2765 = vadd.f32 %v2537, %v2733
      %v2766 = vadd.f32 %v2538, %v2734
      %v2767 = vadd.f32 %v2539, %v2735
      %v2768 = vadd.f32 %v2540, %v2736
      %v2769 = vadd.f32 %v2541, %v2737
      %v2770 = vadd.f32 %v2542, %v2738
      %v2771 = vadd.f32 %v2543, %v2739
      %v2772 = vadd.f32 %v2544, %v2740
      %v2773 = vadd.f32 %v2545, %v2741
      %v2774 = vadd.f32 %v2546, %v2742
      %v2775 = vadd.f32 %v2547, %v2743
      %v2776 = vadd.f32 %v2548, %v2744
      %vm2777 = vcmp.eq.s32.totalorder %v380, 2
      %vm2778 = vcmp.eq.s32.totalorder %v381, 2
      %vm2779 = vcmp.eq.s32.totalorder %v382, 2
      %vm2780 = vcmp.eq.s32.totalorder %v383, 2
      %vm2781 = vcmp.eq.s32.totalorder %v384, 2
      %vm2782 = vcmp.eq.s32.totalorder %v385, 2
      %vm2783 = vcmp.eq.s32.totalorder %v386, 2
      %vm2784 = vcmp.eq.s32.totalorder %v387, 2
      %vm2785 = vcmp.eq.s32.totalorder %v388, 2
      %vm2786 = vcmp.eq.s32.totalorder %v389, 2
      %vm2787 = vcmp.eq.s32.totalorder %v390, 2
      %vm2788 = vcmp.eq.s32.totalorder %v391, 2
      %vm2789 = vcmp.eq.s32.totalorder %v392, 2
      %vm2790 = vcmp.eq.s32.totalorder %v393, 2
      %vm2791 = vcmp.eq.s32.totalorder %v394, 2
      %vm2792 = vcmp.eq.s32.totalorder %v395, 2
      %vm2793 = vcmp.eq.s32.totalorder %v396, 2
      %vm2794 = vcmp.eq.s32.totalorder %v397, 2
      %vm2795 = vcmp.eq.s32.totalorder %v398, 2
      %vm2796 = vcmp.eq.s32.totalorder %v399, 2
      %vm2797 = vcmp.eq.s32.totalorder %v400, 2
      %vm2798 = vcmp.eq.s32.totalorder %v401, 2
      %vm2799 = vcmp.eq.s32.totalorder %v402, 2
      %vm2800 = vcmp.eq.s32.totalorder %v403, 2
      %vm2801 = vcmp.eq.s32.totalorder %v404, 2
      %vm2802 = vcmp.eq.s32.totalorder %v405, 2
      %vm2803 = vcmp.eq.s32.totalorder %v406, 2
      %vm2804 = vcmp.eq.s32.totalorder %v407, 2
      %vm2805 = vcmp.eq.s32.totalorder %v408, 2
      %vm2806 = vcmp.eq.s32.totalorder %v409, 2
      %vm2807 = vcmp.eq.s32.totalorder %v410, 2
      %vm2808 = vcmp.eq.s32.totalorder %v411, 2
      %v2809 = vsel %vm2777, 1, 0
      %v2810 = vsel %vm2778, 1, 0
      %v2811 = vsel %vm2779, 1, 0
      %v2812 = vsel %vm2780, 1, 0
      %v2813 = vsel %vm2781, 1, 0
      %v2814 = vsel %vm2782, 1, 0
      %v2815 = vsel %vm2783, 1, 0
      %v2816 = vsel %vm2784, 1, 0
      %v2817 = vsel %vm2785, 1, 0
      %v2818 = vsel %vm2786, 1, 0
      %v2819 = vsel %vm2787, 1, 0
      %v2820 = vsel %vm2788, 1, 0
      %v2821 = vsel %vm2789, 1, 0
      %v2822 = vsel %vm2790, 1, 0
      %v2823 = vsel %vm2791, 1, 0
      %v2824 = vsel %vm2792, 1, 0
      %v2825 = vsel %vm2793, 1, 0
      %v2826 = vsel %vm2794, 1, 0
      %v2827 = vsel %vm2795, 1, 0
      %v2828 = vsel %vm2796, 1, 0
      %v2829 = vsel %vm2797, 1, 0
      %v2830 = vsel %vm2798, 1, 0
      %v2831 = vsel %vm2799, 1, 0
      %v2832 = vsel %vm2800, 1, 0
      %v2833 = vsel %vm2801, 1, 0
      %v2834 = vsel %vm2802, 1, 0
      %v2835 = vsel %vm2803, 1, 0
      %v2836 = vsel %vm2804, 1, 0
      %v2837 = vsel %vm2805, 1, 0
      %v2838 = vsel %vm2806, 1, 0
      %v2839 = vsel %vm2807, 1, 0
      %v2840 = vsel %vm2808, 1, 0
      %v2841 = vcvt.s32.f32 %v2809
      %v2842 = vcvt.s32.f32 %v2810
      %v2843 = vcvt.s32.f32 %v2811
      %v2844 = vcvt.s32.f32 %v2812
      %v2845 = vcvt.s32.f32 %v2813
      %v2846 = vcvt.s32.f32 %v2814
      %v2847 = vcvt.s32.f32 %v2815
      %v2848 = vcvt.s32.f32 %v2816
      %v2849 = vcvt.s32.f32 %v2817
      %v2850 = vcvt.s32.f32 %v2818
      %v2851 = vcvt.s32.f32 %v2819
      %v2852 = vcvt.s32.f32 %v2820
      %v2853 = vcvt.s32.f32 %v2821
      %v2854 = vcvt.s32.f32 %v2822
      %v2855 = vcvt.s32.f32 %v2823
      %v2856 = vcvt.s32.f32 %v2824
      %v2857 = vcvt.s32.f32 %v2825
      %v2858 = vcvt.s32.f32 %v2826
      %v2859 = vcvt.s32.f32 %v2827
      %v2860 = vcvt.s32.f32 %v2828
      %v2861 = vcvt.s32.f32 %v2829
      %v2862 = vcvt.s32.f32 %v2830
      %v2863 = vcvt.s32.f32 %v2831
      %v2864 = vcvt.s32.f32 %v2832
      %v2865 = vcvt.s32.f32 %v2833
      %v2866 = vcvt.s32.f32 %v2834
      %v2867 = vcvt.s32.f32 %v2835
      %v2868 = vcvt.s32.f32 %v2836
      %v2869 = vcvt.s32.f32 %v2837
      %v2870 = vcvt.s32.f32 %v2838
      %v2871 = vcvt.s32.f32 %v2839
      %v2872 = vcvt.s32.f32 %v2840
      %v2873 = vpack.c.bf16 %v2842, %v2841
      %v2874 = vpack.c.bf16 %v2844, %v2843
      %v2875 = vpack.c.bf16 %v2846, %v2845
      %v2876 = vpack.c.bf16 %v2848, %v2847
      %v2877 = vpack.c.bf16 %v2850, %v2849
      %v2878 = vpack.c.bf16 %v2852, %v2851
      %v2879 = vpack.c.bf16 %v2854, %v2853
      %v2880 = vpack.c.bf16 %v2856, %v2855
      %v2881 = vpack.c.bf16 %v2858, %v2857
      %v2882 = vpack.c.bf16 %v2860, %v2859
      %v2883 = vpack.c.bf16 %v2862, %v2861
      %v2884 = vpack.c.bf16 %v2864, %v2863
      %v2885 = vpack.c.bf16 %v2866, %v2865
      %v2886 = vpack.c.bf16 %v2868, %v2867
      %v2887 = vpack.c.bf16 %v2870, %v2869
      %v2888 = vpack.c.bf16 %v2872, %v2871
      %2890 = vset.pattern.permute.xlu0 0
      %2891 = vperm.xlu0 %2890, %v2873
      %v2892 = vpop.permute.xlu0 %2891
      %2894 = vset.pattern.permute.xlu0 0
      %2895 = vperm.xlu0 %2894, %v2874
      %v2896 = vpop.permute.xlu0 %2895
      %2898 = vset.pattern.permute.xlu0 0
      %2899 = vperm.xlu0 %2898, %v2875
      %v2900 = vpop.permute.xlu0 %2899
      %2902 = vset.pattern.permute.xlu0 0
      %2903 = vperm.xlu0 %2902, %v2876
      %v2904 = vpop.permute.xlu0 %2903
      %2906 = vset.pattern.permute.xlu0 0
      %2907 = vperm.xlu0 %2906, %v2877
      %v2908 = vpop.permute.xlu0 %2907
      %2910 = vset.pattern.permute.xlu0 0
      %2911 = vperm.xlu0 %2910, %v2878
      %v2912 = vpop.permute.xlu0 %2911
      %2914 = vset.pattern.permute.xlu0 0
      %2915 = vperm.xlu0 %2914, %v2879
      %v2916 = vpop.permute.xlu0 %2915
      %2918 = vset.pattern.permute.xlu0 0
      %2919 = vperm.xlu0 %2918, %v2880
      %v2920 = vpop.permute.xlu0 %2919
      %2922 = vset.pattern.permute.xlu0 0
      %2923 = vperm.xlu0 %2922, %v2881
      %v2924 = vpop.permute.xlu0 %2923
      %2926 = vset.pattern.permute.xlu0 0
      %2927 = vperm.xlu0 %2926, %v2882
      %v2928 = vpop.permute.xlu0 %2927
      %2930 = vset.pattern.permute.xlu0 0
      %2931 = vperm.xlu0 %2930, %v2883
      %v2932 = vpop.permute.xlu0 %2931
      %2934 = vset.pattern.permute.xlu0 0
      %2935 = vperm.xlu0 %2934, %v2884
      %v2936 = vpop.permute.xlu0 %2935
      %2938 = vset.pattern.permute.xlu0 0
      %2939 = vperm.xlu0 %2938, %v2885
      %v2940 = vpop.permute.xlu0 %2939
      %2942 = vset.pattern.permute.xlu0 0
      %2943 = vperm.xlu0 %2942, %v2886
      %v2944 = vpop.permute.xlu0 %2943
      %2946 = vset.pattern.permute.xlu0 0
      %2947 = vperm.xlu0 %2946, %v2887
      %v2948 = vpop.permute.xlu0 %2947
      %2950 = vset.pattern.permute.xlu0 0
      %2951 = vperm.xlu0 %2950, %v2888
      %v2952 = vpop.permute.xlu0 %2951
      %v2970 = vunpack.c.l.s4 839922192
      %v2971 = vunpack.c.0.s8 %v2970
      %v2972 = vlaneseq
      %v2973 = vshrl.u32 %v2972, 7
      %v2974 = vsub.s32 %v2971, %v2973
      %v2975 = vrot.slane %v2892, %v2974
      %v2977 = vunpack.c.l.s4 1985246804
      %v2978 = vunpack.c.0.s8 %v2977
      %v2979 = vlaneseq
      %v2980 = vshrl.u32 %v2979, 7
      %v2981 = vsub.s32 %v2978, %v2980
      %v2982 = vrot.slane %v2892, %v2981
      %v2984 = vunpack.c.l.s4 839922192
      %v2985 = vunpack.c.0.s8 %v2984
      %v2986 = vlaneseq
      %v2987 = vshrl.u32 %v2986, 7
      %v2988 = vsub.s32 %v2985, %v2987
      %v2989 = vrot.slane %v2896, %v2988
      %v2991 = vunpack.c.l.s4 1985246804
      %v2992 = vunpack.c.0.s8 %v2991
      %v2993 = vlaneseq
      %v2994 = vshrl.u32 %v2993, 7
      %v2995 = vsub.s32 %v2992, %v2994
      %v2996 = vrot.slane %v2896, %v2995
      %v2998 = vunpack.c.l.s4 839922192
      %v2999 = vunpack.c.0.s8 %v2998
      %v3000 = vlaneseq
      %v3001 = vshrl.u32 %v3000, 7
      %v3002 = vsub.s32 %v2999, %v3001
      %v3003 = vrot.slane %v2900, %v3002
      %v3005 = vunpack.c.l.s4 1985246804
      %v3006 = vunpack.c.0.s8 %v3005
      %v3007 = vlaneseq
      %v3008 = vshrl.u32 %v3007, 7
      %v3009 = vsub.s32 %v3006, %v3008
      %v3010 = vrot.slane %v2900, %v3009
      %v3012 = vunpack.c.l.s4 839922192
      %v3013 = vunpack.c.0.s8 %v3012
      %v3014 = vlaneseq
      %v3015 = vshrl.u32 %v3014, 7
      %v3016 = vsub.s32 %v3013, %v3015
      %v3017 = vrot.slane %v2904, %v3016
      %v3019 = vunpack.c.l.s4 1985246804
      %v3020 = vunpack.c.0.s8 %v3019
      %v3021 = vlaneseq
      %v3022 = vshrl.u32 %v3021, 7
      %v3023 = vsub.s32 %v3020, %v3022
      %v3024 = vrot.slane %v2904, %v3023
      %v3026 = vunpack.c.l.s4 839922192
      %v3027 = vunpack.c.0.s8 %v3026
      %v3028 = vlaneseq
      %v3029 = vshrl.u32 %v3028, 7
      %v3030 = vsub.s32 %v3027, %v3029
      %v3031 = vrot.slane %v2908, %v3030
      %v3033 = vunpack.c.l.s4 1985246804
      %v3034 = vunpack.c.0.s8 %v3033
      %v3035 = vlaneseq
      %v3036 = vshrl.u32 %v3035, 7
      %v3037 = vsub.s32 %v3034, %v3036
      %v3038 = vrot.slane %v2908, %v3037
      %v3040 = vunpack.c.l.s4 839922192
      %v3041 = vunpack.c.0.s8 %v3040
      %v3042 = vlaneseq
      %v3043 = vshrl.u32 %v3042, 7
      %v3044 = vsub.s32 %v3041, %v3043
      %v3045 = vrot.slane %v2912, %v3044
      %v3047 = vunpack.c.l.s4 1985246804
      %v3048 = vunpack.c.0.s8 %v3047
      %v3049 = vlaneseq
      %v3050 = vshrl.u32 %v3049, 7
      %v3051 = vsub.s32 %v3048, %v3050
      %v3052 = vrot.slane %v2912, %v3051
      %v3054 = vunpack.c.l.s4 839922192
      %v3055 = vunpack.c.0.s8 %v3054
      %v3056 = vlaneseq
      %v3057 = vshrl.u32 %v3056, 7
      %v3058 = vsub.s32 %v3055, %v3057
      %v3059 = vrot.slane %v2916, %v3058
      %v3061 = vunpack.c.l.s4 1985246804
      %v3062 = vunpack.c.0.s8 %v3061
      %v3063 = vlaneseq
      %v3064 = vshrl.u32 %v3063, 7
      %v3065 = vsub.s32 %v3062, %v3064
      %v3066 = vrot.slane %v2916, %v3065
      %v3068 = vunpack.c.l.s4 839922192
      %v3069 = vunpack.c.0.s8 %v3068
      %v3070 = vlaneseq
      %v3071 = vshrl.u32 %v3070, 7
      %v3072 = vsub.s32 %v3069, %v3071
      %v3073 = vrot.slane %v2920, %v3072
      %v3075 = vunpack.c.l.s4 1985246804
      %v3076 = vunpack.c.0.s8 %v3075
      %v3077 = vlaneseq
      %v3078 = vshrl.u32 %v3077, 7
      %v3079 = vsub.s32 %v3076, %v3078
      %v3080 = vrot.slane %v2920, %v3079
      %v3082 = vunpack.c.l.s4 839922192
      %v3083 = vunpack.c.0.s8 %v3082
      %v3084 = vlaneseq
      %v3085 = vshrl.u32 %v3084, 7
      %v3086 = vsub.s32 %v3083, %v3085
      %v3087 = vrot.slane %v2924, %v3086
      %v3089 = vunpack.c.l.s4 1985246804
      %v3090 = vunpack.c.0.s8 %v3089
      %v3091 = vlaneseq
      %v3092 = vshrl.u32 %v3091, 7
      %v3093 = vsub.s32 %v3090, %v3092
      %v3094 = vrot.slane %v2924, %v3093
      %v3096 = vunpack.c.l.s4 839922192
      %v3097 = vunpack.c.0.s8 %v3096
      %v3098 = vlaneseq
      %v3099 = vshrl.u32 %v3098, 7
      %v3100 = vsub.s32 %v3097, %v3099
      %v3101 = vrot.slane %v2928, %v3100
      %v3103 = vunpack.c.l.s4 1985246804
      %v3104 = vunpack.c.0.s8 %v3103
      %v3105 = vlaneseq
      %v3106 = vshrl.u32 %v3105, 7
      %v3107 = vsub.s32 %v3104, %v3106
      %v3108 = vrot.slane %v2928, %v3107
      %v3110 = vunpack.c.l.s4 839922192
      %v3111 = vunpack.c.0.s8 %v3110
      %v3112 = vlaneseq
      %v3113 = vshrl.u32 %v3112, 7
      %v3114 = vsub.s32 %v3111, %v3113
      %v3115 = vrot.slane %v2932, %v3114
      %v3117 = vunpack.c.l.s4 1985246804
      %v3118 = vunpack.c.0.s8 %v3117
      %v3119 = vlaneseq
      %v3120 = vshrl.u32 %v3119, 7
      %v3121 = vsub.s32 %v3118, %v3120
      %v3122 = vrot.slane %v2932, %v3121
      %v3124 = vunpack.c.l.s4 839922192
      %v3125 = vunpack.c.0.s8 %v3124
      %v3126 = vlaneseq
      %v3127 = vshrl.u32 %v3126, 7
      %v3128 = vsub.s32 %v3125, %v3127
      %v3129 = vrot.slane %v2936, %v3128
      %v3131 = vunpack.c.l.s4 1985246804
      %v3132 = vunpack.c.0.s8 %v3131
      %v3133 = vlaneseq
      %v3134 = vshrl.u32 %v3133, 7
      %v3135 = vsub.s32 %v3132, %v3134
      %v3136 = vrot.slane %v2936, %v3135
      %v3138 = vunpack.c.l.s4 839922192
      %v3139 = vunpack.c.0.s8 %v3138
      %v3140 = vlaneseq
      %v3141 = vshrl.u32 %v3140, 7
      %v3142 = vsub.s32 %v3139, %v3141
      %v3143 = vrot.slane %v2940, %v3142
      %v3145 = vunpack.c.l.s4 1985246804
      %v3146 = vunpack.c.0.s8 %v3145
      %v3147 = vlaneseq
      %v3148 = vshrl.u32 %v3147, 7
      %v3149 = vsub.s32 %v3146, %v3148
      %v3150 = vrot.slane %v2940, %v3149
      %v3152 = vunpack.c.l.s4 839922192
      %v3153 = vunpack.c.0.s8 %v3152
      %v3154 = vlaneseq
      %v3155 = vshrl.u32 %v3154, 7
      %v3156 = vsub.s32 %v3153, %v3155
      %v3157 = vrot.slane %v2944, %v3156
      %v3159 = vunpack.c.l.s4 1985246804
      %v3160 = vunpack.c.0.s8 %v3159
      %v3161 = vlaneseq
      %v3162 = vshrl.u32 %v3161, 7
      %v3163 = vsub.s32 %v3160, %v3162
      %v3164 = vrot.slane %v2944, %v3163
      %v3166 = vunpack.c.l.s4 839922192
      %v3167 = vunpack.c.0.s8 %v3166
      %v3168 = vlaneseq
      %v3169 = vshrl.u32 %v3168, 7
      %v3170 = vsub.s32 %v3167, %v3169
      %v3171 = vrot.slane %v2948, %v3170
      %v3173 = vunpack.c.l.s4 1985246804
      %v3174 = vunpack.c.0.s8 %v3173
      %v3175 = vlaneseq
      %v3176 = vshrl.u32 %v3175, 7
      %v3177 = vsub.s32 %v3174, %v3176
      %v3178 = vrot.slane %v2948, %v3177
      %v3180 = vunpack.c.l.s4 839922192
      %v3181 = vunpack.c.0.s8 %v3180
      %v3182 = vlaneseq
      %v3183 = vshrl.u32 %v3182, 7
      %v3184 = vsub.s32 %v3181, %v3183
      %v3185 = vrot.slane %v2952, %v3184
      %v3187 = vunpack.c.l.s4 1985246804
      %v3188 = vunpack.c.0.s8 %v3187
      %v3189 = vlaneseq
      %v3190 = vshrl.u32 %v3189, 7
      %v3191 = vsub.s32 %v3188, %v3190
      %v3192 = vrot.slane %v2952, %v3191
      %v3225 = vmul.bf16 %v348, %v2975
      %v3226 = vmul.bf16 %v349, %v2982
      %v3227 = vmul.bf16 %v350, %v2989
      %v3228 = vmul.bf16 %v351, %v2996
      %v3229 = vmul.bf16 %v352, %v3003
      %v3230 = vmul.bf16 %v353, %v3010
      %v3231 = vmul.bf16 %v354, %v3017
      %v3232 = vmul.bf16 %v355, %v3024
      %v3233 = vmul.bf16 %v356, %v3031
      %v3234 = vmul.bf16 %v357, %v3038
      %v3235 = vmul.bf16 %v358, %v3045
      %v3236 = vmul.bf16 %v359, %v3052
      %v3237 = vmul.bf16 %v360, %v3059
      %v3238 = vmul.bf16 %v361, %v3066
      %v3239 = vmul.bf16 %v362, %v3073
      %v3240 = vmul.bf16 %v363, %v3080
      %v3241 = vmul.bf16 %v364, %v3087
      %v3242 = vmul.bf16 %v365, %v3094
      %v3243 = vmul.bf16 %v366, %v3101
      %v3244 = vmul.bf16 %v367, %v3108
      %v3245 = vmul.bf16 %v368, %v3115
      %v3246 = vmul.bf16 %v369, %v3122
      %v3247 = vmul.bf16 %v370, %v3129
      %v3248 = vmul.bf16 %v371, %v3136
      %v3249 = vmul.bf16 %v372, %v3143
      %v3250 = vmul.bf16 %v373, %v3150
      %v3251 = vmul.bf16 %v374, %v3157
      %v3252 = vmul.bf16 %v375, %v3164
      %v3253 = vmul.bf16 %v376, %v3171
      %v3254 = vmul.bf16 %v377, %v3178
      %v3255 = vmul.bf16 %v378, %v3185
      %v3256 = vmul.bf16 %v379, %v3192
      %v3257 = vld [vmem:[%s4 + $0x20] sm:$0xf]
      %v3258 = vld [vmem:[%s4 + $0x24] sm:$0xf]
      %v3259 = vld [vmem:[%s4 + $0x28] sm:$0xf]
      %v3260 = vld [vmem:[%s4 + $0x2c] sm:$0xf]
      %v3293 = vunpack.c.l.b16 %v3225
      %v3294 = vunpack.c.l.b16 %v3226
      %v3295 = vunpack.c.l.b16 %v3227
      %v3296 = vunpack.c.l.b16 %v3228
      %v3297 = vunpack.c.l.b16 %v3229
      %v3298 = vunpack.c.l.b16 %v3230
      %v3299 = vunpack.c.l.b16 %v3231
      %v3300 = vunpack.c.l.b16 %v3232
      %v3301 = vunpack.c.l.b16 %v3233
      %v3302 = vunpack.c.l.b16 %v3234
      %v3303 = vunpack.c.l.b16 %v3235
      %v3304 = vunpack.c.l.b16 %v3236
      %v3305 = vunpack.c.l.b16 %v3237
      %v3306 = vunpack.c.l.b16 %v3238
      %v3307 = vunpack.c.l.b16 %v3239
      %v3308 = vunpack.c.l.b16 %v3240
      %v3309 = vunpack.c.l.b16 %v3241
      %v3310 = vunpack.c.l.b16 %v3242
      %v3311 = vunpack.c.l.b16 %v3243
      %v3312 = vunpack.c.l.b16 %v3244
      %v3313 = vunpack.c.l.b16 %v3245
      %v3314 = vunpack.c.l.b16 %v3246
      %v3315 = vunpack.c.l.b16 %v3247
      %v3316 = vunpack.c.l.b16 %v3248
      %v3317 = vunpack.c.l.b16 %v3249
      %v3318 = vunpack.c.l.b16 %v3250
      %v3319 = vunpack.c.l.b16 %v3251
      %v3320 = vunpack.c.l.b16 %v3252
      %v3321 = vunpack.c.l.b16 %v3253
      %v3322 = vunpack.c.l.b16 %v3254
      %v3323 = vunpack.c.l.b16 %v3255
      %v3324 = vunpack.c.l.b16 %v3256
      %v3325 = vpack.c.b16 %v3294, %v3293
      %v3326 = vpack.c.b16 %v3296, %v3295
      %v3327 = vpack.c.b16 %v3298, %v3297
      %v3328 = vpack.c.b16 %v3300, %v3299
      %v3329 = vpack.c.b16 %v3302, %v3301
      %v3330 = vpack.c.b16 %v3304, %v3303
      %v3331 = vpack.c.b16 %v3306, %v3305
      %v3332 = vpack.c.b16 %v3308, %v3307
      %v3333 = vpack.c.b16 %v3310, %v3309
      %v3334 = vpack.c.b16 %v3312, %v3311
      %v3335 = vpack.c.b16 %v3314, %v3313
      %v3336 = vpack.c.b16 %v3316, %v3315
      %v3337 = vpack.c.b16 %v3318, %v3317
      %v3338 = vpack.c.b16 %v3320, %v3319
      %v3339 = vpack.c.b16 %v3322, %v3321
      %v3340 = vpack.c.b16 %v3324, %v3323
      %v3345 = vunpack.c.l.b16 %v3257
      %v3346 = vunpack.c.l.b16 %v3258
      %v3347 = vunpack.c.l.b16 %v3259
      %v3348 = vunpack.c.l.b16 %v3260
      %v3349 = vpack.c.b16 %v3346, %v3345
      %v3350 = vpack.c.b16 %v3348, %v3347
      %v3354 = vsel %vm989, %v3325, 0
      %v3357 = vsel %vm989, %v3326, 0
      %v3360 = vsel %vm989, %v3327, 0
      %v3363 = vsel %vm989, %v3328, 0
      %v3366 = vsel %vm989, %v3329, 0
      %v3369 = vsel %vm989, %v3330, 0
      %v3372 = vsel %vm989, %v3331, 0
      %v3375 = vsel %vm989, %v3332, 0
      %v3378 = vsel %vm989, %v3333, 0
      %v3381 = vsel %vm989, %v3334, 0
      %v3384 = vsel %vm989, %v3335, 0
      %v3387 = vsel %vm989, %v3336, 0
      %v3390 = vsel %vm989, %v3337, 0
      %v3393 = vsel %vm989, %v3338, 0
      %v3396 = vsel %vm989, %v3339, 0
      %v3399 = vsel %vm989, %v3340, 0
      %3401 = vmatprep.subr.bf16.mxu0 0
      %3402 = vmatpush1.bf16.msra.mxu0 %v3349
      %3403 = vmatprep.subr.bf16.mxu0 0
      %3404 = vmatpush1.bf16.msra.mxu0 %v3350
      %3405 = vmatprep.subr.bf16.mxu0 0
      %3406 = vmatpush1.bf16.msra.mxu0 0
      %3407 = vmatprep.subr.bf16.mxu0 0
      %3408 = vmatpush1.bf16.msra.mxu0 0
      %3409 = vmatprep.subr.bf16.mxu0 0
      %3410 = vmatpush1.bf16.msra.mxu0 0
      %3411 = vmatprep.subr.bf16.mxu0 0
      %3412 = vmatpush1.bf16.msra.mxu0 0
      %3413 = vmatprep.subr.bf16.mxu0 0
      %3414 = vmatpush1.bf16.msra.mxu0 0
      %3415 = vmatprep.subr.bf16.mxu0 0
      %3416 = vmatpush1.bf16.msra.mxu0 0
      %3417 = vmatprep.subr.bf16.mxu0 0
      %3418 = vmatpush1.bf16.msra.mxu0 0
      %3419 = vmatprep.subr.bf16.mxu0 0
      %3420 = vmatpush1.bf16.msra.mxu0 0
      %3421 = vmatprep.subr.bf16.mxu0 0
      %3422 = vmatpush1.bf16.msra.mxu0 0
      %3423 = vmatprep.subr.bf16.mxu0 0
      %3424 = vmatpush1.bf16.msra.mxu0 0
      %3425 = vmatprep.subr.bf16.mxu0 0
      %3426 = vmatpush1.bf16.msra.mxu0 0
      %3427 = vmatprep.subr.bf16.mxu0 0
      %3428 = vmatpush1.bf16.msra.mxu0 0
      %3429 = vmatprep.subr.bf16.mxu0 0
      %3430 = vmatpush1.bf16.msra.mxu0 0
      %3431 = vmatprep.subr.bf16.mxu0 0
      %3432 = vmatpush1.bf16.msra.mxu0 0
      %3433 = vmatprep.mubr.bf16.mxu0 0
      %3434 = vmatmul.mubr.bf16.gmra.mrb[0].mxu0 %v3354
      %v3435 = vpop.f32.mrb[0].mxu0
      %v3436 = vadd.f32 0.0, %v3435
      %v3437 = vpop.f32.mrb[0].mxu0
      %v3438 = vpop.f32.mrb[0].mxu0
      %v3439 = vadd.f32 0.0, %v3438
      %v3440 = vpop.f32.mrb[0].mxu0
      %3441 = vmatprep.mubr.bf16.mxu0 0
      %3442 = vmatmul.mubr.bf16.gmra.mrb[0].mxu0 %v3357
      %v3443 = vpop.f32.mrb[0].mxu0
      %v3444 = vadd.f32 0.0, %v3443
      %v3445 = vpop.f32.mrb[0].mxu0
      %v3446 = vpop.f32.mrb[0].mxu0
      %v3447 = vadd.f32 0.0, %v3446
      %v3448 = vpop.f32.mrb[0].mxu0
      %3449 = vmatprep.mubr.bf16.mxu0 0
      %3450 = vmatmul.mubr.bf16.gmra.mrb[0].mxu0 %v3360
      %v3451 = vpop.f32.mrb[0].mxu0
      %v3452 = vadd.f32 0.0, %v3451
      %v3453 = vpop.f32.mrb[0].mxu0
      %v3454 = vpop.f32.mrb[0].mxu0
      %v3455 = vadd.f32 0.0, %v3454
      %v3456 = vpop.f32.mrb[0].mxu0
      %3457 = vmatprep.mubr.bf16.mxu0 0
      %3458 = vmatmul.mubr.bf16.gmra.mrb[0].mxu0 %v3363
      %v3459 = vpop.f32.mrb[0].mxu0
      %v3460 = vadd.f32 0.0, %v3459
      %v3461 = vpop.f32.mrb[0].mxu0
      %v3462 = vpop.f32.mrb[0].mxu0
      %v3463 = vadd.f32 0.0, %v3462
      %v3464 = vpop.f32.mrb[0].mxu0
      %3465 = vmatprep.mubr.bf16.mxu0 0
      %3466 = vmatmul.mubr.bf16.gmra.mrb[0].mxu0 %v3366
      %v3467 = vpop.f32.mrb[0].mxu0
      %v3468 = vadd.f32 0.0, %v3467
      %v3469 = vpop.f32.mrb[0].mxu0
      %v3470 = vpop.f32.mrb[0].mxu0
      %v3471 = vadd.f32 0.0, %v3470
      %v3472 = vpop.f32.mrb[0].mxu0
      %3473 = vmatprep.mubr.bf16.mxu0 0
      %3474 = vmatmul.mubr.bf16.gmra.mrb[0].mxu0 %v3369
      %v3475 = vpop.f32.mrb[0].mxu0
      %v3476 = vadd.f32 0.0, %v3475
      %v3477 = vpop.f32.mrb[0].mxu0
      %v3478 = vpop.f32.mrb[0].mxu0
      %v3479 = vadd.f32 0.0, %v3478
      %v3480 = vpop.f32.mrb[0].mxu0
      %3481 = vmatprep.mubr.bf16.mxu0 0
      %3482 = vmatmul.mubr.bf16.gmra.mrb[0].mxu0 %v3372
      %v3483 = vpop.f32.mrb[0].mxu0
      %v3484 = vadd.f32 0.0, %v3483
      %v3485 = vpop.f32.mrb[0].mxu0
      %v3486 = vpop.f32.mrb[0].mxu0
      %v3487 = vadd.f32 0.0, %v3486
      %v3488 = vpop.f32.mrb[0].mxu0
      %3489 = vmatprep.mubr.bf16.mxu0 0
      %3490 = vmatmul.mubr.bf16.gmra.mrb[0].mxu0 %v3375
      %v3491 = vpop.f32.mrb[0].mxu0
      %v3492 = vadd.f32 0.0, %v3491
      %v3493 = vpop.f32.mrb[0].mxu0
      %v3494 = vpop.f32.mrb[0].mxu0
      %v3495 = vadd.f32 0.0, %v3494
      %v3496 = vpop.f32.mrb[0].mxu0
      %3497 = vmatprep.mubr.bf16.mxu0 0
      %3498 = vmatmul.mubr.bf16.gmra.mrb[0].mxu0 %v3378
      %v3499 = vpop.f32.mrb[0].mxu0
      %v3500 = vadd.f32 0.0, %v3499
      %v3501 = vpop.f32.mrb[0].mxu0
      %v3502 = vpop.f32.mrb[0].mxu0
      %v3503 = vadd.f32 0.0, %v3502
      %v3504 = vpop.f32.mrb[0].mxu0
      %3505 = vmatprep.mubr.bf16.mxu0 0
      %3506 = vmatmul.mubr.bf16.gmra.mrb[0].mxu0 %v3381
      %v3507 = vpop.f32.mrb[0].mxu0
      %v3508 = vadd.f32 0.0, %v3507
      %v3509 = vpop.f32.mrb[0].mxu0
      %v3510 = vpop.f32.mrb[0].mxu0
      %v3511 = vadd.f32 0.0, %v3510
      %v3512 = vpop.f32.mrb[0].mxu0
      %3513 = vmatprep.mubr.bf16.mxu0 0
      %3514 = vmatmul.mubr.bf16.gmra.mrb[0].mxu0 %v3384
      %v3515 = vpop.f32.mrb[0].mxu0
      %v3516 = vadd.f32 0.0, %v3515
      %v3517 = vpop.f32.mrb[0].mxu0
      %v3518 = vpop.f32.mrb[0].mxu0
      %v3519 = vadd.f32 0.0, %v3518
      %v3520 = vpop.f32.mrb[0].mxu0
      %3521 = vmatprep.mubr.bf16.mxu0 0
      %3522 = vmatmul.mubr.bf16.gmra.mrb[0].mxu0 %v3387
      %v3523 = vpop.f32.mrb[0].mxu0
      %v3524 = vadd.f32 0.0, %v3523
      %v3525 = vpop.f32.mrb[0].mxu0
      %v3526 = vpop.f32.mrb[0].mxu0
      %v3527 = vadd.f32 0.0, %v3526
      %v3528 = vpop.f32.mrb[0].mxu0
      %3529 = vmatprep.mubr.bf16.mxu0 0
      %3530 = vmatmul.mubr.bf16.gmra.mrb[0].mxu0 %v3390
      %v3531 = vpop.f32.mrb[0].mxu0
      %v3532 = vadd.f32 0.0, %v3531
      %v3533 = vpop.f32.mrb[0].mxu0
      %v3534 = vpop.f32.mrb[0].mxu0
      %v3535 = vadd.f32 0.0, %v3534
      %v3536 = vpop.f32.mrb[0].mxu0
      %3537 = vmatprep.mubr.bf16.mxu0 0
      %3538 = vmatmul.mubr.bf16.gmra.mrb[0].mxu0 %v3393
      %v3539 = vpop.f32.mrb[0].mxu0
      %v3540 = vadd.f32 0.0, %v3539
      %v3541 = vpop.f32.mrb[0].mxu0
      %v3542 = vpop.f32.mrb[0].mxu0
      %v3543 = vadd.f32 0.0, %v3542
      %v3544 = vpop.f32.mrb[0].mxu0
      %3545 = vmatprep.mubr.bf16.mxu0 0
      %3546 = vmatmul.mubr.bf16.gmra.mrb[0].mxu0 %v3396
      %v3547 = vpop.f32.mrb[0].mxu0
      %v3548 = vadd.f32 0.0, %v3547
      %v3549 = vpop.f32.mrb[0].mxu0
      %v3550 = vpop.f32.mrb[0].mxu0
      %v3551 = vadd.f32 0.0, %v3550
      %v3552 = vpop.f32.mrb[0].mxu0
      %3553 = vmatprep.mubr.bf16.mxu0 0
      %3554 = vmatmul.mubr.bf16.gmra.mrb[0].mxu0 %v3399
      %v3555 = vpop.f32.mrb[0].mxu0
      %v3556 = vadd.f32 0.0, %v3555
      %v3557 = vpop.f32.mrb[0].mxu0
      %v3558 = vpop.f32.mrb[0].mxu0
      %v3559 = vadd.f32 0.0, %v3558
      %v3560 = vpop.f32.mrb[0].mxu0
      %3561 = vdwg.mxu0
      %v3562 = vadd.f32 %v2745, %v3436
      %v3563 = vadd.f32 %v2746, %v3439
      %v3564 = vadd.f32 %v2747, %v3444
      %v3565 = vadd.f32 %v2748, %v3447
      %v3566 = vadd.f32 %v2749, %v3452
      %v3567 = vadd.f32 %v2750, %v3455
      %v3568 = vadd.f32 %v2751, %v3460
      %v3569 = vadd.f32 %v2752, %v3463
      %v3570 = vadd.f32 %v2753, %v3468
      %v3571 = vadd.f32 %v2754, %v3471
      %v3572 = vadd.f32 %v2755, %v3476
      %v3573 = vadd.f32 %v2756, %v3479
      %v3574 = vadd.f32 %v2757, %v3484
      %v3575 = vadd.f32 %v2758, %v3487
      %v3576 = vadd.f32 %v2759, %v3492
      %v3577 = vadd.f32 %v2760, %v3495
      %v3578 = vadd.f32 %v2761, %v3500
      %v3579 = vadd.f32 %v2762, %v3503
      %v3580 = vadd.f32 %v2763, %v3508
      %v3581 = vadd.f32 %v2764, %v3511
      %v3582 = vadd.f32 %v2765, %v3516
      %v3583 = vadd.f32 %v2766, %v3519
      %v3584 = vadd.f32 %v2767, %v3524
      %v3585 = vadd.f32 %v2768, %v3527
      %v3586 = vadd.f32 %v2769, %v3532
      %v3587 = vadd.f32 %v2770, %v3535
      %v3588 = vadd.f32 %v2771, %v3540
      %v3589 = vadd.f32 %v2772, %v3543
      %v3590 = vadd.f32 %v2773, %v3548
      %v3591 = vadd.f32 %v2774, %v3551
      %v3592 = vadd.f32 %v2775, %v3556
      %v3593 = vadd.f32 %v2776, %v3559
      %3595 = vset.pattern.permute.xlu0 0
      %3596 = vperm.xlu0 %3595, %v2841
      %v3597 = vpop.permute.xlu0 %3596
      %3600 = vset.pattern.permute.xlu0 0
      %3601 = vperm.xlu0 %3600, %v2842
      %v3602 = vpop.permute.xlu0 %3601
      %3605 = vset.pattern.permute.xlu0 0
      %3606 = vperm.xlu0 %3605, %v2843
      %v3607 = vpop.permute.xlu0 %3606
      %3610 = vset.pattern.permute.xlu0 0
      %3611 = vperm.xlu0 %3610, %v2844
      %v3612 = vpop.permute.xlu0 %3611
      %3615 = vset.pattern.permute.xlu0 0
      %3616 = vperm.xlu0 %3615, %v2845
      %v3617 = vpop.permute.xlu0 %3616
      %3620 = vset.pattern.permute.xlu0 0
      %3621 = vperm.xlu0 %3620, %v2846
      %v3622 = vpop.permute.xlu0 %3621
      %3625 = vset.pattern.permute.xlu0 0
      %3626 = vperm.xlu0 %3625, %v2847
      %v3627 = vpop.permute.xlu0 %3626
      %3630 = vset.pattern.permute.xlu0 0
      %3631 = vperm.xlu0 %3630, %v2848
      %v3632 = vpop.permute.xlu0 %3631
      %3635 = vset.pattern.permute.xlu0 0
      %3636 = vperm.xlu0 %3635, %v2849
      %v3637 = vpop.permute.xlu0 %3636
      %3640 = vset.pattern.permute.xlu0 0
      %3641 = vperm.xlu0 %3640, %v2850
      %v3642 = vpop.permute.xlu0 %3641
      %3645 = vset.pattern.permute.xlu0 0
      %3646 = vperm.xlu0 %3645, %v2851
      %v3647 = vpop.permute.xlu0 %3646
      %3650 = vset.pattern.permute.xlu0 0
      %3651 = vperm.xlu0 %3650, %v2852
      %v3652 = vpop.permute.xlu0 %3651
      %3655 = vset.pattern.permute.xlu0 0
      %3656 = vperm.xlu0 %3655, %v2853
      %v3657 = vpop.permute.xlu0 %3656
      %3660 = vset.pattern.permute.xlu0 0
      %3661 = vperm.xlu0 %3660, %v2854
      %v3662 = vpop.permute.xlu0 %3661
      %3665 = vset.pattern.permute.xlu0 0
      %3666 = vperm.xlu0 %3665, %v2855
      %v3667 = vpop.permute.xlu0 %3666
      %3670 = vset.pattern.permute.xlu0 0
      %3671 = vperm.xlu0 %3670, %v2856
      %v3672 = vpop.permute.xlu0 %3671
      %3675 = vset.pattern.permute.xlu0 0
      %3676 = vperm.xlu0 %3675, %v2857
      %v3677 = vpop.permute.xlu0 %3676
      %3680 = vset.pattern.permute.xlu0 0
      %3681 = vperm.xlu0 %3680, %v2858
      %v3682 = vpop.permute.xlu0 %3681
      %3685 = vset.pattern.permute.xlu0 0
      %3686 = vperm.xlu0 %3685, %v2859
      %v3687 = vpop.permute.xlu0 %3686
      %3690 = vset.pattern.permute.xlu0 0
      %3691 = vperm.xlu0 %3690, %v2860
      %v3692 = vpop.permute.xlu0 %3691
      %3695 = vset.pattern.permute.xlu0 0
      %3696 = vperm.xlu0 %3695, %v2861
      %v3697 = vpop.permute.xlu0 %3696
      %3700 = vset.pattern.permute.xlu0 0
      %3701 = vperm.xlu0 %3700, %v2862
      %v3702 = vpop.permute.xlu0 %3701
      %3705 = vset.pattern.permute.xlu0 0
      %3706 = vperm.xlu0 %3705, %v2863
      %v3707 = vpop.permute.xlu0 %3706
      %3710 = vset.pattern.permute.xlu0 0
      %3711 = vperm.xlu0 %3710, %v2864
      %v3712 = vpop.permute.xlu0 %3711
      %3715 = vset.pattern.permute.xlu0 0
      %3716 = vperm.xlu0 %3715, %v2865
      %v3717 = vpop.permute.xlu0 %3716
      %3720 = vset.pattern.permute.xlu0 0
      %3721 = vperm.xlu0 %3720, %v2866
      %v3722 = vpop.permute.xlu0 %3721
      %3725 = vset.pattern.permute.xlu0 0
      %3726 = vperm.xlu0 %3725, %v2867
      %v3727 = vpop.permute.xlu0 %3726
      %3730 = vset.pattern.permute.xlu0 0
      %3731 = vperm.xlu0 %3730, %v2868
      %v3732 = vpop.permute.xlu0 %3731
      %3735 = vset.pattern.permute.xlu0 0
      %3736 = vperm.xlu0 %3735, %v2869
      %v3737 = vpop.permute.xlu0 %3736
      %3740 = vset.pattern.permute.xlu0 0
      %3741 = vperm.xlu0 %3740, %v2870
      %v3742 = vpop.permute.xlu0 %3741
      %3745 = vset.pattern.permute.xlu0 0
      %3746 = vperm.xlu0 %3745, %v2871
      %v3747 = vpop.permute.xlu0 %3746
      %3750 = vset.pattern.permute.xlu0 0
      %3751 = vperm.xlu0 %3750, %v2872
      %v3752 = vpop.permute.xlu0 %3751
      %v3754 = vlaneseq
      %v3755 = vshrl.u32 %v3754, 7
      %v3756 = vsub.s32 2, %v3755
      %v3757 = vrot.slane %v412, %v3756
      %v3758 = vmul.f32 %v3597, %v3757
      %v3759 = vmul.f32 %v3602, %v3757
      %v3760 = vmul.f32 %v3607, %v3757
      %v3761 = vmul.f32 %v3612, %v3757
      %v3762 = vmul.f32 %v3617, %v3757
      %v3763 = vmul.f32 %v3622, %v3757
      %v3764 = vmul.f32 %v3627, %v3757
      %v3765 = vmul.f32 %v3632, %v3757
      %v3766 = vmul.f32 %v3637, %v3757
      %v3767 = vmul.f32 %v3642, %v3757
      %v3768 = vmul.f32 %v3647, %v3757
      %v3769 = vmul.f32 %v3652, %v3757
      %v3770 = vmul.f32 %v3657, %v3757
      %v3771 = vmul.f32 %v3662, %v3757
      %v3772 = vmul.f32 %v3667, %v3757
      %v3773 = vmul.f32 %v3672, %v3757
      %v3774 = vmul.f32 %v3677, %v3757
      %v3775 = vmul.f32 %v3682, %v3757
      %v3776 = vmul.f32 %v3687, %v3757
      %v3777 = vmul.f32 %v3692, %v3757
      %v3778 = vmul.f32 %v3697, %v3757
      %v3779 = vmul.f32 %v3702, %v3757
      %v3780 = vmul.f32 %v3707, %v3757
      %v3781 = vmul.f32 %v3712, %v3757
      %v3782 = vmul.f32 %v3717, %v3757
      %v3783 = vmul.f32 %v3722, %v3757
      %v3784 = vmul.f32 %v3727, %v3757
      %v3785 = vmul.f32 %v3732, %v3757
      %v3786 = vmul.f32 %v3737, %v3757
      %v3787 = vmul.f32 %v3742, %v3757
      %v3788 = vmul.f32 %v3747, %v3757
      %v3789 = vmul.f32 %v3752, %v3757
      %v3790 = vadd.f32 %v3562, %v3758
      %v3791 = vadd.f32 %v3563, %v3759
      %v3792 = vadd.f32 %v3564, %v3760
      %v3793 = vadd.f32 %v3565, %v3761
      %v3794 = vadd.f32 %v3566, %v3762
      %v3795 = vadd.f32 %v3567, %v3763
      %v3796 = vadd.f32 %v3568, %v3764
      %v3797 = vadd.f32 %v3569, %v3765
      %v3798 = vadd.f32 %v3570, %v3766
      %v3799 = vadd.f32 %v3571, %v3767
      %v3800 = vadd.f32 %v3572, %v3768
      %v3801 = vadd.f32 %v3573, %v3769
      %v3802 = vadd.f32 %v3574, %v3770
      %v3803 = vadd.f32 %v3575, %v3771
      %v3804 = vadd.f32 %v3576, %v3772
      %v3805 = vadd.f32 %v3577, %v3773
      %v3806 = vadd.f32 %v3578, %v3774
      %v3807 = vadd.f32 %v3579, %v3775
      %v3808 = vadd.f32 %v3580, %v3776
      %v3809 = vadd.f32 %v3581, %v3777
      %v3810 = vadd.f32 %v3582, %v3778
      %v3811 = vadd.f32 %v3583, %v3779
      %v3812 = vadd.f32 %v3584, %v3780
      %v3813 = vadd.f32 %v3585, %v3781
      %v3814 = vadd.f32 %v3586, %v3782
      %v3815 = vadd.f32 %v3587, %v3783
      %v3816 = vadd.f32 %v3588, %v3784
      %v3817 = vadd.f32 %v3589, %v3785
      %v3818 = vadd.f32 %v3590, %v3786
      %v3819 = vadd.f32 %v3591, %v3787
      %v3820 = vadd.f32 %v3592, %v3788
      %v3821 = vadd.f32 %v3593, %v3789
      %vm3822 = vcmask 130048
      %3823 = vst.msk [vmem:[%s297] sm:$0xff] %vm3822, %v3790
      %3824 = vst.msk [vmem:[%s297 + $0x8] sm:$0xff] %vm3822, %v3791
      %3825 = vst.msk [vmem:[%s297 + $0x10] sm:$0xff] %vm3822, %v3792
      %3826 = vst.msk [vmem:[%s297 + $0x18] sm:$0xff] %vm3822, %v3793
      %3827 = vst.msk [vmem:[%s297 + $0x20] sm:$0xff] %vm3822, %v3794
      %3828 = vst.msk [vmem:[%s297 + $0x28] sm:$0xff] %vm3822, %v3795
      %3829 = vst.msk [vmem:[%s297 + $0x30] sm:$0xff] %vm3822, %v3796
      %3830 = vst.msk [vmem:[%s297 + $0x38] sm:$0xff] %vm3822, %v3797
      %3831 = vst.msk [vmem:[%s297 + $0x40] sm:$0xff] %vm3822, %v3798
      %3832 = vst.msk [vmem:[%s297 + $0x48] sm:$0xff] %vm3822, %v3799
      %3833 = vst.msk [vmem:[%s297 + $0x50] sm:$0xff] %vm3822, %v3800
      %3834 = vst.msk [vmem:[%s297 + $0x58] sm:$0xff] %vm3822, %v3801
      %3835 = vst.msk [vmem:[%s297 + $0x60] sm:$0xff] %vm3822, %v3802
      %3836 = vst.msk [vmem:[%s297 + $0x68] sm:$0xff] %vm3822, %v3803
      %3837 = vst.msk [vmem:[%s297 + $0x70] sm:$0xff] %vm3822, %v3804
      %3838 = vst.msk [vmem:[%s297 + $0x78] sm:$0xff] %vm3822, %v3805
      %3839 = vst.msk [vmem:[%s297 + $0x80] sm:$0xff] %vm3822, %v3806
      %3840 = vst.msk [vmem:[%s297 + $0x88] sm:$0xff] %vm3822, %v3807
      %3841 = vst.msk [vmem:[%s297 + $0x90] sm:$0xff] %vm3822, %v3808
      %3842 = vst.msk [vmem:[%s297 + $0x98] sm:$0xff] %vm3822, %v3809
      %3843 = vst.msk [vmem:[%s297 + $0xa0] sm:$0xff] %vm3822, %v3810
      %3844 = vst.msk [vmem:[%s297 + $0xa8] sm:$0xff] %vm3822, %v3811
      %3845 = vst.msk [vmem:[%s297 + $0xb0] sm:$0xff] %vm3822, %v3812
      %3846 = vst.msk [vmem:[%s297 + $0xb8] sm:$0xff] %vm3822, %v3813
      %3847 = vst.msk [vmem:[%s297 + $0xc0] sm:$0xff] %vm3822, %v3814
      %3848 = vst.msk [vmem:[%s297 + $0xc8] sm:$0xff] %vm3822, %v3815
      %3849 = vst.msk [vmem:[%s297 + $0xd0] sm:$0xff] %vm3822, %v3816
      %3850 = vst.msk [vmem:[%s297 + $0xd8] sm:$0xff] %vm3822, %v3817
      %3851 = vst.msk [vmem:[%s297 + $0xe0] sm:$0xff] %vm3822, %v3818
      %3852 = vst.msk [vmem:[%s297 + $0xe8] sm:$0xff] %vm3822, %v3819
      %3853 = vst.msk [vmem:[%s297 + $0xf0] sm:$0xff] %vm3822, %v3820
      %3854 = vst.msk [vmem:[%s297 + $0xf8] sm:$0xff] %vm3822, %v3821
      %s3855 = smul.u32 32, %s17
      %p3856 = scmp.lt.s32.totalorder %s3855, 63
      %s3857 = scalar_select %p3856, %s3855, 63
      %s3858 = smul.addr %s3857, 8
      %s3859 = scalar_lea.vmem %s6, %s3858
      // Predicated region
      $region45: #{rgcn_forward.5} parent=43 // pred_check
        %p3860 = pneg %p176
      $region46: #{rgcn_forward.5} parent=43 // pred_check_branch
        %3862 = sbr.rel (%p3860) target = $region48
      $region47: #{rgcn_forward.5} parent=43 // pred_region
        %s3863 = smul.u32 32, %s17
      $region48: #{rgcn_forward.5} parent=43 // pred_fallthru
        _
    $region44: #{rgcn_forward.5} parent=5 // pred_fallthru
      _
    %p3864 = scmp.le.s32.totalorder 2, %s12
    // Predicated region
    $region49: #{rgcn_forward.5} parent=5 // pred_check
      %p3865 = pneg %p3864
    $region50: #{rgcn_forward.5} parent=5 // pred_check_branch
      %3867 = sbr.rel (%p3865) target = $region52
    $region51: #{rgcn_forward.5} parent=5 // pred_region
      %s3868 = ssub.s32 %s12, 2
      // Predicated region
      $region53: #{rgcn_forward.5} parent=51 // pred_check
        %p3869 = pneg %p182
      $region54: #{rgcn_forward.5} parent=51 // pred_check_branch
        %3871 = sbr.rel (%p3869) target = $region56
      $region55: #{rgcn_forward.5} parent=51 // pred_region
        %s3872 = smul.u32 32, %s18
        %p3873 = scmp.lt.s32.totalorder %s3872, 63
        %s3874 = scalar_select %p3873, %s3872, 63
        %s3875 = smul.addr %s3874, 8
        %s3876 = scalar_lea.vmem %s6, %s3875
      $region56: #{rgcn_forward.5} parent=51 // pred_fallthru
        _
    $region52: #{rgcn_forward.5} parent=5 // pred_fallthru
      _
  $region6: #{rgcn_forward.5} parent=0 // loop_footer
    %s16 = sadd.s32 1, %s12
  $region7: #{rgcn_forward.5} parent=0 // loop_footer_branch
    %11 = sbr.rel target = $region3
  $region8: #{rgcn_forward.5} parent=0 // loop_exit
    _

</llo_original>
